<compile_context>
chip_gen: v7x
topology: tpu7x:2x2x1
jax: 0.10.0
libtpu: 0.0.40
codegen_flags: <defaults>
</compile_context>

<pallas_src>
import functools

import jax
import jax.numpy as jnp
from jax.experimental import pallas as pl
from jax.experimental.pallas import tpu as pltpu


_OPERAND_DTYPE = jnp.bfloat16     # MXU-native matmul operands; f32 accumulation.


# ---------------------------------------------------------------------------
# Chip-adaptive VMEM budgeting.
# ---------------------------------------------------------------------------
def _vmem_budgets():
    cap = 64 << 20                              # conservative fallback (v7x per-TC)
    try:
        cap = int(pltpu.get_tpu_info().vmem_capacity_bytes)
    except Exception:
        pass
    tile_budget = max(24 << 20, min(cap // 2, 96 << 20))       # v7x: 32M, v5e/v6e: 64M
    vmem_limit = max(48 << 20, min((cap * 3) // 4, 100 << 20))  # v7x: 48M, v5e/v6e: 96M
    return tile_budget, vmem_limit


def _choose_group_tile(m8, per_group_bytes, fixed_bytes, budget_bytes):
    """One 'group' = 8 im2col rows (one 2x2x2 pool window) + 1 pooled output row."""
    if m8 <= 8:
        return m8                                # single full tile (full-dim block)
    avail = max(budget_bytes - fixed_bytes, 8 * per_group_bytes)
    cap = max(8, (avail // per_group_bytes) // 8 * 8)
    if m8 <= 32:
        return min(-(-m8 // 8) * 8, cap)         # tiny: one step beats per-step cost
    # Target >= 4 grid steps (2 per TensorCore on v7x; overlapped DMA elsewhere)
    # while keeping tiles as large as the VMEM budget allows.
    want = -(-m8 // 4)
    d = -(-want // 8) * 8
    return max(8, min(d, cap))


# ---------------------------------------------------------------------------
# Stage 1: Conv3d(1, 64, k=5, p=1) + ReLU + MaxPool3d(2)  -- im2col kernel.
# ---------------------------------------------------------------------------
def _im2col_pool_kernel(p_ref, w_ref, b_ref, o_ref):
    # p_ref: (tm, Kp) bf16 im2col rows; 8 consecutive rows = one 2x2x2 pool window.
    # w_ref: (Kp, Cout) bf16.  b_ref: (1, Cout) f32.  o_ref: (tm//8, Cout) f32.
    y = jnp.dot(p_ref[...], w_ref[...], preferred_element_type=jnp.float32)
    tm, cout = y.shape
    # tm is a multiple of 8, so this split is sublane-aligned (no relayout copy).
    y = jnp.max(y.reshape(tm // 8, 8, cout), axis=1)          # fused 2x2x2 max-pool
    # bias + ReLU commute with the max (both monotone) -> 8x cheaper epilogue.
    o_ref[...] = jnp.maximum(y + b_ref[...], 0.0).astype(o_ref.dtype)


def _extract_patches(x, k, pad):
    # x: (N, D, H, W, C) -> (N, Do, Ho, Wo, k*k*k*C), tap order (kd, kh, kw, c).
    n, d, h, w, c = x.shape
    xp = jnp.pad(x, ((0, 0), (pad, pad), (pad, pad), (pad, pad), (0, 0)))
    do, ho, wo = d + 2 * pad - k + 1, h + 2 * pad - k + 1, w + 2 * pad - k + 1
    taps = []
    for kd in range(k):
        for kh in range(k):
            for kw in range(k):
                taps.append(xp[:, kd:kd + do, kh:kh + ho, kw:kw + wo, :])
    return jnp.concatenate(taps, axis=-1)


def _pool_group_rows(p):
    # (N, Do, Ho, Wo, K) -> (M*8, K) with the 8 taps of each pool window contiguous.
    n, do, ho, wo, kdim = p.shape
    dp, hp, wp = do // 2, ho // 2, wo // 2       # floor-mode pooling (PyTorch default)
    p = p[:, :2 * dp, :2 * hp, :2 * wp, :]
    p = p.reshape(n, dp, 2, hp, 2, wp, 2, kdim)
    p = jnp.transpose(p, (0, 1, 3, 5, 2, 4, 6, 7))
    return p.reshape(n * dp * hp * wp * 8, kdim), (n, dp, hp, wp)


def _conv_im2col_relu_pool(x, w, b, padding):
    """Conv3d + ReLU + 2x2x2 max-pool via bf16 im2col rows (stage 1, Cin=1)."""
    cout, cin, k, _, _ = w.shape
    assert x.shape[-1] == cin
    kdim = k * k * k * cin
    kpad = -(-kdim // 128) * 128                              # lane-align K (125 -> 128)

    xq = x.astype(_OPERAND_DTYPE)
    patches = _extract_patches(xq, k, padding)                # (N, Do, Ho, Wo, K) bf16
    rows, (n, dp, hp, wp) = _pool_group_rows(patches)         # (M*8, K) bf16
    m8 = n * dp * hp * wp
    if kpad != kdim:
        rows = jnp.pad(rows, ((0, 0), (0, kpad - kdim)))

    w2 = jnp.transpose(w, (2, 3, 4, 1, 0)).reshape(kdim, cout)
    if kpad != kdim:
        w2 = jnp.pad(w2, ((0, kpad - kdim), (0, 0)))
    w2 = w2.astype(_OPERAND_DTYPE)
    b2 = b.reshape(1, cout).astype(jnp.float32)

    budget, limit = _vmem_budgets()
    per_group = 2 * (8 * kpad * 2 + cout * 4)      # double-buffered rows + pooled out
    fixed = kpad * cout * 2 + cout * 4             # constant-index weight/bias: count once
    d = _choose_group_tile(m8, per_group, fixed, budget)
    mpad8 = -(-m8 // d) * d
    if mpad8 != m8:
        rows = jnp.pad(rows, ((0, (mpad8 - m8) * 8), (0, 0)))
    tm = d * 8
    grid = (mpad8 // d,)

    cost = pl.CostEstimate(
        flops=2 * mpad8 * 8 * kpad * cout,
        transcendentals=0,
        bytes_accessed=mpad8 * 8 * kpad * 2 + kpad * cout * 2 + mpad8 * cout * 4)

    out = pl.pallas_call(
        _im2col_pool_kernel,
        out_shape=jax.ShapeDtypeStruct((mpad8, cout), jnp.float32),
        grid_spec=pltpu.PrefetchScalarGridSpec(
            num_scalar_prefetch=0,
            grid=grid,
            in_specs=[
                pl.BlockSpec((tm, kpad), lambda i: (i, 0)),       # im2col rows
                pl.BlockSpec((kpad, cout), lambda i: (0, 0)),     # stacked weight
                pl.BlockSpec((1, cout), lambda i: (0, 0)),        # bias
            ],
            out_specs=pl.BlockSpec((d, cout), lambda i: (i, 0)),
        ),
        compiler_params=pltpu.CompilerParams(
            dimension_semantics=("parallel",),
            vmem_limit_bytes=limit),
        cost_estimate=cost,
    )(rows, w2, b2)

    return out[:m8].reshape(n, dp, hp, wp, cout)                  # NDHWC, f32


# ---------------------------------------------------------------------------
# Stage 2: Conv3d(64, 128, k=3, p=1) + ReLU + MaxPool3d(2)
#          -- on-chip tap accumulation over padded-depth slabs (no im2col).
# ---------------------------------------------------------------------------
def _tap_accum_pool_kernel(x_ref, w_ref, b_ref, o_ref, *, k, wpad, hw):
    # x_ref: (1, k+1, R, Cin) bf16 -- k+1 padded depth planes, each flattened to
    #        Hpad*Wpad rows (+ zero rows appended so every tap slice is in bounds).
    # w_ref: (k^3, Cin, Cout) bf16, tap-major.   b_ref: (1, Cout) f32.
    # o_ref: (1, hw, Cout) f32 -- depth-pooled ReLU(conv+bias) at padded positions.
    cout = o_ref.shape[-1]
    acc0 = jnp.zeros((hw, cout), jnp.float32)     # conv output depth 2*dp
    acc1 = jnp.zeros((hw, cout), jnp.float32)     # conv output depth 2*dp + 1
    for kd in range(k):
        for kh in range(k):
            for kw_ in range(k):
                t = (kd * k + kh) * k + kw_
                off = kh * wpad + kw_                              # static offsets
                wt = w_ref[t]                                      # (Cin, Cout)
                a0 = x_ref[0, kd, off:off + hw, :]                 # (hw, Cin)
                a1 = x_ref[0, kd + 1, off:off + hw, :]
                acc0 = acc0 + jnp.dot(a0, wt, preferred_element_type=jnp.float32)
                acc1 = acc1 + jnp.dot(a1, wt, preferred_element_type=jnp.float32)
    # bias + ReLU commute with max -> fuse the depth half of the 2x2x2 pool here.
    z = jnp.maximum(jnp.maximum(acc0, acc1) + b_ref[...], 0.0)
    o_ref[0] = z.astype(o_ref.dtype)


def _conv_tap_accum_relu_pool(x, w, b, padding):
    """Conv3d + ReLU + 2x2x2 max-pool with the k^3 tap expansion done on-chip.

    The wrapper only materializes (k+1)-deep padded-depth windows of the raw
    NDHWC input (~2x raw bytes, vs 27x for im2col).  The kernel computes the
    conv at every padded-plane position (edge positions are garbage and are
    cropped in XLA), pools over depth in-kernel, and the cheap H/W pool half
    plus the valid crop run in XLA on the lane-dense (Cout=128) kernel output.
    """
    n, d, h, wdim, cin = x.shape
    cout, cin_w, k, _, _ = w.shape
    assert cin == cin_w
    do = d + 2 * padding - k + 1
    ho = h + 2 * padding - k + 1
    wo = wdim + 2 * padding - k + 1
    dp2, hp2, wp2 = do // 2, ho // 2, wo // 2            # floor-mode pooling
    dpad, hpad, wpad = d + 2 * padding, h + 2 * padding, wdim + 2 * padding
    hw = hpad * wpad
    max_off = (k - 1) * wpad + (k - 1)
    r = hw + max_off                                     # zero rows appended per plane

    xq = x.astype(_OPERAND_DTYPE)
    xp = jnp.pad(xq, ((0, 0), (padding, padding), (padding, padding),
                      (padding, padding), (0, 0)))
    xflat = xp.reshape(n, dpad, hw, cin)
    xflat = jnp.pad(xflat, ((0, 0), (0, 0), (0, max_off), (0, 0)))
    # Pooled depth dp needs padded depths [2*dp, 2*dp + k + 1)  (k+1 planes).
    win = 2 * jnp.arange(dp2)[:, None] + jnp.arange(k + 1)[None, :]   # (dp2, k+1)
    xwin = xflat[:, win]                                 # (N, dp2, k+1, R, Cin)
    xwin = xwin.reshape(n * dp2, k + 1, r, cin)

    w2 = jnp.transpose(w, (2, 3, 4, 1, 0)).reshape(k * k * k, cin, cout)
    w2 = w2.astype(_OPERAND_DTYPE)
    b2 = b.reshape(1, cout).astype(jnp.float32)

    steps = n * dp2
    _, limit = _vmem_budgets()      # per-step VMEM is ~1 MiB, no K-split needed (v7x ok)
    cost = pl.CostEstimate(
        flops=2 * steps * 2 * (k ** 3) * hw * cin * cout,
        transcendentals=0,
        bytes_accessed=(steps * (k + 1) * r * cin * 2
                        + (k ** 3) * cin * cout * 2
                        + steps * hw * cout * 4))

    kern = functools.partial(_tap_accum_pool_kernel, k=k, wpad=wpad, hw=hw)
    out = pl.pallas_call(
        kern,
        out_shape=jax.ShapeDtypeStruct((steps, hw, cout), jnp.float32),
        grid_spec=pltpu.PrefetchScalarGridSpec(
            num_scalar_prefetch=0,
            grid=(steps,),
            in_specs=[
                pl.BlockSpec((1, k + 1, r, cin), lambda i: (i, 0, 0, 0)),   # depth slab
                pl.BlockSpec((k * k * k, cin, cout), lambda i: (0, 0, 0)),  # tap weights
                pl.BlockSpec((1, cout), lambda i: (0, 0)),                  # bias
            ],
            out_specs=pl.BlockSpec((1, hw, cout), lambda i: (i, 0, 0)),
        ),
        compiler_params=pltpu.CompilerParams(
            dimension_semantics=("parallel",),
            vmem_limit_bytes=limit),
        cost_estimate=cost,
    )(xwin, w2, b2)

    # Crop to valid conv outputs and finish the H/W half of the 2x2x2 pool in XLA.
    y = out.reshape(n, dp2, hpad, wpad, cout)[:, :, :2 * hp2, :2 * wp2, :]
    y = y.reshape(n, dp2, hp2, 2, wp2, 2, cout)
    return jnp.max(y, axis=(3, 5))                       # (N, dp2, hp2, wp2, Cout)


# ---------------------------------------------------------------------------
# Full forward (matches conv_3d.forward).
# ---------------------------------------------------------------------------
def conv_3d_forward(x_ncdhw, w1, b1, w2, b2):
    x = jnp.transpose(x_ncdhw, (0, 2, 3, 4, 1))              # NCDHW -> NDHWC
    y = _conv_im2col_relu_pool(x, w1, b1, padding=1)         # stage 1 (Cin=1)
    y = _conv_tap_accum_relu_pool(y, w2, b2, padding=1)      # stage 2 (Cin=64)
    return jnp.transpose(y, (0, 4, 1, 2, 3))                 # NDHWC -> NCDHW


def _reference(x, w1, b1, w2, b2):
    # Pure-XLA reference mirroring the PyTorch forward.
    def block(xx, w, b, pad):
        y = jax.lax.conv_general_dilated(
            xx, w, window_strides=(1, 1, 1), padding=[(pad, pad)] * 3,
            dimension_numbers=("NCDHW", "OIDHW", "NCDHW"),
            precision=jax.lax.Precision.HIGHEST)
        y = jnp.maximum(y + b[None, :, None, None, None], 0.0)
        return jax.lax.reduce_window(
            y, -jnp.inf, jax.lax.max,
            window_dimensions=(1, 1, 2, 2, 2),
            window_strides=(1, 1, 2, 2, 2), padding="VALID")
    return block(block(x, w1, b1, 1), w2, b2, 1)


if __name__ == "__main__":
    key = jax.random.PRNGKey(0)
    k1, k2, k3, k4, k5 = jax.random.split(key, 5)

    N, Cin, D, H, W = 2, 1, 16, 16, 16
    x = jax.random.normal(k1, (N, Cin, D, H, W), dtype=jnp.float32)

    # PyTorch-like init scales (1/sqrt(fan_in)); deterministic from PRNGKey(0).
    w1 = jax.random.normal(k2, (64, 1, 5, 5, 5), dtype=jnp.float32) * (1.0 / (125.0 ** 0.5))
    b1 = jax.random.normal(k3, (64,), dtype=jnp.float32) * 0.05
    w2 = jax.random.normal(k4, (128, 64, 3, 3, 3), dtype=jnp.float32) * (1.0 / (1728.0 ** 0.5))
    b2 = jax.random.normal(k5, (128,), dtype=jnp.float32) * 0.05

    fwd = jax.jit(conv_3d_forward)
    out = jax.block_until_ready(fwd(x, w1, b1, w2, b2))

    ref = _reference(x, w1, b1, w2, b2)
    assert out.shape == ref.shape == (N, 128, 3, 3, 3), (out.shape, ref.shape)
    # Tolerance covers bf16 matmul operands (f32 accumulation) vs the
    # HIGHEST-precision XLA reference; structural bugs give O(1) errors.
    max_err = float(jnp.max(jnp.abs(out - ref)))
    assert jnp.allclose(out, ref, atol=5e-2, rtol=5e-2), max_err

    print("KERNEL_OK")
</pallas_src>

<mosaic_0001>
module attributes {stable_mosaic.version = 11 : i64} {
  func.func @_im2col_pool_kernel(%arg0: i32, %arg1: memref<1408x128xbf16, #tpu.memory_space<vmem>>, %arg2: memref<128x64xbf16, #tpu.memory_space<vmem>>, %arg3: memref<1x64xf32, #tpu.memory_space<vmem>>, %arg4: memref<176x64xf32, #tpu.memory_space<vmem>>) attributes {dimension_semantics = [#tpu.dimension_semantics<parallel>], iteration_bounds = array<i64: 4>, scalar_prefetch = 0 : i64, scratch_operands = 0 : i64, tpu.core_type = #tpu.core_type<tc>, window_params = [{transform_indices = @transform_0, window_bounds = array<i64: 1408, 128>}, {pipeline_mode = #tpu.pipeline_mode<synchronous>, transform_indices = @transform_1, window_bounds = array<i64: 128, 64>}, {pipeline_mode = #tpu.pipeline_mode<synchronous>, transform_indices = @transform_2, window_bounds = array<i64: 1, 64>}, {transform_indices = @transform_3, window_bounds = array<i64: 176, 64>}]} {
    %c0 = arith.constant 0 : index
    %c0_0 = arith.constant 0 : index
    %0 = vector.load %arg1[%c0, %c0_0] : memref<1408x128xbf16, #tpu.memory_space<vmem>>, vector<1408x128xbf16>
    %c0_1 = arith.constant 0 : index
    %c0_2 = arith.constant 0 : index
    %1 = vector.load %arg2[%c0_1, %c0_2] : memref<128x64xbf16, #tpu.memory_space<vmem>>, vector<128x64xbf16>
    %cst = arith.constant dense<0.000000e+00> : vector<1408x64xf32>
    %2 = tpu.matmul %0, %1, %cst {dimension_numbers = #tpu.dot_dimension_numbers<[1], [0], [0], [1], [0, 0, 1, 1], [], []>} : vector<1408x128xbf16>, vector<128x64xbf16>, vector<1408x64xf32> -> vector<1408x64xf32>
    %3 = vector.shape_cast %2 : vector<1408x64xf32> to vector<176x8x64xf32>
    %cst_3 = arith.constant dense<0xFF800000> : vector<176x64xf32>
    %4 = vector.multi_reduction <maximumf>, %3, %cst_3 [1] : vector<176x8x64xf32> to vector<176x64xf32>
    %c0_4 = arith.constant 0 : index
    %c0_5 = arith.constant 0 : index
    %5 = vector.load %arg3[%c0_4, %c0_5] : memref<1x64xf32, #tpu.memory_space<vmem>>, vector<1x64xf32>
    %6 = vector.broadcast %5 : vector<1x64xf32> to vector<176x64xf32>
    %7 = arith.addf %4, %6 : vector<176x64xf32>
    %cst_6 = arith.constant 0.000000e+00 : f32
    %8 = vector.broadcast %cst_6 : f32 to vector<176x64xf32>
    %9 = arith.maximumf %7, %8 : vector<176x64xf32>
    %c0_7 = arith.constant 0 : index
    %c0_8 = arith.constant 0 : index
    %10 = vector.load %arg4[%c0_7, %c0_8] : memref<176x64xf32, #tpu.memory_space<vmem>>, vector<176x64xf32>
    tpu.vector_store %arg4[%c0_7, %c0_8], %9 {strides = array<i32>} : memref<176x64xf32, #tpu.memory_space<vmem>>, vector<176x64xf32>,
    return
  }
  func.func @transform_0(%arg0: i32) -> (i32, i32) {
    %c0_i32 = arith.constant 0 : i32
    %c0_i32_0 = arith.constant 0 : i32
    return %arg0, %c0_i32 : i32, i32
  }
  func.func @transform_1(%arg0: i32) -> (i32, i32) {
    %c0_i32 = arith.constant 0 : i32
    %c0_i32_0 = arith.constant 0 : i32
    %c0_i32_1 = arith.constant 0 : i32
    return %c0_i32, %c0_i32_0 : i32, i32
  }
  func.func @transform_2(%arg0: i32) -> (i32, i32) {
    %c0_i32 = arith.constant 0 : i32
    %c0_i32_0 = arith.constant 0 : i32
    %c0_i32_1 = arith.constant 0 : i32
    return %c0_i32, %c0_i32_0 : i32, i32
  }
  func.func @transform_3(%arg0: i32) -> (i32, i32) {
    %c0_i32 = arith.constant 0 : i32
    %c0_i32_0 = arith.constant 0 : i32
    return %arg0, %c0_i32 : i32, i32
  }
}

module attributes {stable_mosaic.version = 11 : i64} {
  func.func @_tap_accum_pool_kernel(%arg0: i32, %arg1: memref<1x4x101x64xbf16, #tpu.memory_space<vmem>>, %arg2: memref<27x64x128xbf16, #tpu.memory_space<vmem>>, %arg3: memref<1x128xf32, #tpu.memory_space<vmem>>, %arg4: memref<1x81x128xf32, #tpu.memory_space<vmem>>) attributes {dimension_semantics = [#tpu.dimension_semantics<parallel>], iteration_bounds = array<i64: 6>, scalar_prefetch = 0 : i64, scratch_operands = 0 : i64, tpu.core_type = #tpu.core_type<tc>, window_params = [{transform_indices = @transform_0, window_bounds = array<i64: 1, 4, 101, 64>}, {pipeline_mode = #tpu.pipeline_mode<synchronous>, transform_indices = @transform_1, window_bounds = array<i64: 27, 64, 128>}, {pipeline_mode = #tpu.pipeline_mode<synchronous>, transform_indices = @transform_2, window_bounds = array<i64: 1, 128>}, {transform_indices = @transform_3, window_bounds = array<i64: 1, 81, 128>}]} {
    %cst = arith.constant 0.000000e+00 : f32
    %0 = vector.broadcast %cst : f32 to vector<81x128xf32>
    %cst_0 = arith.constant 0.000000e+00 : f32
    %1 = vector.broadcast %cst_0 : f32 to vector<81x128xf32>
    %c0 = arith.constant 0 : index
    %c0_1 = arith.constant 0 : index
    %c0_2 = arith.constant 0 : index
    %2 = vector.load %arg2[%c0, %c0_1, %c0_2] : memref<27x64x128xbf16, #tpu.memory_space<vmem>>, vector<1x64x128xbf16>
    %3 = vector.shape_cast %2 : vector<1x64x128xbf16> to vector<64x128xbf16>
    %c0_3 = arith.constant 0 : index
    %c0_4 = arith.constant 0 : index
    %c0_5 = arith.constant 0 : index
    %c0_6 = arith.constant 0 : index
    %4 = vector.load %arg1[%c0_3, %c0_4, %c0_5, %c0_6] : memref<1x4x101x64xbf16, #tpu.memory_space<vmem>>, vector<1x1x81x64xbf16>
    %5 = vector.shape_cast %4 : vector<1x1x81x64xbf16> to vector<81x64xbf16>
    %c0_7 = arith.constant 0 : index
    %c1 = arith.constant 1 : index
    %c0_8 = arith.constant 0 : index
    %c0_9 = arith.constant 0 : index
    %6 = vector.load %arg1[%c0_7, %c1, %c0_8, %c0_9] : memref<1x4x101x64xbf16, #tpu.memory_space<vmem>>, vector<1x1x81x64xbf16>
    %7 = vector.shape_cast %6 : vector<1x1x81x64xbf16> to vector<81x64xbf16>
    %cst_10 = arith.constant dense<0.000000e+00> : vector<81x128xf32>
    %8 = tpu.matmul %5, %3, %cst_10 {dimension_numbers = #tpu.dot_dimension_numbers<[1], [0], [0], [1], [0, 0, 1, 1], [], []>} : vector<81x64xbf16>, vector<64x128xbf16>, vector<81x128xf32> -> vector<81x128xf32>
    %9 = arith.addf %0, %8 : vector<81x128xf32>
    %cst_11 = arith.constant dense<0.000000e+00> : vector<81x128xf32>
    %10 = tpu.matmul %7, %3, %cst_11 {dimension_numbers = #tpu.dot_dimension_numbers<[1], [0], [0], [1], [0, 0, 1, 1], [], []>} : vector<81x64xbf16>, vector<64x128xbf16>, vector<81x128xf32> -> vector<81x128xf32>
    %11 = arith.addf %1, %10 : vector<81x128xf32>
    %c1_12 = arith.constant 1 : index
    %c0_13 = arith.constant 0 : index
    %c0_14 = arith.constant 0 : index
    %12 = vector.load %arg2[%c1_12, %c0_13, %c0_14] : memref<27x64x128xbf16, #tpu.memory_space<vmem>>, vector<1x64x128xbf16>
    %13 = vector.shape_cast %12 : vector<1x64x128xbf16> to vector<64x128xbf16>
    %c0_15 = arith.constant 0 : index
    %c0_16 = arith.constant 0 : index
    %c1_17 = arith.constant 1 : index
    %c0_18 = arith.constant 0 : index
    %14 = vector.load %arg1[%c0_15, %c0_16, %c1_17, %c0_18] : memref<1x4x101x64xbf16, #tpu.memory_space<vmem>>, vector<1x1x81x64xbf16>
    %15 = vector.shape_cast %14 : vector<1x1x81x64xbf16> to vector<81x64xbf16>
    %c0_19 = arith.constant 0 : index
    %c1_20 = arith.constant 1 : index
    %c1_21 = arith.constant 1 : index
    %c0_22 = arith.constant 0 : index
    %16 = vector.load %arg1[%c0_19, %c1_20, %c1_21, %c0_22] : memref<1x4x101x64xbf16, #tpu.memory_space<vmem>>, vector<1x1x81x64xbf16>
    %17 = vector.shape_cast %16 : vector<1x1x81x64xbf16> to vector<81x64xbf16>
    %cst_23 = arith.constant dense<0.000000e+00> : vector<81x128xf32>
    %18 = tpu.matmul %15, %13, %cst_23 {dimension_numbers = #tpu.dot_dimension_numbers<[1], [0], [0], [1], [0, 0, 1, 1], [], []>} : vector<81x64xbf16>, vector<64x128xbf16>, vector<81x128xf32> -> vector<81x128xf32>
    %19 = arith.addf %9, %18 : vector<81x128xf32>
    %cst_24 = arith.constant dense<0.000000e+00> : vector<81x128xf32>
    %20 = tpu.matmul %17, %13, %cst_24 {dimension_numbers = #tpu.dot_dimension_numbers<[1], [0], [0], [1], [0, 0, 1, 1], [], []>} : vector<81x64xbf16>, vector<64x128xbf16>, vector<81x128xf32> -> vector<81x128xf32>
    %21 = arith.addf %11, %20 : vector<81x128xf32>
    %c2 = arith.constant 2 : index
    %c0_25 = arith.constant 0 : index
    %c0_26 = arith.constant 0 : index
    %22 = vector.load %arg2[%c2, %c0_25, %c0_26] : memref<27x64x128xbf16, #tpu.memory_space<vmem>>, vector<1x64x128xbf16>
    %23 = vector.shape_cast %22 : vector<1x64x128xbf16> to vector<64x128xbf16>
    %c0_27 = arith.constant 0 : index
    %c0_28 = arith.constant 0 : index
    %c2_29 = arith.constant 2 : index
    %c0_30 = arith.constant 0 : index
    %24 = vector.load %arg1[%c0_27, %c0_28, %c2_29, %c0_30] : memref<1x4x101x64xbf16, #tpu.memory_space<vmem>>, vector<1x1x81x64xbf16>
    %25 = vector.shape_cast %24 : vector<1x1x81x64xbf16> to vector<81x64xbf16>
    %c0_31 = arith.constant 0 : index
    %c1_32 = arith.constant 1 : index
    %c2_33 = arith.constant 2 : index
    %c0_34 = arith.constant 0 : index
    %26 = vector.load %arg1[%c0_31, %c1_32, %c2_33, %c0_34] : memref<1x4x101x64xbf16, #tpu.memory_space<vmem>>, vector<1x1x81x64xbf16>
    %27 = vector.shape_cast %26 : vector<1x1x81x64xbf16> to vector<81x64xbf16>
    %cst_35 = arith.constant dense<0.000000e+00> : vector<81x128xf32>
    %28 = tpu.matmul %25, %23, %cst_35 {dimension_numbers = #tpu.dot_dimension_numbers<[1], [0], [0], [1], [0, 0, 1, 1], [], []>} : vector<81x64xbf16>, vector<64x128xbf16>, vector<81x128xf32> -> vector<81x128xf32>
    %29 = arith.addf %19, %28 : vector<81x128xf32>
    %cst_36 = arith.constant dense<0.000000e+00> : vector<81x128xf32>
    %30 = tpu.matmul %27, %23, %cst_36 {dimension_numbers = #tpu.dot_dimension_numbers<[1], [0], [0], [1], [0, 0, 1, 1], [], []>} : vector<81x64xbf16>, vector<64x128xbf16>, vector<81x128xf32> -> vector<81x128xf32>
    %31 = arith.addf %21, %30 : vector<81x128xf32>
    %c3 = arith.constant 3 : index
    %c0_37 = arith.constant 0 : index
    %c0_38 = arith.constant 0 : index
    %32 = vector.load %arg2[%c3, %c0_37, %c0_38] : memref<27x64x128xbf16, #tpu.memory_space<vmem>>, vector<1x64x128xbf16>
    %33 = vector.shape_cast %32 : vector<1x64x128xbf16> to vector<64x128xbf16>
    %c0_39 = arith.constant 0 : index
    %c0_40 = arith.constant 0 : index
    %c9 = arith.constant 9 : index
    %c0_41 = arith.constant 0 : index
    %34 = vector.load %arg1[%c0_39, %c0_40, %c9, %c0_41] : memref<1x4x101x64xbf16, #tpu.memory_space<vmem>>, vector<1x1x81x64xbf16>
    %35 = vector.shape_cast %34 : vector<1x1x81x64xbf16> to vector<81x64xbf16>
    %c0_42 = arith.constant 0 : index
    %c1_43 = arith.constant 1 : index
    %c9_44 = arith.constant 9 : index
    %c0_45 = arith.constant 0 : index
    %36 = vector.load %arg1[%c0_42, %c1_43, %c9_44, %c0_45] : memref<1x4x101x64xbf16, #tpu.memory_space<vmem>>, vector<1x1x81x64xbf16>
    %37 = vector.shape_cast %36 : vector<1x1x81x64xbf16> to vector<81x64xbf16>
    %cst_46 = arith.constant dense<0.000000e+00> : vector<81x128xf32>
    %38 = tpu.matmul %35, %33, %cst_46 {dimension_numbers = #tpu.dot_dimension_numbers<[1], [0], [0], [1], [0, 0, 1, 1], [], []>} : vector<81x64xbf16>, vector<64x128xbf16>, vector<81x128xf32> -> vector<81x128xf32>
    %39 = arith.addf %29, %38 : vector<81x128xf32>
    %cst_47 = arith.constant dense<0.000000e+00> : vector<81x128xf32>
    %40 = tpu.matmul %37, %33, %cst_47 {dimension_numbers = #tpu.dot_dimension_numbers<[1], [0], [0], [1], [0, 0, 1, 1], [], []>} : vector<81x64xbf16>, vector<64x128xbf16>, vector<81x128xf32> -> vector<81x128xf32>
    %41 = arith.addf %31, %40 : vector<81x128xf32>
    %c4 = arith.constant 4 : index
    %c0_48 = arith.constant 0 : index
    %c0_49 = arith.constant 0 : index
    %42 = vector.load %arg2[%c4, %c0_48, %c0_49] : memref<27x64x128xbf16, #tpu.memory_space<vmem>>, vector<1x64x128xbf16>
    %43 = vector.shape_cast %42 : vector<1x64x128xbf16> to vector<64x128xbf16>
    %c0_50 = arith.constant 0 : index
    %c0_51 = arith.constant 0 : index
    %c10 = arith.constant 10 : index
    %c0_52 = arith.constant 0 : index
    %44 = vector.load %arg1[%c0_50, %c0_51, %c10, %c0_52] : memref<1x4x101x64xbf16, #tpu.memory_space<vmem>>, vector<1x1x81x64xbf16>
    %45 = vector.shape_cast %44 : vector<1x1x81x64xbf16> to vector<81x64xbf16>
    %c0_53 = arith.constant 0 : index
    %c1_54 = arith.constant 1 : index
    %c10_55 = arith.constant 10 : index
    %c0_56 = arith.constant 0 : index
    %46 = vector.load %arg1[%c0_53, %c1_54, %c10_55, %c0_56] : memref<1x4x101x64xbf16, #tpu.memory_space<vmem>>, vector<1x1x81x64xbf16>
    %47 = vector.shape_cast %46 : vector<1x1x81x64xbf16> to vector<81x64xbf16>
    %cst_57 = arith.constant dense<0.000000e+00> : vector<81x128xf32>
    %48 = tpu.matmul %45, %43, %cst_57 {dimension_numbers = #tpu.dot_dimension_numbers<[1], [0], [0], [1], [0, 0, 1, 1], [], []>} : vector<81x64xbf16>, vector<64x128xbf16>, vector<81x128xf32> -> vector<81x128xf32>
    %49 = arith.addf %39, %48 : vector<81x128xf32>
    %cst_58 = arith.constant dense<0.000000e+00> : vector<81x128xf32>
    %50 = tpu.matmul %47, %43, %cst_58 {dimension_numbers = #tpu.dot_dimension_numbers<[1], [0], [0], [1], [0, 0, 1, 1], [], []>} : vector<81x64xbf16>, vector<64x128xbf16>, vector<81x128xf32> -> vector<81x128xf32>
    %51 = arith.addf %41, %50 : vector<81x128xf32>
    %c5 = arith.constant 5 : index
    %c0_59 = arith.constant 0 : index
    %c0_60 = arith.constant 0 : index
    %52 = vector.load %arg2[%c5, %c0_59, %c0_60] : memref<27x64x128xbf16, #tpu.memory_space<vmem>>, vector<1x64x128xbf16>
    %53 = vector.shape_cast %52 : vector<1x64x128xbf16> to vector<64x128xbf16>
    %c0_61 = arith.constant 0 : index
    %c0_62 = arith.constant 0 : index
    %c11 = arith.constant 11 : index
    %c0_63 = arith.constant 0 : index
    %54 = vector.load %arg1[%c0_61, %c0_62, %c11, %c0_63] : memref<1x4x101x64xbf16, #tpu.memory_space<vmem>>, vector<1x1x81x64xbf16>
    %55 = vector.shape_cast %54 : vector<1x1x81x64xbf16> to vector<81x64xbf16>
    %c0_64 = arith.constant 0 : index
    %c1_65 = arith.constant 1 : index
    %c11_66 = arith.constant 11 : index
    %c0_67 = arith.constant 0 : index
    %56 = vector.load %arg1[%c0_64, %c1_65, %c11_66, %c0_67] : memref<1x4x101x64xbf16, #tpu.memory_space<vmem>>, vector<1x1x81x64xbf16>
    %57 = vector.shape_cast %56 : vector<1x1x81x64xbf16> to vector<81x64xbf16>
    %cst_68 = arith.constant dense<0.000000e+00> : vector<81x128xf32>
    %58 = tpu.matmul %55, %53, %cst_68 {dimension_numbers = #tpu.dot_dimension_numbers<[1], [0], [0], [1], [0, 0, 1, 1], [], []>} : vector<81x64xbf16>, vector<64x128xbf16>, vector<81x128xf32> -> vector<81x128xf32>
    %59 = arith.addf %49, %58 : vector<81x128xf32>
    %cst_69 = arith.constant dense<0.000000e+00> : vector<81x128xf32>
    %60 = tpu.matmul %57, %53, %cst_69 {dimension_numbers = #tpu.dot_dimension_numbers<[1], [0], [0], [1], [0, 0, 1, 1], [], []>} : vector<81x64xbf16>, vector<64x128xbf16>, vector<81x128xf32> -> vector<81x128xf32>
    %61 = arith.addf %51, %60 : vector<81x128xf32>
    %c6 = arith.constant 6 : index
    %c0_70 = arith.constant 0 : index
    %c0_71 = arith.constant 0 : index
    %62 = vector.load %arg2[%c6, %c0_70, %c0_71] : memref<27x64x128xbf16, #tpu.memory_space<vmem>>, vector<1x64x128xbf16>
    %63 = vector.shape_cast %62 : vector<1x64x128xbf16> to vector<64x128xbf16>
    %c0_72 = arith.constant 0 : index
    %c0_73 = arith.constant 0 : index
    %c18 = arith.constant 18 : index
    %c0_74 = arith.constant 0 : index
    %64 = vector.load %arg1[%c0_72, %c0_73, %c18, %c0_74] : memref<1x4x101x64xbf16, #tpu.memory_space<vmem>>, vector<1x1x81x64xbf16>
    %65 = vector.shape_cast %64 : vector<1x1x81x64xbf16> to vector<81x64xbf16>
    %c0_75 = arith.constant 0 : index
    %c1_76 = arith.constant 1 : index
    %c18_77 = arith.constant 18 : index
    %c0_78 = arith.constant 0 : index
    %66 = vector.load %arg1[%c0_75, %c1_76, %c18_77, %c0_78] : memref<1x4x101x64xbf16, #tpu.memory_space<vmem>>, vector<1x1x81x64xbf16>
    %67 = vector.shape_cast %66 : vector<1x1x81x64xbf16> to vector<81x64xbf16>
    %cst_79 = arith.constant dense<0.000000e+00> : vector<81x128xf32>
    %68 = tpu.matmul %65, %63, %cst_79 {dimension_numbers = #tpu.dot_dimension_numbers<[1], [0], [0], [1], [0, 0, 1, 1], [], []>} : vector<81x64xbf16>, vector<64x128xbf16>, vector<81x128xf32> -> vector<81x128xf32>
    %69 = arith.addf %59, %68 : vector<81x128xf32>
    %cst_80 = arith.constant dense<0.000000e+00> : vector<81x128xf32>
    %70 = tpu.matmul %67, %63, %cst_80 {dimension_numbers = #tpu.dot_dimension_numbers<[1], [0], [0], [1], [0, 0, 1, 1], [], []>} : vector<81x64xbf16>, vector<64x128xbf16>, vector<81x128xf32> -> vector<81x128xf32>
    %71 = arith.addf %61, %70 : vector<81x128xf32>
    %c7 = arith.constant 7 : index
    %c0_81 = arith.constant 0 : index
    %c0_82 = arith.constant 0 : index
    %72 = vector.load %arg2[%c7, %c0_81, %c0_82] : memref<27x64x128xbf16, #tpu.memory_space<vmem>>, vector<1x64x128xbf16>
    %73 = vector.shape_cast %72 : vector<1x64x128xbf16> to vector<64x128xbf16>
    %c0_83 = arith.constant 0 : index
    %c0_84 = arith.constant 0 : index
    %c19 = arith.constant 19 : index
    %c0_85 = arith.constant 0 : index
    %74 = vector.load %arg1[%c0_83, %c0_84, %c19, %c0_85] : memref<1x4x101x64xbf16, #tpu.memory_space<vmem>>, vector<1x1x81x64xbf16>
    %75 = vector.shape_cast %74 : vector<1x1x81x64xbf16> to vector<81x64xbf16>
    %c0_86 = arith.constant 0 : index
    %c1_87 = arith.constant 1 : index
    %c19_88 = arith.constant 19 : index
    %c0_89 = arith.constant 0 : index
    %76 = vector.load %arg1[%c0_86, %c1_87, %c19_88, %c0_89] : memref<1x4x101x64xbf16, #tpu.memory_space<vmem>>, vector<1x1x81x64xbf16>
    %77 = vector.shape_cast %76 : vector<1x1x81x64xbf16> to vector<81x64xbf16>
    %cst_90 = arith.constant dense<0.000000e+00> : vector<81x128xf32>
    %78 = tpu.matmul %75, %73, %cst_90 {dimension_numbers = #tpu.dot_dimension_numbers<[1], [0], [0], [1], [0, 0, 1, 1], [], []>} : vector<81x64xbf16>, vector<64x128xbf16>, vector<81x128xf32> -> vector<81x128xf32>
    %79 = arith.addf %69, %78 : vector<81x128xf32>
    %cst_91 = arith.constant dense<0.000000e+00> : vector<81x128xf32>
    %80 = tpu.matmul %77, %73, %cst_91 {dimension_numbers = #tpu.dot_dimension_numbers<[1], [0], [0], [1], [0, 0, 1, 1], [], []>} : vector<81x64xbf16>, vector<64x128xbf16>, vector<81x128xf32> -> vector<81x128xf32>
    %81 = arith.addf %71, %80 : vector<81x128xf32>
    %c8 = arith.constant 8 : index
    %c0_92 = arith.constant 0 : index
    %c0_93 = arith.constant 0 : index
    %82 = vector.load %arg2[%c8, %c0_92, %c0_93] : memref<27x64x128xbf16, #tpu.memory_space<vmem>>, vector<1x64x128xbf16>
    %83 = vector.shape_cast %82 : vector<1x64x128xbf16> to vector<64x128xbf16>
    %c0_94 = arith.constant 0 : index
    %c0_95 = arith.constant 0 : index
    %c20 = arith.constant 20 : index
    %c0_96 = arith.constant 0 : index
    %84 = vector.load %arg1[%c0_94, %c0_95, %c20, %c0_96] : memref<1x4x101x64xbf16, #tpu.memory_space<vmem>>, vector<1x1x81x64xbf16>
    %85 = vector.shape_cast %84 : vector<1x1x81x64xbf16> to vector<81x64xbf16>
    %c0_97 = arith.constant 0 : index
    %c1_98 = arith.constant 1 : index
    %c20_99 = arith.constant 20 : index
    %c0_100 = arith.constant 0 : index
    %86 = vector.load %arg1[%c0_97, %c1_98, %c20_99, %c0_100] : memref<1x4x101x64xbf16, #tpu.memory_space<vmem>>, vector<1x1x81x64xbf16>
    %87 = vector.shape_cast %86 : vector<1x1x81x64xbf16> to vector<81x64xbf16>
    %cst_101 = arith.constant dense<0.000000e+00> : vector<81x128xf32>
    %88 = tpu.matmul %85, %83, %cst_101 {dimension_numbers = #tpu.dot_dimension_numbers<[1], [0], [0], [1], [0, 0, 1, 1], [], []>} : vector<81x64xbf16>, vector<64x128xbf16>, vector<81x128xf32> -> vector<81x128xf32>
    %89 = arith.addf %79, %88 : vector<81x128xf32>
    %cst_102 = arith.constant dense<0.000000e+00> : vector<81x128xf32>
    %90 = tpu.matmul %87, %83, %cst_102 {dimension_numbers = #tpu.dot_dimension_numbers<[1], [0], [0], [1], [0, 0, 1, 1], [], []>} : vector<81x64xbf16>, vector<64x128xbf16>, vector<81x128xf32> -> vector<81x128xf32>
    %91 = arith.addf %81, %90 : vector<81x128xf32>
    %c9_103 = arith.constant 9 : index
    %c0_104 = arith.constant 0 : index
    %c0_105 = arith.constant 0 : index
    %92 = vector.load %arg2[%c9_103, %c0_104, %c0_105] : memref<27x64x128xbf16, #tpu.memory_space<vmem>>, vector<1x64x128xbf16>
    %93 = vector.shape_cast %92 : vector<1x64x128xbf16> to vector<64x128xbf16>
    %c0_106 = arith.constant 0 : index
    %c1_107 = arith.constant 1 : index
    %c0_108 = arith.constant 0 : index
    %c0_109 = arith.constant 0 : index
    %94 = vector.load %arg1[%c0_106, %c1_107, %c0_108, %c0_109] : memref<1x4x101x64xbf16, #tpu.memory_space<vmem>>, vector<1x1x81x64xbf16>
    %95 = vector.shape_cast %94 : vector<1x1x81x64xbf16> to vector<81x64xbf16>
    %c0_110 = arith.constant 0 : index
    %c2_111 = arith.constant 2 : index
    %c0_112 = arith.constant 0 : index
    %c0_113 = arith.constant 0 : index
    %96 = vector.load %arg1[%c0_110, %c2_111, %c0_112, %c0_113] : memref<1x4x101x64xbf16, #tpu.memory_space<vmem>>, vector<1x1x81x64xbf16>
    %97 = vector.shape_cast %96 : vector<1x1x81x64xbf16> to vector<81x64xbf16>
    %cst_114 = arith.constant dense<0.000000e+00> : vector<81x128xf32>
    %98 = tpu.matmul %95, %93, %cst_114 {dimension_numbers = #tpu.dot_dimension_numbers<[1], [0], [0], [1], [0, 0, 1, 1], [], []>} : vector<81x64xbf16>, vector<64x128xbf16>, vector<81x128xf32> -> vector<81x128xf32>
    %99 = arith.addf %89, %98 : vector<81x128xf32>
    %cst_115 = arith.constant dense<0.000000e+00> : vector<81x128xf32>
    %100 = tpu.matmul %97, %93, %cst_115 {dimension_numbers = #tpu.dot_dimension_numbers<[1], [0], [0], [1], [0, 0, 1, 1], [], []>} : vector<81x64xbf16>, vector<64x128xbf16>, vector<81x128xf32> -> vector<81x128xf32>
    %101 = arith.addf %91, %100 : vector<81x128xf32>
    %c10_116 = arith.constant 10 : index
    %c0_117 = arith.constant 0 : index
    %c0_118 = arith.constant 0 : index
    %102 = vector.load %arg2[%c10_116, %c0_117, %c0_118] : memref<27x64x128xbf16, #tpu.memory_space<vmem>>, vector<1x64x128xbf16>
    %103 = vector.shape_cast %102 : vector<1x64x128xbf16> to vector<64x128xbf16>
    %c0_119 = arith.constant 0 : index
    %c1_120 = arith.constant 1 : index
    %c1_121 = arith.constant 1 : index
    %c0_122 = arith.constant 0 : index
    %104 = vector.load %arg1[%c0_119, %c1_120, %c1_121, %c0_122] : memref<1x4x101x64xbf16, #tpu.memory_space<vmem>>, vector<1x1x81x64xbf16>
    %105 = vector.shape_cast %104 : vector<1x1x81x64xbf16> to vector<81x64xbf16>
    %c0_123 = arith.constant 0 : index
    %c2_124 = arith.constant 2 : index
    %c1_125 = arith.constant 1 : index
    %c0_126 = arith.constant 0 : index
    %106 = vector.load %arg1[%c0_123, %c2_124, %c1_125, %c0_126] : memref<1x4x101x64xbf16, #tpu.memory_space<vmem>>, vector<1x1x81x64xbf16>
    %107 = vector.shape_cast %106 : vector<1x1x81x64xbf16> to vector<81x64xbf16>
    %cst_127 = arith.constant dense<0.000000e+00> : vector<81x128xf32>
    %108 = tpu.matmul %105, %103, %cst_127 {dimension_numbers = #tpu.dot_dimension_numbers<[1], [0], [0], [1], [0, 0, 1, 1], [], []>} : vector<81x64xbf16>, vector<64x128xbf16>, vector<81x128xf32> -> vector<81x128xf32>
    %109 = arith.addf %99, %108 : vector<81x128xf32>
    %cst_128 = arith.constant dense<0.000000e+00> : vector<81x128xf32>
    %110 = tpu.matmul %107, %103, %cst_128 {dimension_numbers = #tpu.dot_dimension_numbers<[1], [0], [0], [1], [0, 0, 1, 1], [], []>} : vector<81x64xbf16>, vector<64x128xbf16>, vector<81x128xf32> -> vector<81x128xf32>
    %111 = arith.addf %101, %110 : vector<81x128xf32>
    %c11_129 = arith.constant 11 : index
    %c0_130 = arith.constant 0 : index
    %c0_131 = arith.constant 0 : index
    %112 = vector.load %arg2[%c11_129, %c0_130, %c0_131] : memref<27x64x128xbf16, #tpu.memory_space<vmem>>, vector<1x64x128xbf16>
    %113 = vector.shape_cast %112 : vector<1x64x128xbf16> to vector<64x128xbf16>
    %c0_132 = arith.constant 0 : index
    %c1_133 = arith.constant 1 : index
    %c2_134 = arith.constant 2 : index
    %c0_135 = arith.constant 0 : index
    %114 = vector.load %arg1[%c0_132, %c1_133, %c2_134, %c0_135] : memref<1x4x101x64xbf16, #tpu.memory_space<vmem>>, vector<1x1x81x64xbf16>
    %115 = vector.shape_cast %114 : vector<1x1x81x64xbf16> to vector<81x64xbf16>
    %c0_136 = arith.constant 0 : index
    %c2_137 = arith.constant 2 : index
    %c2_138 = arith.constant 2 : index
    %c0_139 = arith.constant 0 : index
    %116 = vector.load %arg1[%c0_136, %c2_137, %c2_138, %c0_139] : memref<1x4x101x64xbf16, #tpu.memory_space<vmem>>, vector<1x1x81x64xbf16>
    %117 = vector.shape_cast %116 : vector<1x1x81x64xbf16> to vector<81x64xbf16>
    %cst_140 = arith.constant dense<0.000000e+00> : vector<81x128xf32>
    %118 = tpu.matmul %115, %113, %cst_140 {dimension_numbers = #tpu.dot_dimension_numbers<[1], [0], [0], [1], [0, 0, 1, 1], [], []>} : vector<81x64xbf16>, vector<64x128xbf16>, vector<81x128xf32> -> vector<81x128xf32>
    %119 = arith.addf %109, %118 : vector<81x128xf32>
    %cst_141 = arith.constant dense<0.000000e+00> : vector<81x128xf32>
    %120 = tpu.matmul %117, %113, %cst_141 {dimension_numbers = #tpu.dot_dimension_numbers<[1], [0], [0], [1], [0, 0, 1, 1], [], []>} : vector<81x64xbf16>, vector<64x128xbf16>, vector<81x128xf32> -> vector<81x128xf32>
    %121 = arith.addf %111, %120 : vector<81x128xf32>
    %c12 = arith.constant 12 : index
    %c0_142 = arith.constant 0 : index
    %c0_143 = arith.constant 0 : index
    %122 = vector.load %arg2[%c12, %c0_142, %c0_143] : memref<27x64x128xbf16, #tpu.memory_space<vmem>>, vector<1x64x128xbf16>
    %123 = vector.shape_cast %122 : vector<1x64x128xbf16> to vector<64x128xbf16>
    %c0_144 = arith.constant 0 : index
    %c1_145 = arith.constant 1 : index
    %c9_146 = arith.constant 9 : index
    %c0_147 = arith.constant 0 : index
    %124 = vector.load %arg1[%c0_144, %c1_145, %c9_146, %c0_147] : memref<1x4x101x64xbf16, #tpu.memory_space<vmem>>, vector<1x1x81x64xbf16>
    %125 = vector.shape_cast %124 : vector<1x1x81x64xbf16> to vector<81x64xbf16>
    %c0_148 = arith.constant 0 : index
    %c2_149 = arith.constant 2 : index
    %c9_150 = arith.constant 9 : index
    %c0_151 = arith.constant 0 : index
    %126 = vector.load %arg1[%c0_148, %c2_149, %c9_150, %c0_151] : memref<1x4x101x64xbf16, #tpu.memory_space<vmem>>, vector<1x1x81x64xbf16>
    %127 = vector.shape_cast %126 : vector<1x1x81x64xbf16> to vector<81x64xbf16>
    %cst_152 = arith.constant dense<0.000000e+00> : vector<81x128xf32>
    %128 = tpu.matmul %125, %123, %cst_152 {dimension_numbers = #tpu.dot_dimension_numbers<[1], [0], [0], [1], [0, 0, 1, 1], [], []>} : vector<81x64xbf16>, vector<64x128xbf16>, vector<81x128xf32> -> vector<81x128xf32>
    %129 = arith.addf %119, %128 : vector<81x128xf32>
    %cst_153 = arith.constant dense<0.000000e+00> : vector<81x128xf32>
    %130 = tpu.matmul %127, %123, %cst_153 {dimension_numbers = #tpu.dot_dimension_numbers<[1], [0], [0], [1], [0, 0, 1, 1], [], []>} : vector<81x64xbf16>, vector<64x128xbf16>, vector<81x128xf32> -> vector<81x128xf32>
    %131 = arith.addf %121, %130 : vector<81x128xf32>
    %c13 = arith.constant 13 : index
    %c0_154 = arith.constant 0 : index
    %c0_155 = arith.constant 0 : index
    %132 = vector.load %arg2[%c13, %c0_154, %c0_155] : memref<27x64x128xbf16, #tpu.memory_space<vmem>>, vector<1x64x128xbf16>
    %133 = vector.shape_cast %132 : vector<1x64x128xbf16> to vector<64x128xbf16>
    %c0_156 = arith.constant 0 : index
    %c1_157 = arith.constant 1 : index
    %c10_158 = arith.constant 10 : index
    %c0_159 = arith.constant 0 : index
    %134 = vector.load %arg1[%c0_156, %c1_157, %c10_158, %c0_159] : memref<1x4x101x64xbf16, #tpu.memory_space<vmem>>, vector<1x1x81x64xbf16>
    %135 = vector.shape_cast %134 : vector<1x1x81x64xbf16> to vector<81x64xbf16>
    %c0_160 = arith.constant 0 : index
    %c2_161 = arith.constant 2 : index
    %c10_162 = arith.constant 10 : index
    %c0_163 = arith.constant 0 : index
    %136 = vector.load %arg1[%c0_160, %c2_161, %c10_162, %c0_163] : memref<1x4x101x64xbf16, #tpu.memory_space<vmem>>, vector<1x1x81x64xbf16>
    %137 = vector.shape_cast %136 : vector<1x1x81x64xbf16> to vector<81x64xbf16>
    %cst_164 = arith.constant dense<0.000000e+00> : vector<81x128xf32>
    %138 = tpu.matmul %135, %133, %cst_164 {dimension_numbers = #tpu.dot_dimension_numbers<[1], [0], [0], [1], [0, 0, 1, 1], [], []>} : vector<81x64xbf16>, vector<64x128xbf16>, vector<81x128xf32> -> vector<81x128xf32>
    %139 = arith.addf %129, %138 : vector<81x128xf32>
    %cst_165 = arith.constant dense<0.000000e+00> : vector<81x128xf32>
    %140 = tpu.matmul %137, %133, %cst_165 {dimension_numbers = #tpu.dot_dimension_numbers<[1], [0], [0], [1], [0, 0, 1, 1], [], []>} : vector<81x64xbf16>, vector<64x128xbf16>, vector<81x128xf32> -> vector<81x128xf32>
    %141 = arith.addf %131, %140 : vector<81x128xf32>
    %c14 = arith.constant 14 : index
    %c0_166 = arith.constant 0 : index
    %c0_167 = arith.constant 0 : index
    %142 = vector.load %arg2[%c14, %c0_166, %c0_167] : memref<27x64x128xbf16, #tpu.memory_space<vmem>>, vector<1x64x128xbf16>
    %143 = vector.shape_cast %142 : vector<1x64x128xbf16> to vector<64x128xbf16>
    %c0_168 = arith.constant 0 : index
    %c1_169 = arith.constant 1 : index
    %c11_170 = arith.constant 11 : index
    %c0_171 = arith.constant 0 : index
    %144 = vector.load %arg1[%c0_168, %c1_169, %c11_170, %c0_171] : memref<1x4x101x64xbf16, #tpu.memory_space<vmem>>, vector<1x1x81x64xbf16>
    %145 = vector.shape_cast %144 : vector<1x1x81x64xbf16> to vector<81x64xbf16>
    %c0_172 = arith.constant 0 : index
    %c2_173 = arith.constant 2 : index
    %c11_174 = arith.constant 11 : index
    %c0_175 = arith.constant 0 : index
    %146 = vector.load %arg1[%c0_172, %c2_173, %c11_174, %c0_175] : memref<1x4x101x64xbf16, #tpu.memory_space<vmem>>, vector<1x1x81x64xbf16>
    %147 = vector.shape_cast %146 : vector<1x1x81x64xbf16> to vector<81x64xbf16>
    %cst_176 = arith.constant dense<0.000000e+00> : vector<81x128xf32>
    %148 = tpu.matmul %145, %143, %cst_176 {dimension_numbers = #tpu.dot_dimension_numbers<[1], [0], [0], [1], [0, 0, 1, 1], [], []>} : vector<81x64xbf16>, vector<64x128xbf16>, vector<81x128xf32> -> vector<81x128xf32>
    %149 = arith.addf %139, %148 : vector<81x128xf32>
    %cst_177 = arith.constant dense<0.000000e+00> : vector<81x128xf32>
    %150 = tpu.matmul %147, %143, %cst_177 {dimension_numbers = #tpu.dot_dimension_numbers<[1], [0], [0], [1], [0, 0, 1, 1], [], []>} : vector<81x64xbf16>, vector<64x128xbf16>, vector<81x128xf32> -> vector<81x128xf32>
    %151 = arith.addf %141, %150 : vector<81x128xf32>
    %c15 = arith.constant 15 : index
    %c0_178 = arith.constant 0 : index
    %c0_179 = arith.constant 0 : index
    %152 = vector.load %arg2[%c15, %c0_178, %c0_179] : memref<27x64x128xbf16, #tpu.memory_space<vmem>>, vector<1x64x128xbf16>
    %153 = vector.shape_cast %152 : vector<1x64x128xbf16> to vector<64x128xbf16>
    %c0_180 = arith.constant 0 : index
    %c1_181 = arith.constant 1 : index
    %c18_182 = arith.constant 18 : index
    %c0_183 = arith.constant 0 : index
    %154 = vector.load %arg1[%c0_180, %c1_181, %c18_182, %c0_183] : memref<1x4x101x64xbf16, #tpu.memory_space<vmem>>, vector<1x1x81x64xbf16>
    %155 = vector.shape_cast %154 : vector<1x1x81x64xbf16> to vector<81x64xbf16>
    %c0_184 = arith.constant 0 : index
    %c2_185 = arith.constant 2 : index
    %c18_186 = arith.constant 18 : index
    %c0_187 = arith.constant 0 : index
    %156 = vector.load %arg1[%c0_184, %c2_185, %c18_186, %c0_187] : memref<1x4x101x64xbf16, #tpu.memory_space<vmem>>, vector<1x1x81x64xbf16>
    %157 = vector.shape_cast %156 : vector<1x1x81x64xbf16> to vector<81x64xbf16>
    %cst_188 = arith.constant dense<0.000000e+00> : vector<81x128xf32>
    %158 = tpu.matmul %155, %153, %cst_188 {dimension_numbers = #tpu.dot_dimension_numbers<[1], [0], [0], [1], [0, 0, 1, 1], [], []>} : vector<81x64xbf16>, vector<64x128xbf16>, vector<81x128xf32> -> vector<81x128xf32>
    %159 = arith.addf %149, %158 : vector<81x128xf32>
    %cst_189 = arith.constant dense<0.000000e+00> : vector<81x128xf32>
    %160 = tpu.matmul %157, %153, %cst_189 {dimension_numbers = #tpu.dot_dimension_numbers<[1], [0], [0], [1], [0, 0, 1, 1], [], []>} : vector<81x64xbf16>, vector<64x128xbf16>, vector<81x128xf32> -> vector<81x128xf32>
    %161 = arith.addf %151, %160 : vector<81x128xf32>
    %c16 = arith.constant 16 : index
    %c0_190 = arith.constant 0 : index
    %c0_191 = arith.constant 0 : index
    %162 = vector.load %arg2[%c16, %c0_190, %c0_191] : memref<27x64x128xbf16, #tpu.memory_space<vmem>>, vector<1x64x128xbf16>
    %163 = vector.shape_cast %162 : vector<1x64x128xbf16> to vector<64x128xbf16>
    %c0_192 = arith.constant 0 : index
    %c1_193 = arith.constant 1 : index
    %c19_194 = arith.constant 19 : index
    %c0_195 = arith.constant 0 : index
    %164 = vector.load %arg1[%c0_192, %c1_193, %c19_194, %c0_195] : memref<1x4x101x64xbf16, #tpu.memory_space<vmem>>, vector<1x1x81x64xbf16>
    %165 = vector.shape_cast %164 : vector<1x1x81x64xbf16> to vector<81x64xbf16>
    %c0_196 = arith.constant 0 : index
    %c2_197 = arith.constant 2 : index
    %c19_198 = arith.constant 19 : index
    %c0_199 = arith.constant 0 : index
    %166 = vector.load %arg1[%c0_196, %c2_197, %c19_198, %c0_199] : memref<1x4x101x64xbf16, #tpu.memory_space<vmem>>, vector<1x1x81x64xbf16>
    %167 = vector.shape_cast %166 : vector<1x1x81x64xbf16> to vector<81x64xbf16>
    %cst_200 = arith.constant dense<0.000000e+00> : vector<81x128xf32>
    %168 = tpu.matmul %165, %163, %cst_200 {dimension_numbers = #tpu.dot_dimension_numbers<[1], [0], [0], [1], [0, 0, 1, 1], [], []>} : vector<81x64xbf16>, vector<64x128xbf16>, vector<81x128xf32> -> vector<81x128xf32>
    %169 = arith.addf %159, %168 : vector<81x128xf32>
    %cst_201 = arith.constant dense<0.000000e+00> : vector<81x128xf32>
    %170 = tpu.matmul %167, %163, %cst_201 {dimension_numbers = #tpu.dot_dimension_numbers<[1], [0], [0], [1], [0, 0, 1, 1], [], []>} : vector<81x64xbf16>, vector<64x128xbf16>, vector<81x128xf32> -> vector<81x128xf32>
    %171 = arith.addf %161, %170 : vector<81x128xf32>
    %c17 = arith.constant 17 : index
    %c0_202 = arith.constant 0 : index
    %c0_203 = arith.constant 0 : index
    %172 = vector.load %arg2[%c17, %c0_202, %c0_203] : memref<27x64x128xbf16, #tpu.memory_space<vmem>>, vector<1x64x128xbf16>
    %173 = vector.shape_cast %172 : vector<1x64x128xbf16> to vector<64x128xbf16>
    %c0_204 = arith.constant 0 : index
    %c1_205 = arith.constant 1 : index
    %c20_206 = arith.constant 20 : index
    %c0_207 = arith.constant 0 : index
    %174 = vector.load %arg1[%c0_204, %c1_205, %c20_206, %c0_207] : memref<1x4x101x64xbf16, #tpu.memory_space<vmem>>, vector<1x1x81x64xbf16>
    %175 = vector.shape_cast %174 : vector<1x1x81x64xbf16> to vector<81x64xbf16>
    %c0_208 = arith.constant 0 : index
    %c2_209 = arith.constant 2 : index
    %c20_210 = arith.constant 20 : index
    %c0_211 = arith.constant 0 : index
    %176 = vector.load %arg1[%c0_208, %c2_209, %c20_210, %c0_211] : memref<1x4x101x64xbf16, #tpu.memory_space<vmem>>, vector<1x1x81x64xbf16>
    %177 = vector.shape_cast %176 : vector<1x1x81x64xbf16> to vector<81x64xbf16>
    %cst_212 = arith.constant dense<0.000000e+00> : vector<81x128xf32>
    %178 = tpu.matmul %175, %173, %cst_212 {dimension_numbers = #tpu.dot_dimension_numbers<[1], [0], [0], [1], [0, 0, 1, 1], [], []>} : vector<81x64xbf16>, vector<64x128xbf16>, vector<81x128xf32> -> vector<81x128xf32>
    %179 = arith.addf %169, %178 : vector<81x128xf32>
    %cst_213 = arith.constant dense<0.000000e+00> : vector<81x128xf32>
    %180 = tpu.matmul %177, %173, %cst_213 {dimension_numbers = #tpu.dot_dimension_numbers<[1], [0], [0], [1], [0, 0, 1, 1], [], []>} : vector<81x64xbf16>, vector<64x128xbf16>, vector<81x128xf32> -> vector<81x128xf32>
    %181 = arith.addf %171, %180 : vector<81x128xf32>
    %c18_214 = arith.constant 18 : index
    %c0_215 = arith.constant 0 : index
    %c0_216 = arith.constant 0 : index
    %182 = vector.load %arg2[%c18_214, %c0_215, %c0_216] : memref<27x64x128xbf16, #tpu.memory_space<vmem>>, vector<1x64x128xbf16>
    %183 = vector.shape_cast %182 : vector<1x64x128xbf16> to vector<64x128xbf16>
    %c0_217 = arith.constant 0 : index
    %c2_218 = arith.constant 2 : index
    %c0_219 = arith.constant 0 : index
    %c0_220 = arith.constant 0 : index
    %184 = vector.load %arg1[%c0_217, %c2_218, %c0_219, %c0_220] : memref<1x4x101x64xbf16, #tpu.memory_space<vmem>>, vector<1x1x81x64xbf16>
    %185 = vector.shape_cast %184 : vector<1x1x81x64xbf16> to vector<81x64xbf16>
    %c0_221 = arith.constant 0 : index
    %c3_222 = arith.constant 3 : index
    %c0_223 = arith.constant 0 : index
    %c0_224 = arith.constant 0 : index
    %186 = vector.load %arg1[%c0_221, %c3_222, %c0_223, %c0_224] : memref<1x4x101x64xbf16, #tpu.memory_space<vmem>>, vector<1x1x81x64xbf16>
    %187 = vector.shape_cast %186 : vector<1x1x81x64xbf16> to vector<81x64xbf16>
    %cst_225 = arith.constant dense<0.000000e+00> : vector<81x128xf32>
    %188 = tpu.matmul %185, %183, %cst_225 {dimension_numbers = #tpu.dot_dimension_numbers<[1], [0], [0], [1], [0, 0, 1, 1], [], []>} : vector<81x64xbf16>, vector<64x128xbf16>, vector<81x128xf32> -> vector<81x128xf32>
    %189 = arith.addf %179, %188 : vector<81x128xf32>
    %cst_226 = arith.constant dense<0.000000e+00> : vector<81x128xf32>
    %190 = tpu.matmul %187, %183, %cst_226 {dimension_numbers = #tpu.dot_dimension_numbers<[1], [0], [0], [1], [0, 0, 1, 1], [], []>} : vector<81x64xbf16>, vector<64x128xbf16>, vector<81x128xf32> -> vector<81x128xf32>
    %191 = arith.addf %181, %190 : vector<81x128xf32>
    %c19_227 = arith.constant 19 : index
    %c0_228 = arith.constant 0 : index
    %c0_229 = arith.constant 0 : index
    %192 = vector.load %arg2[%c19_227, %c0_228, %c0_229] : memref<27x64x128xbf16, #tpu.memory_space<vmem>>, vector<1x64x128xbf16>
    %193 = vector.shape_cast %192 : vector<1x64x128xbf16> to vector<64x128xbf16>
    %c0_230 = arith.constant 0 : index
    %c2_231 = arith.constant 2 : index
    %c1_232 = arith.constant 1 : index
    %c0_233 = arith.constant 0 : index
    %194 = vector.load %arg1[%c0_230, %c2_231, %c1_232, %c0_233] : memref<1x4x101x64xbf16, #tpu.memory_space<vmem>>, vector<1x1x81x64xbf16>
    %195 = vector.shape_cast %194 : vector<1x1x81x64xbf16> to vector<81x64xbf16>
    %c0_234 = arith.constant 0 : index
    %c3_235 = arith.constant 3 : index
    %c1_236 = arith.constant 1 : index
    %c0_237 = arith.constant 0 : index
    %196 = vector.load %arg1[%c0_234, %c3_235, %c1_236, %c0_237] : memref<1x4x101x64xbf16, #tpu.memory_space<vmem>>, vector<1x1x81x64xbf16>
    %197 = vector.shape_cast %196 : vector<1x1x81x64xbf16> to vector<81x64xbf16>
    %cst_238 = arith.constant dense<0.000000e+00> : vector<81x128xf32>
    %198 = tpu.matmul %195, %193, %cst_238 {dimension_numbers = #tpu.dot_dimension_numbers<[1], [0], [0], [1], [0, 0, 1, 1], [], []>} : vector<81x64xbf16>, vector<64x128xbf16>, vector<81x128xf32> -> vector<81x128xf32>
    %199 = arith.addf %189, %198 : vector<81x128xf32>
    %cst_239 = arith.constant dense<0.000000e+00> : vector<81x128xf32>
    %200 = tpu.matmul %197, %193, %cst_239 {dimension_numbers = #tpu.dot_dimension_numbers<[1], [0], [0], [1], [0, 0, 1, 1], [], []>} : vector<81x64xbf16>, vector<64x128xbf16>, vector<81x128xf32> -> vector<81x128xf32>
    %201 = arith.addf %191, %200 : vector<81x128xf32>
    %c20_240 = arith.constant 20 : index
    %c0_241 = arith.constant 0 : index
    %c0_242 = arith.constant 0 : index
    %202 = vector.load %arg2[%c20_240, %c0_241, %c0_242] : memref<27x64x128xbf16, #tpu.memory_space<vmem>>, vector<1x64x128xbf16>
    %203 = vector.shape_cast %202 : vector<1x64x128xbf16> to vector<64x128xbf16>
    %c0_243 = arith.constant 0 : index
    %c2_244 = arith.constant 2 : index
    %c2_245 = arith.constant 2 : index
    %c0_246 = arith.constant 0 : index
    %204 = vector.load %arg1[%c0_243, %c2_244, %c2_245, %c0_246] : memref<1x4x101x64xbf16, #tpu.memory_space<vmem>>, vector<1x1x81x64xbf16>
    %205 = vector.shape_cast %204 : vector<1x1x81x64xbf16> to vector<81x64xbf16>
    %c0_247 = arith.constant 0 : index
    %c3_248 = arith.constant 3 : index
    %c2_249 = arith.constant 2 : index
    %c0_250 = arith.constant 0 : index
    %206 = vector.load %arg1[%c0_247, %c3_248, %c2_249, %c0_250] : memref<1x4x101x64xbf16, #tpu.memory_space<vmem>>, vector<1x1x81x64xbf16>
    %207 = vector.shape_cast %206 : vector<1x1x81x64xbf16> to vector<81x64xbf16>
    %cst_251 = arith.constant dense<0.000000e+00> : vector<81x128xf32>
    %208 = tpu.matmul %205, %203, %cst_251 {dimension_numbers = #tpu.dot_dimension_numbers<[1], [0], [0], [1], [0, 0, 1, 1], [], []>} : vector<81x64xbf16>, vector<64x128xbf16>, vector<81x128xf32> -> vector<81x128xf32>
    %209 = arith.addf %199, %208 : vector<81x128xf32>
    %cst_252 = arith.constant dense<0.000000e+00> : vector<81x128xf32>
    %210 = tpu.matmul %207, %203, %cst_252 {dimension_numbers = #tpu.dot_dimension_numbers<[1], [0], [0], [1], [0, 0, 1, 1], [], []>} : vector<81x64xbf16>, vector<64x128xbf16>, vector<81x128xf32> -> vector<81x128xf32>
    %211 = arith.addf %201, %210 : vector<81x128xf32>
    %c21 = arith.constant 21 : index
    %c0_253 = arith.constant 0 : index
    %c0_254 = arith.constant 0 : index
    %212 = vector.load %arg2[%c21, %c0_253, %c0_254] : memref<27x64x128xbf16, #tpu.memory_space<vmem>>, vector<1x64x128xbf16>
    %213 = vector.shape_cast %212 : vector<1x64x128xbf16> to vector<64x128xbf16>
    %c0_255 = arith.constant 0 : index
    %c2_256 = arith.constant 2 : index
    %c9_257 = arith.constant 9 : index
    %c0_258 = arith.constant 0 : index
    %214 = vector.load %arg1[%c0_255, %c2_256, %c9_257, %c0_258] : memref<1x4x101x64xbf16, #tpu.memory_space<vmem>>, vector<1x1x81x64xbf16>
    %215 = vector.shape_cast %214 : vector<1x1x81x64xbf16> to vector<81x64xbf16>
    %c0_259 = arith.constant 0 : index
    %c3_260 = arith.constant 3 : index
    %c9_261 = arith.constant 9 : index
    %c0_262 = arith.constant 0 : index
    %216 = vector.load %arg1[%c0_259, %c3_260, %c9_261, %c0_262] : memref<1x4x101x64xbf16, #tpu.memory_space<vmem>>, vector<1x1x81x64xbf16>
    %217 = vector.shape_cast %216 : vector<1x1x81x64xbf16> to vector<81x64xbf16>
    %cst_263 = arith.constant dense<0.000000e+00> : vector<81x128xf32>
    %218 = tpu.matmul %215, %213, %cst_263 {dimension_numbers = #tpu.dot_dimension_numbers<[1], [0], [0], [1], [0, 0, 1, 1], [], []>} : vector<81x64xbf16>, vector<64x128xbf16>, vector<81x128xf32> -> vector<81x128xf32>
    %219 = arith.addf %209, %218 : vector<81x128xf32>
    %cst_264 = arith.constant dense<0.000000e+00> : vector<81x128xf32>
    %220 = tpu.matmul %217, %213, %cst_264 {dimension_numbers = #tpu.dot_dimension_numbers<[1], [0], [0], [1], [0, 0, 1, 1], [], []>} : vector<81x64xbf16>, vector<64x128xbf16>, vector<81x128xf32> -> vector<81x128xf32>
    %221 = arith.addf %211, %220 : vector<81x128xf32>
    %c22 = arith.constant 22 : index
    %c0_265 = arith.constant 0 : index
    %c0_266 = arith.constant 0 : index
    %222 = vector.load %arg2[%c22, %c0_265, %c0_266] : memref<27x64x128xbf16, #tpu.memory_space<vmem>>, vector<1x64x128xbf16>
    %223 = vector.shape_cast %222 : vector<1x64x128xbf16> to vector<64x128xbf16>
    %c0_267 = arith.constant 0 : index
    %c2_268 = arith.constant 2 : index
    %c10_269 = arith.constant 10 : index
    %c0_270 = arith.constant 0 : index
    %224 = vector.load %arg1[%c0_267, %c2_268, %c10_269, %c0_270] : memref<1x4x101x64xbf16, #tpu.memory_space<vmem>>, vector<1x1x81x64xbf16>
    %225 = vector.shape_cast %224 : vector<1x1x81x64xbf16> to vector<81x64xbf16>
    %c0_271 = arith.constant 0 : index
    %c3_272 = arith.constant 3 : index
    %c10_273 = arith.constant 10 : index
    %c0_274 = arith.constant 0 : index
    %226 = vector.load %arg1[%c0_271, %c3_272, %c10_273, %c0_274] : memref<1x4x101x64xbf16, #tpu.memory_space<vmem>>, vector<1x1x81x64xbf16>
    %227 = vector.shape_cast %226 : vector<1x1x81x64xbf16> to vector<81x64xbf16>
    %cst_275 = arith.constant dense<0.000000e+00> : vector<81x128xf32>
    %228 = tpu.matmul %225, %223, %cst_275 {dimension_numbers = #tpu.dot_dimension_numbers<[1], [0], [0], [1], [0, 0, 1, 1], [], []>} : vector<81x64xbf16>, vector<64x128xbf16>, vector<81x128xf32> -> vector<81x128xf32>
    %229 = arith.addf %219, %228 : vector<81x128xf32>
    %cst_276 = arith.constant dense<0.000000e+00> : vector<81x128xf32>
    %230 = tpu.matmul %227, %223, %cst_276 {dimension_numbers = #tpu.dot_dimension_numbers<[1], [0], [0], [1], [0, 0, 1, 1], [], []>} : vector<81x64xbf16>, vector<64x128xbf16>, vector<81x128xf32> -> vector<81x128xf32>
    %231 = arith.addf %221, %230 : vector<81x128xf32>
    %c23 = arith.constant 23 : index
    %c0_277 = arith.constant 0 : index
    %c0_278 = arith.constant 0 : index
    %232 = vector.load %arg2[%c23, %c0_277, %c0_278] : memref<27x64x128xbf16, #tpu.memory_space<vmem>>, vector<1x64x128xbf16>
    %233 = vector.shape_cast %232 : vector<1x64x128xbf16> to vector<64x128xbf16>
    %c0_279 = arith.constant 0 : index
    %c2_280 = arith.constant 2 : index
    %c11_281 = arith.constant 11 : index
    %c0_282 = arith.constant 0 : index
    %234 = vector.load %arg1[%c0_279, %c2_280, %c11_281, %c0_282] : memref<1x4x101x64xbf16, #tpu.memory_space<vmem>>, vector<1x1x81x64xbf16>
    %235 = vector.shape_cast %234 : vector<1x1x81x64xbf16> to vector<81x64xbf16>
    %c0_283 = arith.constant 0 : index
    %c3_284 = arith.constant 3 : index
    %c11_285 = arith.constant 11 : index
    %c0_286 = arith.constant 0 : index
    %236 = vector.load %arg1[%c0_283, %c3_284, %c11_285, %c0_286] : memref<1x4x101x64xbf16, #tpu.memory_space<vmem>>, vector<1x1x81x64xbf16>
    %237 = vector.shape_cast %236 : vector<1x1x81x64xbf16> to vector<81x64xbf16>
    %cst_287 = arith.constant dense<0.000000e+00> : vector<81x128xf32>
    %238 = tpu.matmul %235, %233, %cst_287 {dimension_numbers = #tpu.dot_dimension_numbers<[1], [0], [0], [1], [0, 0, 1, 1], [], []>} : vector<81x64xbf16>, vector<64x128xbf16>, vector<81x128xf32> -> vector<81x128xf32>
    %239 = arith.addf %229, %238 : vector<81x128xf32>
    %cst_288 = arith.constant dense<0.000000e+00> : vector<81x128xf32>
    %240 = tpu.matmul %237, %233, %cst_288 {dimension_numbers = #tpu.dot_dimension_numbers<[1], [0], [0], [1], [0, 0, 1, 1], [], []>} : vector<81x64xbf16>, vector<64x128xbf16>, vector<81x128xf32> -> vector<81x128xf32>
    %241 = arith.addf %231, %240 : vector<81x128xf32>
    %c24 = arith.constant 24 : index
    %c0_289 = arith.constant 0 : index
    %c0_290 = arith.constant 0 : index
    %242 = vector.load %arg2[%c24, %c0_289, %c0_290] : memref<27x64x128xbf16, #tpu.memory_space<vmem>>, vector<1x64x128xbf16>
    %243 = vector.shape_cast %242 : vector<1x64x128xbf16> to vector<64x128xbf16>
    %c0_291 = arith.constant 0 : index
    %c2_292 = arith.constant 2 : index
    %c18_293 = arith.constant 18 : index
    %c0_294 = arith.constant 0 : index
    %244 = vector.load %arg1[%c0_291, %c2_292, %c18_293, %c0_294] : memref<1x4x101x64xbf16, #tpu.memory_space<vmem>>, vector<1x1x81x64xbf16>
    %245 = vector.shape_cast %244 : vector<1x1x81x64xbf16> to vector<81x64xbf16>
    %c0_295 = arith.constant 0 : index
    %c3_296 = arith.constant 3 : index
    %c18_297 = arith.constant 18 : index
    %c0_298 = arith.constant 0 : index
    %246 = vector.load %arg1[%c0_295, %c3_296, %c18_297, %c0_298] : memref<1x4x101x64xbf16, #tpu.memory_space<vmem>>, vector<1x1x81x64xbf16>
    %247 = vector.shape_cast %246 : vector<1x1x81x64xbf16> to vector<81x64xbf16>
    %cst_299 = arith.constant dense<0.000000e+00> : vector<81x128xf32>
    %248 = tpu.matmul %245, %243, %cst_299 {dimension_numbers = #tpu.dot_dimension_numbers<[1], [0], [0], [1], [0, 0, 1, 1], [], []>} : vector<81x64xbf16>, vector<64x128xbf16>, vector<81x128xf32> -> vector<81x128xf32>
    %249 = arith.addf %239, %248 : vector<81x128xf32>
    %cst_300 = arith.constant dense<0.000000e+00> : vector<81x128xf32>
    %250 = tpu.matmul %247, %243, %cst_300 {dimension_numbers = #tpu.dot_dimension_numbers<[1], [0], [0], [1], [0, 0, 1, 1], [], []>} : vector<81x64xbf16>, vector<64x128xbf16>, vector<81x128xf32> -> vector<81x128xf32>
    %251 = arith.addf %241, %250 : vector<81x128xf32>
    %c25 = arith.constant 25 : index
    %c0_301 = arith.constant 0 : index
    %c0_302 = arith.constant 0 : index
    %252 = vector.load %arg2[%c25, %c0_301, %c0_302] : memref<27x64x128xbf16, #tpu.memory_space<vmem>>, vector<1x64x128xbf16>
    %253 = vector.shape_cast %252 : vector<1x64x128xbf16> to vector<64x128xbf16>
    %c0_303 = arith.constant 0 : index
    %c2_304 = arith.constant 2 : index
    %c19_305 = arith.constant 19 : index
    %c0_306 = arith.constant 0 : index
    %254 = vector.load %arg1[%c0_303, %c2_304, %c19_305, %c0_306] : memref<1x4x101x64xbf16, #tpu.memory_space<vmem>>, vector<1x1x81x64xbf16>
    %255 = vector.shape_cast %254 : vector<1x1x81x64xbf16> to vector<81x64xbf16>
    %c0_307 = arith.constant 0 : index
    %c3_308 = arith.constant 3 : index
    %c19_309 = arith.constant 19 : index
    %c0_310 = arith.constant 0 : index
    %256 = vector.load %arg1[%c0_307, %c3_308, %c19_309, %c0_310] : memref<1x4x101x64xbf16, #tpu.memory_space<vmem>>, vector<1x1x81x64xbf16>
    %257 = vector.shape_cast %256 : vector<1x1x81x64xbf16> to vector<81x64xbf16>
    %cst_311 = arith.constant dense<0.000000e+00> : vector<81x128xf32>
    %258 = tpu.matmul %255, %253, %cst_311 {dimension_numbers = #tpu.dot_dimension_numbers<[1], [0], [0], [1], [0, 0, 1, 1], [], []>} : vector<81x64xbf16>, vector<64x128xbf16>, vector<81x128xf32> -> vector<81x128xf32>
    %259 = arith.addf %249, %258 : vector<81x128xf32>
    %cst_312 = arith.constant dense<0.000000e+00> : vector<81x128xf32>
    %260 = tpu.matmul %257, %253, %cst_312 {dimension_numbers = #tpu.dot_dimension_numbers<[1], [0], [0], [1], [0, 0, 1, 1], [], []>} : vector<81x64xbf16>, vector<64x128xbf16>, vector<81x128xf32> -> vector<81x128xf32>
    %261 = arith.addf %251, %260 : vector<81x128xf32>
    %c26 = arith.constant 26 : index
    %c0_313 = arith.constant 0 : index
    %c0_314 = arith.constant 0 : index
    %262 = vector.load %arg2[%c26, %c0_313, %c0_314] : memref<27x64x128xbf16, #tpu.memory_space<vmem>>, vector<1x64x128xbf16>
    %263 = vector.shape_cast %262 : vector<1x64x128xbf16> to vector<64x128xbf16>
    %c0_315 = arith.constant 0 : index
    %c2_316 = arith.constant 2 : index
    %c20_317 = arith.constant 20 : index
    %c0_318 = arith.constant 0 : index
    %264 = vector.load %arg1[%c0_315, %c2_316, %c20_317, %c0_318] : memref<1x4x101x64xbf16, #tpu.memory_space<vmem>>, vector<1x1x81x64xbf16>
    %265 = vector.shape_cast %264 : vector<1x1x81x64xbf16> to vector<81x64xbf16>
    %c0_319 = arith.constant 0 : index
    %c3_320 = arith.constant 3 : index
    %c20_321 = arith.constant 20 : index
    %c0_322 = arith.constant 0 : index
    %266 = vector.load %arg1[%c0_319, %c3_320, %c20_321, %c0_322] : memref<1x4x101x64xbf16, #tpu.memory_space<vmem>>, vector<1x1x81x64xbf16>
    %267 = vector.shape_cast %266 : vector<1x1x81x64xbf16> to vector<81x64xbf16>
    %cst_323 = arith.constant dense<0.000000e+00> : vector<81x128xf32>
    %268 = tpu.matmul %265, %263, %cst_323 {dimension_numbers = #tpu.dot_dimension_numbers<[1], [0], [0], [1], [0, 0, 1, 1], [], []>} : vector<81x64xbf16>, vector<64x128xbf16>, vector<81x128xf32> -> vector<81x128xf32>
    %269 = arith.addf %259, %268 : vector<81x128xf32>
    %cst_324 = arith.constant dense<0.000000e+00> : vector<81x128xf32>
    %270 = tpu.matmul %267, %263, %cst_324 {dimension_numbers = #tpu.dot_dimension_numbers<[1], [0], [0], [1], [0, 0, 1, 1], [], []>} : vector<81x64xbf16>, vector<64x128xbf16>, vector<81x128xf32> -> vector<81x128xf32>
    %271 = arith.addf %261, %270 : vector<81x128xf32>
    %272 = arith.maximumf %269, %271 : vector<81x128xf32>
    %c0_325 = arith.constant 0 : index
    %c0_326 = arith.constant 0 : index
    %273 = vector.load %arg3[%c0_325, %c0_326] : memref<1x128xf32, #tpu.memory_space<vmem>>, vector<1x128xf32>
    %274 = vector.broadcast %273 : vector<1x128xf32> to vector<81x128xf32>
    %275 = arith.addf %272, %274 : vector<81x128xf32>
    %cst_327 = arith.constant 0.000000e+00 : f32
    %276 = vector.broadcast %cst_327 : f32 to vector<81x128xf32>
    %277 = arith.maximumf %275, %276 : vector<81x128xf32>
    %c0_328 = arith.constant 0 : index
    %c0_329 = arith.constant 0 : index
    %c0_330 = arith.constant 0 : index
    %278 = vector.load %arg4[%c0_328, %c0_329, %c0_330] : memref<1x81x128xf32, #tpu.memory_space<vmem>>, vector<1x81x128xf32>
    %279 = vector.shape_cast %278 : vector<1x81x128xf32> to vector<81x128xf32>
    %280 = vector.shape_cast %277 : vector<81x128xf32> to vector<1x81x128xf32>
    tpu.vector_store %arg4[%c0_328, %c0_329, %c0_330], %280 {strides = array<i32>} : memref<1x81x128xf32, #tpu.memory_space<vmem>>, vector<1x81x128xf32>,
    return
  }
  func.func @transform_0(%arg0: i32) -> (i32, i32, i32, i32) {
    %c0_i32 = arith.constant 0 : i32
    %c0_i32_0 = arith.constant 0 : i32
    %c0_i32_1 = arith.constant 0 : i32
    %c0_i32_2 = arith.constant 0 : i32
    return %arg0, %c0_i32, %c0_i32_0, %c0_i32_1 : i32, i32, i32, i32
  }
  func.func @transform_1(%arg0: i32) -> (i32, i32, i32) {
    %c0_i32 = arith.constant 0 : i32
    %c0_i32_0 = arith.constant 0 : i32
    %c0_i32_1 = arith.constant 0 : i32
    %c0_i32_2 = arith.constant 0 : i32
    return %c0_i32, %c0_i32_0, %c0_i32_1 : i32, i32, i32
  }
  func.func @transform_2(%arg0: i32) -> (i32, i32) {
    %c0_i32 = arith.constant 0 : i32
    %c0_i32_0 = arith.constant 0 : i32
    %c0_i32_1 = arith.constant 0 : i32
    return %c0_i32, %c0_i32_0 : i32, i32
  }
  func.func @transform_3(%arg0: i32) -> (i32, i32, i32) {
    %c0_i32 = arith.constant 0 : i32
    %c0_i32_0 = arith.constant 0 : i32
    %c0_i32_1 = arith.constant 0 : i32
    return %arg0, %c0_i32, %c0_i32_0 : i32, i32, i32
  }
}

</mosaic_0001>

<llo_original>
// kernel: conv_3d_forward.2
$region0: #{conv_3d_forward.2}
  #allocation0 [shape = 'u32[]', space=smem, size = 0x4, offset = 0x4, fixed_abs, tag = 'smem constant byte address 0x4 - core index']
  #allocation1 [shape = 'u32[144,128]{1,0:T(1,128)}', space=vmem, size = 0x12000, scoped, tag = 'internal scratch']
  %s0 = inlined_call_operand.vmem [shape: bf16[5632,128], index: 0, kind: input, shape index: {}]
  %s1 = inlined_call_operand.vmem [shape: bf16[128,64], index: 1, kind: input, shape index: {}]
  %s2 = inlined_call_operand.vmem [shape: f32[1,64], index: 2, kind: input, shape index: {}]
  %s3 = inlined_call_operand.vmem [shape: f32[704,64], index: 3, kind: output, shape index: {}]
  %s4 = sld [smem:[#allocation0]]
  $region45: #{conv_3d_forward.2} parent=0
    _
  %s6 = ssub.s32 1, %s4
  %s7 = scalar_select 0, %s6, %s4
  loop: start=0, step=1, limit=6
  $region2: #{conv_3d_forward.2} parent=0 // loop_pre_header
    _
  $region3: #{conv_3d_forward.2} parent=0 // loop_header
    %s9 = sphi 0, %s13
    %p10 = scmp.ge.s32.totalorder %s9, 6
    %s19 = sphi 0, %s21
    %s22 = sphi 0, %s19
    %s23 = sphi 0, %s22
    %s39 = sphi 0, %s23
    %s43 = sphi 0, %s43
    %s45 = sphi 0, %s43
    %s46 = sphi 0, %s45
    %s60 = sphi 0, %s46
    %s64 = sphi 0, %s64
    %s66 = sphi 0, %s64
    %s67 = sphi 0, %s66
    %s81 = sphi 0, %s67
    %s87 = sphi 0, %s89
    %s90 = sphi 0, %s87
    %s91 = sphi 0, %s90
    %s107 = sphi 0, %s91
  $region4: #{conv_3d_forward.2} parent=0 // loop_header_branch
    %12 = sbr.rel (%p10) target = $region8
  $region5: #{conv_3d_forward.2} parent=0 // loop_body
    %s14 = ssub.s32 %s9, 1
    %s15 = ssub.s32 %s9, 2
    %s16 = sadd.s32 %s9, 1
    %s17 = ssub.s32 %s9, %s16
    %p18 = scmp.eq.s32.totalorder %s17, 0
    %s20 = sadd.s32 %s19, 1
    %s21 = scalar_select %p18, %s19, %s20
    %p24 = pneg %p18
    %p25 = scmp.eq.s32.totalorder %s9, 3
    %p26 = por %p24, %p25
    %p27 = scmp.ne.s32.totalorder %s19, %s22
    %p28 = scmp.eq.s32.totalorder %s9, 0
    %p29 = por %p27, %p28
    %p30 = scmp.ne.s32.totalorder %s19, %s22
    %p31 = scmp.eq.s32.totalorder %s14, 3
    %p32 = por %p30, %p31
    %p33 = scmp.ne.s32.totalorder %s22, %s23
    %p34 = scmp.eq.s32.totalorder %s14, 0
    %p35 = por %p33, %p34
    %p36 = scmp.ne.s32.totalorder %s22, %s23
    %p37 = scmp.eq.s32.totalorder %s15, 3
    %p38 = por %p36, %p37
    %p40 = scmp.ne.s32.totalorder %s23, %s39
    %p41 = scmp.eq.s32.totalorder %s15, 0
    %p42 = por %p40, %p41
    %s44 = sadd.s32 %s43, 1
    %p47 = scmp.eq.s32.totalorder %s9, 3
    %p48 = scmp.ne.s32.totalorder %s43, %s45
    %p49 = scmp.eq.s32.totalorder %s9, 0
    %p50 = por %p48, %p49
    %p51 = scmp.ne.s32.totalorder %s43, %s45
    %p52 = scmp.eq.s32.totalorder %s14, 3
    %p53 = por %p51, %p52
    %p54 = scmp.ne.s32.totalorder %s45, %s46
    %p55 = scmp.eq.s32.totalorder %s14, 0
    %p56 = por %p54, %p55
    %p57 = scmp.ne.s32.totalorder %s45, %s46
    %p58 = scmp.eq.s32.totalorder %s15, 3
    %p59 = por %p57, %p58
    %p61 = scmp.ne.s32.totalorder %s46, %s60
    %p62 = scmp.eq.s32.totalorder %s15, 0
    %p63 = por %p61, %p62
    %s65 = sadd.s32 %s64, 1
    %p68 = scmp.eq.s32.totalorder %s9, 3
    %p69 = scmp.ne.s32.totalorder %s64, %s66
    %p70 = scmp.eq.s32.totalorder %s9, 0
    %p71 = por %p69, %p70
    %p72 = scmp.ne.s32.totalorder %s64, %s66
    %p73 = scmp.eq.s32.totalorder %s14, 3
    %p74 = por %p72, %p73
    %p75 = scmp.ne.s32.totalorder %s66, %s67
    %p76 = scmp.eq.s32.totalorder %s14, 0
    %p77 = por %p75, %p76
    %p78 = scmp.ne.s32.totalorder %s66, %s67
    %p79 = scmp.eq.s32.totalorder %s15, 3
    %p80 = por %p78, %p79
    %p82 = scmp.ne.s32.totalorder %s67, %s81
    %p83 = scmp.eq.s32.totalorder %s15, 0
    %p84 = por %p82, %p83
    %s85 = ssub.s32 %s9, %s16
    %p86 = scmp.eq.s32.totalorder %s85, 0
    %s88 = sadd.s32 %s87, 1
    %s89 = scalar_select %p86, %s87, %s88
    %p92 = pneg %p86
    %p93 = scmp.eq.s32.totalorder %s9, 3
    %p94 = por %p92, %p93
    %p95 = scmp.ne.s32.totalorder %s87, %s90
    %p96 = scmp.eq.s32.totalorder %s9, 0
    %p97 = por %p95, %p96
    %p98 = scmp.ne.s32.totalorder %s87, %s90
    %p99 = scmp.eq.s32.totalorder %s14, 3
    %p100 = por %p98, %p99
    %p101 = scmp.ne.s32.totalorder %s90, %s91
    %p102 = scmp.eq.s32.totalorder %s14, 0
    %p103 = por %p101, %p102
    %p104 = scmp.ne.s32.totalorder %s90, %s91
    %p105 = scmp.eq.s32.totalorder %s15, 3
    %p106 = por %p104, %p105
    %p108 = scmp.ne.s32.totalorder %s91, %s107
    %p109 = scmp.eq.s32.totalorder %s15, 0
    %p110 = por %p108, %p109
    %p111 = scmp.le.s32.totalorder 1, %s9
    %p112 = scmp.lt.s32.totalorder %s9, 5
    %p113 = pnand %p111, %p112
    %p114 = pneg %p113
    // Predicated region
    $region9: #{conv_3d_forward.2} parent=5 // pred_check
      _
    $region10: #{conv_3d_forward.2} parent=5 // pred_check_branch
      %116 = sbr.rel (%p113) target = $region12
    $region11: #{conv_3d_forward.2} parent=5 // pred_region
      %s117 = ssub.s32 %s9, 1
      // Predicated region
      $region13: #{conv_3d_forward.2} parent=11 // pred_check
        %p118 = pneg %p56
      $region14: #{conv_3d_forward.2} parent=11 // pred_check_branch
        %120 = sbr.rel (%p118) target = $region16
      $region15: #{conv_3d_forward.2} parent=11 // pred_region
        _
      $region16: #{conv_3d_forward.2} parent=11 // pred_fallthru
        _
      // Predicated region
      $region17: #{conv_3d_forward.2} parent=11 // pred_check
        %p121 = pneg %p77
      $region18: #{conv_3d_forward.2} parent=11 // pred_check_branch
        %123 = sbr.rel (%p121) target = $region20
      $region19: #{conv_3d_forward.2} parent=11 // pred_region
        _
      $region20: #{conv_3d_forward.2} parent=11 // pred_fallthru
        _
    $region12: #{conv_3d_forward.2} parent=5 // pred_fallthru
      _
    %p124 = scmp.lt.s32.totalorder %s9, 4
    // Predicated region
    $region21: #{conv_3d_forward.2} parent=5 // pred_check
      %p125 = pneg %p124
    $region22: #{conv_3d_forward.2} parent=5 // pred_check_branch
      %127 = sbr.rel (%p125) target = $region24
    $region23: #{conv_3d_forward.2} parent=5 // pred_region
      // Predicated region
      $region25: #{conv_3d_forward.2} parent=23 // pred_check
        %p128 = pneg %p29
      $region26: #{conv_3d_forward.2} parent=23 // pred_check_branch
        %130 = sbr.rel (%p128) target = $region28
      $region27: #{conv_3d_forward.2} parent=23 // pred_region
        %s131 = smul.u32 176, %s9
        %p132 = scmp.lt.s32.totalorder %s131, 703
        %s133 = scalar_select %p132, %s131, 703
        %s134 = smul.addr %s133, 4
        %s135 = scalar_lea.vmem %s0, %s134
        %s136 = smul.u32 176, %s9
      $region28: #{conv_3d_forward.2} parent=23 // pred_fallthru
        _
    $region24: #{conv_3d_forward.2} parent=5 // pred_fallthru
      _
    %p137 = scmp.le.s32.totalorder 1, %s9
    %p138 = scmp.lt.s32.totalorder %s9, 5
    %p139 = pnand %p137, %p138
    %p140 = pneg %p139
    // Predicated region
    $region29: #{conv_3d_forward.2} parent=5 // pred_check
      _
    $region30: #{conv_3d_forward.2} parent=5 // pred_check_branch
      %142 = sbr.rel (%p139) target = $region32
    $region31: #{conv_3d_forward.2} parent=5 // pred_region
      %s143 = ssub.s32 %s9, 1
      %s144 = smul.u32 176, %s14
      %p145 = scmp.lt.s32.totalorder %s144, 703
      %s146 = scalar_select %p145, %s144, 703
      %s147 = smul.addr %s146, 4
      %s148 = scalar_lea.vmem %s0, %s147
      %p149 = pneg %p35
      %p150 = pneg %p32
      %p151 = pneg %p56
      %p152 = pneg %p53
      %p153 = pneg %p77
      %p154 = pneg %p74
      %p155 = pneg %p103
      %p156 = pneg %p100
      %s157 = smul.u32 22, %s14
      %p158 = scmp.lt.s32.totalorder %s157, 87
      %s159 = scalar_select %p158, %s157, 87
      %s160 = smul.addr %s159, 8
      %s161 = scalar_lea.vmem %s3, %s160
      %s162 = smul.u32 176, %s14
      %p163 = scmp.lt.s32.totalorder %s162, 703
      %s164 = scalar_select %p163, %s162, 703
      %s165 = smul.addr %s164, 4
      %s166 = scalar_lea.vmem %s0, %s165
      %s167 = smul.u32 176, %s14
      %s168 = smul.u32 22, %s14
      %p169 = scmp.lt.s32.totalorder %s168, 87
      %s170 = scalar_select %p169, %s168, 87
      %s171 = smul.addr %s170, 8
      %s172 = scalar_lea.vmem %s3, %s171
      %s173 = smul.u32 22, %s14
      %v175 = vld [vmem:[%s166] sm:$0xf]
      %v176 = vld [vmem:[%s166 + $0x4] sm:$0xf]
      %v177 = vld [vmem:[%s166 + $0x8] sm:$0xf]
      %v178 = vld [vmem:[%s166 + $0xc] sm:$0xf]
      %v179 = vld [vmem:[%s166 + $0x10] sm:$0xf]
      %v180 = vld [vmem:[%s166 + $0x14] sm:$0xf]
      %v181 = vld [vmem:[%s166 + $0x18] sm:$0xf]
      %v182 = vld [vmem:[%s166 + $0x1c] sm:$0xf]
      %v183 = vld [vmem:[%s166 + $0x20] sm:$0xf]
      %v184 = vld [vmem:[%s166 + $0x24] sm:$0xf]
      %v185 = vld [vmem:[%s166 + $0x28] sm:$0xf]
      %v186 = vld [vmem:[%s166 + $0x2c] sm:$0xf]
      %v187 = vld [vmem:[%s166 + $0x30] sm:$0xf]
      %v188 = vld [vmem:[%s166 + $0x34] sm:$0xf]
      %v189 = vld [vmem:[%s166 + $0x38] sm:$0xf]
      %v190 = vld [vmem:[%s166 + $0x3c] sm:$0xf]
      %v191 = vld [vmem:[%s166 + $0x40] sm:$0xf]
      %v192 = vld [vmem:[%s166 + $0x44] sm:$0xf]
      %v193 = vld [vmem:[%s166 + $0x48] sm:$0xf]
      %v194 = vld [vmem:[%s166 + $0x4c] sm:$0xf]
      %v195 = vld [vmem:[%s166 + $0x50] sm:$0xf]
      %v196 = vld [vmem:[%s166 + $0x54] sm:$0xf]
      %v197 = vld [vmem:[%s166 + $0x58] sm:$0xf]
      %v198 = vld [vmem:[%s166 + $0x5c] sm:$0xf]
      %v199 = vld [vmem:[%s166 + $0x60] sm:$0xf]
      %v200 = vld [vmem:[%s166 + $0x64] sm:$0xf]
      %v201 = vld [vmem:[%s166 + $0x68] sm:$0xf]
      %v202 = vld [vmem:[%s166 + $0x6c] sm:$0xf]
      %v203 = vld [vmem:[%s166 + $0x70] sm:$0xf]
      %v204 = vld [vmem:[%s166 + $0x74] sm:$0xf]
      %v205 = vld [vmem:[%s166 + $0x78] sm:$0xf]
      %v206 = vld [vmem:[%s166 + $0x7c] sm:$0xf]
      %v207 = vld [vmem:[%s166 + $0x80] sm:$0xf]
      %v208 = vld [vmem:[%s166 + $0x84] sm:$0xf]
      %v209 = vld [vmem:[%s166 + $0x88] sm:$0xf]
      %v210 = vld [vmem:[%s166 + $0x8c] sm:$0xf]
      %v211 = vld [vmem:[%s166 + $0x90] sm:$0xf]
      %v212 = vld [vmem:[%s166 + $0x94] sm:$0xf]
      %v213 = vld [vmem:[%s166 + $0x98] sm:$0xf]
      %v214 = vld [vmem:[%s166 + $0x9c] sm:$0xf]
      %v215 = vld [vmem:[%s166 + $0xa0] sm:$0xf]
      %v216 = vld [vmem:[%s166 + $0xa4] sm:$0xf]
      %v217 = vld [vmem:[%s166 + $0xa8] sm:$0xf]
      %v218 = vld [vmem:[%s166 + $0xac] sm:$0xf]
      %v219 = vld [vmem:[%s166 + $0xb0] sm:$0xf]
      %v220 = vld [vmem:[%s166 + $0xb4] sm:$0xf]
      %v221 = vld [vmem:[%s166 + $0xb8] sm:$0xf]
      %v222 = vld [vmem:[%s166 + $0xbc] sm:$0xf]
      %v223 = vld [vmem:[%s166 + $0xc0] sm:$0xf]
      %v224 = vld [vmem:[%s166 + $0xc4] sm:$0xf]
      %v225 = vld [vmem:[%s166 + $0xc8] sm:$0xf]
      %v226 = vld [vmem:[%s166 + $0xcc] sm:$0xf]
      %v227 = vld [vmem:[%s166 + $0xd0] sm:$0xf]
      %v228 = vld [vmem:[%s166 + $0xd4] sm:$0xf]
      %v229 = vld [vmem:[%s166 + $0xd8] sm:$0xf]
      %v230 = vld [vmem:[%s166 + $0xdc] sm:$0xf]
      %v231 = vld [vmem:[%s166 + $0xe0] sm:$0xf]
      %v232 = vld [vmem:[%s166 + $0xe4] sm:$0xf]
      %v233 = vld [vmem:[%s166 + $0xe8] sm:$0xf]
      %v234 = vld [vmem:[%s166 + $0xec] sm:$0xf]
      %v235 = vld [vmem:[%s166 + $0xf0] sm:$0xf]
      %v236 = vld [vmem:[%s166 + $0xf4] sm:$0xf]
      %v237 = vld [vmem:[%s166 + $0xf8] sm:$0xf]
      %v238 = vld [vmem:[%s166 + $0xfc] sm:$0xf]
      %v239 = vld [vmem:[%s166 + $0x100] sm:$0xf]
      %v240 = vld [vmem:[%s166 + $0x104] sm:$0xf]
      %v241 = vld [vmem:[%s166 + $0x108] sm:$0xf]
      %v242 = vld [vmem:[%s166 + $0x10c] sm:$0xf]
      %v243 = vld [vmem:[%s166 + $0x110] sm:$0xf]
      %v244 = vld [vmem:[%s166 + $0x114] sm:$0xf]
      %v245 = vld [vmem:[%s166 + $0x118] sm:$0xf]
      %v246 = vld [vmem:[%s166 + $0x11c] sm:$0xf]
      %v247 = vld [vmem:[%s166 + $0x120] sm:$0xf]
      %v248 = vld [vmem:[%s166 + $0x124] sm:$0xf]
      %v249 = vld [vmem:[%s166 + $0x128] sm:$0xf]
      %v250 = vld [vmem:[%s166 + $0x12c] sm:$0xf]
      %v251 = vld [vmem:[%s166 + $0x130] sm:$0xf]
      %v252 = vld [vmem:[%s166 + $0x134] sm:$0xf]
      %v253 = vld [vmem:[%s166 + $0x138] sm:$0xf]
      %v254 = vld [vmem:[%s166 + $0x13c] sm:$0xf]
      %v255 = vld [vmem:[%s166 + $0x140] sm:$0xf]
      %v256 = vld [vmem:[%s166 + $0x144] sm:$0xf]
      %v257 = vld [vmem:[%s166 + $0x148] sm:$0xf]
      %v258 = vld [vmem:[%s166 + $0x14c] sm:$0xf]
      %v259 = vld [vmem:[%s166 + $0x150] sm:$0xf]
      %v260 = vld [vmem:[%s166 + $0x154] sm:$0xf]
      %v261 = vld [vmem:[%s166 + $0x158] sm:$0xf]
      %v262 = vld [vmem:[%s166 + $0x15c] sm:$0xf]
      %v263 = vld [vmem:[%s166 + $0x160] sm:$0xf]
      %v264 = vld [vmem:[%s166 + $0x164] sm:$0xf]
      %v265 = vld [vmem:[%s166 + $0x168] sm:$0xf]
      %v266 = vld [vmem:[%s166 + $0x16c] sm:$0xf]
      %v267 = vld [vmem:[%s166 + $0x170] sm:$0xf]
      %v268 = vld [vmem:[%s166 + $0x174] sm:$0xf]
      %v269 = vld [vmem:[%s166 + $0x178] sm:$0xf]
      %v270 = vld [vmem:[%s166 + $0x17c] sm:$0xf]
      %v271 = vld [vmem:[%s166 + $0x180] sm:$0xf]
      %v272 = vld [vmem:[%s166 + $0x184] sm:$0xf]
      %v273 = vld [vmem:[%s166 + $0x188] sm:$0xf]
      %v274 = vld [vmem:[%s166 + $0x18c] sm:$0xf]
      %v275 = vld [vmem:[%s166 + $0x190] sm:$0xf]
      %v276 = vld [vmem:[%s166 + $0x194] sm:$0xf]
      %v277 = vld [vmem:[%s166 + $0x198] sm:$0xf]
      %v278 = vld [vmem:[%s166 + $0x19c] sm:$0xf]
      %v279 = vld [vmem:[%s166 + $0x1a0] sm:$0xf]
      %v280 = vld [vmem:[%s166 + $0x1a4] sm:$0xf]
      %v281 = vld [vmem:[%s166 + $0x1a8] sm:$0xf]
      %v282 = vld [vmem:[%s166 + $0x1ac] sm:$0xf]
      %v283 = vld [vmem:[%s166 + $0x1b0] sm:$0xf]
      %v284 = vld [vmem:[%s166 + $0x1b4] sm:$0xf]
      %v285 = vld [vmem:[%s166 + $0x1b8] sm:$0xf]
      %v286 = vld [vmem:[%s166 + $0x1bc] sm:$0xf]
      %v287 = vld [vmem:[%s166 + $0x1c0] sm:$0xf]
      %v288 = vld [vmem:[%s166 + $0x1c4] sm:$0xf]
      %v289 = vld [vmem:[%s166 + $0x1c8] sm:$0xf]
      %v290 = vld [vmem:[%s166 + $0x1cc] sm:$0xf]
      %v291 = vld [vmem:[%s166 + $0x1d0] sm:$0xf]
      %v292 = vld [vmem:[%s166 + $0x1d4] sm:$0xf]
      %v293 = vld [vmem:[%s166 + $0x1d8] sm:$0xf]
      %v294 = vld [vmem:[%s166 + $0x1dc] sm:$0xf]
      %v295 = vld [vmem:[%s166 + $0x1e0] sm:$0xf]
      %v296 = vld [vmem:[%s166 + $0x1e4] sm:$0xf]
      %v297 = vld [vmem:[%s166 + $0x1e8] sm:$0xf]
      %v298 = vld [vmem:[%s166 + $0x1ec] sm:$0xf]
      %v299 = vld [vmem:[%s166 + $0x1f0] sm:$0xf]
      %v300 = vld [vmem:[%s166 + $0x1f4] sm:$0xf]
      %v301 = vld [vmem:[%s166 + $0x1f8] sm:$0xf]
      %v302 = vld [vmem:[%s166 + $0x1fc] sm:$0xf]
      %v303 = vld [vmem:[%s166 + $0x200] sm:$0xf]
      %v304 = vld [vmem:[%s166 + $0x204] sm:$0xf]
      %v305 = vld [vmem:[%s166 + $0x208] sm:$0xf]
      %v306 = vld [vmem:[%s166 + $0x20c] sm:$0xf]
      %v307 = vld [vmem:[%s166 + $0x210] sm:$0xf]
      %v308 = vld [vmem:[%s166 + $0x214] sm:$0xf]
      %v309 = vld [vmem:[%s166 + $0x218] sm:$0xf]
      %v310 = vld [vmem:[%s166 + $0x21c] sm:$0xf]
      %v311 = vld [vmem:[%s166 + $0x220] sm:$0xf]
      %v312 = vld [vmem:[%s166 + $0x224] sm:$0xf]
      %v313 = vld [vmem:[%s166 + $0x228] sm:$0xf]
      %v314 = vld [vmem:[%s166 + $0x22c] sm:$0xf]
      %v315 = vld [vmem:[%s166 + $0x230] sm:$0xf]
      %v316 = vld [vmem:[%s166 + $0x234] sm:$0xf]
      %v317 = vld [vmem:[%s166 + $0x238] sm:$0xf]
      %v318 = vld [vmem:[%s166 + $0x23c] sm:$0xf]
      %v319 = vld [vmem:[%s166 + $0x240] sm:$0xf]
      %v320 = vld [vmem:[%s166 + $0x244] sm:$0xf]
      %v321 = vld [vmem:[%s166 + $0x248] sm:$0xf]
      %v322 = vld [vmem:[%s166 + $0x24c] sm:$0xf]
      %v323 = vld [vmem:[%s166 + $0x250] sm:$0xf]
      %v324 = vld [vmem:[%s166 + $0x254] sm:$0xf]
      %v325 = vld [vmem:[%s166 + $0x258] sm:$0xf]
      %v326 = vld [vmem:[%s166 + $0x25c] sm:$0xf]
      %v327 = vld [vmem:[%s166 + $0x260] sm:$0xf]
      %v328 = vld [vmem:[%s166 + $0x264] sm:$0xf]
      %v329 = vld [vmem:[%s166 + $0x268] sm:$0xf]
      %v330 = vld [vmem:[%s166 + $0x26c] sm:$0xf]
      %v331 = vld [vmem:[%s166 + $0x270] sm:$0xf]
      %v332 = vld [vmem:[%s166 + $0x274] sm:$0xf]
      %v333 = vld [vmem:[%s166 + $0x278] sm:$0xf]
      %v334 = vld [vmem:[%s166 + $0x27c] sm:$0xf]
      %v335 = vld [vmem:[%s166 + $0x280] sm:$0xf]
      %v336 = vld [vmem:[%s166 + $0x284] sm:$0xf]
      %v337 = vld [vmem:[%s166 + $0x288] sm:$0xf]
      %v338 = vld [vmem:[%s166 + $0x28c] sm:$0xf]
      %v339 = vld [vmem:[%s166 + $0x290] sm:$0xf]
      %v340 = vld [vmem:[%s166 + $0x294] sm:$0xf]
      %v341 = vld [vmem:[%s166 + $0x298] sm:$0xf]
      %v342 = vld [vmem:[%s166 + $0x29c] sm:$0xf]
      %v343 = vld [vmem:[%s166 + $0x2a0] sm:$0xf]
      %v344 = vld [vmem:[%s166 + $0x2a4] sm:$0xf]
      %v345 = vld [vmem:[%s166 + $0x2a8] sm:$0xf]
      %v346 = vld [vmem:[%s166 + $0x2ac] sm:$0xf]
      %v347 = vld [vmem:[%s166 + $0x2b0] sm:$0xf]
      %v348 = vld [vmem:[%s166 + $0x2b4] sm:$0xf]
      %v349 = vld [vmem:[%s166 + $0x2b8] sm:$0xf]
      %v350 = vld [vmem:[%s166 + $0x2bc] sm:$0xf]
      %v351 = vld [vmem:[%s1] sm:$0xf]
      %v352 = vld [vmem:[%s1 + $0x4] sm:$0xf]
      %v353 = vld [vmem:[%s1 + $0x8] sm:$0xf]
      %v354 = vld [vmem:[%s1 + $0xc] sm:$0xf]
      %v355 = vld [vmem:[%s1 + $0x10] sm:$0xf]
      %v356 = vld [vmem:[%s1 + $0x14] sm:$0xf]
      %v357 = vld [vmem:[%s1 + $0x18] sm:$0xf]
      %v358 = vld [vmem:[%s1 + $0x1c] sm:$0xf]
      %v359 = vld [vmem:[%s1 + $0x20] sm:$0xf]
      %v360 = vld [vmem:[%s1 + $0x24] sm:$0xf]
      %v361 = vld [vmem:[%s1 + $0x28] sm:$0xf]
      %v362 = vld [vmem:[%s1 + $0x2c] sm:$0xf]
      %v363 = vld [vmem:[%s1 + $0x30] sm:$0xf]
      %v364 = vld [vmem:[%s1 + $0x34] sm:$0xf]
      %v365 = vld [vmem:[%s1 + $0x38] sm:$0xf]
      %v366 = vld [vmem:[%s1 + $0x3c] sm:$0xf]
      %v543 = vunpack.c.l.b16 %v175
      %v544 = vunpack.c.l.b16 %v176
      %v545 = vunpack.c.l.b16 %v177
      %v546 = vunpack.c.l.b16 %v178
      %v547 = vunpack.c.l.b16 %v179
      %v548 = vunpack.c.l.b16 %v180
      %v549 = vunpack.c.l.b16 %v181
      %v550 = vunpack.c.l.b16 %v182
      %v551 = vunpack.c.l.b16 %v183
      %v552 = vunpack.c.l.b16 %v184
      %v553 = vunpack.c.l.b16 %v185
      %v554 = vunpack.c.l.b16 %v186
      %v555 = vunpack.c.l.b16 %v187
      %v556 = vunpack.c.l.b16 %v188
      %v557 = vunpack.c.l.b16 %v189
      %v558 = vunpack.c.l.b16 %v190
      %v559 = vunpack.c.l.b16 %v191
      %v560 = vunpack.c.l.b16 %v192
      %v561 = vunpack.c.l.b16 %v193
      %v562 = vunpack.c.l.b16 %v194
      %v563 = vunpack.c.l.b16 %v195
      %v564 = vunpack.c.l.b16 %v196
      %v565 = vunpack.c.l.b16 %v197
      %v566 = vunpack.c.l.b16 %v198
      %v567 = vunpack.c.l.b16 %v199
      %v568 = vunpack.c.l.b16 %v200
      %v569 = vunpack.c.l.b16 %v201
      %v570 = vunpack.c.l.b16 %v202
      %v571 = vunpack.c.l.b16 %v203
      %v572 = vunpack.c.l.b16 %v204
      %v573 = vunpack.c.l.b16 %v205
      %v574 = vunpack.c.l.b16 %v206
      %v575 = vunpack.c.l.b16 %v207
      %v576 = vunpack.c.l.b16 %v208
      %v577 = vunpack.c.l.b16 %v209
      %v578 = vunpack.c.l.b16 %v210
      %v579 = vunpack.c.l.b16 %v211
      %v580 = vunpack.c.l.b16 %v212
      %v581 = vunpack.c.l.b16 %v213
      %v582 = vunpack.c.l.b16 %v214
      %v583 = vunpack.c.l.b16 %v215
      %v584 = vunpack.c.l.b16 %v216
      %v585 = vunpack.c.l.b16 %v217
      %v586 = vunpack.c.l.b16 %v218
      %v587 = vunpack.c.l.b16 %v219
      %v588 = vunpack.c.l.b16 %v220
      %v589 = vunpack.c.l.b16 %v221
      %v590 = vunpack.c.l.b16 %v222
      %v591 = vunpack.c.l.b16 %v223
      %v592 = vunpack.c.l.b16 %v224
      %v593 = vunpack.c.l.b16 %v225
      %v594 = vunpack.c.l.b16 %v226
      %v595 = vunpack.c.l.b16 %v227
      %v596 = vunpack.c.l.b16 %v228
      %v597 = vunpack.c.l.b16 %v229
      %v598 = vunpack.c.l.b16 %v230
      %v599 = vunpack.c.l.b16 %v231
      %v600 = vunpack.c.l.b16 %v232
      %v601 = vunpack.c.l.b16 %v233
      %v602 = vunpack.c.l.b16 %v234
      %v603 = vunpack.c.l.b16 %v235
      %v604 = vunpack.c.l.b16 %v236
      %v605 = vunpack.c.l.b16 %v237
      %v606 = vunpack.c.l.b16 %v238
      %v607 = vunpack.c.l.b16 %v239
      %v608 = vunpack.c.l.b16 %v240
      %v609 = vunpack.c.l.b16 %v241
      %v610 = vunpack.c.l.b16 %v242
      %v611 = vunpack.c.l.b16 %v243
      %v612 = vunpack.c.l.b16 %v244
      %v613 = vunpack.c.l.b16 %v245
      %v614 = vunpack.c.l.b16 %v246
      %v615 = vunpack.c.l.b16 %v247
      %v616 = vunpack.c.l.b16 %v248
      %v617 = vunpack.c.l.b16 %v249
      %v618 = vunpack.c.l.b16 %v250
      %v619 = vunpack.c.l.b16 %v251
      %v620 = vunpack.c.l.b16 %v252
      %v621 = vunpack.c.l.b16 %v253
      %v622 = vunpack.c.l.b16 %v254
      %v623 = vunpack.c.l.b16 %v255
      %v624 = vunpack.c.l.b16 %v256
      %v625 = vunpack.c.l.b16 %v257
      %v626 = vunpack.c.l.b16 %v258
      %v627 = vunpack.c.l.b16 %v259
      %v628 = vunpack.c.l.b16 %v260
      %v629 = vunpack.c.l.b16 %v261
      %v630 = vunpack.c.l.b16 %v262
      %v631 = vunpack.c.l.b16 %v263
      %v632 = vunpack.c.l.b16 %v264
      %v633 = vunpack.c.l.b16 %v265
      %v634 = vunpack.c.l.b16 %v266
      %v635 = vunpack.c.l.b16 %v267
      %v636 = vunpack.c.l.b16 %v268
      %v637 = vunpack.c.l.b16 %v269
      %v638 = vunpack.c.l.b16 %v270
      %v639 = vunpack.c.l.b16 %v271
      %v640 = vunpack.c.l.b16 %v272
      %v641 = vunpack.c.l.b16 %v273
      %v642 = vunpack.c.l.b16 %v274
      %v643 = vunpack.c.l.b16 %v275
      %v644 = vunpack.c.l.b16 %v276
      %v645 = vunpack.c.l.b16 %v277
      %v646 = vunpack.c.l.b16 %v278
      %v647 = vunpack.c.l.b16 %v279
      %v648 = vunpack.c.l.b16 %v280
      %v649 = vunpack.c.l.b16 %v281
      %v650 = vunpack.c.l.b16 %v282
      %v651 = vunpack.c.l.b16 %v283
      %v652 = vunpack.c.l.b16 %v284
      %v653 = vunpack.c.l.b16 %v285
      %v654 = vunpack.c.l.b16 %v286
      %v655 = vunpack.c.l.b16 %v287
      %v656 = vunpack.c.l.b16 %v288
      %v657 = vunpack.c.l.b16 %v289
      %v658 = vunpack.c.l.b16 %v290
      %v659 = vunpack.c.l.b16 %v291
      %v660 = vunpack.c.l.b16 %v292
      %v661 = vunpack.c.l.b16 %v293
      %v662 = vunpack.c.l.b16 %v294
      %v663 = vunpack.c.l.b16 %v295
      %v664 = vunpack.c.l.b16 %v296
      %v665 = vunpack.c.l.b16 %v297
      %v666 = vunpack.c.l.b16 %v298
      %v667 = vunpack.c.l.b16 %v299
      %v668 = vunpack.c.l.b16 %v300
      %v669 = vunpack.c.l.b16 %v301
      %v670 = vunpack.c.l.b16 %v302
      %v671 = vunpack.c.l.b16 %v303
      %v672 = vunpack.c.l.b16 %v304
      %v673 = vunpack.c.l.b16 %v305
      %v674 = vunpack.c.l.b16 %v306
      %v675 = vunpack.c.l.b16 %v307
      %v676 = vunpack.c.l.b16 %v308
      %v677 = vunpack.c.l.b16 %v309
      %v678 = vunpack.c.l.b16 %v310
      %v679 = vunpack.c.l.b16 %v311
      %v680 = vunpack.c.l.b16 %v312
      %v681 = vunpack.c.l.b16 %v313
      %v682 = vunpack.c.l.b16 %v314
      %v683 = vunpack.c.l.b16 %v315
      %v684 = vunpack.c.l.b16 %v316
      %v685 = vunpack.c.l.b16 %v317
      %v686 = vunpack.c.l.b16 %v318
      %v687 = vunpack.c.l.b16 %v319
      %v688 = vunpack.c.l.b16 %v320
      %v689 = vunpack.c.l.b16 %v321
      %v690 = vunpack.c.l.b16 %v322
      %v691 = vunpack.c.l.b16 %v323
      %v692 = vunpack.c.l.b16 %v324
      %v693 = vunpack.c.l.b16 %v325
      %v694 = vunpack.c.l.b16 %v326
      %v695 = vunpack.c.l.b16 %v327
      %v696 = vunpack.c.l.b16 %v328
      %v697 = vunpack.c.l.b16 %v329
      %v698 = vunpack.c.l.b16 %v330
      %v699 = vunpack.c.l.b16 %v331
      %v700 = vunpack.c.l.b16 %v332
      %v701 = vunpack.c.l.b16 %v333
      %v702 = vunpack.c.l.b16 %v334
      %v703 = vunpack.c.l.b16 %v335
      %v704 = vunpack.c.l.b16 %v336
      %v705 = vunpack.c.l.b16 %v337
      %v706 = vunpack.c.l.b16 %v338
      %v707 = vunpack.c.l.b16 %v339
      %v708 = vunpack.c.l.b16 %v340
      %v709 = vunpack.c.l.b16 %v341
      %v710 = vunpack.c.l.b16 %v342
      %v711 = vunpack.c.l.b16 %v343
      %v712 = vunpack.c.l.b16 %v344
      %v713 = vunpack.c.l.b16 %v345
      %v714 = vunpack.c.l.b16 %v346
      %v715 = vunpack.c.l.b16 %v347
      %v716 = vunpack.c.l.b16 %v348
      %v717 = vunpack.c.l.b16 %v349
      %v718 = vunpack.c.l.b16 %v350
      %v719 = vpack.c.b16 %v544, %v543
      %v720 = vpack.c.b16 %v546, %v545
      %v721 = vpack.c.b16 %v548, %v547
      %v722 = vpack.c.b16 %v550, %v549
      %v723 = vpack.c.b16 %v552, %v551
      %v724 = vpack.c.b16 %v554, %v553
      %v725 = vpack.c.b16 %v556, %v555
      %v726 = vpack.c.b16 %v558, %v557
      %v727 = vpack.c.b16 %v560, %v559
      %v728 = vpack.c.b16 %v562, %v561
      %v729 = vpack.c.b16 %v564, %v563
      %v730 = vpack.c.b16 %v566, %v565
      %v731 = vpack.c.b16 %v568, %v567
      %v732 = vpack.c.b16 %v570, %v569
      %v733 = vpack.c.b16 %v572, %v571
      %v734 = vpack.c.b16 %v574, %v573
      %v735 = vpack.c.b16 %v576, %v575
      %v736 = vpack.c.b16 %v578, %v577
      %v737 = vpack.c.b16 %v580, %v579
      %v738 = vpack.c.b16 %v582, %v581
      %v739 = vpack.c.b16 %v584, %v583
      %v740 = vpack.c.b16 %v586, %v585
      %v741 = vpack.c.b16 %v588, %v587
      %v742 = vpack.c.b16 %v590, %v589
      %v743 = vpack.c.b16 %v592, %v591
      %v744 = vpack.c.b16 %v594, %v593
      %v745 = vpack.c.b16 %v596, %v595
      %v746 = vpack.c.b16 %v598, %v597
      %v747 = vpack.c.b16 %v600, %v599
      %v748 = vpack.c.b16 %v602, %v601
      %v749 = vpack.c.b16 %v604, %v603
      %v750 = vpack.c.b16 %v606, %v605
      %v751 = vpack.c.b16 %v608, %v607
      %v752 = vpack.c.b16 %v610, %v609
      %v753 = vpack.c.b16 %v612, %v611
      %v754 = vpack.c.b16 %v614, %v613
      %v755 = vpack.c.b16 %v616, %v615
      %v756 = vpack.c.b16 %v618, %v617
      %v757 = vpack.c.b16 %v620, %v619
      %v758 = vpack.c.b16 %v622, %v621
      %v759 = vpack.c.b16 %v624, %v623
      %v760 = vpack.c.b16 %v626, %v625
      %v761 = vpack.c.b16 %v628, %v627
      %v762 = vpack.c.b16 %v630, %v629
      %v763 = vpack.c.b16 %v632, %v631
      %v764 = vpack.c.b16 %v634, %v633
      %v765 = vpack.c.b16 %v636, %v635
      %v766 = vpack.c.b16 %v638, %v637
      %v767 = vpack.c.b16 %v640, %v639
      %v768 = vpack.c.b16 %v642, %v641
      %v769 = vpack.c.b16 %v644, %v643
      %v770 = vpack.c.b16 %v646, %v645
      %v771 = vpack.c.b16 %v648, %v647
      %v772 = vpack.c.b16 %v650, %v649
      %v773 = vpack.c.b16 %v652, %v651
      %v774 = vpack.c.b16 %v654, %v653
      %v775 = vpack.c.b16 %v656, %v655
      %v776 = vpack.c.b16 %v658, %v657
      %v777 = vpack.c.b16 %v660, %v659
      %v778 = vpack.c.b16 %v662, %v661
      %v779 = vpack.c.b16 %v664, %v663
      %v780 = vpack.c.b16 %v666, %v665
      %v781 = vpack.c.b16 %v668, %v667
      %v782 = vpack.c.b16 %v670, %v669
      %v783 = vpack.c.b16 %v672, %v671
      %v784 = vpack.c.b16 %v674, %v673
      %v785 = vpack.c.b16 %v676, %v675
      %v786 = vpack.c.b16 %v678, %v677
      %v787 = vpack.c.b16 %v680, %v679
      %v788 = vpack.c.b16 %v682, %v681
      %v789 = vpack.c.b16 %v684, %v683
      %v790 = vpack.c.b16 %v686, %v685
      %v791 = vpack.c.b16 %v688, %v687
      %v792 = vpack.c.b16 %v690, %v689
      %v793 = vpack.c.b16 %v692, %v691
      %v794 = vpack.c.b16 %v694, %v693
      %v795 = vpack.c.b16 %v696, %v695
      %v796 = vpack.c.b16 %v698, %v697
      %v797 = vpack.c.b16 %v700, %v699
      %v798 = vpack.c.b16 %v702, %v701
      %v799 = vpack.c.b16 %v704, %v703
      %v800 = vpack.c.b16 %v706, %v705
      %v801 = vpack.c.b16 %v708, %v707
      %v802 = vpack.c.b16 %v710, %v709
      %v803 = vpack.c.b16 %v712, %v711
      %v804 = vpack.c.b16 %v714, %v713
      %v805 = vpack.c.b16 %v716, %v715
      %v806 = vpack.c.b16 %v718, %v717
      %v911 = vunpack.c.l.b16 %v351
      %v912 = vunpack.c.l.b16 %v352
      %v913 = vunpack.c.l.b16 %v353
      %v914 = vunpack.c.l.b16 %v354
      %v915 = vunpack.c.l.b16 %v355
      %v916 = vunpack.c.l.b16 %v356
      %v917 = vunpack.c.l.b16 %v357
      %v918 = vunpack.c.l.b16 %v358
      %v919 = vunpack.c.l.b16 %v359
      %v920 = vunpack.c.l.b16 %v360
      %v921 = vunpack.c.l.b16 %v361
      %v922 = vunpack.c.l.b16 %v362
      %v923 = vunpack.c.l.b16 %v363
      %v924 = vunpack.c.l.b16 %v364
      %v925 = vunpack.c.l.b16 %v365
      %v926 = vunpack.c.l.b16 %v366
      %v927 = vpack.c.b16 %v912, %v911
      %v928 = vpack.c.b16 %v914, %v913
      %v929 = vpack.c.b16 %v916, %v915
      %v930 = vpack.c.b16 %v918, %v917
      %v931 = vpack.c.b16 %v920, %v919
      %v932 = vpack.c.b16 %v922, %v921
      %v933 = vpack.c.b16 %v924, %v923
      %v934 = vpack.c.b16 %v926, %v925
      %943 = vmatprep.subr.bf16.mxu0 0
      %944 = vmatpush1.bf16.msra.mxu0 %v927
      %945 = vmatprep.subr.bf16.mxu0 0
      %946 = vmatpush1.bf16.msra.mxu0 %v928
      %947 = vmatprep.subr.bf16.mxu0 0
      %948 = vmatpush1.bf16.msra.mxu0 %v929
      %949 = vmatprep.subr.bf16.mxu0 0
      %950 = vmatpush1.bf16.msra.mxu0 %v930
      %951 = vmatprep.subr.bf16.mxu0 0
      %952 = vmatpush1.bf16.msra.mxu0 %v931
      %953 = vmatprep.subr.bf16.mxu0 0
      %954 = vmatpush1.bf16.msra.mxu0 %v932
      %955 = vmatprep.subr.bf16.mxu0 0
      %956 = vmatpush1.bf16.msra.mxu0 %v933
      %957 = vmatprep.subr.bf16.mxu0 0
      %958 = vmatpush1.bf16.msra.mxu0 %v934
      %959 = vmatprep.subr.bf16.mxu0 0
      %960 = vmatpush1.bf16.msra.mxu0 0
      %961 = vmatprep.subr.bf16.mxu0 0
      %962 = vmatpush1.bf16.msra.mxu0 0
      %963 = vmatprep.subr.bf16.mxu0 0
      %964 = vmatpush1.bf16.msra.mxu0 0
      %965 = vmatprep.subr.bf16.mxu0 0
      %966 = vmatpush1.bf16.msra.mxu0 0
      %967 = vmatprep.subr.bf16.mxu0 0
      %968 = vmatpush1.bf16.msra.mxu0 0
      %969 = vmatprep.subr.bf16.mxu0 0
      %970 = vmatpush1.bf16.msra.mxu0 0
      %971 = vmatprep.subr.bf16.mxu0 0
      %972 = vmatpush1.bf16.msra.mxu0 0
      %973 = vmatprep.subr.bf16.mxu0 0
      %974 = vmatpush1.bf16.msra.mxu0 0
      %975 = vmatprep.mubr.bf16.mxu0 0
      %976 = vmatmul.mubr.bf16.gmra.mrb[0].mxu0 %v719
      %v977 = vpop.f32.mrb[0].mxu0
      %v978 = vadd.f32 0.0, %v977
      %v979 = vpop.f32.mrb[0].mxu0
      %v980 = vpop.f32.mrb[0].mxu0
      %v981 = vadd.f32 0.0, %v980
      %v982 = vpop.f32.mrb[0].mxu0
      %983 = vmatprep.mubr.bf16.mxu0 0
      %984 = vmatmul.mubr.bf16.gmra.mrb[0].mxu0 %v720
      %v985 = vpop.f32.mrb[0].mxu0
      %v986 = vadd.f32 0.0, %v985
      %v987 = vpop.f32.mrb[0].mxu0
      %v988 = vpop.f32.mrb[0].mxu0
      %v989 = vadd.f32 0.0, %v988
      %v990 = vpop.f32.mrb[0].mxu0
      %991 = vmatprep.mubr.bf16.mxu0 0
      %992 = vmatmul.mubr.bf16.gmra.mrb[0].mxu0 %v721
      %v993 = vpop.f32.mrb[0].mxu0
      %v994 = vadd.f32 0.0, %v993
      %v995 = vpop.f32.mrb[0].mxu0
      %v996 = vpop.f32.mrb[0].mxu0
      %v997 = vadd.f32 0.0, %v996
      %v998 = vpop.f32.mrb[0].mxu0
      %999 = vmatprep.mubr.bf16.mxu0 0
      %1000 = vmatmul.mubr.bf16.gmra.mrb[0].mxu0 %v722
      %v1001 = vpop.f32.mrb[0].mxu0
      %v1002 = vadd.f32 0.0, %v1001
      %v1003 = vpop.f32.mrb[0].mxu0
      %v1004 = vpop.f32.mrb[0].mxu0
      %v1005 = vadd.f32 0.0, %v1004
      %v1006 = vpop.f32.mrb[0].mxu0
      %1007 = vmatprep.mubr.bf16.mxu0 0
      %1008 = vmatmul.mubr.bf16.gmra.mrb[0].mxu0 %v723
      %v1009 = vpop.f32.mrb[0].mxu0
      %v1010 = vadd.f32 0.0, %v1009
      %v1011 = vpop.f32.mrb[0].mxu0
      %v1012 = vpop.f32.mrb[0].mxu0
      %v1013 = vadd.f32 0.0, %v1012
      %v1014 = vpop.f32.mrb[0].mxu0
      %1015 = vmatprep.mubr.bf16.mxu0 0
      %1016 = vmatmul.mubr.bf16.gmra.mrb[0].mxu0 %v724
      %v1017 = vpop.f32.mrb[0].mxu0
      %v1018 = vadd.f32 0.0, %v1017
      %v1019 = vpop.f32.mrb[0].mxu0
      %v1020 = vpop.f32.mrb[0].mxu0
      %v1021 = vadd.f32 0.0, %v1020
      %v1022 = vpop.f32.mrb[0].mxu0
      %1023 = vmatprep.mubr.bf16.mxu0 0
      %1024 = vmatmul.mubr.bf16.gmra.mrb[0].mxu0 %v725
      %v1025 = vpop.f32.mrb[0].mxu0
      %v1026 = vadd.f32 0.0, %v1025
      %v1027 = vpop.f32.mrb[0].mxu0
      %v1028 = vpop.f32.mrb[0].mxu0
      %v1029 = vadd.f32 0.0, %v1028
      %v1030 = vpop.f32.mrb[0].mxu0
      %1031 = vmatprep.mubr.bf16.mxu0 0
      %1032 = vmatmul.mubr.bf16.gmra.mrb[0].mxu0 %v726
      %v1033 = vpop.f32.mrb[0].mxu0
      %v1034 = vadd.f32 0.0, %v1033
      %v1035 = vpop.f32.mrb[0].mxu0
      %v1036 = vpop.f32.mrb[0].mxu0
      %v1037 = vadd.f32 0.0, %v1036
      %v1038 = vpop.f32.mrb[0].mxu0
      %1039 = vmatprep.mubr.bf16.mxu0 0
      %1040 = vmatmul.mubr.bf16.gmra.mrb[0].mxu0 %v727
      %v1041 = vpop.f32.mrb[0].mxu0
      %v1042 = vadd.f32 0.0, %v1041
      %v1043 = vpop.f32.mrb[0].mxu0
      %v1044 = vpop.f32.mrb[0].mxu0
      %v1045 = vadd.f32 0.0, %v1044
      %v1046 = vpop.f32.mrb[0].mxu0
      %1047 = vmatprep.mubr.bf16.mxu0 0
      %1048 = vmatmul.mubr.bf16.gmra.mrb[0].mxu0 %v728
      %v1049 = vpop.f32.mrb[0].mxu0
      %v1050 = vadd.f32 0.0, %v1049
      %v1051 = vpop.f32.mrb[0].mxu0
      %v1052 = vpop.f32.mrb[0].mxu0
      %v1053 = vadd.f32 0.0, %v1052
      %v1054 = vpop.f32.mrb[0].mxu0
      %1055 = vmatprep.mubr.bf16.mxu0 0
      %1056 = vmatmul.mubr.bf16.gmra.mrb[0].mxu0 %v729
      %v1057 = vpop.f32.mrb[0].mxu0
      %v1058 = vadd.f32 0.0, %v1057
      %v1059 = vpop.f32.mrb[0].mxu0
      %v1060 = vpop.f32.mrb[0].mxu0
      %v1061 = vadd.f32 0.0, %v1060
      %v1062 = vpop.f32.mrb[0].mxu0
      %1063 = vmatprep.mubr.bf16.mxu0 0
      %1064 = vmatmul.mubr.bf16.gmra.mrb[0].mxu0 %v730
      %v1065 = vpop.f32.mrb[0].mxu0
      %v1066 = vadd.f32 0.0, %v1065
      %v1067 = vpop.f32.mrb[0].mxu0
      %v1068 = vpop.f32.mrb[0].mxu0
      %v1069 = vadd.f32 0.0, %v1068
      %v1070 = vpop.f32.mrb[0].mxu0
      %1071 = vmatprep.mubr.bf16.mxu0 0
      %1072 = vmatmul.mubr.bf16.gmra.mrb[0].mxu0 %v731
      %v1073 = vpop.f32.mrb[0].mxu0
      %v1074 = vadd.f32 0.0, %v1073
      %v1075 = vpop.f32.mrb[0].mxu0
      %v1076 = vpop.f32.mrb[0].mxu0
      %v1077 = vadd.f32 0.0, %v1076
      %v1078 = vpop.f32.mrb[0].mxu0
      %1079 = vmatprep.mubr.bf16.mxu0 0
      %1080 = vmatmul.mubr.bf16.gmra.mrb[0].mxu0 %v732
      %v1081 = vpop.f32.mrb[0].mxu0
      %v1082 = vadd.f32 0.0, %v1081
      %v1083 = vpop.f32.mrb[0].mxu0
      %v1084 = vpop.f32.mrb[0].mxu0
      %v1085 = vadd.f32 0.0, %v1084
      %v1086 = vpop.f32.mrb[0].mxu0
      %1087 = vmatprep.mubr.bf16.mxu0 0
      %1088 = vmatmul.mubr.bf16.gmra.mrb[0].mxu0 %v733
      %v1089 = vpop.f32.mrb[0].mxu0
      %v1090 = vadd.f32 0.0, %v1089
      %v1091 = vpop.f32.mrb[0].mxu0
      %v1092 = vpop.f32.mrb[0].mxu0
      %v1093 = vadd.f32 0.0, %v1092
      %v1094 = vpop.f32.mrb[0].mxu0
      %1095 = vmatprep.mubr.bf16.mxu0 0
      %1096 = vmatmul.mubr.bf16.gmra.mrb[0].mxu0 %v734
      %v1097 = vpop.f32.mrb[0].mxu0
      %v1098 = vadd.f32 0.0, %v1097
      %v1099 = vpop.f32.mrb[0].mxu0
      %v1100 = vpop.f32.mrb[0].mxu0
      %v1101 = vadd.f32 0.0, %v1100
      %v1102 = vpop.f32.mrb[0].mxu0
      %1103 = vmatprep.mubr.bf16.mxu0 0
      %1104 = vmatmul.mubr.bf16.gmra.mrb[0].mxu0 %v735
      %v1105 = vpop.f32.mrb[0].mxu0
      %v1106 = vadd.f32 0.0, %v1105
      %v1107 = vpop.f32.mrb[0].mxu0
      %v1108 = vpop.f32.mrb[0].mxu0
      %v1109 = vadd.f32 0.0, %v1108
      %v1110 = vpop.f32.mrb[0].mxu0
      %1111 = vmatprep.mubr.bf16.mxu0 0
      %1112 = vmatmul.mubr.bf16.gmra.mrb[0].mxu0 %v736
      %v1113 = vpop.f32.mrb[0].mxu0
      %v1114 = vadd.f32 0.0, %v1113
      %v1115 = vpop.f32.mrb[0].mxu0
      %v1116 = vpop.f32.mrb[0].mxu0
      %v1117 = vadd.f32 0.0, %v1116
      %v1118 = vpop.f32.mrb[0].mxu0
      %1119 = vmatprep.mubr.bf16.mxu0 0
      %1120 = vmatmul.mubr.bf16.gmra.mrb[0].mxu0 %v737
      %v1121 = vpop.f32.mrb[0].mxu0
      %v1122 = vadd.f32 0.0, %v1121
      %v1123 = vpop.f32.mrb[0].mxu0
      %v1124 = vpop.f32.mrb[0].mxu0
      %v1125 = vadd.f32 0.0, %v1124
      %v1126 = vpop.f32.mrb[0].mxu0
      %1127 = vmatprep.mubr.bf16.mxu0 0
      %1128 = vmatmul.mubr.bf16.gmra.mrb[0].mxu0 %v738
      %v1129 = vpop.f32.mrb[0].mxu0
      %v1130 = vadd.f32 0.0, %v1129
      %v1131 = vpop.f32.mrb[0].mxu0
      %v1132 = vpop.f32.mrb[0].mxu0
      %v1133 = vadd.f32 0.0, %v1132
      %v1134 = vpop.f32.mrb[0].mxu0
      %1135 = vmatprep.mubr.bf16.mxu0 0
      %1136 = vmatmul.mubr.bf16.gmra.mrb[0].mxu0 %v739
      %v1137 = vpop.f32.mrb[0].mxu0
      %v1138 = vadd.f32 0.0, %v1137
      %v1139 = vpop.f32.mrb[0].mxu0
      %v1140 = vpop.f32.mrb[0].mxu0
      %v1141 = vadd.f32 0.0, %v1140
      %v1142 = vpop.f32.mrb[0].mxu0
      %1143 = vmatprep.mubr.bf16.mxu0 0
      %1144 = vmatmul.mubr.bf16.gmra.mrb[0].mxu0 %v740
      %v1145 = vpop.f32.mrb[0].mxu0
      %v1146 = vadd.f32 0.0, %v1145
      %v1147 = vpop.f32.mrb[0].mxu0
      %v1148 = vpop.f32.mrb[0].mxu0
      %v1149 = vadd.f32 0.0, %v1148
      %v1150 = vpop.f32.mrb[0].mxu0
      %1151 = vmatprep.mubr.bf16.mxu0 0
      %1152 = vmatmul.mubr.bf16.gmra.mrb[0].mxu0 %v741
      %v1153 = vpop.f32.mrb[0].mxu0
      %v1154 = vadd.f32 0.0, %v1153
      %v1155 = vpop.f32.mrb[0].mxu0
      %v1156 = vpop.f32.mrb[0].mxu0
      %v1157 = vadd.f32 0.0, %v1156
      %v1158 = vpop.f32.mrb[0].mxu0
      %1159 = vmatprep.mubr.bf16.mxu0 0
      %1160 = vmatmul.mubr.bf16.gmra.mrb[0].mxu0 %v742
      %v1161 = vpop.f32.mrb[0].mxu0
      %v1162 = vadd.f32 0.0, %v1161
      %v1163 = vpop.f32.mrb[0].mxu0
      %v1164 = vpop.f32.mrb[0].mxu0
      %v1165 = vadd.f32 0.0, %v1164
      %v1166 = vpop.f32.mrb[0].mxu0
      %1167 = vmatprep.mubr.bf16.mxu0 0
      %1168 = vmatmul.mubr.bf16.gmra.mrb[0].mxu0 %v743
      %v1169 = vpop.f32.mrb[0].mxu0
      %v1170 = vadd.f32 0.0, %v1169
      %v1171 = vpop.f32.mrb[0].mxu0
      %v1172 = vpop.f32.mrb[0].mxu0
      %v1173 = vadd.f32 0.0, %v1172
      %v1174 = vpop.f32.mrb[0].mxu0
      %1175 = vmatprep.mubr.bf16.mxu0 0
      %1176 = vmatmul.mubr.bf16.gmra.mrb[0].mxu0 %v744
      %v1177 = vpop.f32.mrb[0].mxu0
      %v1178 = vadd.f32 0.0, %v1177
      %v1179 = vpop.f32.mrb[0].mxu0
      %v1180 = vpop.f32.mrb[0].mxu0
      %v1181 = vadd.f32 0.0, %v1180
      %v1182 = vpop.f32.mrb[0].mxu0
      %1183 = vmatprep.mubr.bf16.mxu0 0
      %1184 = vmatmul.mubr.bf16.gmra.mrb[0].mxu0 %v745
      %v1185 = vpop.f32.mrb[0].mxu0
      %v1186 = vadd.f32 0.0, %v1185
      %v1187 = vpop.f32.mrb[0].mxu0
      %v1188 = vpop.f32.mrb[0].mxu0
      %v1189 = vadd.f32 0.0, %v1188
      %v1190 = vpop.f32.mrb[0].mxu0
      %1191 = vmatprep.mubr.bf16.mxu0 0
      %1192 = vmatmul.mubr.bf16.gmra.mrb[0].mxu0 %v746
      %v1193 = vpop.f32.mrb[0].mxu0
      %v1194 = vadd.f32 0.0, %v1193
      %v1195 = vpop.f32.mrb[0].mxu0
      %v1196 = vpop.f32.mrb[0].mxu0
      %v1197 = vadd.f32 0.0, %v1196
      %v1198 = vpop.f32.mrb[0].mxu0
      %1199 = vmatprep.mubr.bf16.mxu0 0
      %1200 = vmatmul.mubr.bf16.gmra.mrb[0].mxu0 %v747
      %v1201 = vpop.f32.mrb[0].mxu0
      %v1202 = vadd.f32 0.0, %v1201
      %v1203 = vpop.f32.mrb[0].mxu0
      %v1204 = vpop.f32.mrb[0].mxu0
      %v1205 = vadd.f32 0.0, %v1204
      %v1206 = vpop.f32.mrb[0].mxu0
      %1207 = vmatprep.mubr.bf16.mxu0 0
      %1208 = vmatmul.mubr.bf16.gmra.mrb[0].mxu0 %v748
      %v1209 = vpop.f32.mrb[0].mxu0
      %v1210 = vadd.f32 0.0, %v1209
      %v1211 = vpop.f32.mrb[0].mxu0
      %v1212 = vpop.f32.mrb[0].mxu0
      %v1213 = vadd.f32 0.0, %v1212
      %v1214 = vpop.f32.mrb[0].mxu0
      %1215 = vmatprep.mubr.bf16.mxu0 0
      %1216 = vmatmul.mubr.bf16.gmra.mrb[0].mxu0 %v749
      %v1217 = vpop.f32.mrb[0].mxu0
      %v1218 = vadd.f32 0.0, %v1217
      %v1219 = vpop.f32.mrb[0].mxu0
      %v1220 = vpop.f32.mrb[0].mxu0
      %v1221 = vadd.f32 0.0, %v1220
      %v1222 = vpop.f32.mrb[0].mxu0
      %1223 = vmatprep.mubr.bf16.mxu0 0
      %1224 = vmatmul.mubr.bf16.gmra.mrb[0].mxu0 %v750
      %v1225 = vpop.f32.mrb[0].mxu0
      %v1226 = vadd.f32 0.0, %v1225
      %v1227 = vpop.f32.mrb[0].mxu0
      %v1228 = vpop.f32.mrb[0].mxu0
      %v1229 = vadd.f32 0.0, %v1228
      %v1230 = vpop.f32.mrb[0].mxu0
      %1231 = vmatprep.mubr.bf16.mxu0 0
      %1232 = vmatmul.mubr.bf16.gmra.mrb[0].mxu0 %v751
      %v1233 = vpop.f32.mrb[0].mxu0
      %v1234 = vadd.f32 0.0, %v1233
      %v1235 = vpop.f32.mrb[0].mxu0
      %v1236 = vpop.f32.mrb[0].mxu0
      %v1237 = vadd.f32 0.0, %v1236
      %v1238 = vpop.f32.mrb[0].mxu0
      %1239 = vmatprep.mubr.bf16.mxu0 0
      %1240 = vmatmul.mubr.bf16.gmra.mrb[0].mxu0 %v752
      %v1241 = vpop.f32.mrb[0].mxu0
      %v1242 = vadd.f32 0.0, %v1241
      %v1243 = vpop.f32.mrb[0].mxu0
      %v1244 = vpop.f32.mrb[0].mxu0
      %v1245 = vadd.f32 0.0, %v1244
      %v1246 = vpop.f32.mrb[0].mxu0
      %1247 = vmatprep.mubr.bf16.mxu0 0
      %1248 = vmatmul.mubr.bf16.gmra.mrb[0].mxu0 %v753
      %v1249 = vpop.f32.mrb[0].mxu0
      %v1250 = vadd.f32 0.0, %v1249
      %v1251 = vpop.f32.mrb[0].mxu0
      %v1252 = vpop.f32.mrb[0].mxu0
      %v1253 = vadd.f32 0.0, %v1252
      %v1254 = vpop.f32.mrb[0].mxu0
      %1255 = vmatprep.mubr.bf16.mxu0 0
      %1256 = vmatmul.mubr.bf16.gmra.mrb[0].mxu0 %v754
      %v1257 = vpop.f32.mrb[0].mxu0
      %v1258 = vadd.f32 0.0, %v1257
      %v1259 = vpop.f32.mrb[0].mxu0
      %v1260 = vpop.f32.mrb[0].mxu0
      %v1261 = vadd.f32 0.0, %v1260
      %v1262 = vpop.f32.mrb[0].mxu0
      %1263 = vmatprep.mubr.bf16.mxu0 0
      %1264 = vmatmul.mubr.bf16.gmra.mrb[0].mxu0 %v755
      %v1265 = vpop.f32.mrb[0].mxu0
      %v1266 = vadd.f32 0.0, %v1265
      %v1267 = vpop.f32.mrb[0].mxu0
      %v1268 = vpop.f32.mrb[0].mxu0
      %v1269 = vadd.f32 0.0, %v1268
      %v1270 = vpop.f32.mrb[0].mxu0
      %1271 = vmatprep.mubr.bf16.mxu0 0
      %1272 = vmatmul.mubr.bf16.gmra.mrb[0].mxu0 %v756
      %v1273 = vpop.f32.mrb[0].mxu0
      %v1274 = vadd.f32 0.0, %v1273
      %v1275 = vpop.f32.mrb[0].mxu0
      %v1276 = vpop.f32.mrb[0].mxu0
      %v1277 = vadd.f32 0.0, %v1276
      %v1278 = vpop.f32.mrb[0].mxu0
      %1279 = vmatprep.mubr.bf16.mxu0 0
      %1280 = vmatmul.mubr.bf16.gmra.mrb[0].mxu0 %v757
      %v1281 = vpop.f32.mrb[0].mxu0
      %v1282 = vadd.f32 0.0, %v1281
      %v1283 = vpop.f32.mrb[0].mxu0
      %v1284 = vpop.f32.mrb[0].mxu0
      %v1285 = vadd.f32 0.0, %v1284
      %v1286 = vpop.f32.mrb[0].mxu0
      %1287 = vmatprep.mubr.bf16.mxu0 0
      %1288 = vmatmul.mubr.bf16.gmra.mrb[0].mxu0 %v758
      %v1289 = vpop.f32.mrb[0].mxu0
      %v1290 = vadd.f32 0.0, %v1289
      %v1291 = vpop.f32.mrb[0].mxu0
      %v1292 = vpop.f32.mrb[0].mxu0
      %v1293 = vadd.f32 0.0, %v1292
      %v1294 = vpop.f32.mrb[0].mxu0
      %1295 = vmatprep.mubr.bf16.mxu0 0
      %1296 = vmatmul.mubr.bf16.gmra.mrb[0].mxu0 %v759
      %v1297 = vpop.f32.mrb[0].mxu0
      %v1298 = vadd.f32 0.0, %v1297
      %v1299 = vpop.f32.mrb[0].mxu0
      %v1300 = vpop.f32.mrb[0].mxu0
      %v1301 = vadd.f32 0.0, %v1300
      %v1302 = vpop.f32.mrb[0].mxu0
      %1303 = vmatprep.mubr.bf16.mxu0 0
      %1304 = vmatmul.mubr.bf16.gmra.mrb[0].mxu0 %v760
      %v1305 = vpop.f32.mrb[0].mxu0
      %v1306 = vadd.f32 0.0, %v1305
      %v1307 = vpop.f32.mrb[0].mxu0
      %v1308 = vpop.f32.mrb[0].mxu0
      %v1309 = vadd.f32 0.0, %v1308
      %v1310 = vpop.f32.mrb[0].mxu0
      %1311 = vmatprep.mubr.bf16.mxu0 0
      %1312 = vmatmul.mubr.bf16.gmra.mrb[0].mxu0 %v761
      %v1313 = vpop.f32.mrb[0].mxu0
      %v1314 = vadd.f32 0.0, %v1313
      %v1315 = vpop.f32.mrb[0].mxu0
      %v1316 = vpop.f32.mrb[0].mxu0
      %v1317 = vadd.f32 0.0, %v1316
      %v1318 = vpop.f32.mrb[0].mxu0
      %1319 = vmatprep.mubr.bf16.mxu0 0
      %1320 = vmatmul.mubr.bf16.gmra.mrb[0].mxu0 %v762
      %v1321 = vpop.f32.mrb[0].mxu0
      %v1322 = vadd.f32 0.0, %v1321
      %v1323 = vpop.f32.mrb[0].mxu0
      %v1324 = vpop.f32.mrb[0].mxu0
      %v1325 = vadd.f32 0.0, %v1324
      %v1326 = vpop.f32.mrb[0].mxu0
      %1327 = vmatprep.mubr.bf16.mxu0 0
      %1328 = vmatmul.mubr.bf16.gmra.mrb[0].mxu0 %v763
      %v1329 = vpop.f32.mrb[0].mxu0
      %v1330 = vadd.f32 0.0, %v1329
      %v1331 = vpop.f32.mrb[0].mxu0
      %v1332 = vpop.f32.mrb[0].mxu0
      %v1333 = vadd.f32 0.0, %v1332
      %v1334 = vpop.f32.mrb[0].mxu0
      %1335 = vmatprep.mubr.bf16.mxu0 0
      %1336 = vmatmul.mubr.bf16.gmra.mrb[0].mxu0 %v764
      %v1337 = vpop.f32.mrb[0].mxu0
      %v1338 = vadd.f32 0.0, %v1337
      %v1339 = vpop.f32.mrb[0].mxu0
      %v1340 = vpop.f32.mrb[0].mxu0
      %v1341 = vadd.f32 0.0, %v1340
      %v1342 = vpop.f32.mrb[0].mxu0
      %1343 = vmatprep.mubr.bf16.mxu0 0
      %1344 = vmatmul.mubr.bf16.gmra.mrb[0].mxu0 %v765
      %v1345 = vpop.f32.mrb[0].mxu0
      %v1346 = vadd.f32 0.0, %v1345
      %v1347 = vpop.f32.mrb[0].mxu0
      %v1348 = vpop.f32.mrb[0].mxu0
      %v1349 = vadd.f32 0.0, %v1348
      %v1350 = vpop.f32.mrb[0].mxu0
      %1351 = vmatprep.mubr.bf16.mxu0 0
      %1352 = vmatmul.mubr.bf16.gmra.mrb[0].mxu0 %v766
      %v1353 = vpop.f32.mrb[0].mxu0
      %v1354 = vadd.f32 0.0, %v1353
      %v1355 = vpop.f32.mrb[0].mxu0
      %v1356 = vpop.f32.mrb[0].mxu0
      %v1357 = vadd.f32 0.0, %v1356
      %v1358 = vpop.f32.mrb[0].mxu0
      %1359 = vmatprep.mubr.bf16.mxu0 0
      %1360 = vmatmul.mubr.bf16.gmra.mrb[0].mxu0 %v767
      %v1361 = vpop.f32.mrb[0].mxu0
      %v1362 = vadd.f32 0.0, %v1361
      %v1363 = vpop.f32.mrb[0].mxu0
      %v1364 = vpop.f32.mrb[0].mxu0
      %v1365 = vadd.f32 0.0, %v1364
      %v1366 = vpop.f32.mrb[0].mxu0
      %1367 = vmatprep.mubr.bf16.mxu0 0
      %1368 = vmatmul.mubr.bf16.gmra.mrb[0].mxu0 %v768
      %v1369 = vpop.f32.mrb[0].mxu0
      %v1370 = vadd.f32 0.0, %v1369
      %v1371 = vpop.f32.mrb[0].mxu0
      %v1372 = vpop.f32.mrb[0].mxu0
      %v1373 = vadd.f32 0.0, %v1372
      %v1374 = vpop.f32.mrb[0].mxu0
      %1375 = vmatprep.mubr.bf16.mxu0 0
      %1376 = vmatmul.mubr.bf16.gmra.mrb[0].mxu0 %v769
      %v1377 = vpop.f32.mrb[0].mxu0
      %v1378 = vadd.f32 0.0, %v1377
      %v1379 = vpop.f32.mrb[0].mxu0
      %v1380 = vpop.f32.mrb[0].mxu0
      %v1381 = vadd.f32 0.0, %v1380
      %v1382 = vpop.f32.mrb[0].mxu0
      %1383 = vmatprep.mubr.bf16.mxu0 0
      %1384 = vmatmul.mubr.bf16.gmra.mrb[0].mxu0 %v770
      %v1385 = vpop.f32.mrb[0].mxu0
      %v1386 = vadd.f32 0.0, %v1385
      %v1387 = vpop.f32.mrb[0].mxu0
      %v1388 = vpop.f32.mrb[0].mxu0
      %v1389 = vadd.f32 0.0, %v1388
      %v1390 = vpop.f32.mrb[0].mxu0
      %1391 = vmatprep.mubr.bf16.mxu0 0
      %1392 = vmatmul.mubr.bf16.gmra.mrb[0].mxu0 %v771
      %v1393 = vpop.f32.mrb[0].mxu0
      %v1394 = vadd.f32 0.0, %v1393
      %v1395 = vpop.f32.mrb[0].mxu0
      %v1396 = vpop.f32.mrb[0].mxu0
      %v1397 = vadd.f32 0.0, %v1396
      %v1398 = vpop.f32.mrb[0].mxu0
      %1399 = vmatprep.mubr.bf16.mxu0 0
      %1400 = vmatmul.mubr.bf16.gmra.mrb[0].mxu0 %v772
      %v1401 = vpop.f32.mrb[0].mxu0
      %v1402 = vadd.f32 0.0, %v1401
      %v1403 = vpop.f32.mrb[0].mxu0
      %v1404 = vpop.f32.mrb[0].mxu0
      %v1405 = vadd.f32 0.0, %v1404
      %v1406 = vpop.f32.mrb[0].mxu0
      %1407 = vmatprep.mubr.bf16.mxu0 0
      %1408 = vmatmul.mubr.bf16.gmra.mrb[0].mxu0 %v773
      %v1409 = vpop.f32.mrb[0].mxu0
      %v1410 = vadd.f32 0.0, %v1409
      %v1411 = vpop.f32.mrb[0].mxu0
      %v1412 = vpop.f32.mrb[0].mxu0
      %v1413 = vadd.f32 0.0, %v1412
      %v1414 = vpop.f32.mrb[0].mxu0
      %1415 = vmatprep.mubr.bf16.mxu0 0
      %1416 = vmatmul.mubr.bf16.gmra.mrb[0].mxu0 %v774
      %v1417 = vpop.f32.mrb[0].mxu0
      %v1418 = vadd.f32 0.0, %v1417
      %v1419 = vpop.f32.mrb[0].mxu0
      %v1420 = vpop.f32.mrb[0].mxu0
      %v1421 = vadd.f32 0.0, %v1420
      %v1422 = vpop.f32.mrb[0].mxu0
      %1423 = vmatprep.mubr.bf16.mxu0 0
      %1424 = vmatmul.mubr.bf16.gmra.mrb[0].mxu0 %v775
      %v1425 = vpop.f32.mrb[0].mxu0
      %v1426 = vadd.f32 0.0, %v1425
      %v1427 = vpop.f32.mrb[0].mxu0
      %v1428 = vpop.f32.mrb[0].mxu0
      %v1429 = vadd.f32 0.0, %v1428
      %v1430 = vpop.f32.mrb[0].mxu0
      %1431 = vmatprep.mubr.bf16.mxu0 0
      %1432 = vmatmul.mubr.bf16.gmra.mrb[0].mxu0 %v776
      %v1433 = vpop.f32.mrb[0].mxu0
      %v1434 = vadd.f32 0.0, %v1433
      %v1435 = vpop.f32.mrb[0].mxu0
      %v1436 = vpop.f32.mrb[0].mxu0
      %v1437 = vadd.f32 0.0, %v1436
      %v1438 = vpop.f32.mrb[0].mxu0
      %1439 = vmatprep.mubr.bf16.mxu0 0
      %1440 = vmatmul.mubr.bf16.gmra.mrb[0].mxu0 %v777
      %v1441 = vpop.f32.mrb[0].mxu0
      %v1442 = vadd.f32 0.0, %v1441
      %v1443 = vpop.f32.mrb[0].mxu0
      %v1444 = vpop.f32.mrb[0].mxu0
      %v1445 = vadd.f32 0.0, %v1444
      %v1446 = vpop.f32.mrb[0].mxu0
      %1447 = vmatprep.mubr.bf16.mxu0 0
      %1448 = vmatmul.mubr.bf16.gmra.mrb[0].mxu0 %v778
      %v1449 = vpop.f32.mrb[0].mxu0
      %v1450 = vadd.f32 0.0, %v1449
      %v1451 = vpop.f32.mrb[0].mxu0
      %v1452 = vpop.f32.mrb[0].mxu0
      %v1453 = vadd.f32 0.0, %v1452
      %v1454 = vpop.f32.mrb[0].mxu0
      %1455 = vmatprep.mubr.bf16.mxu0 0
      %1456 = vmatmul.mubr.bf16.gmra.mrb[0].mxu0 %v779
      %v1457 = vpop.f32.mrb[0].mxu0
      %v1458 = vadd.f32 0.0, %v1457
      %v1459 = vpop.f32.mrb[0].mxu0
      %v1460 = vpop.f32.mrb[0].mxu0
      %v1461 = vadd.f32 0.0, %v1460
      %v1462 = vpop.f32.mrb[0].mxu0
      %1463 = vmatprep.mubr.bf16.mxu0 0
      %1464 = vmatmul.mubr.bf16.gmra.mrb[0].mxu0 %v780
      %v1465 = vpop.f32.mrb[0].mxu0
      %v1466 = vadd.f32 0.0, %v1465
      %v1467 = vpop.f32.mrb[0].mxu0
      %v1468 = vpop.f32.mrb[0].mxu0
      %v1469 = vadd.f32 0.0, %v1468
      %v1470 = vpop.f32.mrb[0].mxu0
      %1471 = vmatprep.mubr.bf16.mxu0 0
      %1472 = vmatmul.mubr.bf16.gmra.mrb[0].mxu0 %v781
      %v1473 = vpop.f32.mrb[0].mxu0
      %v1474 = vadd.f32 0.0, %v1473
      %v1475 = vpop.f32.mrb[0].mxu0
      %v1476 = vpop.f32.mrb[0].mxu0
      %v1477 = vadd.f32 0.0, %v1476
      %v1478 = vpop.f32.mrb[0].mxu0
      %1479 = vmatprep.mubr.bf16.mxu0 0
      %1480 = vmatmul.mubr.bf16.gmra.mrb[0].mxu0 %v782
      %v1481 = vpop.f32.mrb[0].mxu0
      %v1482 = vadd.f32 0.0, %v1481
      %v1483 = vpop.f32.mrb[0].mxu0
      %v1484 = vpop.f32.mrb[0].mxu0
      %v1485 = vadd.f32 0.0, %v1484
      %v1486 = vpop.f32.mrb[0].mxu0
      %1487 = vmatprep.mubr.bf16.mxu0 0
      %1488 = vmatmul.mubr.bf16.gmra.mrb[0].mxu0 %v783
      %v1489 = vpop.f32.mrb[0].mxu0
      %v1490 = vadd.f32 0.0, %v1489
      %v1491 = vpop.f32.mrb[0].mxu0
      %v1492 = vpop.f32.mrb[0].mxu0
      %v1493 = vadd.f32 0.0, %v1492
      %v1494 = vpop.f32.mrb[0].mxu0
      %1495 = vmatprep.mubr.bf16.mxu0 0
      %1496 = vmatmul.mubr.bf16.gmra.mrb[0].mxu0 %v784
      %v1497 = vpop.f32.mrb[0].mxu0
      %v1498 = vadd.f32 0.0, %v1497
      %v1499 = vpop.f32.mrb[0].mxu0
      %v1500 = vpop.f32.mrb[0].mxu0
      %v1501 = vadd.f32 0.0, %v1500
      %v1502 = vpop.f32.mrb[0].mxu0
      %1503 = vmatprep.mubr.bf16.mxu0 0
      %1504 = vmatmul.mubr.bf16.gmra.mrb[0].mxu0 %v785
      %v1505 = vpop.f32.mrb[0].mxu0
      %v1506 = vadd.f32 0.0, %v1505
      %v1507 = vpop.f32.mrb[0].mxu0
      %v1508 = vpop.f32.mrb[0].mxu0
      %v1509 = vadd.f32 0.0, %v1508
      %v1510 = vpop.f32.mrb[0].mxu0
      %1511 = vmatprep.mubr.bf16.mxu0 0
      %1512 = vmatmul.mubr.bf16.gmra.mrb[0].mxu0 %v786
      %v1513 = vpop.f32.mrb[0].mxu0
      %v1514 = vadd.f32 0.0, %v1513
      %v1515 = vpop.f32.mrb[0].mxu0
      %v1516 = vpop.f32.mrb[0].mxu0
      %v1517 = vadd.f32 0.0, %v1516
      %v1518 = vpop.f32.mrb[0].mxu0
      %1519 = vmatprep.mubr.bf16.mxu0 0
      %1520 = vmatmul.mubr.bf16.gmra.mrb[0].mxu0 %v787
      %v1521 = vpop.f32.mrb[0].mxu0
      %v1522 = vadd.f32 0.0, %v1521
      %v1523 = vpop.f32.mrb[0].mxu0
      %v1524 = vpop.f32.mrb[0].mxu0
      %v1525 = vadd.f32 0.0, %v1524
      %v1526 = vpop.f32.mrb[0].mxu0
      %1527 = vmatprep.mubr.bf16.mxu0 0
      %1528 = vmatmul.mubr.bf16.gmra.mrb[0].mxu0 %v788
      %v1529 = vpop.f32.mrb[0].mxu0
      %v1530 = vadd.f32 0.0, %v1529
      %v1531 = vpop.f32.mrb[0].mxu0
      %v1532 = vpop.f32.mrb[0].mxu0
      %v1533 = vadd.f32 0.0, %v1532
      %v1534 = vpop.f32.mrb[0].mxu0
      %1535 = vmatprep.mubr.bf16.mxu0 0
      %1536 = vmatmul.mubr.bf16.gmra.mrb[0].mxu0 %v789
      %v1537 = vpop.f32.mrb[0].mxu0
      %v1538 = vadd.f32 0.0, %v1537
      %v1539 = vpop.f32.mrb[0].mxu0
      %v1540 = vpop.f32.mrb[0].mxu0
      %v1541 = vadd.f32 0.0, %v1540
      %v1542 = vpop.f32.mrb[0].mxu0
      %1543 = vmatprep.mubr.bf16.mxu0 0
      %1544 = vmatmul.mubr.bf16.gmra.mrb[0].mxu0 %v790
      %v1545 = vpop.f32.mrb[0].mxu0
      %v1546 = vadd.f32 0.0, %v1545
      %v1547 = vpop.f32.mrb[0].mxu0
      %v1548 = vpop.f32.mrb[0].mxu0
      %v1549 = vadd.f32 0.0, %v1548
      %v1550 = vpop.f32.mrb[0].mxu0
      %1551 = vmatprep.mubr.bf16.mxu0 0
      %1552 = vmatmul.mubr.bf16.gmra.mrb[0].mxu0 %v791
      %v1553 = vpop.f32.mrb[0].mxu0
      %v1554 = vadd.f32 0.0, %v1553
      %v1555 = vpop.f32.mrb[0].mxu0
      %v1556 = vpop.f32.mrb[0].mxu0
      %v1557 = vadd.f32 0.0, %v1556
      %v1558 = vpop.f32.mrb[0].mxu0
      %1559 = vmatprep.mubr.bf16.mxu0 0
      %1560 = vmatmul.mubr.bf16.gmra.mrb[0].mxu0 %v792
      %v1561 = vpop.f32.mrb[0].mxu0
      %v1562 = vadd.f32 0.0, %v1561
      %v1563 = vpop.f32.mrb[0].mxu0
      %v1564 = vpop.f32.mrb[0].mxu0
      %v1565 = vadd.f32 0.0, %v1564
      %v1566 = vpop.f32.mrb[0].mxu0
      %1567 = vmatprep.mubr.bf16.mxu0 0
      %1568 = vmatmul.mubr.bf16.gmra.mrb[0].mxu0 %v793
      %v1569 = vpop.f32.mrb[0].mxu0
      %v1570 = vadd.f32 0.0, %v1569
      %v1571 = vpop.f32.mrb[0].mxu0
      %v1572 = vpop.f32.mrb[0].mxu0
      %v1573 = vadd.f32 0.0, %v1572
      %v1574 = vpop.f32.mrb[0].mxu0
      %1575 = vmatprep.mubr.bf16.mxu0 0
      %1576 = vmatmul.mubr.bf16.gmra.mrb[0].mxu0 %v794
      %v1577 = vpop.f32.mrb[0].mxu0
      %v1578 = vadd.f32 0.0, %v1577
      %v1579 = vpop.f32.mrb[0].mxu0
      %v1580 = vpop.f32.mrb[0].mxu0
      %v1581 = vadd.f32 0.0, %v1580
      %v1582 = vpop.f32.mrb[0].mxu0
      %1583 = vmatprep.mubr.bf16.mxu0 0
      %1584 = vmatmul.mubr.bf16.gmra.mrb[0].mxu0 %v795
      %v1585 = vpop.f32.mrb[0].mxu0
      %v1586 = vadd.f32 0.0, %v1585
      %v1587 = vpop.f32.mrb[0].mxu0
      %v1588 = vpop.f32.mrb[0].mxu0
      %v1589 = vadd.f32 0.0, %v1588
      %v1590 = vpop.f32.mrb[0].mxu0
      %1591 = vmatprep.mubr.bf16.mxu0 0
      %1592 = vmatmul.mubr.bf16.gmra.mrb[0].mxu0 %v796
      %v1593 = vpop.f32.mrb[0].mxu0
      %v1594 = vadd.f32 0.0, %v1593
      %v1595 = vpop.f32.mrb[0].mxu0
      %v1596 = vpop.f32.mrb[0].mxu0
      %v1597 = vadd.f32 0.0, %v1596
      %v1598 = vpop.f32.mrb[0].mxu0
      %1599 = vmatprep.mubr.bf16.mxu0 0
      %1600 = vmatmul.mubr.bf16.gmra.mrb[0].mxu0 %v797
      %v1601 = vpop.f32.mrb[0].mxu0
      %v1602 = vadd.f32 0.0, %v1601
      %v1603 = vpop.f32.mrb[0].mxu0
      %v1604 = vpop.f32.mrb[0].mxu0
      %v1605 = vadd.f32 0.0, %v1604
      %v1606 = vpop.f32.mrb[0].mxu0
      %1607 = vmatprep.mubr.bf16.mxu0 0
      %1608 = vmatmul.mubr.bf16.gmra.mrb[0].mxu0 %v798
      %v1609 = vpop.f32.mrb[0].mxu0
      %v1610 = vadd.f32 0.0, %v1609
      %v1611 = vpop.f32.mrb[0].mxu0
      %v1612 = vpop.f32.mrb[0].mxu0
      %v1613 = vadd.f32 0.0, %v1612
      %v1614 = vpop.f32.mrb[0].mxu0
      %1615 = vmatprep.mubr.bf16.mxu0 0
      %1616 = vmatmul.mubr.bf16.gmra.mrb[0].mxu0 %v799
      %v1617 = vpop.f32.mrb[0].mxu0
      %v1618 = vadd.f32 0.0, %v1617
      %v1619 = vpop.f32.mrb[0].mxu0
      %v1620 = vpop.f32.mrb[0].mxu0
      %v1621 = vadd.f32 0.0, %v1620
      %v1622 = vpop.f32.mrb[0].mxu0
      %1623 = vmatprep.mubr.bf16.mxu0 0
      %1624 = vmatmul.mubr.bf16.gmra.mrb[0].mxu0 %v800
      %v1625 = vpop.f32.mrb[0].mxu0
      %v1626 = vadd.f32 0.0, %v1625
      %v1627 = vpop.f32.mrb[0].mxu0
      %v1628 = vpop.f32.mrb[0].mxu0
      %v1629 = vadd.f32 0.0, %v1628
      %v1630 = vpop.f32.mrb[0].mxu0
      %1631 = vmatprep.mubr.bf16.mxu0 0
      %1632 = vmatmul.mubr.bf16.gmra.mrb[0].mxu0 %v801
      %v1633 = vpop.f32.mrb[0].mxu0
      %v1634 = vadd.f32 0.0, %v1633
      %v1635 = vpop.f32.mrb[0].mxu0
      %v1636 = vpop.f32.mrb[0].mxu0
      %v1637 = vadd.f32 0.0, %v1636
      %v1638 = vpop.f32.mrb[0].mxu0
      %1639 = vmatprep.mubr.bf16.mxu0 0
      %1640 = vmatmul.mubr.bf16.gmra.mrb[0].mxu0 %v802
      %v1641 = vpop.f32.mrb[0].mxu0
      %v1642 = vadd.f32 0.0, %v1641
      %v1643 = vpop.f32.mrb[0].mxu0
      %v1644 = vpop.f32.mrb[0].mxu0
      %v1645 = vadd.f32 0.0, %v1644
      %v1646 = vpop.f32.mrb[0].mxu0
      %1647 = vmatprep.mubr.bf16.mxu0 0
      %1648 = vmatmul.mubr.bf16.gmra.mrb[0].mxu0 %v803
      %v1649 = vpop.f32.mrb[0].mxu0
      %v1650 = vadd.f32 0.0, %v1649
      %v1651 = vpop.f32.mrb[0].mxu0
      %v1652 = vpop.f32.mrb[0].mxu0
      %v1653 = vadd.f32 0.0, %v1652
      %v1654 = vpop.f32.mrb[0].mxu0
      %1655 = vmatprep.mubr.bf16.mxu0 0
      %1656 = vmatmul.mubr.bf16.gmra.mrb[0].mxu0 %v804
      %v1657 = vpop.f32.mrb[0].mxu0
      %v1658 = vadd.f32 0.0, %v1657
      %v1659 = vpop.f32.mrb[0].mxu0
      %v1660 = vpop.f32.mrb[0].mxu0
      %v1661 = vadd.f32 0.0, %v1660
      %v1662 = vpop.f32.mrb[0].mxu0
      %1663 = vmatprep.mubr.bf16.mxu0 0
      %1664 = vmatmul.mubr.bf16.gmra.mrb[0].mxu0 %v805
      %v1665 = vpop.f32.mrb[0].mxu0
      %v1666 = vadd.f32 0.0, %v1665
      %v1667 = vpop.f32.mrb[0].mxu0
      %v1668 = vpop.f32.mrb[0].mxu0
      %v1669 = vadd.f32 0.0, %v1668
      %v1670 = vpop.f32.mrb[0].mxu0
      %1671 = vmatprep.mubr.bf16.mxu0 0
      %1672 = vmatmul.mubr.bf16.gmra.mrb[0].mxu0 %v806
      %v1673 = vpop.f32.mrb[0].mxu0
      %v1674 = vadd.f32 0.0, %v1673
      %v1675 = vpop.f32.mrb[0].mxu0
      %v1676 = vpop.f32.mrb[0].mxu0
      %v1677 = vadd.f32 0.0, %v1676
      %v1678 = vpop.f32.mrb[0].mxu0
      %1679 = vdwg.mxu0
      %vm1680 = vcmask 523264
      %v1681 = vsel %vm1680, %v978, -inf
      %v1682 = vrot.slane %v1681, 4
      %v1683 = vmax.f32 %v1681, %v1682
      %v1684 = vrot.slane %v1683, 2
      %v1685 = vmax.f32 %v1683, %v1684
      %v1686 = vrot.slane %v1685, 1
      %v1687 = vmax.f32 %v1685, %v1686
      %v1688 = vsel %vm1680, %v981, -inf
      %v1689 = vrot.slane %v1688, 4
      %v1690 = vmax.f32 %v1688, %v1689
      %v1691 = vrot.slane %v1690, 2
      %v1692 = vmax.f32 %v1690, %v1691
      %v1693 = vrot.slane %v1692, 1
      %v1694 = vmax.f32 %v1692, %v1693
      %v1695 = vsel %vm1680, %v986, -inf
      %v1696 = vrot.slane %v1695, 4
      %v1697 = vmax.f32 %v1695, %v1696
      %v1698 = vrot.slane %v1697, 2
      %v1699 = vmax.f32 %v1697, %v1698
      %v1700 = vrot.slane %v1699, 1
      %v1701 = vmax.f32 %v1699, %v1700
      %v1702 = vsel %vm1680, %v989, -inf
      %v1703 = vrot.slane %v1702, 4
      %v1704 = vmax.f32 %v1702, %v1703
      %v1705 = vrot.slane %v1704, 2
      %v1706 = vmax.f32 %v1704, %v1705
      %v1707 = vrot.slane %v1706, 1
      %v1708 = vmax.f32 %v1706, %v1707
      %v1709 = vsel %vm1680, %v994, -inf
      %v1710 = vrot.slane %v1709, 4
      %v1711 = vmax.f32 %v1709, %v1710
      %v1712 = vrot.slane %v1711, 2
      %v1713 = vmax.f32 %v1711, %v1712
      %v1714 = vrot.slane %v1713, 1
      %v1715 = vmax.f32 %v1713, %v1714
      %v1716 = vsel %vm1680, %v997, -inf
      %v1717 = vrot.slane %v1716, 4
      %v1718 = vmax.f32 %v1716, %v1717
      %v1719 = vrot.slane %v1718, 2
      %v1720 = vmax.f32 %v1718, %v1719
      %v1721 = vrot.slane %v1720, 1
      %v1722 = vmax.f32 %v1720, %v1721
      %v1723 = vsel %vm1680, %v1002, -inf
      %v1724 = vrot.slane %v1723, 4
      %v1725 = vmax.f32 %v1723, %v1724
      %v1726 = vrot.slane %v1725, 2
      %v1727 = vmax.f32 %v1725, %v1726
      %v1728 = vrot.slane %v1727, 1
      %v1729 = vmax.f32 %v1727, %v1728
      %v1730 = vsel %vm1680, %v1005, -inf
      %v1731 = vrot.slane %v1730, 4
      %v1732 = vmax.f32 %v1730, %v1731
      %v1733 = vrot.slane %v1732, 2
      %v1734 = vmax.f32 %v1732, %v1733
      %v1735 = vrot.slane %v1734, 1
      %v1736 = vmax.f32 %v1734, %v1735
      %v1737 = vsel %vm1680, %v1010, -inf
      %v1738 = vrot.slane %v1737, 4
      %v1739 = vmax.f32 %v1737, %v1738
      %v1740 = vrot.slane %v1739, 2
      %v1741 = vmax.f32 %v1739, %v1740
      %v1742 = vrot.slane %v1741, 1
      %v1743 = vmax.f32 %v1741, %v1742
      %v1744 = vsel %vm1680, %v1013, -inf
      %v1745 = vrot.slane %v1744, 4
      %v1746 = vmax.f32 %v1744, %v1745
      %v1747 = vrot.slane %v1746, 2
      %v1748 = vmax.f32 %v1746, %v1747
      %v1749 = vrot.slane %v1748, 1
      %v1750 = vmax.f32 %v1748, %v1749
      %v1751 = vsel %vm1680, %v1018, -inf
      %v1752 = vrot.slane %v1751, 4
      %v1753 = vmax.f32 %v1751, %v1752
      %v1754 = vrot.slane %v1753, 2
      %v1755 = vmax.f32 %v1753, %v1754
      %v1756 = vrot.slane %v1755, 1
      %v1757 = vmax.f32 %v1755, %v1756
      %v1758 = vsel %vm1680, %v1021, -inf
      %v1759 = vrot.slane %v1758, 4
      %v1760 = vmax.f32 %v1758, %v1759
      %v1761 = vrot.slane %v1760, 2
      %v1762 = vmax.f32 %v1760, %v1761
      %v1763 = vrot.slane %v1762, 1
      %v1764 = vmax.f32 %v1762, %v1763
      %v1765 = vsel %vm1680, %v1026, -inf
      %v1766 = vrot.slane %v1765, 4
      %v1767 = vmax.f32 %v1765, %v1766
      %v1768 = vrot.slane %v1767, 2
      %v1769 = vmax.f32 %v1767, %v1768
      %v1770 = vrot.slane %v1769, 1
      %v1771 = vmax.f32 %v1769, %v1770
      %v1772 = vsel %vm1680, %v1029, -inf
      %v1773 = vrot.slane %v1772, 4
      %v1774 = vmax.f32 %v1772, %v1773
      %v1775 = vrot.slane %v1774, 2
      %v1776 = vmax.f32 %v1774, %v1775
      %v1777 = vrot.slane %v1776, 1
      %v1778 = vmax.f32 %v1776, %v1777
      %v1779 = vsel %vm1680, %v1034, -inf
      %v1780 = vrot.slane %v1779, 4
      %v1781 = vmax.f32 %v1779, %v1780
      %v1782 = vrot.slane %v1781, 2
      %v1783 = vmax.f32 %v1781, %v1782
      %v1784 = vrot.slane %v1783, 1
      %v1785 = vmax.f32 %v1783, %v1784
      %v1786 = vsel %vm1680, %v1037, -inf
      %v1787 = vrot.slane %v1786, 4
      %v1788 = vmax.f32 %v1786, %v1787
      %v1789 = vrot.slane %v1788, 2
      %v1790 = vmax.f32 %v1788, %v1789
      %v1791 = vrot.slane %v1790, 1
      %v1792 = vmax.f32 %v1790, %v1791
      %v1793 = vsel %vm1680, %v1042, -inf
      %v1794 = vrot.slane %v1793, 4
      %v1795 = vmax.f32 %v1793, %v1794
      %v1796 = vrot.slane %v1795, 2
      %v1797 = vmax.f32 %v1795, %v1796
      %v1798 = vrot.slane %v1797, 1
      %v1799 = vmax.f32 %v1797, %v1798
      %v1800 = vsel %vm1680, %v1045, -inf
      %v1801 = vrot.slane %v1800, 4
      %v1802 = vmax.f32 %v1800, %v1801
      %v1803 = vrot.slane %v1802, 2
      %v1804 = vmax.f32 %v1802, %v1803
      %v1805 = vrot.slane %v1804, 1
      %v1806 = vmax.f32 %v1804, %v1805
      %v1807 = vsel %vm1680, %v1050, -inf
      %v1808 = vrot.slane %v1807, 4
      %v1809 = vmax.f32 %v1807, %v1808
      %v1810 = vrot.slane %v1809, 2
      %v1811 = vmax.f32 %v1809, %v1810
      %v1812 = vrot.slane %v1811, 1
      %v1813 = vmax.f32 %v1811, %v1812
      %v1814 = vsel %vm1680, %v1053, -inf
      %v1815 = vrot.slane %v1814, 4
      %v1816 = vmax.f32 %v1814, %v1815
      %v1817 = vrot.slane %v1816, 2
      %v1818 = vmax.f32 %v1816, %v1817
      %v1819 = vrot.slane %v1818, 1
      %v1820 = vmax.f32 %v1818, %v1819
      %v1821 = vsel %vm1680, %v1058, -inf
      %v1822 = vrot.slane %v1821, 4
      %v1823 = vmax.f32 %v1821, %v1822
      %v1824 = vrot.slane %v1823, 2
      %v1825 = vmax.f32 %v1823, %v1824
      %v1826 = vrot.slane %v1825, 1
      %v1827 = vmax.f32 %v1825, %v1826
      %v1828 = vsel %vm1680, %v1061, -inf
      %v1829 = vrot.slane %v1828, 4
      %v1830 = vmax.f32 %v1828, %v1829
      %v1831 = vrot.slane %v1830, 2
      %v1832 = vmax.f32 %v1830, %v1831
      %v1833 = vrot.slane %v1832, 1
      %v1834 = vmax.f32 %v1832, %v1833
      %v1835 = vsel %vm1680, %v1066, -inf
      %v1836 = vrot.slane %v1835, 4
      %v1837 = vmax.f32 %v1835, %v1836
      %v1838 = vrot.slane %v1837, 2
      %v1839 = vmax.f32 %v1837, %v1838
      %v1840 = vrot.slane %v1839, 1
      %v1841 = vmax.f32 %v1839, %v1840
      %v1842 = vsel %vm1680, %v1069, -inf
      %v1843 = vrot.slane %v1842, 4
      %v1844 = vmax.f32 %v1842, %v1843
      %v1845 = vrot.slane %v1844, 2
      %v1846 = vmax.f32 %v1844, %v1845
      %v1847 = vrot.slane %v1846, 1
      %v1848 = vmax.f32 %v1846, %v1847
      %v1849 = vsel %vm1680, %v1074, -inf
      %v1850 = vrot.slane %v1849, 4
      %v1851 = vmax.f32 %v1849, %v1850
      %v1852 = vrot.slane %v1851, 2
      %v1853 = vmax.f32 %v1851, %v1852
      %v1854 = vrot.slane %v1853, 1
      %v1855 = vmax.f32 %v1853, %v1854
      %v1856 = vsel %vm1680, %v1077, -inf
      %v1857 = vrot.slane %v1856, 4
      %v1858 = vmax.f32 %v1856, %v1857
      %v1859 = vrot.slane %v1858, 2
      %v1860 = vmax.f32 %v1858, %v1859
      %v1861 = vrot.slane %v1860, 1
      %v1862 = vmax.f32 %v1860, %v1861
      %v1863 = vsel %vm1680, %v1082, -inf
      %v1864 = vrot.slane %v1863, 4
      %v1865 = vmax.f32 %v1863, %v1864
      %v1866 = vrot.slane %v1865, 2
      %v1867 = vmax.f32 %v1865, %v1866
      %v1868 = vrot.slane %v1867, 1
      %v1869 = vmax.f32 %v1867, %v1868
      %v1870 = vsel %vm1680, %v1085, -inf
      %v1871 = vrot.slane %v1870, 4
      %v1872 = vmax.f32 %v1870, %v1871
      %v1873 = vrot.slane %v1872, 2
      %v1874 = vmax.f32 %v1872, %v1873
      %v1875 = vrot.slane %v1874, 1
      %v1876 = vmax.f32 %v1874, %v1875
      %v1877 = vsel %vm1680, %v1090, -inf
      %v1878 = vrot.slane %v1877, 4
      %v1879 = vmax.f32 %v1877, %v1878
      %v1880 = vrot.slane %v1879, 2
      %v1881 = vmax.f32 %v1879, %v1880
      %v1882 = vrot.slane %v1881, 1
      %v1883 = vmax.f32 %v1881, %v1882
      %v1884 = vsel %vm1680, %v1093, -inf
      %v1885 = vrot.slane %v1884, 4
      %v1886 = vmax.f32 %v1884, %v1885
      %v1887 = vrot.slane %v1886, 2
      %v1888 = vmax.f32 %v1886, %v1887
      %v1889 = vrot.slane %v1888, 1
      %v1890 = vmax.f32 %v1888, %v1889
      %v1891 = vsel %vm1680, %v1098, -inf
      %v1892 = vrot.slane %v1891, 4
      %v1893 = vmax.f32 %v1891, %v1892
      %v1894 = vrot.slane %v1893, 2
      %v1895 = vmax.f32 %v1893, %v1894
      %v1896 = vrot.slane %v1895, 1
      %v1897 = vmax.f32 %v1895, %v1896
      %v1898 = vsel %vm1680, %v1101, -inf
      %v1899 = vrot.slane %v1898, 4
      %v1900 = vmax.f32 %v1898, %v1899
      %v1901 = vrot.slane %v1900, 2
      %v1902 = vmax.f32 %v1900, %v1901
      %v1903 = vrot.slane %v1902, 1
      %v1904 = vmax.f32 %v1902, %v1903
      %v1905 = vsel %vm1680, %v1106, -inf
      %v1906 = vrot.slane %v1905, 4
      %v1907 = vmax.f32 %v1905, %v1906
      %v1908 = vrot.slane %v1907, 2
      %v1909 = vmax.f32 %v1907, %v1908
      %v1910 = vrot.slane %v1909, 1
      %v1911 = vmax.f32 %v1909, %v1910
      %v1912 = vsel %vm1680, %v1109, -inf
      %v1913 = vrot.slane %v1912, 4
      %v1914 = vmax.f32 %v1912, %v1913
      %v1915 = vrot.slane %v1914, 2
      %v1916 = vmax.f32 %v1914, %v1915
      %v1917 = vrot.slane %v1916, 1
      %v1918 = vmax.f32 %v1916, %v1917
      %v1919 = vsel %vm1680, %v1114, -inf
      %v1920 = vrot.slane %v1919, 4
      %v1921 = vmax.f32 %v1919, %v1920
      %v1922 = vrot.slane %v1921, 2
      %v1923 = vmax.f32 %v1921, %v1922
      %v1924 = vrot.slane %v1923, 1
      %v1925 = vmax.f32 %v1923, %v1924
      %v1926 = vsel %vm1680, %v1117, -inf
      %v1927 = vrot.slane %v1926, 4
      %v1928 = vmax.f32 %v1926, %v1927
      %v1929 = vrot.slane %v1928, 2
      %v1930 = vmax.f32 %v1928, %v1929
      %v1931 = vrot.slane %v1930, 1
      %v1932 = vmax.f32 %v1930, %v1931
      %v1933 = vsel %vm1680, %v1122, -inf
      %v1934 = vrot.slane %v1933, 4
      %v1935 = vmax.f32 %v1933, %v1934
      %v1936 = vrot.slane %v1935, 2
      %v1937 = vmax.f32 %v1935, %v1936
      %v1938 = vrot.slane %v1937, 1
      %v1939 = vmax.f32 %v1937, %v1938
      %v1940 = vsel %vm1680, %v1125, -inf
      %v1941 = vrot.slane %v1940, 4
      %v1942 = vmax.f32 %v1940, %v1941
      %v1943 = vrot.slane %v1942, 2
      %v1944 = vmax.f32 %v1942, %v1943
      %v1945 = vrot.slane %v1944, 1
      %v1946 = vmax.f32 %v1944, %v1945
      %v1947 = vsel %vm1680, %v1130, -inf
      %v1948 = vrot.slane %v1947, 4
      %v1949 = vmax.f32 %v1947, %v1948
      %v1950 = vrot.slane %v1949, 2
      %v1951 = vmax.f32 %v1949, %v1950
      %v1952 = vrot.slane %v1951, 1
      %v1953 = vmax.f32 %v1951, %v1952
      %v1954 = vsel %vm1680, %v1133, -inf
      %v1955 = vrot.slane %v1954, 4
      %v1956 = vmax.f32 %v1954, %v1955
      %v1957 = vrot.slane %v1956, 2
      %v1958 = vmax.f32 %v1956, %v1957
      %v1959 = vrot.slane %v1958, 1
      %v1960 = vmax.f32 %v1958, %v1959
      %v1961 = vsel %vm1680, %v1138, -inf
      %v1962 = vrot.slane %v1961, 4
      %v1963 = vmax.f32 %v1961, %v1962
      %v1964 = vrot.slane %v1963, 2
      %v1965 = vmax.f32 %v1963, %v1964
      %v1966 = vrot.slane %v1965, 1
      %v1967 = vmax.f32 %v1965, %v1966
      %v1968 = vsel %vm1680, %v1141, -inf
      %v1969 = vrot.slane %v1968, 4
      %v1970 = vmax.f32 %v1968, %v1969
      %v1971 = vrot.slane %v1970, 2
      %v1972 = vmax.f32 %v1970, %v1971
      %v1973 = vrot.slane %v1972, 1
      %v1974 = vmax.f32 %v1972, %v1973
      %v1975 = vsel %vm1680, %v1146, -inf
      %v1976 = vrot.slane %v1975, 4
      %v1977 = vmax.f32 %v1975, %v1976
      %v1978 = vrot.slane %v1977, 2
      %v1979 = vmax.f32 %v1977, %v1978
      %v1980 = vrot.slane %v1979, 1
      %v1981 = vmax.f32 %v1979, %v1980
      %v1982 = vsel %vm1680, %v1149, -inf
      %v1983 = vrot.slane %v1982, 4
      %v1984 = vmax.f32 %v1982, %v1983
      %v1985 = vrot.slane %v1984, 2
      %v1986 = vmax.f32 %v1984, %v1985
      %v1987 = vrot.slane %v1986, 1
      %v1988 = vmax.f32 %v1986, %v1987
      %v1989 = vsel %vm1680, %v1154, -inf
      %v1990 = vrot.slane %v1989, 4
      %v1991 = vmax.f32 %v1989, %v1990
      %v1992 = vrot.slane %v1991, 2
      %v1993 = vmax.f32 %v1991, %v1992
      %v1994 = vrot.slane %v1993, 1
      %v1995 = vmax.f32 %v1993, %v1994
      %v1996 = vsel %vm1680, %v1157, -inf
      %v1997 = vrot.slane %v1996, 4
      %v1998 = vmax.f32 %v1996, %v1997
      %v1999 = vrot.slane %v1998, 2
      %v2000 = vmax.f32 %v1998, %v1999
      %v2001 = vrot.slane %v2000, 1
      %v2002 = vmax.f32 %v2000, %v2001
      %v2003 = vsel %vm1680, %v1162, -inf
      %v2004 = vrot.slane %v2003, 4
      %v2005 = vmax.f32 %v2003, %v2004
      %v2006 = vrot.slane %v2005, 2
      %v2007 = vmax.f32 %v2005, %v2006
      %v2008 = vrot.slane %v2007, 1
      %v2009 = vmax.f32 %v2007, %v2008
      %v2010 = vsel %vm1680, %v1165, -inf
      %v2011 = vrot.slane %v2010, 4
      %v2012 = vmax.f32 %v2010, %v2011
      %v2013 = vrot.slane %v2012, 2
      %v2014 = vmax.f32 %v2012, %v2013
      %v2015 = vrot.slane %v2014, 1
      %v2016 = vmax.f32 %v2014, %v2015
      %v2017 = vsel %vm1680, %v1170, -inf
      %v2018 = vrot.slane %v2017, 4
      %v2019 = vmax.f32 %v2017, %v2018
      %v2020 = vrot.slane %v2019, 2
      %v2021 = vmax.f32 %v2019, %v2020
      %v2022 = vrot.slane %v2021, 1
      %v2023 = vmax.f32 %v2021, %v2022
      %v2024 = vsel %vm1680, %v1173, -inf
      %v2025 = vrot.slane %v2024, 4
      %v2026 = vmax.f32 %v2024, %v2025
      %v2027 = vrot.slane %v2026, 2
      %v2028 = vmax.f32 %v2026, %v2027
      %v2029 = vrot.slane %v2028, 1
      %v2030 = vmax.f32 %v2028, %v2029
      %v2031 = vsel %vm1680, %v1178, -inf
      %v2032 = vrot.slane %v2031, 4
      %v2033 = vmax.f32 %v2031, %v2032
      %v2034 = vrot.slane %v2033, 2
      %v2035 = vmax.f32 %v2033, %v2034
      %v2036 = vrot.slane %v2035, 1
      %v2037 = vmax.f32 %v2035, %v2036
      %v2038 = vsel %vm1680, %v1181, -inf
      %v2039 = vrot.slane %v2038, 4
      %v2040 = vmax.f32 %v2038, %v2039
      %v2041 = vrot.slane %v2040, 2
      %v2042 = vmax.f32 %v2040, %v2041
      %v2043 = vrot.slane %v2042, 1
      %v2044 = vmax.f32 %v2042, %v2043
      %v2045 = vsel %vm1680, %v1186, -inf
      %v2046 = vrot.slane %v2045, 4
      %v2047 = vmax.f32 %v2045, %v2046
      %v2048 = vrot.slane %v2047, 2
      %v2049 = vmax.f32 %v2047, %v2048
      %v2050 = vrot.slane %v2049, 1
      %v2051 = vmax.f32 %v2049, %v2050
      %v2052 = vsel %vm1680, %v1189, -inf
      %v2053 = vrot.slane %v2052, 4
      %v2054 = vmax.f32 %v2052, %v2053
      %v2055 = vrot.slane %v2054, 2
      %v2056 = vmax.f32 %v2054, %v2055
      %v2057 = vrot.slane %v2056, 1
      %v2058 = vmax.f32 %v2056, %v2057
      %v2059 = vsel %vm1680, %v1194, -inf
      %v2060 = vrot.slane %v2059, 4
      %v2061 = vmax.f32 %v2059, %v2060
      %v2062 = vrot.slane %v2061, 2
      %v2063 = vmax.f32 %v2061, %v2062
      %v2064 = vrot.slane %v2063, 1
      %v2065 = vmax.f32 %v2063, %v2064
      %v2066 = vsel %vm1680, %v1197, -inf
      %v2067 = vrot.slane %v2066, 4
      %v2068 = vmax.f32 %v2066, %v2067
      %v2069 = vrot.slane %v2068, 2
      %v2070 = vmax.f32 %v2068, %v2069
      %v2071 = vrot.slane %v2070, 1
      %v2072 = vmax.f32 %v2070, %v2071
      %v2073 = vsel %vm1680, %v1202, -inf
      %v2074 = vrot.slane %v2073, 4
      %v2075 = vmax.f32 %v2073, %v2074
      %v2076 = vrot.slane %v2075, 2
      %v2077 = vmax.f32 %v2075, %v2076
      %v2078 = vrot.slane %v2077, 1
      %v2079 = vmax.f32 %v2077, %v2078
      %v2080 = vsel %vm1680, %v1205, -inf
      %v2081 = vrot.slane %v2080, 4
      %v2082 = vmax.f32 %v2080, %v2081
      %v2083 = vrot.slane %v2082, 2
      %v2084 = vmax.f32 %v2082, %v2083
      %v2085 = vrot.slane %v2084, 1
      %v2086 = vmax.f32 %v2084, %v2085
      %v2087 = vsel %vm1680, %v1210, -inf
      %v2088 = vrot.slane %v2087, 4
      %v2089 = vmax.f32 %v2087, %v2088
      %v2090 = vrot.slane %v2089, 2
      %v2091 = vmax.f32 %v2089, %v2090
      %v2092 = vrot.slane %v2091, 1
      %v2093 = vmax.f32 %v2091, %v2092
      %v2094 = vsel %vm1680, %v1213, -inf
      %v2095 = vrot.slane %v2094, 4
      %v2096 = vmax.f32 %v2094, %v2095
      %v2097 = vrot.slane %v2096, 2
      %v2098 = vmax.f32 %v2096, %v2097
      %v2099 = vrot.slane %v2098, 1
      %v2100 = vmax.f32 %v2098, %v2099
      %v2101 = vsel %vm1680, %v1218, -inf
      %v2102 = vrot.slane %v2101, 4
      %v2103 = vmax.f32 %v2101, %v2102
      %v2104 = vrot.slane %v2103, 2
      %v2105 = vmax.f32 %v2103, %v2104
      %v2106 = vrot.slane %v2105, 1
      %v2107 = vmax.f32 %v2105, %v2106
      %v2108 = vsel %vm1680, %v1221, -inf
      %v2109 = vrot.slane %v2108, 4
      %v2110 = vmax.f32 %v2108, %v2109
      %v2111 = vrot.slane %v2110, 2
      %v2112 = vmax.f32 %v2110, %v2111
      %v2113 = vrot.slane %v2112, 1
      %v2114 = vmax.f32 %v2112, %v2113
      %v2115 = vsel %vm1680, %v1226, -inf
      %v2116 = vrot.slane %v2115, 4
      %v2117 = vmax.f32 %v2115, %v2116
      %v2118 = vrot.slane %v2117, 2
      %v2119 = vmax.f32 %v2117, %v2118
      %v2120 = vrot.slane %v2119, 1
      %v2121 = vmax.f32 %v2119, %v2120
      %v2122 = vsel %vm1680, %v1229, -inf
      %v2123 = vrot.slane %v2122, 4
      %v2124 = vmax.f32 %v2122, %v2123
      %v2125 = vrot.slane %v2124, 2
      %v2126 = vmax.f32 %v2124, %v2125
      %v2127 = vrot.slane %v2126, 1
      %v2128 = vmax.f32 %v2126, %v2127
      %v2129 = vsel %vm1680, %v1234, -inf
      %v2130 = vrot.slane %v2129, 4
      %v2131 = vmax.f32 %v2129, %v2130
      %v2132 = vrot.slane %v2131, 2
      %v2133 = vmax.f32 %v2131, %v2132
      %v2134 = vrot.slane %v2133, 1
      %v2135 = vmax.f32 %v2133, %v2134
      %v2136 = vsel %vm1680, %v1237, -inf
      %v2137 = vrot.slane %v2136, 4
      %v2138 = vmax.f32 %v2136, %v2137
      %v2139 = vrot.slane %v2138, 2
      %v2140 = vmax.f32 %v2138, %v2139
      %v2141 = vrot.slane %v2140, 1
      %v2142 = vmax.f32 %v2140, %v2141
      %v2143 = vsel %vm1680, %v1242, -inf
      %v2144 = vrot.slane %v2143, 4
      %v2145 = vmax.f32 %v2143, %v2144
      %v2146 = vrot.slane %v2145, 2
      %v2147 = vmax.f32 %v2145, %v2146
      %v2148 = vrot.slane %v2147, 1
      %v2149 = vmax.f32 %v2147, %v2148
      %v2150 = vsel %vm1680, %v1245, -inf
      %v2151 = vrot.slane %v2150, 4
      %v2152 = vmax.f32 %v2150, %v2151
      %v2153 = vrot.slane %v2152, 2
      %v2154 = vmax.f32 %v2152, %v2153
      %v2155 = vrot.slane %v2154, 1
      %v2156 = vmax.f32 %v2154, %v2155
      %v2157 = vsel %vm1680, %v1250, -inf
      %v2158 = vrot.slane %v2157, 4
      %v2159 = vmax.f32 %v2157, %v2158
      %v2160 = vrot.slane %v2159, 2
      %v2161 = vmax.f32 %v2159, %v2160
      %v2162 = vrot.slane %v2161, 1
      %v2163 = vmax.f32 %v2161, %v2162
      %v2164 = vsel %vm1680, %v1253, -inf
      %v2165 = vrot.slane %v2164, 4
      %v2166 = vmax.f32 %v2164, %v2165
      %v2167 = vrot.slane %v2166, 2
      %v2168 = vmax.f32 %v2166, %v2167
      %v2169 = vrot.slane %v2168, 1
      %v2170 = vmax.f32 %v2168, %v2169
      %v2171 = vsel %vm1680, %v1258, -inf
      %v2172 = vrot.slane %v2171, 4
      %v2173 = vmax.f32 %v2171, %v2172
      %v2174 = vrot.slane %v2173, 2
      %v2175 = vmax.f32 %v2173, %v2174
      %v2176 = vrot.slane %v2175, 1
      %v2177 = vmax.f32 %v2175, %v2176
      %v2178 = vsel %vm1680, %v1261, -inf
      %v2179 = vrot.slane %v2178, 4
      %v2180 = vmax.f32 %v2178, %v2179
      %v2181 = vrot.slane %v2180, 2
      %v2182 = vmax.f32 %v2180, %v2181
      %v2183 = vrot.slane %v2182, 1
      %v2184 = vmax.f32 %v2182, %v2183
      %v2185 = vsel %vm1680, %v1266, -inf
      %v2186 = vrot.slane %v2185, 4
      %v2187 = vmax.f32 %v2185, %v2186
      %v2188 = vrot.slane %v2187, 2
      %v2189 = vmax.f32 %v2187, %v2188
      %v2190 = vrot.slane %v2189, 1
      %v2191 = vmax.f32 %v2189, %v2190
      %v2192 = vsel %vm1680, %v1269, -inf
      %v2193 = vrot.slane %v2192, 4
      %v2194 = vmax.f32 %v2192, %v2193
      %v2195 = vrot.slane %v2194, 2
      %v2196 = vmax.f32 %v2194, %v2195
      %v2197 = vrot.slane %v2196, 1
      %v2198 = vmax.f32 %v2196, %v2197
      %v2199 = vsel %vm1680, %v1274, -inf
      %v2200 = vrot.slane %v2199, 4
      %v2201 = vmax.f32 %v2199, %v2200
      %v2202 = vrot.slane %v2201, 2
      %v2203 = vmax.f32 %v2201, %v2202
      %v2204 = vrot.slane %v2203, 1
      %v2205 = vmax.f32 %v2203, %v2204
      %v2206 = vsel %vm1680, %v1277, -inf
      %v2207 = vrot.slane %v2206, 4
      %v2208 = vmax.f32 %v2206, %v2207
      %v2209 = vrot.slane %v2208, 2
      %v2210 = vmax.f32 %v2208, %v2209
      %v2211 = vrot.slane %v2210, 1
      %v2212 = vmax.f32 %v2210, %v2211
      %v2213 = vsel %vm1680, %v1282, -inf
      %v2214 = vrot.slane %v2213, 4
      %v2215 = vmax.f32 %v2213, %v2214
      %v2216 = vrot.slane %v2215, 2
      %v2217 = vmax.f32 %v2215, %v2216
      %v2218 = vrot.slane %v2217, 1
      %v2219 = vmax.f32 %v2217, %v2218
      %v2220 = vsel %vm1680, %v1285, -inf
      %v2221 = vrot.slane %v2220, 4
      %v2222 = vmax.f32 %v2220, %v2221
      %v2223 = vrot.slane %v2222, 2
      %v2224 = vmax.f32 %v2222, %v2223
      %v2225 = vrot.slane %v2224, 1
      %v2226 = vmax.f32 %v2224, %v2225
      %v2227 = vsel %vm1680, %v1290, -inf
      %v2228 = vrot.slane %v2227, 4
      %v2229 = vmax.f32 %v2227, %v2228
      %v2230 = vrot.slane %v2229, 2
      %v2231 = vmax.f32 %v2229, %v2230
      %v2232 = vrot.slane %v2231, 1
      %v2233 = vmax.f32 %v2231, %v2232
      %v2234 = vsel %vm1680, %v1293, -inf
      %v2235 = vrot.slane %v2234, 4
      %v2236 = vmax.f32 %v2234, %v2235
      %v2237 = vrot.slane %v2236, 2
      %v2238 = vmax.f32 %v2236, %v2237
      %v2239 = vrot.slane %v2238, 1
      %v2240 = vmax.f32 %v2238, %v2239
      %v2241 = vsel %vm1680, %v1298, -inf
      %v2242 = vrot.slane %v2241, 4
      %v2243 = vmax.f32 %v2241, %v2242
      %v2244 = vrot.slane %v2243, 2
      %v2245 = vmax.f32 %v2243, %v2244
      %v2246 = vrot.slane %v2245, 1
      %v2247 = vmax.f32 %v2245, %v2246
      %v2248 = vsel %vm1680, %v1301, -inf
      %v2249 = vrot.slane %v2248, 4
      %v2250 = vmax.f32 %v2248, %v2249
      %v2251 = vrot.slane %v2250, 2
      %v2252 = vmax.f32 %v2250, %v2251
      %v2253 = vrot.slane %v2252, 1
      %v2254 = vmax.f32 %v2252, %v2253
      %v2255 = vsel %vm1680, %v1306, -inf
      %v2256 = vrot.slane %v2255, 4
      %v2257 = vmax.f32 %v2255, %v2256
      %v2258 = vrot.slane %v2257, 2
      %v2259 = vmax.f32 %v2257, %v2258
      %v2260 = vrot.slane %v2259, 1
      %v2261 = vmax.f32 %v2259, %v2260
      %v2262 = vsel %vm1680, %v1309, -inf
      %v2263 = vrot.slane %v2262, 4
      %v2264 = vmax.f32 %v2262, %v2263
      %v2265 = vrot.slane %v2264, 2
      %v2266 = vmax.f32 %v2264, %v2265
      %v2267 = vrot.slane %v2266, 1
      %v2268 = vmax.f32 %v2266, %v2267
      %v2269 = vsel %vm1680, %v1314, -inf
      %v2270 = vrot.slane %v2269, 4
      %v2271 = vmax.f32 %v2269, %v2270
      %v2272 = vrot.slane %v2271, 2
      %v2273 = vmax.f32 %v2271, %v2272
      %v2274 = vrot.slane %v2273, 1
      %v2275 = vmax.f32 %v2273, %v2274
      %v2276 = vsel %vm1680, %v1317, -inf
      %v2277 = vrot.slane %v2276, 4
      %v2278 = vmax.f32 %v2276, %v2277
      %v2279 = vrot.slane %v2278, 2
      %v2280 = vmax.f32 %v2278, %v2279
      %v2281 = vrot.slane %v2280, 1
      %v2282 = vmax.f32 %v2280, %v2281
      %v2283 = vsel %vm1680, %v1322, -inf
      %v2284 = vrot.slane %v2283, 4
      %v2285 = vmax.f32 %v2283, %v2284
      %v2286 = vrot.slane %v2285, 2
      %v2287 = vmax.f32 %v2285, %v2286
      %v2288 = vrot.slane %v2287, 1
      %v2289 = vmax.f32 %v2287, %v2288
      %v2290 = vsel %vm1680, %v1325, -inf
      %v2291 = vrot.slane %v2290, 4
      %v2292 = vmax.f32 %v2290, %v2291
      %v2293 = vrot.slane %v2292, 2
      %v2294 = vmax.f32 %v2292, %v2293
      %v2295 = vrot.slane %v2294, 1
      %v2296 = vmax.f32 %v2294, %v2295
      %v2297 = vsel %vm1680, %v1330, -inf
      %v2298 = vrot.slane %v2297, 4
      %v2299 = vmax.f32 %v2297, %v2298
      %v2300 = vrot.slane %v2299, 2
      %v2301 = vmax.f32 %v2299, %v2300
      %v2302 = vrot.slane %v2301, 1
      %v2303 = vmax.f32 %v2301, %v2302
      %v2304 = vsel %vm1680, %v1333, -inf
      %v2305 = vrot.slane %v2304, 4
      %v2306 = vmax.f32 %v2304, %v2305
      %v2307 = vrot.slane %v2306, 2
      %v2308 = vmax.f32 %v2306, %v2307
      %v2309 = vrot.slane %v2308, 1
      %v2310 = vmax.f32 %v2308, %v2309
      %v2311 = vsel %vm1680, %v1338, -inf
      %v2312 = vrot.slane %v2311, 4
      %v2313 = vmax.f32 %v2311, %v2312
      %v2314 = vrot.slane %v2313, 2
      %v2315 = vmax.f32 %v2313, %v2314
      %v2316 = vrot.slane %v2315, 1
      %v2317 = vmax.f32 %v2315, %v2316
      %v2318 = vsel %vm1680, %v1341, -inf
      %v2319 = vrot.slane %v2318, 4
      %v2320 = vmax.f32 %v2318, %v2319
      %v2321 = vrot.slane %v2320, 2
      %v2322 = vmax.f32 %v2320, %v2321
      %v2323 = vrot.slane %v2322, 1
      %v2324 = vmax.f32 %v2322, %v2323
      %v2325 = vsel %vm1680, %v1346, -inf
      %v2326 = vrot.slane %v2325, 4
      %v2327 = vmax.f32 %v2325, %v2326
      %v2328 = vrot.slane %v2327, 2
      %v2329 = vmax.f32 %v2327, %v2328
      %v2330 = vrot.slane %v2329, 1
      %v2331 = vmax.f32 %v2329, %v2330
      %v2332 = vsel %vm1680, %v1349, -inf
      %v2333 = vrot.slane %v2332, 4
      %v2334 = vmax.f32 %v2332, %v2333
      %v2335 = vrot.slane %v2334, 2
      %v2336 = vmax.f32 %v2334, %v2335
      %v2337 = vrot.slane %v2336, 1
      %v2338 = vmax.f32 %v2336, %v2337
      %v2339 = vsel %vm1680, %v1354, -inf
      %v2340 = vrot.slane %v2339, 4
      %v2341 = vmax.f32 %v2339, %v2340
      %v2342 = vrot.slane %v2341, 2
      %v2343 = vmax.f32 %v2341, %v2342
      %v2344 = vrot.slane %v2343, 1
      %v2345 = vmax.f32 %v2343, %v2344
      %v2346 = vsel %vm1680, %v1357, -inf
      %v2347 = vrot.slane %v2346, 4
      %v2348 = vmax.f32 %v2346, %v2347
      %v2349 = vrot.slane %v2348, 2
      %v2350 = vmax.f32 %v2348, %v2349
      %v2351 = vrot.slane %v2350, 1
      %v2352 = vmax.f32 %v2350, %v2351
      %v2353 = vsel %vm1680, %v1362, -inf
      %v2354 = vrot.slane %v2353, 4
      %v2355 = vmax.f32 %v2353, %v2354
      %v2356 = vrot.slane %v2355, 2
      %v2357 = vmax.f32 %v2355, %v2356
      %v2358 = vrot.slane %v2357, 1
      %v2359 = vmax.f32 %v2357, %v2358
      %v2360 = vsel %vm1680, %v1365, -inf
      %v2361 = vrot.slane %v2360, 4
      %v2362 = vmax.f32 %v2360, %v2361
      %v2363 = vrot.slane %v2362, 2
      %v2364 = vmax.f32 %v2362, %v2363
      %v2365 = vrot.slane %v2364, 1
      %v2366 = vmax.f32 %v2364, %v2365
      %v2367 = vsel %vm1680, %v1370, -inf
      %v2368 = vrot.slane %v2367, 4
      %v2369 = vmax.f32 %v2367, %v2368
      %v2370 = vrot.slane %v2369, 2
      %v2371 = vmax.f32 %v2369, %v2370
      %v2372 = vrot.slane %v2371, 1
      %v2373 = vmax.f32 %v2371, %v2372
      %v2374 = vsel %vm1680, %v1373, -inf
      %v2375 = vrot.slane %v2374, 4
      %v2376 = vmax.f32 %v2374, %v2375
      %v2377 = vrot.slane %v2376, 2
      %v2378 = vmax.f32 %v2376, %v2377
      %v2379 = vrot.slane %v2378, 1
      %v2380 = vmax.f32 %v2378, %v2379
      %v2381 = vsel %vm1680, %v1378, -inf
      %v2382 = vrot.slane %v2381, 4
      %v2383 = vmax.f32 %v2381, %v2382
      %v2384 = vrot.slane %v2383, 2
      %v2385 = vmax.f32 %v2383, %v2384
      %v2386 = vrot.slane %v2385, 1
      %v2387 = vmax.f32 %v2385, %v2386
      %v2388 = vsel %vm1680, %v1381, -inf
      %v2389 = vrot.slane %v2388, 4
      %v2390 = vmax.f32 %v2388, %v2389
      %v2391 = vrot.slane %v2390, 2
      %v2392 = vmax.f32 %v2390, %v2391
      %v2393 = vrot.slane %v2392, 1
      %v2394 = vmax.f32 %v2392, %v2393
      %v2395 = vsel %vm1680, %v1386, -inf
      %v2396 = vrot.slane %v2395, 4
      %v2397 = vmax.f32 %v2395, %v2396
      %v2398 = vrot.slane %v2397, 2
      %v2399 = vmax.f32 %v2397, %v2398
      %v2400 = vrot.slane %v2399, 1
      %v2401 = vmax.f32 %v2399, %v2400
      %v2402 = vsel %vm1680, %v1389, -inf
      %v2403 = vrot.slane %v2402, 4
      %v2404 = vmax.f32 %v2402, %v2403
      %v2405 = vrot.slane %v2404, 2
      %v2406 = vmax.f32 %v2404, %v2405
      %v2407 = vrot.slane %v2406, 1
      %v2408 = vmax.f32 %v2406, %v2407
      %v2409 = vsel %vm1680, %v1394, -inf
      %v2410 = vrot.slane %v2409, 4
      %v2411 = vmax.f32 %v2409, %v2410
      %v2412 = vrot.slane %v2411, 2
      %v2413 = vmax.f32 %v2411, %v2412
      %v2414 = vrot.slane %v2413, 1
      %v2415 = vmax.f32 %v2413, %v2414
      %v2416 = vsel %vm1680, %v1397, -inf
      %v2417 = vrot.slane %v2416, 4
      %v2418 = vmax.f32 %v2416, %v2417
      %v2419 = vrot.slane %v2418, 2
      %v2420 = vmax.f32 %v2418, %v2419
      %v2421 = vrot.slane %v2420, 1
      %v2422 = vmax.f32 %v2420, %v2421
      %v2423 = vsel %vm1680, %v1402, -inf
      %v2424 = vrot.slane %v2423, 4
      %v2425 = vmax.f32 %v2423, %v2424
      %v2426 = vrot.slane %v2425, 2
      %v2427 = vmax.f32 %v2425, %v2426
      %v2428 = vrot.slane %v2427, 1
      %v2429 = vmax.f32 %v2427, %v2428
      %v2430 = vsel %vm1680, %v1405, -inf
      %v2431 = vrot.slane %v2430, 4
      %v2432 = vmax.f32 %v2430, %v2431
      %v2433 = vrot.slane %v2432, 2
      %v2434 = vmax.f32 %v2432, %v2433
      %v2435 = vrot.slane %v2434, 1
      %v2436 = vmax.f32 %v2434, %v2435
      %v2437 = vsel %vm1680, %v1410, -inf
      %v2438 = vrot.slane %v2437, 4
      %v2439 = vmax.f32 %v2437, %v2438
      %v2440 = vrot.slane %v2439, 2
      %v2441 = vmax.f32 %v2439, %v2440
      %v2442 = vrot.slane %v2441, 1
      %v2443 = vmax.f32 %v2441, %v2442
      %v2444 = vsel %vm1680, %v1413, -inf
      %v2445 = vrot.slane %v2444, 4
      %v2446 = vmax.f32 %v2444, %v2445
      %v2447 = vrot.slane %v2446, 2
      %v2448 = vmax.f32 %v2446, %v2447
      %v2449 = vrot.slane %v2448, 1
      %v2450 = vmax.f32 %v2448, %v2449
      %v2451 = vsel %vm1680, %v1418, -inf
      %v2452 = vrot.slane %v2451, 4
      %v2453 = vmax.f32 %v2451, %v2452
      %v2454 = vrot.slane %v2453, 2
      %v2455 = vmax.f32 %v2453, %v2454
      %v2456 = vrot.slane %v2455, 1
      %v2457 = vmax.f32 %v2455, %v2456
      %v2458 = vsel %vm1680, %v1421, -inf
      %v2459 = vrot.slane %v2458, 4
      %v2460 = vmax.f32 %v2458, %v2459
      %v2461 = vrot.slane %v2460, 2
      %v2462 = vmax.f32 %v2460, %v2461
      %v2463 = vrot.slane %v2462, 1
      %v2464 = vmax.f32 %v2462, %v2463
      %v2465 = vsel %vm1680, %v1426, -inf
      %v2466 = vrot.slane %v2465, 4
      %v2467 = vmax.f32 %v2465, %v2466
      %v2468 = vrot.slane %v2467, 2
      %v2469 = vmax.f32 %v2467, %v2468
      %v2470 = vrot.slane %v2469, 1
      %v2471 = vmax.f32 %v2469, %v2470
      %v2472 = vsel %vm1680, %v1429, -inf
      %v2473 = vrot.slane %v2472, 4
      %v2474 = vmax.f32 %v2472, %v2473
      %v2475 = vrot.slane %v2474, 2
      %v2476 = vmax.f32 %v2474, %v2475
      %v2477 = vrot.slane %v2476, 1
      %v2478 = vmax.f32 %v2476, %v2477
      %v2479 = vsel %vm1680, %v1434, -inf
      %v2480 = vrot.slane %v2479, 4
      %v2481 = vmax.f32 %v2479, %v2480
      %v2482 = vrot.slane %v2481, 2
      %v2483 = vmax.f32 %v2481, %v2482
      %v2484 = vrot.slane %v2483, 1
      %v2485 = vmax.f32 %v2483, %v2484
      %v2486 = vsel %vm1680, %v1437, -inf
      %v2487 = vrot.slane %v2486, 4
      %v2488 = vmax.f32 %v2486, %v2487
      %v2489 = vrot.slane %v2488, 2
      %v2490 = vmax.f32 %v2488, %v2489
      %v2491 = vrot.slane %v2490, 1
      %v2492 = vmax.f32 %v2490, %v2491
      %v2493 = vsel %vm1680, %v1442, -inf
      %v2494 = vrot.slane %v2493, 4
      %v2495 = vmax.f32 %v2493, %v2494
      %v2496 = vrot.slane %v2495, 2
      %v2497 = vmax.f32 %v2495, %v2496
      %v2498 = vrot.slane %v2497, 1
      %v2499 = vmax.f32 %v2497, %v2498
      %v2500 = vsel %vm1680, %v1445, -inf
      %v2501 = vrot.slane %v2500, 4
      %v2502 = vmax.f32 %v2500, %v2501
      %v2503 = vrot.slane %v2502, 2
      %v2504 = vmax.f32 %v2502, %v2503
      %v2505 = vrot.slane %v2504, 1
      %v2506 = vmax.f32 %v2504, %v2505
      %v2507 = vsel %vm1680, %v1450, -inf
      %v2508 = vrot.slane %v2507, 4
      %v2509 = vmax.f32 %v2507, %v2508
      %v2510 = vrot.slane %v2509, 2
      %v2511 = vmax.f32 %v2509, %v2510
      %v2512 = vrot.slane %v2511, 1
      %v2513 = vmax.f32 %v2511, %v2512
      %v2514 = vsel %vm1680, %v1453, -inf
      %v2515 = vrot.slane %v2514, 4
      %v2516 = vmax.f32 %v2514, %v2515
      %v2517 = vrot.slane %v2516, 2
      %v2518 = vmax.f32 %v2516, %v2517
      %v2519 = vrot.slane %v2518, 1
      %v2520 = vmax.f32 %v2518, %v2519
      %v2521 = vsel %vm1680, %v1458, -inf
      %v2522 = vrot.slane %v2521, 4
      %v2523 = vmax.f32 %v2521, %v2522
      %v2524 = vrot.slane %v2523, 2
      %v2525 = vmax.f32 %v2523, %v2524
      %v2526 = vrot.slane %v2525, 1
      %v2527 = vmax.f32 %v2525, %v2526
      %v2528 = vsel %vm1680, %v1461, -inf
      %v2529 = vrot.slane %v2528, 4
      %v2530 = vmax.f32 %v2528, %v2529
      %v2531 = vrot.slane %v2530, 2
      %v2532 = vmax.f32 %v2530, %v2531
      %v2533 = vrot.slane %v2532, 1
      %v2534 = vmax.f32 %v2532, %v2533
      %v2535 = vsel %vm1680, %v1466, -inf
      %v2536 = vrot.slane %v2535, 4
      %v2537 = vmax.f32 %v2535, %v2536
      %v2538 = vrot.slane %v2537, 2
      %v2539 = vmax.f32 %v2537, %v2538
      %v2540 = vrot.slane %v2539, 1
      %v2541 = vmax.f32 %v2539, %v2540
      %v2542 = vsel %vm1680, %v1469, -inf
      %v2543 = vrot.slane %v2542, 4
      %v2544 = vmax.f32 %v2542, %v2543
      %v2545 = vrot.slane %v2544, 2
      %v2546 = vmax.f32 %v2544, %v2545
      %v2547 = vrot.slane %v2546, 1
      %v2548 = vmax.f32 %v2546, %v2547
      %v2549 = vsel %vm1680, %v1474, -inf
      %v2550 = vrot.slane %v2549, 4
      %v2551 = vmax.f32 %v2549, %v2550
      %v2552 = vrot.slane %v2551, 2
      %v2553 = vmax.f32 %v2551, %v2552
      %v2554 = vrot.slane %v2553, 1
      %v2555 = vmax.f32 %v2553, %v2554
      %v2556 = vsel %vm1680, %v1477, -inf
      %v2557 = vrot.slane %v2556, 4
      %v2558 = vmax.f32 %v2556, %v2557
      %v2559 = vrot.slane %v2558, 2
      %v2560 = vmax.f32 %v2558, %v2559
      %v2561 = vrot.slane %v2560, 1
      %v2562 = vmax.f32 %v2560, %v2561
      %v2563 = vsel %vm1680, %v1482, -inf
      %v2564 = vrot.slane %v2563, 4
      %v2565 = vmax.f32 %v2563, %v2564
      %v2566 = vrot.slane %v2565, 2
      %v2567 = vmax.f32 %v2565, %v2566
      %v2568 = vrot.slane %v2567, 1
      %v2569 = vmax.f32 %v2567, %v2568
      %v2570 = vsel %vm1680, %v1485, -inf
      %v2571 = vrot.slane %v2570, 4
      %v2572 = vmax.f32 %v2570, %v2571
      %v2573 = vrot.slane %v2572, 2
      %v2574 = vmax.f32 %v2572, %v2573
      %v2575 = vrot.slane %v2574, 1
      %v2576 = vmax.f32 %v2574, %v2575
      %v2577 = vsel %vm1680, %v1490, -inf
      %v2578 = vrot.slane %v2577, 4
      %v2579 = vmax.f32 %v2577, %v2578
      %v2580 = vrot.slane %v2579, 2
      %v2581 = vmax.f32 %v2579, %v2580
      %v2582 = vrot.slane %v2581, 1
      %v2583 = vmax.f32 %v2581, %v2582
      %v2584 = vsel %vm1680, %v1493, -inf
      %v2585 = vrot.slane %v2584, 4
      %v2586 = vmax.f32 %v2584, %v2585
      %v2587 = vrot.slane %v2586, 2
      %v2588 = vmax.f32 %v2586, %v2587
      %v2589 = vrot.slane %v2588, 1
      %v2590 = vmax.f32 %v2588, %v2589
      %v2591 = vsel %vm1680, %v1498, -inf
      %v2592 = vrot.slane %v2591, 4
      %v2593 = vmax.f32 %v2591, %v2592
      %v2594 = vrot.slane %v2593, 2
      %v2595 = vmax.f32 %v2593, %v2594
      %v2596 = vrot.slane %v2595, 1
      %v2597 = vmax.f32 %v2595, %v2596
      %v2598 = vsel %vm1680, %v1501, -inf
      %v2599 = vrot.slane %v2598, 4
      %v2600 = vmax.f32 %v2598, %v2599
      %v2601 = vrot.slane %v2600, 2
      %v2602 = vmax.f32 %v2600, %v2601
      %v2603 = vrot.slane %v2602, 1
      %v2604 = vmax.f32 %v2602, %v2603
      %v2605 = vsel %vm1680, %v1506, -inf
      %v2606 = vrot.slane %v2605, 4
      %v2607 = vmax.f32 %v2605, %v2606
      %v2608 = vrot.slane %v2607, 2
      %v2609 = vmax.f32 %v2607, %v2608
      %v2610 = vrot.slane %v2609, 1
      %v2611 = vmax.f32 %v2609, %v2610
      %v2612 = vsel %vm1680, %v1509, -inf
      %v2613 = vrot.slane %v2612, 4
      %v2614 = vmax.f32 %v2612, %v2613
      %v2615 = vrot.slane %v2614, 2
      %v2616 = vmax.f32 %v2614, %v2615
      %v2617 = vrot.slane %v2616, 1
      %v2618 = vmax.f32 %v2616, %v2617
      %v2619 = vsel %vm1680, %v1514, -inf
      %v2620 = vrot.slane %v2619, 4
      %v2621 = vmax.f32 %v2619, %v2620
      %v2622 = vrot.slane %v2621, 2
      %v2623 = vmax.f32 %v2621, %v2622
      %v2624 = vrot.slane %v2623, 1
      %v2625 = vmax.f32 %v2623, %v2624
      %v2626 = vsel %vm1680, %v1517, -inf
      %v2627 = vrot.slane %v2626, 4
      %v2628 = vmax.f32 %v2626, %v2627
      %v2629 = vrot.slane %v2628, 2
      %v2630 = vmax.f32 %v2628, %v2629
      %v2631 = vrot.slane %v2630, 1
      %v2632 = vmax.f32 %v2630, %v2631
      %v2633 = vsel %vm1680, %v1522, -inf
      %v2634 = vrot.slane %v2633, 4
      %v2635 = vmax.f32 %v2633, %v2634
      %v2636 = vrot.slane %v2635, 2
      %v2637 = vmax.f32 %v2635, %v2636
      %v2638 = vrot.slane %v2637, 1
      %v2639 = vmax.f32 %v2637, %v2638
      %v2640 = vsel %vm1680, %v1525, -inf
      %v2641 = vrot.slane %v2640, 4
      %v2642 = vmax.f32 %v2640, %v2641
      %v2643 = vrot.slane %v2642, 2
      %v2644 = vmax.f32 %v2642, %v2643
      %v2645 = vrot.slane %v2644, 1
      %v2646 = vmax.f32 %v2644, %v2645
      %v2647 = vsel %vm1680, %v1530, -inf
      %v2648 = vrot.slane %v2647, 4
      %v2649 = vmax.f32 %v2647, %v2648
      %v2650 = vrot.slane %v2649, 2
      %v2651 = vmax.f32 %v2649, %v2650
      %v2652 = vrot.slane %v2651, 1
      %v2653 = vmax.f32 %v2651, %v2652
      %v2654 = vsel %vm1680, %v1533, -inf
      %v2655 = vrot.slane %v2654, 4
      %v2656 = vmax.f32 %v2654, %v2655
      %v2657 = vrot.slane %v2656, 2
      %v2658 = vmax.f32 %v2656, %v2657
      %v2659 = vrot.slane %v2658, 1
      %v2660 = vmax.f32 %v2658, %v2659
      %v2661 = vsel %vm1680, %v1538, -inf
      %v2662 = vrot.slane %v2661, 4
      %v2663 = vmax.f32 %v2661, %v2662
      %v2664 = vrot.slane %v2663, 2
      %v2665 = vmax.f32 %v2663, %v2664
      %v2666 = vrot.slane %v2665, 1
      %v2667 = vmax.f32 %v2665, %v2666
      %v2668 = vsel %vm1680, %v1541, -inf
      %v2669 = vrot.slane %v2668, 4
      %v2670 = vmax.f32 %v2668, %v2669
      %v2671 = vrot.slane %v2670, 2
      %v2672 = vmax.f32 %v2670, %v2671
      %v2673 = vrot.slane %v2672, 1
      %v2674 = vmax.f32 %v2672, %v2673
      %v2675 = vsel %vm1680, %v1546, -inf
      %v2676 = vrot.slane %v2675, 4
      %v2677 = vmax.f32 %v2675, %v2676
      %v2678 = vrot.slane %v2677, 2
      %v2679 = vmax.f32 %v2677, %v2678
      %v2680 = vrot.slane %v2679, 1
      %v2681 = vmax.f32 %v2679, %v2680
      %v2682 = vsel %vm1680, %v1549, -inf
      %v2683 = vrot.slane %v2682, 4
      %v2684 = vmax.f32 %v2682, %v2683
      %v2685 = vrot.slane %v2684, 2
      %v2686 = vmax.f32 %v2684, %v2685
      %v2687 = vrot.slane %v2686, 1
      %v2688 = vmax.f32 %v2686, %v2687
      %v2689 = vsel %vm1680, %v1554, -inf
      %v2690 = vrot.slane %v2689, 4
      %v2691 = vmax.f32 %v2689, %v2690
      %v2692 = vrot.slane %v2691, 2
      %v2693 = vmax.f32 %v2691, %v2692
      %v2694 = vrot.slane %v2693, 1
      %v2695 = vmax.f32 %v2693, %v2694
      %v2696 = vsel %vm1680, %v1557, -inf
      %v2697 = vrot.slane %v2696, 4
      %v2698 = vmax.f32 %v2696, %v2697
      %v2699 = vrot.slane %v2698, 2
      %v2700 = vmax.f32 %v2698, %v2699
      %v2701 = vrot.slane %v2700, 1
      %v2702 = vmax.f32 %v2700, %v2701
      %v2703 = vsel %vm1680, %v1562, -inf
      %v2704 = vrot.slane %v2703, 4
      %v2705 = vmax.f32 %v2703, %v2704
      %v2706 = vrot.slane %v2705, 2
      %v2707 = vmax.f32 %v2705, %v2706
      %v2708 = vrot.slane %v2707, 1
      %v2709 = vmax.f32 %v2707, %v2708
      %v2710 = vsel %vm1680, %v1565, -inf
      %v2711 = vrot.slane %v2710, 4
      %v2712 = vmax.f32 %v2710, %v2711
      %v2713 = vrot.slane %v2712, 2
      %v2714 = vmax.f32 %v2712, %v2713
      %v2715 = vrot.slane %v2714, 1
      %v2716 = vmax.f32 %v2714, %v2715
      %v2717 = vsel %vm1680, %v1570, -inf
      %v2718 = vrot.slane %v2717, 4
      %v2719 = vmax.f32 %v2717, %v2718
      %v2720 = vrot.slane %v2719, 2
      %v2721 = vmax.f32 %v2719, %v2720
      %v2722 = vrot.slane %v2721, 1
      %v2723 = vmax.f32 %v2721, %v2722
      %v2724 = vsel %vm1680, %v1573, -inf
      %v2725 = vrot.slane %v2724, 4
      %v2726 = vmax.f32 %v2724, %v2725
      %v2727 = vrot.slane %v2726, 2
      %v2728 = vmax.f32 %v2726, %v2727
      %v2729 = vrot.slane %v2728, 1
      %v2730 = vmax.f32 %v2728, %v2729
      %v2731 = vsel %vm1680, %v1578, -inf
      %v2732 = vrot.slane %v2731, 4
      %v2733 = vmax.f32 %v2731, %v2732
      %v2734 = vrot.slane %v2733, 2
      %v2735 = vmax.f32 %v2733, %v2734
      %v2736 = vrot.slane %v2735, 1
      %v2737 = vmax.f32 %v2735, %v2736
      %v2738 = vsel %vm1680, %v1581, -inf
      %v2739 = vrot.slane %v2738, 4
      %v2740 = vmax.f32 %v2738, %v2739
      %v2741 = vrot.slane %v2740, 2
      %v2742 = vmax.f32 %v2740, %v2741
      %v2743 = vrot.slane %v2742, 1
      %v2744 = vmax.f32 %v2742, %v2743
      %v2745 = vsel %vm1680, %v1586, -inf
      %v2746 = vrot.slane %v2745, 4
      %v2747 = vmax.f32 %v2745, %v2746
      %v2748 = vrot.slane %v2747, 2
      %v2749 = vmax.f32 %v2747, %v2748
      %v2750 = vrot.slane %v2749, 1
      %v2751 = vmax.f32 %v2749, %v2750
      %v2752 = vsel %vm1680, %v1589, -inf
      %v2753 = vrot.slane %v2752, 4
      %v2754 = vmax.f32 %v2752, %v2753
      %v2755 = vrot.slane %v2754, 2
      %v2756 = vmax.f32 %v2754, %v2755
      %v2757 = vrot.slane %v2756, 1
      %v2758 = vmax.f32 %v2756, %v2757
      %v2759 = vsel %vm1680, %v1594, -inf
      %v2760 = vrot.slane %v2759, 4
      %v2761 = vmax.f32 %v2759, %v2760
      %v2762 = vrot.slane %v2761, 2
      %v2763 = vmax.f32 %v2761, %v2762
      %v2764 = vrot.slane %v2763, 1
      %v2765 = vmax.f32 %v2763, %v2764
      %v2766 = vsel %vm1680, %v1597, -inf
      %v2767 = vrot.slane %v2766, 4
      %v2768 = vmax.f32 %v2766, %v2767
      %v2769 = vrot.slane %v2768, 2
      %v2770 = vmax.f32 %v2768, %v2769
      %v2771 = vrot.slane %v2770, 1
      %v2772 = vmax.f32 %v2770, %v2771
      %v2773 = vsel %vm1680, %v1602, -inf
      %v2774 = vrot.slane %v2773, 4
      %v2775 = vmax.f32 %v2773, %v2774
      %v2776 = vrot.slane %v2775, 2
      %v2777 = vmax.f32 %v2775, %v2776
      %v2778 = vrot.slane %v2777, 1
      %v2779 = vmax.f32 %v2777, %v2778
      %v2780 = vsel %vm1680, %v1605, -inf
      %v2781 = vrot.slane %v2780, 4
      %v2782 = vmax.f32 %v2780, %v2781
      %v2783 = vrot.slane %v2782, 2
      %v2784 = vmax.f32 %v2782, %v2783
      %v2785 = vrot.slane %v2784, 1
      %v2786 = vmax.f32 %v2784, %v2785
      %v2787 = vsel %vm1680, %v1610, -inf
      %v2788 = vrot.slane %v2787, 4
      %v2789 = vmax.f32 %v2787, %v2788
      %v2790 = vrot.slane %v2789, 2
      %v2791 = vmax.f32 %v2789, %v2790
      %v2792 = vrot.slane %v2791, 1
      %v2793 = vmax.f32 %v2791, %v2792
      %v2794 = vsel %vm1680, %v1613, -inf
      %v2795 = vrot.slane %v2794, 4
      %v2796 = vmax.f32 %v2794, %v2795
      %v2797 = vrot.slane %v2796, 2
      %v2798 = vmax.f32 %v2796, %v2797
      %v2799 = vrot.slane %v2798, 1
      %v2800 = vmax.f32 %v2798, %v2799
      %v2801 = vsel %vm1680, %v1618, -inf
      %v2802 = vrot.slane %v2801, 4
      %v2803 = vmax.f32 %v2801, %v2802
      %v2804 = vrot.slane %v2803, 2
      %v2805 = vmax.f32 %v2803, %v2804
      %v2806 = vrot.slane %v2805, 1
      %v2807 = vmax.f32 %v2805, %v2806
      %v2808 = vsel %vm1680, %v1621, -inf
      %v2809 = vrot.slane %v2808, 4
      %v2810 = vmax.f32 %v2808, %v2809
      %v2811 = vrot.slane %v2810, 2
      %v2812 = vmax.f32 %v2810, %v2811
      %v2813 = vrot.slane %v2812, 1
      %v2814 = vmax.f32 %v2812, %v2813
      %v2815 = vsel %vm1680, %v1626, -inf
      %v2816 = vrot.slane %v2815, 4
      %v2817 = vmax.f32 %v2815, %v2816
      %v2818 = vrot.slane %v2817, 2
      %v2819 = vmax.f32 %v2817, %v2818
      %v2820 = vrot.slane %v2819, 1
      %v2821 = vmax.f32 %v2819, %v2820
      %v2822 = vsel %vm1680, %v1629, -inf
      %v2823 = vrot.slane %v2822, 4
      %v2824 = vmax.f32 %v2822, %v2823
      %v2825 = vrot.slane %v2824, 2
      %v2826 = vmax.f32 %v2824, %v2825
      %v2827 = vrot.slane %v2826, 1
      %v2828 = vmax.f32 %v2826, %v2827
      %v2829 = vsel %vm1680, %v1634, -inf
      %v2830 = vrot.slane %v2829, 4
      %v2831 = vmax.f32 %v2829, %v2830
      %v2832 = vrot.slane %v2831, 2
      %v2833 = vmax.f32 %v2831, %v2832
      %v2834 = vrot.slane %v2833, 1
      %v2835 = vmax.f32 %v2833, %v2834
      %v2836 = vsel %vm1680, %v1637, -inf
      %v2837 = vrot.slane %v2836, 4
      %v2838 = vmax.f32 %v2836, %v2837
      %v2839 = vrot.slane %v2838, 2
      %v2840 = vmax.f32 %v2838, %v2839
      %v2841 = vrot.slane %v2840, 1
      %v2842 = vmax.f32 %v2840, %v2841
      %v2843 = vsel %vm1680, %v1642, -inf
      %v2844 = vrot.slane %v2843, 4
      %v2845 = vmax.f32 %v2843, %v2844
      %v2846 = vrot.slane %v2845, 2
      %v2847 = vmax.f32 %v2845, %v2846
      %v2848 = vrot.slane %v2847, 1
      %v2849 = vmax.f32 %v2847, %v2848
      %v2850 = vsel %vm1680, %v1645, -inf
      %v2851 = vrot.slane %v2850, 4
      %v2852 = vmax.f32 %v2850, %v2851
      %v2853 = vrot.slane %v2852, 2
      %v2854 = vmax.f32 %v2852, %v2853
      %v2855 = vrot.slane %v2854, 1
      %v2856 = vmax.f32 %v2854, %v2855
      %v2857 = vsel %vm1680, %v1650, -inf
      %v2858 = vrot.slane %v2857, 4
      %v2859 = vmax.f32 %v2857, %v2858
      %v2860 = vrot.slane %v2859, 2
      %v2861 = vmax.f32 %v2859, %v2860
      %v2862 = vrot.slane %v2861, 1
      %v2863 = vmax.f32 %v2861, %v2862
      %v2864 = vsel %vm1680, %v1653, -inf
      %v2865 = vrot.slane %v2864, 4
      %v2866 = vmax.f32 %v2864, %v2865
      %v2867 = vrot.slane %v2866, 2
      %v2868 = vmax.f32 %v2866, %v2867
      %v2869 = vrot.slane %v2868, 1
      %v2870 = vmax.f32 %v2868, %v2869
      %v2871 = vsel %vm1680, %v1658, -inf
      %v2872 = vrot.slane %v2871, 4
      %v2873 = vmax.f32 %v2871, %v2872
      %v2874 = vrot.slane %v2873, 2
      %v2875 = vmax.f32 %v2873, %v2874
      %v2876 = vrot.slane %v2875, 1
      %v2877 = vmax.f32 %v2875, %v2876
      %v2878 = vsel %vm1680, %v1661, -inf
      %v2879 = vrot.slane %v2878, 4
      %v2880 = vmax.f32 %v2878, %v2879
      %v2881 = vrot.slane %v2880, 2
      %v2882 = vmax.f32 %v2880, %v2881
      %v2883 = vrot.slane %v2882, 1
      %v2884 = vmax.f32 %v2882, %v2883
      %v2885 = vsel %vm1680, %v1666, -inf
      %v2886 = vrot.slane %v2885, 4
      %v2887 = vmax.f32 %v2885, %v2886
      %v2888 = vrot.slane %v2887, 2
      %v2889 = vmax.f32 %v2887, %v2888
      %v2890 = vrot.slane %v2889, 1
      %v2891 = vmax.f32 %v2889, %v2890
      %v2892 = vsel %vm1680, %v1669, -inf
      %v2893 = vrot.slane %v2892, 4
      %v2894 = vmax.f32 %v2892, %v2893
      %v2895 = vrot.slane %v2894, 2
      %v2896 = vmax.f32 %v2894, %v2895
      %v2897 = vrot.slane %v2896, 1
      %v2898 = vmax.f32 %v2896, %v2897
      %v2899 = vsel %vm1680, %v1674, -inf
      %v2900 = vrot.slane %v2899, 4
      %v2901 = vmax.f32 %v2899, %v2900
      %v2902 = vrot.slane %v2901, 2
      %v2903 = vmax.f32 %v2901, %v2902
      %v2904 = vrot.slane %v2903, 1
      %v2905 = vmax.f32 %v2903, %v2904
      %v2906 = vsel %vm1680, %v1677, -inf
      %v2907 = vrot.slane %v2906, 4
      %v2908 = vmax.f32 %v2906, %v2907
      %v2909 = vrot.slane %v2908, 2
      %v2910 = vmax.f32 %v2908, %v2909
      %v2911 = vrot.slane %v2910, 1
      %v2912 = vmax.f32 %v2910, %v2911
      %v2913 = vld [vmem:[%s2] sm:$0x1]
      %v2915 = vlaneseq
      %v2916 = vshrl.u32 %v2915, 7
      %v2917 = vsub.s32 0, %v2916
      %v2918 = vrot.slane %v2913, %v2917
      %v2920 = vadd.f32 %v1687, %v2918
      %v2921 = vadd.f32 %v1694, %v2918
      %v2922 = vadd.f32 %v1701, %v2918
      %v2923 = vadd.f32 %v1708, %v2918
      %v2924 = vadd.f32 %v1715, %v2918
      %v2925 = vadd.f32 %v1722, %v2918
      %v2926 = vadd.f32 %v1729, %v2918
      %v2927 = vadd.f32 %v1736, %v2918
      %v2928 = vadd.f32 %v1743, %v2918
      %v2929 = vadd.f32 %v1750, %v2918
      %v2930 = vadd.f32 %v1757, %v2918
      %v2931 = vadd.f32 %v1764, %v2918
      %v2932 = vadd.f32 %v1771, %v2918
      %v2933 = vadd.f32 %v1778, %v2918
      %v2934 = vadd.f32 %v1785, %v2918
      %v2935 = vadd.f32 %v1792, %v2918
      %v2936 = vadd.f32 %v1799, %v2918
      %v2937 = vadd.f32 %v1806, %v2918
      %v2938 = vadd.f32 %v1813, %v2918
      %v2939 = vadd.f32 %v1820, %v2918
      %v2940 = vadd.f32 %v1827, %v2918
      %v2941 = vadd.f32 %v1834, %v2918
      %v2942 = vadd.f32 %v1841, %v2918
      %v2943 = vadd.f32 %v1848, %v2918
      %v2944 = vadd.f32 %v1855, %v2918
      %v2945 = vadd.f32 %v1862, %v2918
      %v2946 = vadd.f32 %v1869, %v2918
      %v2947 = vadd.f32 %v1876, %v2918
      %v2948 = vadd.f32 %v1883, %v2918
      %v2949 = vadd.f32 %v1890, %v2918
      %v2950 = vadd.f32 %v1897, %v2918
      %v2951 = vadd.f32 %v1904, %v2918
      %v2952 = vadd.f32 %v1911, %v2918
      %v2953 = vadd.f32 %v1918, %v2918
      %v2954 = vadd.f32 %v1925, %v2918
      %v2955 = vadd.f32 %v1932, %v2918
      %v2956 = vadd.f32 %v1939, %v2918
      %v2957 = vadd.f32 %v1946, %v2918
      %v2958 = vadd.f32 %v1953, %v2918
      %v2959 = vadd.f32 %v1960, %v2918
      %v2960 = vadd.f32 %v1967, %v2918
      %v2961 = vadd.f32 %v1974, %v2918
      %v2962 = vadd.f32 %v1981, %v2918
      %v2963 = vadd.f32 %v1988, %v2918
      %v2964 = vadd.f32 %v1995, %v2918
      %v2965 = vadd.f32 %v2002, %v2918
      %v2966 = vadd.f32 %v2009, %v2918
      %v2967 = vadd.f32 %v2016, %v2918
      %v2968 = vadd.f32 %v2023, %v2918
      %v2969 = vadd.f32 %v2030, %v2918
      %v2970 = vadd.f32 %v2037, %v2918
      %v2971 = vadd.f32 %v2044, %v2918
      %v2972 = vadd.f32 %v2051, %v2918
      %v2973 = vadd.f32 %v2058, %v2918
      %v2974 = vadd.f32 %v2065, %v2918
      %v2975 = vadd.f32 %v2072, %v2918
      %v2976 = vadd.f32 %v2079, %v2918
      %v2977 = vadd.f32 %v2086, %v2918
      %v2978 = vadd.f32 %v2093, %v2918
      %v2979 = vadd.f32 %v2100, %v2918
      %v2980 = vadd.f32 %v2107, %v2918
      %v2981 = vadd.f32 %v2114, %v2918
      %v2982 = vadd.f32 %v2121, %v2918
      %v2983 = vadd.f32 %v2128, %v2918
      %v2984 = vadd.f32 %v2135, %v2918
      %v2985 = vadd.f32 %v2142, %v2918
      %v2986 = vadd.f32 %v2149, %v2918
      %v2987 = vadd.f32 %v2156, %v2918
      %v2988 = vadd.f32 %v2163, %v2918
      %v2989 = vadd.f32 %v2170, %v2918
      %v2990 = vadd.f32 %v2177, %v2918
      %v2991 = vadd.f32 %v2184, %v2918
      %v2992 = vadd.f32 %v2191, %v2918
      %v2993 = vadd.f32 %v2198, %v2918
      %v2994 = vadd.f32 %v2205, %v2918
      %v2995 = vadd.f32 %v2212, %v2918
      %v2996 = vadd.f32 %v2219, %v2918
      %v2997 = vadd.f32 %v2226, %v2918
      %v2998 = vadd.f32 %v2233, %v2918
      %v2999 = vadd.f32 %v2240, %v2918
      %v3000 = vadd.f32 %v2247, %v2918
      %v3001 = vadd.f32 %v2254, %v2918
      %v3002 = vadd.f32 %v2261, %v2918
      %v3003 = vadd.f32 %v2268, %v2918
      %v3004 = vadd.f32 %v2275, %v2918
      %v3005 = vadd.f32 %v2282, %v2918
      %v3006 = vadd.f32 %v2289, %v2918
      %v3007 = vadd.f32 %v2296, %v2918
      %v3008 = vadd.f32 %v2303, %v2918
      %v3009 = vadd.f32 %v2310, %v2918
      %v3010 = vadd.f32 %v2317, %v2918
      %v3011 = vadd.f32 %v2324, %v2918
      %v3012 = vadd.f32 %v2331, %v2918
      %v3013 = vadd.f32 %v2338, %v2918
      %v3014 = vadd.f32 %v2345, %v2918
      %v3015 = vadd.f32 %v2352, %v2918
      %v3016 = vadd.f32 %v2359, %v2918
      %v3017 = vadd.f32 %v2366, %v2918
      %v3018 = vadd.f32 %v2373, %v2918
      %v3019 = vadd.f32 %v2380, %v2918
      %v3020 = vadd.f32 %v2387, %v2918
      %v3021 = vadd.f32 %v2394, %v2918
      %v3022 = vadd.f32 %v2401, %v2918
      %v3023 = vadd.f32 %v2408, %v2918
      %v3024 = vadd.f32 %v2415, %v2918
      %v3025 = vadd.f32 %v2422, %v2918
      %v3026 = vadd.f32 %v2429, %v2918
      %v3027 = vadd.f32 %v2436, %v2918
      %v3028 = vadd.f32 %v2443, %v2918
      %v3029 = vadd.f32 %v2450, %v2918
      %v3030 = vadd.f32 %v2457, %v2918
      %v3031 = vadd.f32 %v2464, %v2918
      %v3032 = vadd.f32 %v2471, %v2918
      %v3033 = vadd.f32 %v2478, %v2918
      %v3034 = vadd.f32 %v2485, %v2918
      %v3035 = vadd.f32 %v2492, %v2918
      %v3036 = vadd.f32 %v2499, %v2918
      %v3037 = vadd.f32 %v2506, %v2918
      %v3038 = vadd.f32 %v2513, %v2918
      %v3039 = vadd.f32 %v2520, %v2918
      %v3040 = vadd.f32 %v2527, %v2918
      %v3041 = vadd.f32 %v2534, %v2918
      %v3042 = vadd.f32 %v2541, %v2918
      %v3043 = vadd.f32 %v2548, %v2918
      %v3044 = vadd.f32 %v2555, %v2918
      %v3045 = vadd.f32 %v2562, %v2918
      %v3046 = vadd.f32 %v2569, %v2918
      %v3047 = vadd.f32 %v2576, %v2918
      %v3048 = vadd.f32 %v2583, %v2918
      %v3049 = vadd.f32 %v2590, %v2918
      %v3050 = vadd.f32 %v2597, %v2918
      %v3051 = vadd.f32 %v2604, %v2918
      %v3052 = vadd.f32 %v2611, %v2918
      %v3053 = vadd.f32 %v2618, %v2918
      %v3054 = vadd.f32 %v2625, %v2918
      %v3055 = vadd.f32 %v2632, %v2918
      %v3056 = vadd.f32 %v2639, %v2918
      %v3057 = vadd.f32 %v2646, %v2918
      %v3058 = vadd.f32 %v2653, %v2918
      %v3059 = vadd.f32 %v2660, %v2918
      %v3060 = vadd.f32 %v2667, %v2918
      %v3061 = vadd.f32 %v2674, %v2918
      %v3062 = vadd.f32 %v2681, %v2918
      %v3063 = vadd.f32 %v2688, %v2918
      %v3064 = vadd.f32 %v2695, %v2918
      %v3065 = vadd.f32 %v2702, %v2918
      %v3066 = vadd.f32 %v2709, %v2918
      %v3067 = vadd.f32 %v2716, %v2918
      %v3068 = vadd.f32 %v2723, %v2918
      %v3069 = vadd.f32 %v2730, %v2918
      %v3070 = vadd.f32 %v2737, %v2918
      %v3071 = vadd.f32 %v2744, %v2918
      %v3072 = vadd.f32 %v2751, %v2918
      %v3073 = vadd.f32 %v2758, %v2918
      %v3074 = vadd.f32 %v2765, %v2918
      %v3075 = vadd.f32 %v2772, %v2918
      %v3076 = vadd.f32 %v2779, %v2918
      %v3077 = vadd.f32 %v2786, %v2918
      %v3078 = vadd.f32 %v2793, %v2918
      %v3079 = vadd.f32 %v2800, %v2918
      %v3080 = vadd.f32 %v2807, %v2918
      %v3081 = vadd.f32 %v2814, %v2918
      %v3082 = vadd.f32 %v2821, %v2918
      %v3083 = vadd.f32 %v2828, %v2918
      %v3084 = vadd.f32 %v2835, %v2918
      %v3085 = vadd.f32 %v2842, %v2918
      %v3086 = vadd.f32 %v2849, %v2918
      %v3087 = vadd.f32 %v2856, %v2918
      %v3088 = vadd.f32 %v2863, %v2918
      %v3089 = vadd.f32 %v2870, %v2918
      %v3090 = vadd.f32 %v2877, %v2918
      %v3091 = vadd.f32 %v2884, %v2918
      %v3092 = vadd.f32 %v2891, %v2918
      %v3093 = vadd.f32 %v2898, %v2918
      %v3094 = vadd.f32 %v2905, %v2918
      %v3095 = vadd.f32 %v2912, %v2918
      %v3096 = vmax.f32 %v2920, 0.0
      %v3097 = vmax.f32 %v2921, 0.0
      %v3098 = vmax.f32 %v2922, 0.0
      %v3099 = vmax.f32 %v2923, 0.0
      %v3100 = vmax.f32 %v2924, 0.0
      %v3101 = vmax.f32 %v2925, 0.0
      %v3102 = vmax.f32 %v2926, 0.0
      %v3103 = vmax.f32 %v2927, 0.0
      %v3104 = vmax.f32 %v2928, 0.0
      %v3105 = vmax.f32 %v2929, 0.0
      %v3106 = vmax.f32 %v2930, 0.0
      %v3107 = vmax.f32 %v2931, 0.0
      %v3108 = vmax.f32 %v2932, 0.0
      %v3109 = vmax.f32 %v2933, 0.0
      %v3110 = vmax.f32 %v2934, 0.0
      %v3111 = vmax.f32 %v2935, 0.0
      %v3112 = vmax.f32 %v2936, 0.0
      %v3113 = vmax.f32 %v2937, 0.0
      %v3114 = vmax.f32 %v2938, 0.0
      %v3115 = vmax.f32 %v2939, 0.0
      %v3116 = vmax.f32 %v2940, 0.0
      %v3117 = vmax.f32 %v2941, 0.0
      %v3118 = vmax.f32 %v2942, 0.0
      %v3119 = vmax.f32 %v2943, 0.0
      %v3120 = vmax.f32 %v2944, 0.0
      %v3121 = vmax.f32 %v2945, 0.0
      %v3122 = vmax.f32 %v2946, 0.0
      %v3123 = vmax.f32 %v2947, 0.0
      %v3124 = vmax.f32 %v2948, 0.0
      %v3125 = vmax.f32 %v2949, 0.0
      %v3126 = vmax.f32 %v2950, 0.0
      %v3127 = vmax.f32 %v2951, 0.0
      %v3128 = vmax.f32 %v2952, 0.0
      %v3129 = vmax.f32 %v2953, 0.0
      %v3130 = vmax.f32 %v2954, 0.0
      %v3131 = vmax.f32 %v2955, 0.0
      %v3132 = vmax.f32 %v2956, 0.0
      %v3133 = vmax.f32 %v2957, 0.0
      %v3134 = vmax.f32 %v2958, 0.0
      %v3135 = vmax.f32 %v2959, 0.0
      %v3136 = vmax.f32 %v2960, 0.0
      %v3137 = vmax.f32 %v2961, 0.0
      %v3138 = vmax.f32 %v2962, 0.0
      %v3139 = vmax.f32 %v2963, 0.0
      %v3140 = vmax.f32 %v2964, 0.0
      %v3141 = vmax.f32 %v2965, 0.0
      %v3142 = vmax.f32 %v2966, 0.0
      %v3143 = vmax.f32 %v2967, 0.0
      %v3144 = vmax.f32 %v2968, 0.0
      %v3145 = vmax.f32 %v2969, 0.0
      %v3146 = vmax.f32 %v2970, 0.0
      %v3147 = vmax.f32 %v2971, 0.0
      %v3148 = vmax.f32 %v2972, 0.0
      %v3149 = vmax.f32 %v2973, 0.0
      %v3150 = vmax.f32 %v2974, 0.0
      %v3151 = vmax.f32 %v2975, 0.0
      %v3152 = vmax.f32 %v2976, 0.0
      %v3153 = vmax.f32 %v2977, 0.0
      %v3154 = vmax.f32 %v2978, 0.0
      %v3155 = vmax.f32 %v2979, 0.0
      %v3156 = vmax.f32 %v2980, 0.0
      %v3157 = vmax.f32 %v2981, 0.0
      %v3158 = vmax.f32 %v2982, 0.0
      %v3159 = vmax.f32 %v2983, 0.0
      %v3160 = vmax.f32 %v2984, 0.0
      %v3161 = vmax.f32 %v2985, 0.0
      %v3162 = vmax.f32 %v2986, 0.0
      %v3163 = vmax.f32 %v2987, 0.0
      %v3164 = vmax.f32 %v2988, 0.0
      %v3165 = vmax.f32 %v2989, 0.0
      %v3166 = vmax.f32 %v2990, 0.0
      %v3167 = vmax.f32 %v2991, 0.0
      %v3168 = vmax.f32 %v2992, 0.0
      %v3169 = vmax.f32 %v2993, 0.0
      %v3170 = vmax.f32 %v2994, 0.0
      %v3171 = vmax.f32 %v2995, 0.0
      %v3172 = vmax.f32 %v2996, 0.0
      %v3173 = vmax.f32 %v2997, 0.0
      %v3174 = vmax.f32 %v2998, 0.0
      %v3175 = vmax.f32 %v2999, 0.0
      %v3176 = vmax.f32 %v3000, 0.0
      %v3177 = vmax.f32 %v3001, 0.0
      %v3178 = vmax.f32 %v3002, 0.0
      %v3179 = vmax.f32 %v3003, 0.0
      %v3180 = vmax.f32 %v3004, 0.0
      %v3181 = vmax.f32 %v3005, 0.0
      %v3182 = vmax.f32 %v3006, 0.0
      %v3183 = vmax.f32 %v3007, 0.0
      %v3184 = vmax.f32 %v3008, 0.0
      %v3185 = vmax.f32 %v3009, 0.0
      %v3186 = vmax.f32 %v3010, 0.0
      %v3187 = vmax.f32 %v3011, 0.0
      %v3188 = vmax.f32 %v3012, 0.0
      %v3189 = vmax.f32 %v3013, 0.0
      %v3190 = vmax.f32 %v3014, 0.0
      %v3191 = vmax.f32 %v3015, 0.0
      %v3192 = vmax.f32 %v3016, 0.0
      %v3193 = vmax.f32 %v3017, 0.0
      %v3194 = vmax.f32 %v3018, 0.0
      %v3195 = vmax.f32 %v3019, 0.0
      %v3196 = vmax.f32 %v3020, 0.0
      %v3197 = vmax.f32 %v3021, 0.0
      %v3198 = vmax.f32 %v3022, 0.0
      %v3199 = vmax.f32 %v3023, 0.0
      %v3200 = vmax.f32 %v3024, 0.0
      %v3201 = vmax.f32 %v3025, 0.0
      %v3202 = vmax.f32 %v3026, 0.0
      %v3203 = vmax.f32 %v3027, 0.0
      %v3204 = vmax.f32 %v3028, 0.0
      %v3205 = vmax.f32 %v3029, 0.0
      %v3206 = vmax.f32 %v3030, 0.0
      %v3207 = vmax.f32 %v3031, 0.0
      %v3208 = vmax.f32 %v3032, 0.0
      %v3209 = vmax.f32 %v3033, 0.0
      %v3210 = vmax.f32 %v3034, 0.0
      %v3211 = vmax.f32 %v3035, 0.0
      %v3212 = vmax.f32 %v3036, 0.0
      %v3213 = vmax.f32 %v3037, 0.0
      %v3214 = vmax.f32 %v3038, 0.0
      %v3215 = vmax.f32 %v3039, 0.0
      %v3216 = vmax.f32 %v3040, 0.0
      %v3217 = vmax.f32 %v3041, 0.0
      %v3218 = vmax.f32 %v3042, 0.0
      %v3219 = vmax.f32 %v3043, 0.0
      %v3220 = vmax.f32 %v3044, 0.0
      %v3221 = vmax.f32 %v3045, 0.0
      %v3222 = vmax.f32 %v3046, 0.0
      %v3223 = vmax.f32 %v3047, 0.0
      %v3224 = vmax.f32 %v3048, 0.0
      %v3225 = vmax.f32 %v3049, 0.0
      %v3226 = vmax.f32 %v3050, 0.0
      %v3227 = vmax.f32 %v3051, 0.0
      %v3228 = vmax.f32 %v3052, 0.0
      %v3229 = vmax.f32 %v3053, 0.0
      %v3230 = vmax.f32 %v3054, 0.0
      %v3231 = vmax.f32 %v3055, 0.0
      %v3232 = vmax.f32 %v3056, 0.0
      %v3233 = vmax.f32 %v3057, 0.0
      %v3234 = vmax.f32 %v3058, 0.0
      %v3235 = vmax.f32 %v3059, 0.0
      %v3236 = vmax.f32 %v3060, 0.0
      %v3237 = vmax.f32 %v3061, 0.0
      %v3238 = vmax.f32 %v3062, 0.0
      %v3239 = vmax.f32 %v3063, 0.0
      %v3240 = vmax.f32 %v3064, 0.0
      %v3241 = vmax.f32 %v3065, 0.0
      %v3242 = vmax.f32 %v3066, 0.0
      %v3243 = vmax.f32 %v3067, 0.0
      %v3244 = vmax.f32 %v3068, 0.0
      %v3245 = vmax.f32 %v3069, 0.0
      %v3246 = vmax.f32 %v3070, 0.0
      %v3247 = vmax.f32 %v3071, 0.0
      %v3248 = vmax.f32 %v3072, 0.0
      %v3249 = vmax.f32 %v3073, 0.0
      %v3250 = vmax.f32 %v3074, 0.0
      %v3251 = vmax.f32 %v3075, 0.0
      %v3252 = vmax.f32 %v3076, 0.0
      %v3253 = vmax.f32 %v3077, 0.0
      %v3254 = vmax.f32 %v3078, 0.0
      %v3255 = vmax.f32 %v3079, 0.0
      %v3256 = vmax.f32 %v3080, 0.0
      %v3257 = vmax.f32 %v3081, 0.0
      %v3258 = vmax.f32 %v3082, 0.0
      %v3259 = vmax.f32 %v3083, 0.0
      %v3260 = vmax.f32 %v3084, 0.0
      %v3261 = vmax.f32 %v3085, 0.0
      %v3262 = vmax.f32 %v3086, 0.0
      %v3263 = vmax.f32 %v3087, 0.0
      %v3264 = vmax.f32 %v3088, 0.0
      %v3265 = vmax.f32 %v3089, 0.0
      %v3266 = vmax.f32 %v3090, 0.0
      %v3267 = vmax.f32 %v3091, 0.0
      %v3268 = vmax.f32 %v3092, 0.0
      %v3269 = vmax.f32 %v3093, 0.0
      %v3270 = vmax.f32 %v3094, 0.0
      %v3271 = vmax.f32 %v3095, 0.0
      %v3448 = vrot.slane %v3097, 7
      %vm3449 = vcmask 1041409
      %v3450 = vsel %vm3449, %v3448, %v3096
      %v3451 = vrot.slane %v3098, 6
      %vm3452 = vcmask 1042434
      %v3453 = vsel %vm3452, %v3451, %v3450
      %v3454 = vrot.slane %v3099, 5
      %vm3455 = vcmask 1043459
      %v3456 = vsel %vm3455, %v3454, %v3453
      %v3457 = vrot.slane %v3100, 4
      %vm3458 = vcmask 1044484
      %v3459 = vsel %vm3458, %v3457, %v3456
      %v3460 = vrot.slane %v3101, 3
      %vm3461 = vcmask 1045509
      %v3462 = vsel %vm3461, %v3460, %v3459
      %v3463 = vrot.slane %v3102, 2
      %vm3464 = vcmask 1046534
      %v3465 = vsel %vm3464, %v3463, %v3462
      %v3466 = vrot.slane %v3103, 1
      %vm3467 = vcmask 1047559
      %v3468 = vsel %vm3467, %v3466, %v3465
      %v3469 = vrot.slane %v3105, 7
      %v3470 = vsel %vm3449, %v3469, %v3104
      %v3471 = vrot.slane %v3106, 6
      %v3472 = vsel %vm3452, %v3471, %v3470
      %v3473 = vrot.slane %v3107, 5
      %v3474 = vsel %vm3455, %v3473, %v3472
      %v3475 = vrot.slane %v3108, 4
      %v3476 = vsel %vm3458, %v3475, %v3474
      %v3477 = vrot.slane %v3109, 3
      %v3478 = vsel %vm3461, %v3477, %v3476
      %v3479 = vrot.slane %v3110, 2
      %v3480 = vsel %vm3464, %v3479, %v3478
      %v3481 = vrot.slane %v3111, 1
      %v3482 = vsel %vm3467, %v3481, %v3480
      %v3483 = vrot.slane %v3113, 7
      %v3484 = vsel %vm3449, %v3483, %v3112
      %v3485 = vrot.slane %v3114, 6
      %v3486 = vsel %vm3452, %v3485, %v3484
      %v3487 = vrot.slane %v3115, 5
      %v3488 = vsel %vm3455, %v3487, %v3486
      %v3489 = vrot.slane %v3116, 4
      %v3490 = vsel %vm3458, %v3489, %v3488
      %v3491 = vrot.slane %v3117, 3
      %v3492 = vsel %vm3461, %v3491, %v3490
      %v3493 = vrot.slane %v3118, 2
      %v3494 = vsel %vm3464, %v3493, %v3492
      %v3495 = vrot.slane %v3119, 1
      %v3496 = vsel %vm3467, %v3495, %v3494
      %v3497 = vrot.slane %v3121, 7
      %v3498 = vsel %vm3449, %v3497, %v3120
      %v3499 = vrot.slane %v3122, 6
      %v3500 = vsel %vm3452, %v3499, %v3498
      %v3501 = vrot.slane %v3123, 5
      %v3502 = vsel %vm3455, %v3501, %v3500
      %v3503 = vrot.slane %v3124, 4
      %v3504 = vsel %vm3458, %v3503, %v3502
      %v3505 = vrot.slane %v3125, 3
      %v3506 = vsel %vm3461, %v3505, %v3504
      %v3507 = vrot.slane %v3126, 2
      %v3508 = vsel %vm3464, %v3507, %v3506
      %v3509 = vrot.slane %v3127, 1
      %v3510 = vsel %vm3467, %v3509, %v3508
      %v3511 = vrot.slane %v3129, 7
      %v3512 = vsel %vm3449, %v3511, %v3128
      %v3513 = vrot.slane %v3130, 6
      %v3514 = vsel %vm3452, %v3513, %v3512
      %v3515 = vrot.slane %v3131, 5
      %v3516 = vsel %vm3455, %v3515, %v3514
      %v3517 = vrot.slane %v3132, 4
      %v3518 = vsel %vm3458, %v3517, %v3516
      %v3519 = vrot.slane %v3133, 3
      %v3520 = vsel %vm3461, %v3519, %v3518
      %v3521 = vrot.slane %v3134, 2
      %v3522 = vsel %vm3464, %v3521, %v3520
      %v3523 = vrot.slane %v3135, 1
      %v3524 = vsel %vm3467, %v3523, %v3522
      %v3525 = vrot.slane %v3137, 7
      %v3526 = vsel %vm3449, %v3525, %v3136
      %v3527 = vrot.slane %v3138, 6
      %v3528 = vsel %vm3452, %v3527, %v3526
      %v3529 = vrot.slane %v3139, 5
      %v3530 = vsel %vm3455, %v3529, %v3528
      %v3531 = vrot.slane %v3140, 4
      %v3532 = vsel %vm3458, %v3531, %v3530
      %v3533 = vrot.slane %v3141, 3
      %v3534 = vsel %vm3461, %v3533, %v3532
      %v3535 = vrot.slane %v3142, 2
      %v3536 = vsel %vm3464, %v3535, %v3534
      %v3537 = vrot.slane %v3143, 1
      %v3538 = vsel %vm3467, %v3537, %v3536
      %v3539 = vrot.slane %v3145, 7
      %v3540 = vsel %vm3449, %v3539, %v3144
      %v3541 = vrot.slane %v3146, 6
      %v3542 = vsel %vm3452, %v3541, %v3540
      %v3543 = vrot.slane %v3147, 5
      %v3544 = vsel %vm3455, %v3543, %v3542
      %v3545 = vrot.slane %v3148, 4
      %v3546 = vsel %vm3458, %v3545, %v3544
      %v3547 = vrot.slane %v3149, 3
      %v3548 = vsel %vm3461, %v3547, %v3546
      %v3549 = vrot.slane %v3150, 2
      %v3550 = vsel %vm3464, %v3549, %v3548
      %v3551 = vrot.slane %v3151, 1
      %v3552 = vsel %vm3467, %v3551, %v3550
      %v3553 = vrot.slane %v3153, 7
      %v3554 = vsel %vm3449, %v3553, %v3152
      %v3555 = vrot.slane %v3154, 6
      %v3556 = vsel %vm3452, %v3555, %v3554
      %v3557 = vrot.slane %v3155, 5
      %v3558 = vsel %vm3455, %v3557, %v3556
      %v3559 = vrot.slane %v3156, 4
      %v3560 = vsel %vm3458, %v3559, %v3558
      %v3561 = vrot.slane %v3157, 3
      %v3562 = vsel %vm3461, %v3561, %v3560
      %v3563 = vrot.slane %v3158, 2
      %v3564 = vsel %vm3464, %v3563, %v3562
      %v3565 = vrot.slane %v3159, 1
      %v3566 = vsel %vm3467, %v3565, %v3564
      %v3567 = vrot.slane %v3161, 7
      %v3568 = vsel %vm3449, %v3567, %v3160
      %v3569 = vrot.slane %v3162, 6
      %v3570 = vsel %vm3452, %v3569, %v3568
      %v3571 = vrot.slane %v3163, 5
      %v3572 = vsel %vm3455, %v3571, %v3570
      %v3573 = vrot.slane %v3164, 4
      %v3574 = vsel %vm3458, %v3573, %v3572
      %v3575 = vrot.slane %v3165, 3
      %v3576 = vsel %vm3461, %v3575, %v3574
      %v3577 = vrot.slane %v3166, 2
      %v3578 = vsel %vm3464, %v3577, %v3576
      %v3579 = vrot.slane %v3167, 1
      %v3580 = vsel %vm3467, %v3579, %v3578
      %v3581 = vrot.slane %v3169, 7
      %v3582 = vsel %vm3449, %v3581, %v3168
      %v3583 = vrot.slane %v3170, 6
      %v3584 = vsel %vm3452, %v3583, %v3582
      %v3585 = vrot.slane %v3171, 5
      %v3586 = vsel %vm3455, %v3585, %v3584
      %v3587 = vrot.slane %v3172, 4
      %v3588 = vsel %vm3458, %v3587, %v3586
      %v3589 = vrot.slane %v3173, 3
      %v3590 = vsel %vm3461, %v3589, %v3588
      %v3591 = vrot.slane %v3174, 2
      %v3592 = vsel %vm3464, %v3591, %v3590
      %v3593 = vrot.slane %v3175, 1
      %v3594 = vsel %vm3467, %v3593, %v3592
      %v3595 = vrot.slane %v3177, 7
      %v3596 = vsel %vm3449, %v3595, %v3176
      %v3597 = vrot.slane %v3178, 6
      %v3598 = vsel %vm3452, %v3597, %v3596
      %v3599 = vrot.slane %v3179, 5
      %v3600 = vsel %vm3455, %v3599, %v3598
      %v3601 = vrot.slane %v3180, 4
      %v3602 = vsel %vm3458, %v3601, %v3600
      %v3603 = vrot.slane %v3181, 3
      %v3604 = vsel %vm3461, %v3603, %v3602
      %v3605 = vrot.slane %v3182, 2
      %v3606 = vsel %vm3464, %v3605, %v3604
      %v3607 = vrot.slane %v3183, 1
      %v3608 = vsel %vm3467, %v3607, %v3606
      %v3609 = vrot.slane %v3185, 7
      %v3610 = vsel %vm3449, %v3609, %v3184
      %v3611 = vrot.slane %v3186, 6
      %v3612 = vsel %vm3452, %v3611, %v3610
      %v3613 = vrot.slane %v3187, 5
      %v3614 = vsel %vm3455, %v3613, %v3612
      %v3615 = vrot.slane %v3188, 4
      %v3616 = vsel %vm3458, %v3615, %v3614
      %v3617 = vrot.slane %v3189, 3
      %v3618 = vsel %vm3461, %v3617, %v3616
      %v3619 = vrot.slane %v3190, 2
      %v3620 = vsel %vm3464, %v3619, %v3618
      %v3621 = vrot.slane %v3191, 1
      %v3622 = vsel %vm3467, %v3621, %v3620
      %v3623 = vrot.slane %v3193, 7
      %v3624 = vsel %vm3449, %v3623, %v3192
      %v3625 = vrot.slane %v3194, 6
      %v3626 = vsel %vm3452, %v3625, %v3624
      %v3627 = vrot.slane %v3195, 5
      %v3628 = vsel %vm3455, %v3627, %v3626
      %v3629 = vrot.slane %v3196, 4
      %v3630 = vsel %vm3458, %v3629, %v3628
      %v3631 = vrot.slane %v3197, 3
      %v3632 = vsel %vm3461, %v3631, %v3630
      %v3633 = vrot.slane %v3198, 2
      %v3634 = vsel %vm3464, %v3633, %v3632
      %v3635 = vrot.slane %v3199, 1
      %v3636 = vsel %vm3467, %v3635, %v3634
      %v3637 = vrot.slane %v3201, 7
      %v3638 = vsel %vm3449, %v3637, %v3200
      %v3639 = vrot.slane %v3202, 6
      %v3640 = vsel %vm3452, %v3639, %v3638
      %v3641 = vrot.slane %v3203, 5
      %v3642 = vsel %vm3455, %v3641, %v3640
      %v3643 = vrot.slane %v3204, 4
      %v3644 = vsel %vm3458, %v3643, %v3642
      %v3645 = vrot.slane %v3205, 3
      %v3646 = vsel %vm3461, %v3645, %v3644
      %v3647 = vrot.slane %v3206, 2
      %v3648 = vsel %vm3464, %v3647, %v3646
      %v3649 = vrot.slane %v3207, 1
      %v3650 = vsel %vm3467, %v3649, %v3648
      %v3651 = vrot.slane %v3209, 7
      %v3652 = vsel %vm3449, %v3651, %v3208
      %v3653 = vrot.slane %v3210, 6
      %v3654 = vsel %vm3452, %v3653, %v3652
      %v3655 = vrot.slane %v3211, 5
      %v3656 = vsel %vm3455, %v3655, %v3654
      %v3657 = vrot.slane %v3212, 4
      %v3658 = vsel %vm3458, %v3657, %v3656
      %v3659 = vrot.slane %v3213, 3
      %v3660 = vsel %vm3461, %v3659, %v3658
      %v3661 = vrot.slane %v3214, 2
      %v3662 = vsel %vm3464, %v3661, %v3660
      %v3663 = vrot.slane %v3215, 1
      %v3664 = vsel %vm3467, %v3663, %v3662
      %v3665 = vrot.slane %v3217, 7
      %v3666 = vsel %vm3449, %v3665, %v3216
      %v3667 = vrot.slane %v3218, 6
      %v3668 = vsel %vm3452, %v3667, %v3666
      %v3669 = vrot.slane %v3219, 5
      %v3670 = vsel %vm3455, %v3669, %v3668
      %v3671 = vrot.slane %v3220, 4
      %v3672 = vsel %vm3458, %v3671, %v3670
      %v3673 = vrot.slane %v3221, 3
      %v3674 = vsel %vm3461, %v3673, %v3672
      %v3675 = vrot.slane %v3222, 2
      %v3676 = vsel %vm3464, %v3675, %v3674
      %v3677 = vrot.slane %v3223, 1
      %v3678 = vsel %vm3467, %v3677, %v3676
      %v3679 = vrot.slane %v3225, 7
      %v3680 = vsel %vm3449, %v3679, %v3224
      %v3681 = vrot.slane %v3226, 6
      %v3682 = vsel %vm3452, %v3681, %v3680
      %v3683 = vrot.slane %v3227, 5
      %v3684 = vsel %vm3455, %v3683, %v3682
      %v3685 = vrot.slane %v3228, 4
      %v3686 = vsel %vm3458, %v3685, %v3684
      %v3687 = vrot.slane %v3229, 3
      %v3688 = vsel %vm3461, %v3687, %v3686
      %v3689 = vrot.slane %v3230, 2
      %v3690 = vsel %vm3464, %v3689, %v3688
      %v3691 = vrot.slane %v3231, 1
      %v3692 = vsel %vm3467, %v3691, %v3690
      %v3693 = vrot.slane %v3233, 7
      %v3694 = vsel %vm3449, %v3693, %v3232
      %v3695 = vrot.slane %v3234, 6
      %v3696 = vsel %vm3452, %v3695, %v3694
      %v3697 = vrot.slane %v3235, 5
      %v3698 = vsel %vm3455, %v3697, %v3696
      %v3699 = vrot.slane %v3236, 4
      %v3700 = vsel %vm3458, %v3699, %v3698
      %v3701 = vrot.slane %v3237, 3
      %v3702 = vsel %vm3461, %v3701, %v3700
      %v3703 = vrot.slane %v3238, 2
      %v3704 = vsel %vm3464, %v3703, %v3702
      %v3705 = vrot.slane %v3239, 1
      %v3706 = vsel %vm3467, %v3705, %v3704
      %v3707 = vrot.slane %v3241, 7
      %v3708 = vsel %vm3449, %v3707, %v3240
      %v3709 = vrot.slane %v3242, 6
      %v3710 = vsel %vm3452, %v3709, %v3708
      %v3711 = vrot.slane %v3243, 5
      %v3712 = vsel %vm3455, %v3711, %v3710
      %v3713 = vrot.slane %v3244, 4
      %v3714 = vsel %vm3458, %v3713, %v3712
      %v3715 = vrot.slane %v3245, 3
      %v3716 = vsel %vm3461, %v3715, %v3714
      %v3717 = vrot.slane %v3246, 2
      %v3718 = vsel %vm3464, %v3717, %v3716
      %v3719 = vrot.slane %v3247, 1
      %v3720 = vsel %vm3467, %v3719, %v3718
      %v3721 = vrot.slane %v3249, 7
      %v3722 = vsel %vm3449, %v3721, %v3248
      %v3723 = vrot.slane %v3250, 6
      %v3724 = vsel %vm3452, %v3723, %v3722
      %v3725 = vrot.slane %v3251, 5
      %v3726 = vsel %vm3455, %v3725, %v3724
      %v3727 = vrot.slane %v3252, 4
      %v3728 = vsel %vm3458, %v3727, %v3726
      %v3729 = vrot.slane %v3253, 3
      %v3730 = vsel %vm3461, %v3729, %v3728
      %v3731 = vrot.slane %v3254, 2
      %v3732 = vsel %vm3464, %v3731, %v3730
      %v3733 = vrot.slane %v3255, 1
      %v3734 = vsel %vm3467, %v3733, %v3732
      %v3735 = vrot.slane %v3257, 7
      %v3736 = vsel %vm3449, %v3735, %v3256
      %v3737 = vrot.slane %v3258, 6
      %v3738 = vsel %vm3452, %v3737, %v3736
      %v3739 = vrot.slane %v3259, 5
      %v3740 = vsel %vm3455, %v3739, %v3738
      %v3741 = vrot.slane %v3260, 4
      %v3742 = vsel %vm3458, %v3741, %v3740
      %v3743 = vrot.slane %v3261, 3
      %v3744 = vsel %vm3461, %v3743, %v3742
      %v3745 = vrot.slane %v3262, 2
      %v3746 = vsel %vm3464, %v3745, %v3744
      %v3747 = vrot.slane %v3263, 1
      %v3748 = vsel %vm3467, %v3747, %v3746
      %v3749 = vrot.slane %v3265, 7
      %v3750 = vsel %vm3449, %v3749, %v3264
      %v3751 = vrot.slane %v3266, 6
      %v3752 = vsel %vm3452, %v3751, %v3750
      %v3753 = vrot.slane %v3267, 5
      %v3754 = vsel %vm3455, %v3753, %v3752
      %v3755 = vrot.slane %v3268, 4
      %v3756 = vsel %vm3458, %v3755, %v3754
      %v3757 = vrot.slane %v3269, 3
      %v3758 = vsel %vm3461, %v3757, %v3756
      %v3759 = vrot.slane %v3270, 2
      %v3760 = vsel %vm3464, %v3759, %v3758
      %v3761 = vrot.slane %v3271, 1
      %v3762 = vsel %vm3467, %v3761, %v3760
      %3785 = vst.msk [vmem:[%s172] sm:$0xff] %vm1680, %v3468
      %3786 = vst.msk [vmem:[%s172 + $0x8] sm:$0xff] %vm1680, %v3482
      %3787 = vst.msk [vmem:[%s172 + $0x10] sm:$0xff] %vm1680, %v3496
      %3788 = vst.msk [vmem:[%s172 + $0x18] sm:$0xff] %vm1680, %v3510
      %3789 = vst.msk [vmem:[%s172 + $0x20] sm:$0xff] %vm1680, %v3524
      %3790 = vst.msk [vmem:[%s172 + $0x28] sm:$0xff] %vm1680, %v3538
      %3791 = vst.msk [vmem:[%s172 + $0x30] sm:$0xff] %vm1680, %v3552
      %3792 = vst.msk [vmem:[%s172 + $0x38] sm:$0xff] %vm1680, %v3566
      %3793 = vst.msk [vmem:[%s172 + $0x40] sm:$0xff] %vm1680, %v3580
      %3794 = vst.msk [vmem:[%s172 + $0x48] sm:$0xff] %vm1680, %v3594
      %3795 = vst.msk [vmem:[%s172 + $0x50] sm:$0xff] %vm1680, %v3608
      %3796 = vst.msk [vmem:[%s172 + $0x58] sm:$0xff] %vm1680, %v3622
      %3797 = vst.msk [vmem:[%s172 + $0x60] sm:$0xff] %vm1680, %v3636
      %3798 = vst.msk [vmem:[%s172 + $0x68] sm:$0xff] %vm1680, %v3650
      %3799 = vst.msk [vmem:[%s172 + $0x70] sm:$0xff] %vm1680, %v3664
      %3800 = vst.msk [vmem:[%s172 + $0x78] sm:$0xff] %vm1680, %v3678
      %3801 = vst.msk [vmem:[%s172 + $0x80] sm:$0xff] %vm1680, %v3692
      %3802 = vst.msk [vmem:[%s172 + $0x88] sm:$0xff] %vm1680, %v3706
      %3803 = vst.msk [vmem:[%s172 + $0x90] sm:$0xff] %vm1680, %v3720
      %3804 = vst.msk [vmem:[%s172 + $0x98] sm:$0xff] %vm1680, %v3734
      %3805 = vst.msk [vmem:[%s172 + $0xa0] sm:$0xff] %vm1680, %v3748
      %3806 = vst.msk [vmem:[%s172 + $0xa8] sm:$0xff] %vm1680, %v3762
      %s3807 = smul.u32 22, %s14
      %p3808 = scmp.lt.s32.totalorder %s3807, 87
      %s3809 = scalar_select %p3808, %s3807, 87
      %s3810 = smul.addr %s3809, 8
      %s3811 = scalar_lea.vmem %s3, %s3810
      // Predicated region
      $region33: #{conv_3d_forward.2} parent=31 // pred_check
        %p3812 = pneg %p100
      $region34: #{conv_3d_forward.2} parent=31 // pred_check_branch
        %3814 = sbr.rel (%p3812) target = $region36
      $region35: #{conv_3d_forward.2} parent=31 // pred_region
        %s3815 = smul.u32 22, %s14
      $region36: #{conv_3d_forward.2} parent=31 // pred_fallthru
        _
    $region32: #{conv_3d_forward.2} parent=5 // pred_fallthru
      _
    %p3816 = scmp.le.s32.totalorder 2, %s9
    // Predicated region
    $region37: #{conv_3d_forward.2} parent=5 // pred_check
      %p3817 = pneg %p3816
    $region38: #{conv_3d_forward.2} parent=5 // pred_check_branch
      %3819 = sbr.rel (%p3817) target = $region40
    $region39: #{conv_3d_forward.2} parent=5 // pred_region
      %s3820 = ssub.s32 %s9, 2
      // Predicated region
      $region41: #{conv_3d_forward.2} parent=39 // pred_check
        %p3821 = pneg %p106
      $region42: #{conv_3d_forward.2} parent=39 // pred_check_branch
        %3823 = sbr.rel (%p3821) target = $region44
      $region43: #{conv_3d_forward.2} parent=39 // pred_region
        %s3824 = smul.u32 22, %s15
        %p3825 = scmp.lt.s32.totalorder %s3824, 87
        %s3826 = scalar_select %p3825, %s3824, 87
        %s3827 = smul.addr %s3826, 8
        %s3828 = scalar_lea.vmem %s3, %s3827
      $region44: #{conv_3d_forward.2} parent=39 // pred_fallthru
        _
    $region40: #{conv_3d_forward.2} parent=5 // pred_fallthru
      _
  $region6: #{conv_3d_forward.2} parent=0 // loop_footer
    %s13 = sadd.s32 1, %s9
  $region7: #{conv_3d_forward.2} parent=0 // loop_footer_branch
    %8 = sbr.rel target = $region3
  $region8: #{conv_3d_forward.2} parent=0 // loop_exit
    _

// kernel: conv_3d_forward.3
$region0: #{conv_3d_forward.3}
  #allocation0 [shape = 'u32[]', space=smem, size = 0x4, offset = 0x4, fixed_abs, tag = 'smem constant byte address 0x4 - core index']
  #allocation1 [shape = 'u32[144,128]{1,0:T(1,128)}', space=vmem, size = 0x12000, scoped, tag = 'internal scratch']
  %s0 = inlined_call_operand.vmem [shape: bf16[6,4,101,64], index: 0, kind: input, shape index: {}]
  %s1 = inlined_call_operand.vmem [shape: bf16[27,64,128], index: 1, kind: input, shape index: {}]
  %s2 = inlined_call_operand.vmem [shape: f32[1,128], index: 2, kind: input, shape index: {}]
  %s3 = inlined_call_operand.vmem [shape: f32[6,81,128], index: 3, kind: output, shape index: {}]
  %s4 = sld [smem:[#allocation0]]
  $region45: #{conv_3d_forward.3} parent=0
    _
  %s6 = ssub.s32 1, %s4
  %s7 = scalar_select 0, %s6, %s4
  loop: start=0, step=1, limit=8
  $region2: #{conv_3d_forward.3} parent=0 // loop_pre_header
    _
  $region3: #{conv_3d_forward.3} parent=0 // loop_header
    %s9 = sphi 0, %s13
    %p10 = scmp.ge.s32.totalorder %s9, 8
    %s19 = sphi 0, %s21
    %s22 = sphi 0, %s19
    %s23 = sphi 0, %s22
    %s39 = sphi 0, %s23
    %s43 = sphi 0, %s43
    %s45 = sphi 0, %s43
    %s46 = sphi 0, %s45
    %s60 = sphi 0, %s46
    %s64 = sphi 0, %s64
    %s66 = sphi 0, %s64
    %s67 = sphi 0, %s66
    %s81 = sphi 0, %s67
    %s87 = sphi 0, %s89
    %s90 = sphi 0, %s87
    %s91 = sphi 0, %s90
    %s107 = sphi 0, %s91
  $region4: #{conv_3d_forward.3} parent=0 // loop_header_branch
    %12 = sbr.rel (%p10) target = $region8
  $region5: #{conv_3d_forward.3} parent=0 // loop_body
    %s14 = ssub.s32 %s9, 1
    %s15 = ssub.s32 %s9, 2
    %s16 = sadd.s32 %s9, 1
    %s17 = ssub.s32 %s9, %s16
    %p18 = scmp.eq.s32.totalorder %s17, 0
    %s20 = sadd.s32 %s19, 1
    %s21 = scalar_select %p18, %s19, %s20
    %p24 = pneg %p18
    %p25 = scmp.eq.s32.totalorder %s9, 5
    %p26 = por %p24, %p25
    %p27 = scmp.ne.s32.totalorder %s19, %s22
    %p28 = scmp.eq.s32.totalorder %s9, 0
    %p29 = por %p27, %p28
    %p30 = scmp.ne.s32.totalorder %s19, %s22
    %p31 = scmp.eq.s32.totalorder %s14, 5
    %p32 = por %p30, %p31
    %p33 = scmp.ne.s32.totalorder %s22, %s23
    %p34 = scmp.eq.s32.totalorder %s14, 0
    %p35 = por %p33, %p34
    %p36 = scmp.ne.s32.totalorder %s22, %s23
    %p37 = scmp.eq.s32.totalorder %s15, 5
    %p38 = por %p36, %p37
    %p40 = scmp.ne.s32.totalorder %s23, %s39
    %p41 = scmp.eq.s32.totalorder %s15, 0
    %p42 = por %p40, %p41
    %s44 = sadd.s32 %s43, 1
    %p47 = scmp.eq.s32.totalorder %s9, 5
    %p48 = scmp.ne.s32.totalorder %s43, %s45
    %p49 = scmp.eq.s32.totalorder %s9, 0
    %p50 = por %p48, %p49
    %p51 = scmp.ne.s32.totalorder %s43, %s45
    %p52 = scmp.eq.s32.totalorder %s14, 5
    %p53 = por %p51, %p52
    %p54 = scmp.ne.s32.totalorder %s45, %s46
    %p55 = scmp.eq.s32.totalorder %s14, 0
    %p56 = por %p54, %p55
    %p57 = scmp.ne.s32.totalorder %s45, %s46
    %p58 = scmp.eq.s32.totalorder %s15, 5
    %p59 = por %p57, %p58
    %p61 = scmp.ne.s32.totalorder %s46, %s60
    %p62 = scmp.eq.s32.totalorder %s15, 0
    %p63 = por %p61, %p62
    %s65 = sadd.s32 %s64, 1
    %p68 = scmp.eq.s32.totalorder %s9, 5
    %p69 = scmp.ne.s32.totalorder %s64, %s66
    %p70 = scmp.eq.s32.totalorder %s9, 0
    %p71 = por %p69, %p70
    %p72 = scmp.ne.s32.totalorder %s64, %s66
    %p73 = scmp.eq.s32.totalorder %s14, 5
    %p74 = por %p72, %p73
    %p75 = scmp.ne.s32.totalorder %s66, %s67
    %p76 = scmp.eq.s32.totalorder %s14, 0
    %p77 = por %p75, %p76
    %p78 = scmp.ne.s32.totalorder %s66, %s67
    %p79 = scmp.eq.s32.totalorder %s15, 5
    %p80 = por %p78, %p79
    %p82 = scmp.ne.s32.totalorder %s67, %s81
    %p83 = scmp.eq.s32.totalorder %s15, 0
    %p84 = por %p82, %p83
    %s85 = ssub.s32 %s9, %s16
    %p86 = scmp.eq.s32.totalorder %s85, 0
    %s88 = sadd.s32 %s87, 1
    %s89 = scalar_select %p86, %s87, %s88
    %p92 = pneg %p86
    %p93 = scmp.eq.s32.totalorder %s9, 5
    %p94 = por %p92, %p93
    %p95 = scmp.ne.s32.totalorder %s87, %s90
    %p96 = scmp.eq.s32.totalorder %s9, 0
    %p97 = por %p95, %p96
    %p98 = scmp.ne.s32.totalorder %s87, %s90
    %p99 = scmp.eq.s32.totalorder %s14, 5
    %p100 = por %p98, %p99
    %p101 = scmp.ne.s32.totalorder %s90, %s91
    %p102 = scmp.eq.s32.totalorder %s14, 0
    %p103 = por %p101, %p102
    %p104 = scmp.ne.s32.totalorder %s90, %s91
    %p105 = scmp.eq.s32.totalorder %s15, 5
    %p106 = por %p104, %p105
    %p108 = scmp.ne.s32.totalorder %s91, %s107
    %p109 = scmp.eq.s32.totalorder %s15, 0
    %p110 = por %p108, %p109
    %p111 = scmp.le.s32.totalorder 1, %s9
    %p112 = scmp.lt.s32.totalorder %s9, 7
    %p113 = pnand %p111, %p112
    %p114 = pneg %p113
    // Predicated region
    $region9: #{conv_3d_forward.3} parent=5 // pred_check
      _
    $region10: #{conv_3d_forward.3} parent=5 // pred_check_branch
      %116 = sbr.rel (%p113) target = $region12
    $region11: #{conv_3d_forward.3} parent=5 // pred_region
      %s117 = ssub.s32 %s9, 1
      // Predicated region
      $region13: #{conv_3d_forward.3} parent=11 // pred_check
        %p118 = pneg %p56
      $region14: #{conv_3d_forward.3} parent=11 // pred_check_branch
        %120 = sbr.rel (%p118) target = $region16
      $region15: #{conv_3d_forward.3} parent=11 // pred_region
        _
      $region16: #{conv_3d_forward.3} parent=11 // pred_fallthru
        _
      // Predicated region
      $region17: #{conv_3d_forward.3} parent=11 // pred_check
        %p121 = pneg %p77
      $region18: #{conv_3d_forward.3} parent=11 // pred_check_branch
        %123 = sbr.rel (%p121) target = $region20
      $region19: #{conv_3d_forward.3} parent=11 // pred_region
        _
      $region20: #{conv_3d_forward.3} parent=11 // pred_fallthru
        _
    $region12: #{conv_3d_forward.3} parent=5 // pred_fallthru
      _
    %p124 = scmp.lt.s32.totalorder %s9, 6
    // Predicated region
    $region21: #{conv_3d_forward.3} parent=5 // pred_check
      %p125 = pneg %p124
    $region22: #{conv_3d_forward.3} parent=5 // pred_check_branch
      %127 = sbr.rel (%p125) target = $region24
    $region23: #{conv_3d_forward.3} parent=5 // pred_region
      // Predicated region
      $region25: #{conv_3d_forward.3} parent=23 // pred_check
        %p128 = pneg %p29
      $region26: #{conv_3d_forward.3} parent=23 // pred_check_branch
        %130 = sbr.rel (%p128) target = $region28
      $region27: #{conv_3d_forward.3} parent=23 // pred_region
        %p131 = scmp.lt.s32.totalorder %s9, 5
        %s132 = scalar_select %p131, %s9, 5
        %s133 = smul.addr %s132, 52
        %s134 = smul.addr %s133, 4
        %s135 = scalar_lea.vmem %s0, %s134
      $region28: #{conv_3d_forward.3} parent=23 // pred_fallthru
        _
    $region24: #{conv_3d_forward.3} parent=5 // pred_fallthru
      _
    %p136 = scmp.le.s32.totalorder 1, %s9
    %p137 = scmp.lt.s32.totalorder %s9, 7
    %p138 = pnand %p136, %p137
    %p139 = pneg %p138
    // Predicated region
    $region29: #{conv_3d_forward.3} parent=5 // pred_check
      _
    $region30: #{conv_3d_forward.3} parent=5 // pred_check_branch
      %141 = sbr.rel (%p138) target = $region32
    $region31: #{conv_3d_forward.3} parent=5 // pred_region
      %s142 = ssub.s32 %s9, 1
      %p143 = scmp.lt.s32.totalorder %s14, 5
      %s144 = scalar_select %p143, %s14, 5
      %s145 = smul.addr %s144, 52
      %s146 = smul.addr %s145, 4
      %s147 = scalar_lea.vmem %s0, %s146
      %p148 = pneg %p35
      %p149 = pneg %p32
      %p150 = pneg %p56
      %p151 = pneg %p53
      %p152 = pneg %p77
      %p153 = pneg %p74
      %p154 = pneg %p103
      %p155 = pneg %p100
      %p156 = scmp.lt.s32.totalorder %s14, 5
      %s157 = scalar_select %p156, %s14, 5
      %s158 = smul.addr %s157, 11
      %s159 = smul.addr %s158, 8
      %s160 = scalar_lea.vmem %s3, %s159
      %p161 = scmp.lt.s32.totalorder %s14, 5
      %s162 = scalar_select %p161, %s14, 5
      %s163 = smul.addr %s162, 52
      %s164 = smul.addr %s163, 4
      %s165 = scalar_lea.vmem %s0, %s164
      %p166 = scmp.lt.s32.totalorder %s14, 5
      %s167 = scalar_select %p166, %s14, 5
      %s168 = smul.addr %s167, 11
      %s169 = smul.addr %s168, 8
      %s170 = scalar_lea.vmem %s3, %s169
      %v172 = vld [vmem:[%s1] sm:$0xf]
      %v173 = vld [vmem:[%s1 + $0x4] sm:$0xf]
      %v174 = vld [vmem:[%s1 + $0x8] sm:$0xf]
      %v175 = vld [vmem:[%s1 + $0xc] sm:$0xf]
      %v176 = vld [vmem:[%s1 + $0x10] sm:$0xf]
      %v177 = vld [vmem:[%s1 + $0x14] sm:$0xf]
      %v178 = vld [vmem:[%s1 + $0x18] sm:$0xf]
      %v179 = vld [vmem:[%s1 + $0x1c] sm:$0xf]
      %v180 = vld [vmem:[%s165] sm:$0xf]
      %v181 = vld [vmem:[%s165 + $0x4] sm:$0xf]
      %v182 = vld [vmem:[%s165 + $0x8] sm:$0xf]
      %v183 = vld [vmem:[%s165 + $0xc] sm:$0xf]
      %v184 = vld [vmem:[%s165 + $0x10] sm:$0xf]
      %v185 = vld [vmem:[%s165 + $0x14] sm:$0xf]
      %v186 = vld [vmem:[%s165 + $0x18] sm:$0xf]
      %v187 = vld [vmem:[%s165 + $0x1c] sm:$0xf]
      %v188 = vld [vmem:[%s165 + $0x20] sm:$0xf]
      %v189 = vld [vmem:[%s165 + $0x24] sm:$0xf]
      %v190 = vld [vmem:[%s165 + $0x28] sm:$0x1]
      %s191 = scalar_lea.vmem %s165, 52
      %v192 = vld [vmem:[%s191] sm:$0xf]
      %v193 = vld [vmem:[%s191 + $0x4] sm:$0xf]
      %v194 = vld [vmem:[%s191 + $0x8] sm:$0xf]
      %v195 = vld [vmem:[%s191 + $0xc] sm:$0xf]
      %v196 = vld [vmem:[%s191 + $0x10] sm:$0xf]
      %v197 = vld [vmem:[%s191 + $0x14] sm:$0xf]
      %v198 = vld [vmem:[%s191 + $0x18] sm:$0xf]
      %v199 = vld [vmem:[%s191 + $0x1c] sm:$0xf]
      %v200 = vld [vmem:[%s191 + $0x20] sm:$0xf]
      %v201 = vld [vmem:[%s191 + $0x24] sm:$0xf]
      %v202 = vld [vmem:[%s191 + $0x28] sm:$0x1]
      %s203 = scalar_lea.vmem %s1, 32
      %v204 = vld [vmem:[%s203] sm:$0xf]
      %v205 = vld [vmem:[%s203 + $0x4] sm:$0xf]
      %v206 = vld [vmem:[%s203 + $0x8] sm:$0xf]
      %v207 = vld [vmem:[%s203 + $0xc] sm:$0xf]
      %v208 = vld [vmem:[%s203 + $0x10] sm:$0xf]
      %v209 = vld [vmem:[%s203 + $0x14] sm:$0xf]
      %v210 = vld [vmem:[%s203 + $0x18] sm:$0xf]
      %v211 = vld [vmem:[%s203 + $0x1c] sm:$0xf]
      %v223 = vunpack.c.l.b16 %v180
      %v224 = vunpack.c.l.b16 %v181
      %v225 = vunpack.c.l.b16 %v182
      %v226 = vunpack.c.l.b16 %v183
      %v227 = vunpack.c.l.b16 %v184
      %v228 = vunpack.c.l.b16 %v185
      %v229 = vunpack.c.l.b16 %v186
      %v230 = vunpack.c.l.b16 %v187
      %v231 = vunpack.c.l.b16 %v188
      %v232 = vunpack.c.l.b16 %v189
      %v233 = vunpack.c.l.b16 %v190
      %v234 = vpack.c.b16 %v224, %v223
      %v235 = vpack.c.b16 %v226, %v225
      %v236 = vpack.c.b16 %v228, %v227
      %v237 = vpack.c.b16 %v230, %v229
      %v238 = vpack.c.b16 %v232, %v231
      %v239 = vpack.c.b16 %v233, %v233
      %vm240 = vsmask.f32 7424
      %v242 = vshrl.u32 %v234, 16
      %v244 = vshll.u32 %v234, 16
      %v246 = vrot.slane %v244, 1
      %v247 = vor.u32 %v242, %v246
      %v249 = vshll.u32 %v235, 16
      %v251 = vrot.slane %v249, 1
      %v252 = vsel %vm240, %v247, %v251
      %v253 = vshrl.u32 %v235, 16
      %v255 = vor.u32 %v253, %v251
      %v257 = vshll.u32 %v236, 16
      %v259 = vrot.slane %v257, 1
      %v260 = vsel %vm240, %v255, %v259
      %v261 = vshrl.u32 %v236, 16
      %v263 = vor.u32 %v261, %v259
      %v265 = vshll.u32 %v237, 16
      %v267 = vrot.slane %v265, 1
      %v268 = vsel %vm240, %v263, %v267
      %v269 = vshrl.u32 %v237, 16
      %v271 = vor.u32 %v269, %v267
      %v273 = vshll.u32 %v238, 16
      %v275 = vrot.slane %v273, 1
      %v276 = vsel %vm240, %v271, %v275
      %v277 = vshrl.u32 %v238, 16
      %v279 = vor.u32 %v277, %v275
      %v281 = vshll.u32 %v239, 16
      %v283 = vrot.slane %v281, 1
      %v284 = vsel %vm240, %v279, %v283
      %v285 = vshrl.u32 %v239, 16
      %v295 = vunpack.c.l.b16 %v204
      %v296 = vunpack.c.l.b16 %v205
      %v297 = vunpack.c.l.b16 %v206
      %v298 = vunpack.c.l.b16 %v207
      %v299 = vunpack.c.l.b16 %v208
      %v300 = vunpack.c.l.b16 %v209
      %v301 = vunpack.c.l.b16 %v210
      %v302 = vunpack.c.l.b16 %v211
      %v303 = vpack.c.b16 %v296, %v295
      %v304 = vpack.c.b16 %v298, %v297
      %v305 = vpack.c.b16 %v300, %v299
      %v306 = vpack.c.b16 %v302, %v301
      %vm311 = vcmask 523264
      %v313 = vsel %vm311, %v252, 0
      %v316 = vsel %vm311, %v260, 0
      %v319 = vsel %vm311, %v268, 0
      %v322 = vsel %vm311, %v276, 0
      %v325 = vsel %vm311, %v284, 0
      %v328 = vsel %vm311, %v285, 0
      %330 = vmatprep.subr.bf16.mxu0 0
      %331 = vmatpush1.bf16.msra.mxu0 %v303
      %332 = vmatprep.subr.bf16.mxu0 0
      %333 = vmatpush1.bf16.msra.mxu0 %v304
      %334 = vmatprep.subr.bf16.mxu0 0
      %335 = vmatpush1.bf16.msra.mxu0 %v305
      %336 = vmatprep.subr.bf16.mxu0 0
      %337 = vmatpush1.bf16.msra.mxu0 %v306
      %338 = vmatprep.subr.bf16.mxu0 0
      %339 = vmatpush1.bf16.msra.mxu0 0
      %340 = vmatprep.subr.bf16.mxu0 0
      %341 = vmatpush1.bf16.msra.mxu0 0
      %342 = vmatprep.subr.bf16.mxu0 0
      %343 = vmatpush1.bf16.msra.mxu0 0
      %344 = vmatprep.subr.bf16.mxu0 0
      %345 = vmatpush1.bf16.msra.mxu0 0
      %346 = vmatprep.subr.bf16.mxu0 0
      %347 = vmatpush1.bf16.msra.mxu0 0
      %348 = vmatprep.subr.bf16.mxu0 0
      %349 = vmatpush1.bf16.msra.mxu0 0
      %350 = vmatprep.subr.bf16.mxu0 0
      %351 = vmatpush1.bf16.msra.mxu0 0
      %352 = vmatprep.subr.bf16.mxu0 0
      %353 = vmatpush1.bf16.msra.mxu0 0
      %354 = vmatprep.subr.bf16.mxu0 0
      %355 = vmatpush1.bf16.msra.mxu0 0
      %356 = vmatprep.subr.bf16.mxu0 0
      %357 = vmatpush1.bf16.msra.mxu0 0
      %358 = vmatprep.subr.bf16.mxu0 0
      %359 = vmatpush1.bf16.msra.mxu0 0
      %360 = vmatprep.subr.bf16.mxu0 0
      %361 = vmatpush1.bf16.msra.mxu0 0
      %362 = vmatprep.mubr.bf16.mxu0 0
      %363 = vmatmul.mubr.bf16.gmra.mrb[0].mxu0 %v313
      %v364 = vpop.f32.mrb[0].mxu0
      %v365 = vadd.f32 0.0, %v364
      %v366 = vpop.f32.mrb[0].mxu0
      %v367 = vpop.f32.mrb[0].mxu0
      %v368 = vadd.f32 0.0, %v367
      %v369 = vpop.f32.mrb[0].mxu0
      %370 = vmatprep.mubr.bf16.mxu0 0
      %371 = vmatmul.mubr.bf16.gmra.mrb[0].mxu0 %v316
      %v372 = vpop.f32.mrb[0].mxu0
      %v373 = vadd.f32 0.0, %v372
      %v374 = vpop.f32.mrb[0].mxu0
      %v375 = vpop.f32.mrb[0].mxu0
      %v376 = vadd.f32 0.0, %v375
      %v377 = vpop.f32.mrb[0].mxu0
      %378 = vmatprep.mubr.bf16.mxu0 0
      %379 = vmatmul.mubr.bf16.gmra.mrb[0].mxu0 %v319
      %v380 = vpop.f32.mrb[0].mxu0
      %v381 = vadd.f32 0.0, %v380
      %v382 = vpop.f32.mrb[0].mxu0
      %v383 = vpop.f32.mrb[0].mxu0
      %v384 = vadd.f32 0.0, %v383
      %v385 = vpop.f32.mrb[0].mxu0
      %386 = vmatprep.mubr.bf16.mxu0 0
      %387 = vmatmul.mubr.bf16.gmra.mrb[0].mxu0 %v322
      %v388 = vpop.f32.mrb[0].mxu0
      %v389 = vadd.f32 0.0, %v388
      %v390 = vpop.f32.mrb[0].mxu0
      %v391 = vpop.f32.mrb[0].mxu0
      %v392 = vadd.f32 0.0, %v391
      %v393 = vpop.f32.mrb[0].mxu0
      %394 = vmatprep.mubr.bf16.mxu0 0
      %395 = vmatmul.mubr.bf16.gmra.mrb[0].mxu0 %v325
      %v396 = vpop.f32.mrb[0].mxu0
      %v397 = vadd.f32 0.0, %v396
      %v398 = vpop.f32.mrb[0].mxu0
      %v399 = vpop.f32.mrb[0].mxu0
      %v400 = vadd.f32 0.0, %v399
      %v401 = vpop.f32.mrb[0].mxu0
      %402 = vmatprep.mubr.bf16.mxu0 0
      %403 = vmatmul.mubr.bf16.gmra.mrb[0].mxu0 %v328
      %v404 = vpop.f32.mrb[0].mxu0
      %v405 = vadd.f32 0.0, %v404
      %v406 = vpop.f32.mrb[0].mxu0
      %v407 = vpop.f32.mrb[0].mxu0
      %v408 = vpop.f32.mrb[0].mxu0
      %409 = vdwg.mxu0
      %v418 = vunpack.c.l.b16 %v172
      %v419 = vunpack.c.l.b16 %v173
      %v420 = vunpack.c.l.b16 %v174
      %v421 = vunpack.c.l.b16 %v175
      %v422 = vunpack.c.l.b16 %v176
      %v423 = vunpack.c.l.b16 %v177
      %v424 = vunpack.c.l.b16 %v178
      %v425 = vunpack.c.l.b16 %v179
      %v426 = vpack.c.b16 %v419, %v418
      %v427 = vpack.c.b16 %v421, %v420
      %v428 = vpack.c.b16 %v423, %v422
      %v429 = vpack.c.b16 %v425, %v424
      %v434 = vsel %vm311, %v234, 0
      %v436 = vsel %vm311, %v235, 0
      %v438 = vsel %vm311, %v236, 0
      %v440 = vsel %vm311, %v237, 0
      %v442 = vsel %vm311, %v238, 0
      %v444 = vsel %vm311, %v239, 0
      %446 = vmatprep.subr.bf16.mxu0 0
      %447 = vmatpush1.bf16.msra.mxu0 %v426
      %448 = vmatprep.subr.bf16.mxu0 0
      %449 = vmatpush1.bf16.msra.mxu0 %v427
      %450 = vmatprep.subr.bf16.mxu0 0
      %451 = vmatpush1.bf16.msra.mxu0 %v428
      %452 = vmatprep.subr.bf16.mxu0 0
      %453 = vmatpush1.bf16.msra.mxu0 %v429
      %454 = vmatprep.subr.bf16.mxu0 0
      %455 = vmatpush1.bf16.msra.mxu0 0
      %456 = vmatprep.subr.bf16.mxu0 0
      %457 = vmatpush1.bf16.msra.mxu0 0
      %458 = vmatprep.subr.bf16.mxu0 0
      %459 = vmatpush1.bf16.msra.mxu0 0
      %460 = vmatprep.subr.bf16.mxu0 0
      %461 = vmatpush1.bf16.msra.mxu0 0
      %462 = vmatprep.subr.bf16.mxu0 0
      %463 = vmatpush1.bf16.msra.mxu0 0
      %464 = vmatprep.subr.bf16.mxu0 0
      %465 = vmatpush1.bf16.msra.mxu0 0
      %466 = vmatprep.subr.bf16.mxu0 0
      %467 = vmatpush1.bf16.msra.mxu0 0
      %468 = vmatprep.subr.bf16.mxu0 0
      %469 = vmatpush1.bf16.msra.mxu0 0
      %470 = vmatprep.subr.bf16.mxu0 0
      %471 = vmatpush1.bf16.msra.mxu0 0
      %472 = vmatprep.subr.bf16.mxu0 0
      %473 = vmatpush1.bf16.msra.mxu0 0
      %474 = vmatprep.subr.bf16.mxu0 0
      %475 = vmatpush1.bf16.msra.mxu0 0
      %476 = vmatprep.subr.bf16.mxu0 0
      %477 = vmatpush1.bf16.msra.mxu0 0
      %478 = vmatprep.mubr.bf16.mxu0 0
      %479 = vmatmul.mubr.bf16.gmra.mrb[0].mxu0 %v434
      %v480 = vpop.f32.mrb[0].mxu0
      %v481 = vadd.f32 %v365, %v480
      %v482 = vpop.f32.mrb[0].mxu0
      %v483 = vpop.f32.mrb[0].mxu0
      %v484 = vadd.f32 %v368, %v483
      %v485 = vpop.f32.mrb[0].mxu0
      %486 = vmatprep.mubr.bf16.mxu0 0
      %487 = vmatmul.mubr.bf16.gmra.mrb[0].mxu0 %v436
      %v488 = vpop.f32.mrb[0].mxu0
      %v489 = vadd.f32 %v373, %v488
      %v490 = vpop.f32.mrb[0].mxu0
      %v491 = vpop.f32.mrb[0].mxu0
      %v492 = vadd.f32 %v376, %v491
      %v493 = vpop.f32.mrb[0].mxu0
      %494 = vmatprep.mubr.bf16.mxu0 0
      %495 = vmatmul.mubr.bf16.gmra.mrb[0].mxu0 %v438
      %v496 = vpop.f32.mrb[0].mxu0
      %v497 = vadd.f32 %v381, %v496
      %v498 = vpop.f32.mrb[0].mxu0
      %v499 = vpop.f32.mrb[0].mxu0
      %v500 = vadd.f32 %v384, %v499
      %v501 = vpop.f32.mrb[0].mxu0
      %502 = vmatprep.mubr.bf16.mxu0 0
      %503 = vmatmul.mubr.bf16.gmra.mrb[0].mxu0 %v440
      %v504 = vpop.f32.mrb[0].mxu0
      %v505 = vadd.f32 %v389, %v504
      %v506 = vpop.f32.mrb[0].mxu0
      %v507 = vpop.f32.mrb[0].mxu0
      %v508 = vadd.f32 %v392, %v507
      %v509 = vpop.f32.mrb[0].mxu0
      %510 = vmatprep.mubr.bf16.mxu0 0
      %511 = vmatmul.mubr.bf16.gmra.mrb[0].mxu0 %v442
      %v512 = vpop.f32.mrb[0].mxu0
      %v513 = vadd.f32 %v397, %v512
      %v514 = vpop.f32.mrb[0].mxu0
      %v515 = vpop.f32.mrb[0].mxu0
      %v516 = vadd.f32 %v400, %v515
      %v517 = vpop.f32.mrb[0].mxu0
      %518 = vmatprep.mubr.bf16.mxu0 0
      %519 = vmatmul.mubr.bf16.gmra.mrb[0].mxu0 %v444
      %v520 = vpop.f32.mrb[0].mxu0
      %v521 = vadd.f32 %v405, %v520
      %v522 = vpop.f32.mrb[0].mxu0
      %v523 = vpop.f32.mrb[0].mxu0
      %v524 = vpop.f32.mrb[0].mxu0
      %525 = vdwg.mxu0
      %v537 = vunpack.c.l.b16 %v192
      %v538 = vunpack.c.l.b16 %v193
      %v539 = vunpack.c.l.b16 %v194
      %v540 = vunpack.c.l.b16 %v195
      %v541 = vunpack.c.l.b16 %v196
      %v542 = vunpack.c.l.b16 %v197
      %v543 = vunpack.c.l.b16 %v198
      %v544 = vunpack.c.l.b16 %v199
      %v545 = vunpack.c.l.b16 %v200
      %v546 = vunpack.c.l.b16 %v201
      %v547 = vunpack.c.l.b16 %v202
      %v548 = vpack.c.b16 %v538, %v537
      %v549 = vpack.c.b16 %v540, %v539
      %v550 = vpack.c.b16 %v542, %v541
      %v551 = vpack.c.b16 %v544, %v543
      %v552 = vpack.c.b16 %v546, %v545
      %v553 = vpack.c.b16 %v547, %v547
      %v555 = vshrl.u32 %v548, 16
      %v557 = vshll.u32 %v548, 16
      %v559 = vrot.slane %v557, 1
      %v560 = vor.u32 %v555, %v559
      %v562 = vshll.u32 %v549, 16
      %v564 = vrot.slane %v562, 1
      %v565 = vsel %vm240, %v560, %v564
      %v566 = vshrl.u32 %v549, 16
      %v568 = vor.u32 %v566, %v564
      %v570 = vshll.u32 %v550, 16
      %v572 = vrot.slane %v570, 1
      %v573 = vsel %vm240, %v568, %v572
      %v574 = vshrl.u32 %v550, 16
      %v576 = vor.u32 %v574, %v572
      %v578 = vshll.u32 %v551, 16
      %v580 = vrot.slane %v578, 1
      %v581 = vsel %vm240, %v576, %v580
      %v582 = vshrl.u32 %v551, 16
      %v584 = vor.u32 %v582, %v580
      %v586 = vshll.u32 %v552, 16
      %v588 = vrot.slane %v586, 1
      %v589 = vsel %vm240, %v584, %v588
      %v590 = vshrl.u32 %v552, 16
      %v592 = vor.u32 %v590, %v588
      %v594 = vshll.u32 %v553, 16
      %v596 = vrot.slane %v594, 1
      %v597 = vsel %vm240, %v592, %v596
      %v598 = vshrl.u32 %v553, 16
      %v601 = vsel %vm311, %v565, 0
      %v604 = vsel %vm311, %v573, 0
      %v607 = vsel %vm311, %v581, 0
      %v610 = vsel %vm311, %v589, 0
      %v613 = vsel %vm311, %v597, 0
      %v616 = vsel %vm311, %v598, 0
      %618 = vmatprep.subr.bf16.mxu0 0
      %619 = vmatpush1.bf16.msra.mxu0 %v303
      %620 = vmatprep.subr.bf16.mxu0 0
      %621 = vmatpush1.bf16.msra.mxu0 %v304
      %622 = vmatprep.subr.bf16.mxu0 0
      %623 = vmatpush1.bf16.msra.mxu0 %v305
      %624 = vmatprep.subr.bf16.mxu0 0
      %625 = vmatpush1.bf16.msra.mxu0 %v306
      %626 = vmatprep.subr.bf16.mxu0 0
      %627 = vmatpush1.bf16.msra.mxu0 0
      %628 = vmatprep.subr.bf16.mxu0 0
      %629 = vmatpush1.bf16.msra.mxu0 0
      %630 = vmatprep.subr.bf16.mxu0 0
      %631 = vmatpush1.bf16.msra.mxu0 0
      %632 = vmatprep.subr.bf16.mxu0 0
      %633 = vmatpush1.bf16.msra.mxu0 0
      %634 = vmatprep.subr.bf16.mxu0 0
      %635 = vmatpush1.bf16.msra.mxu0 0
      %636 = vmatprep.subr.bf16.mxu0 0
      %637 = vmatpush1.bf16.msra.mxu0 0
      %638 = vmatprep.subr.bf16.mxu0 0
      %639 = vmatpush1.bf16.msra.mxu0 0
      %640 = vmatprep.subr.bf16.mxu0 0
      %641 = vmatpush1.bf16.msra.mxu0 0
      %642 = vmatprep.subr.bf16.mxu0 0
      %643 = vmatpush1.bf16.msra.mxu0 0
      %644 = vmatprep.subr.bf16.mxu0 0
      %645 = vmatpush1.bf16.msra.mxu0 0
      %646 = vmatprep.subr.bf16.mxu0 0
      %647 = vmatpush1.bf16.msra.mxu0 0
      %648 = vmatprep.subr.bf16.mxu0 0
      %649 = vmatpush1.bf16.msra.mxu0 0
      %650 = vmatprep.mubr.bf16.mxu0 0
      %651 = vmatmul.mubr.bf16.gmra.mrb[0].mxu0 %v601
      %v652 = vpop.f32.mrb[0].mxu0
      %v653 = vadd.f32 0.0, %v652
      %v654 = vpop.f32.mrb[0].mxu0
      %v655 = vpop.f32.mrb[0].mxu0
      %v656 = vadd.f32 0.0, %v655
      %v657 = vpop.f32.mrb[0].mxu0
      %658 = vmatprep.mubr.bf16.mxu0 0
      %659 = vmatmul.mubr.bf16.gmra.mrb[0].mxu0 %v604
      %v660 = vpop.f32.mrb[0].mxu0
      %v661 = vadd.f32 0.0, %v660
      %v662 = vpop.f32.mrb[0].mxu0
      %v663 = vpop.f32.mrb[0].mxu0
      %v664 = vadd.f32 0.0, %v663
      %v665 = vpop.f32.mrb[0].mxu0
      %666 = vmatprep.mubr.bf16.mxu0 0
      %667 = vmatmul.mubr.bf16.gmra.mrb[0].mxu0 %v607
      %v668 = vpop.f32.mrb[0].mxu0
      %v669 = vadd.f32 0.0, %v668
      %v670 = vpop.f32.mrb[0].mxu0
      %v671 = vpop.f32.mrb[0].mxu0
      %v672 = vadd.f32 0.0, %v671
      %v673 = vpop.f32.mrb[0].mxu0
      %674 = vmatprep.mubr.bf16.mxu0 0
      %675 = vmatmul.mubr.bf16.gmra.mrb[0].mxu0 %v610
      %v676 = vpop.f32.mrb[0].mxu0
      %v677 = vadd.f32 0.0, %v676
      %v678 = vpop.f32.mrb[0].mxu0
      %v679 = vpop.f32.mrb[0].mxu0
      %v680 = vadd.f32 0.0, %v679
      %v681 = vpop.f32.mrb[0].mxu0
      %682 = vmatprep.mubr.bf16.mxu0 0
      %683 = vmatmul.mubr.bf16.gmra.mrb[0].mxu0 %v613
      %v684 = vpop.f32.mrb[0].mxu0
      %v685 = vadd.f32 0.0, %v684
      %v686 = vpop.f32.mrb[0].mxu0
      %v687 = vpop.f32.mrb[0].mxu0
      %v688 = vadd.f32 0.0, %v687
      %v689 = vpop.f32.mrb[0].mxu0
      %690 = vmatprep.mubr.bf16.mxu0 0
      %691 = vmatmul.mubr.bf16.gmra.mrb[0].mxu0 %v616
      %v692 = vpop.f32.mrb[0].mxu0
      %v693 = vadd.f32 0.0, %v692
      %v694 = vpop.f32.mrb[0].mxu0
      %v695 = vpop.f32.mrb[0].mxu0
      %v696 = vpop.f32.mrb[0].mxu0
      %697 = vdwg.mxu0
      %v698 = vsel %vm311, %v548, 0
      %v700 = vsel %vm311, %v549, 0
      %v702 = vsel %vm311, %v550, 0
      %v704 = vsel %vm311, %v551, 0
      %v706 = vsel %vm311, %v552, 0
      %v708 = vsel %vm311, %v553, 0
      %710 = vmatprep.subr.bf16.mxu0 0
      %711 = vmatpush1.bf16.msra.mxu0 %v426
      %712 = vmatprep.subr.bf16.mxu0 0
      %713 = vmatpush1.bf16.msra.mxu0 %v427
      %714 = vmatprep.subr.bf16.mxu0 0
      %715 = vmatpush1.bf16.msra.mxu0 %v428
      %716 = vmatprep.subr.bf16.mxu0 0
      %717 = vmatpush1.bf16.msra.mxu0 %v429
      %718 = vmatprep.subr.bf16.mxu0 0
      %719 = vmatpush1.bf16.msra.mxu0 0
      %720 = vmatprep.subr.bf16.mxu0 0
      %721 = vmatpush1.bf16.msra.mxu0 0
      %722 = vmatprep.subr.bf16.mxu0 0
      %723 = vmatpush1.bf16.msra.mxu0 0
      %724 = vmatprep.subr.bf16.mxu0 0
      %725 = vmatpush1.bf16.msra.mxu0 0
      %726 = vmatprep.subr.bf16.mxu0 0
      %727 = vmatpush1.bf16.msra.mxu0 0
      %728 = vmatprep.subr.bf16.mxu0 0
      %729 = vmatpush1.bf16.msra.mxu0 0
      %730 = vmatprep.subr.bf16.mxu0 0
      %731 = vmatpush1.bf16.msra.mxu0 0
      %732 = vmatprep.subr.bf16.mxu0 0
      %733 = vmatpush1.bf16.msra.mxu0 0
      %734 = vmatprep.subr.bf16.mxu0 0
      %735 = vmatpush1.bf16.msra.mxu0 0
      %736 = vmatprep.subr.bf16.mxu0 0
      %737 = vmatpush1.bf16.msra.mxu0 0
      %738 = vmatprep.subr.bf16.mxu0 0
      %739 = vmatpush1.bf16.msra.mxu0 0
      %740 = vmatprep.subr.bf16.mxu0 0
      %741 = vmatpush1.bf16.msra.mxu0 0
      %742 = vmatprep.mubr.bf16.mxu0 0
      %743 = vmatmul.mubr.bf16.gmra.mrb[0].mxu0 %v698
      %v744 = vpop.f32.mrb[0].mxu0
      %v745 = vadd.f32 %v653, %v744
      %v746 = vpop.f32.mrb[0].mxu0
      %v747 = vpop.f32.mrb[0].mxu0
      %v748 = vadd.f32 %v656, %v747
      %v749 = vpop.f32.mrb[0].mxu0
      %750 = vmatprep.mubr.bf16.mxu0 0
      %751 = vmatmul.mubr.bf16.gmra.mrb[0].mxu0 %v700
      %v752 = vpop.f32.mrb[0].mxu0
      %v753 = vadd.f32 %v661, %v752
      %v754 = vpop.f32.mrb[0].mxu0
      %v755 = vpop.f32.mrb[0].mxu0
      %v756 = vadd.f32 %v664, %v755
      %v757 = vpop.f32.mrb[0].mxu0
      %758 = vmatprep.mubr.bf16.mxu0 0
      %759 = vmatmul.mubr.bf16.gmra.mrb[0].mxu0 %v702
      %v760 = vpop.f32.mrb[0].mxu0
      %v761 = vadd.f32 %v669, %v760
      %v762 = vpop.f32.mrb[0].mxu0
      %v763 = vpop.f32.mrb[0].mxu0
      %v764 = vadd.f32 %v672, %v763
      %v765 = vpop.f32.mrb[0].mxu0
      %766 = vmatprep.mubr.bf16.mxu0 0
      %767 = vmatmul.mubr.bf16.gmra.mrb[0].mxu0 %v704
      %v768 = vpop.f32.mrb[0].mxu0
      %v769 = vadd.f32 %v677, %v768
      %v770 = vpop.f32.mrb[0].mxu0
      %v771 = vpop.f32.mrb[0].mxu0
      %v772 = vadd.f32 %v680, %v771
      %v773 = vpop.f32.mrb[0].mxu0
      %774 = vmatprep.mubr.bf16.mxu0 0
      %775 = vmatmul.mubr.bf16.gmra.mrb[0].mxu0 %v706
      %v776 = vpop.f32.mrb[0].mxu0
      %v777 = vadd.f32 %v685, %v776
      %v778 = vpop.f32.mrb[0].mxu0
      %v779 = vpop.f32.mrb[0].mxu0
      %v780 = vadd.f32 %v688, %v779
      %v781 = vpop.f32.mrb[0].mxu0
      %782 = vmatprep.mubr.bf16.mxu0 0
      %783 = vmatmul.mubr.bf16.gmra.mrb[0].mxu0 %v708
      %v784 = vpop.f32.mrb[0].mxu0
      %v785 = vadd.f32 %v693, %v784
      %v786 = vpop.f32.mrb[0].mxu0
      %v787 = vpop.f32.mrb[0].mxu0
      %v788 = vpop.f32.mrb[0].mxu0
      %789 = vdwg.mxu0
      %s790 = scalar_lea.vmem %s1, 64
      %v791 = vld [vmem:[%s790] sm:$0xf]
      %v792 = vld [vmem:[%s790 + $0x4] sm:$0xf]
      %v793 = vld [vmem:[%s790 + $0x8] sm:$0xf]
      %v794 = vld [vmem:[%s790 + $0xc] sm:$0xf]
      %v795 = vld [vmem:[%s790 + $0x10] sm:$0xf]
      %v796 = vld [vmem:[%s790 + $0x14] sm:$0xf]
      %v797 = vld [vmem:[%s790 + $0x18] sm:$0xf]
      %v798 = vld [vmem:[%s790 + $0x1c] sm:$0xf]
      %v799 = vld [vmem:[%s165] sm:$0xe]
      %v800 = vld [vmem:[%s165 + $0x28] sm:$0x3]
      %v801 = vld [vmem:[%s191] sm:$0xe]
      %v802 = vld [vmem:[%s191 + $0x28] sm:$0x3]
      %v805 = vunpack.c.l.b16 %v799
      %v806 = vunpack.c.l.b16 %v800
      %v807 = vpack.c.b16 %v224, %v805
      %v808 = vpack.c.b16 %v806, %v806
      %vm809 = vcmask 1046528
      %v810 = vrot.slane %v807, 1
      %v811 = vrot.slane %v235, 1
      %v812 = vsel %vm809, %v810, %v811
      %v813 = vrot.slane %v236, 1
      %v814 = vsel %vm809, %v811, %v813
      %v815 = vrot.slane %v237, 1
      %v816 = vsel %vm809, %v813, %v815
      %v817 = vrot.slane %v238, 1
      %v818 = vsel %vm809, %v815, %v817
      %v819 = vrot.slane %v808, 1
      %v820 = vsel %vm809, %v817, %v819
      %v829 = vunpack.c.l.b16 %v791
      %v830 = vunpack.c.l.b16 %v792
      %v831 = vunpack.c.l.b16 %v793
      %v832 = vunpack.c.l.b16 %v794
      %v833 = vunpack.c.l.b16 %v795
      %v834 = vunpack.c.l.b16 %v796
      %v835 = vunpack.c.l.b16 %v797
      %v836 = vunpack.c.l.b16 %v798
      %v837 = vpack.c.b16 %v830, %v829
      %v838 = vpack.c.b16 %v832, %v831
      %v839 = vpack.c.b16 %v834, %v833
      %v840 = vpack.c.b16 %v836, %v835
      %v846 = vsel %vm311, %v812, 0
      %v849 = vsel %vm311, %v814, 0
      %v852 = vsel %vm311, %v816, 0
      %v855 = vsel %vm311, %v818, 0
      %v858 = vsel %vm311, %v820, 0
      %v861 = vsel %vm311, %v819, 0
      %863 = vmatprep.subr.bf16.mxu0 0
      %864 = vmatpush1.bf16.msra.mxu0 %v837
      %865 = vmatprep.subr.bf16.mxu0 0
      %866 = vmatpush1.bf16.msra.mxu0 %v838
      %867 = vmatprep.subr.bf16.mxu0 0
      %868 = vmatpush1.bf16.msra.mxu0 %v839
      %869 = vmatprep.subr.bf16.mxu0 0
      %870 = vmatpush1.bf16.msra.mxu0 %v840
      %871 = vmatprep.subr.bf16.mxu0 0
      %872 = vmatpush1.bf16.msra.mxu0 0
      %873 = vmatprep.subr.bf16.mxu0 0
      %874 = vmatpush1.bf16.msra.mxu0 0
      %875 = vmatprep.subr.bf16.mxu0 0
      %876 = vmatpush1.bf16.msra.mxu0 0
      %877 = vmatprep.subr.bf16.mxu0 0
      %878 = vmatpush1.bf16.msra.mxu0 0
      %879 = vmatprep.subr.bf16.mxu0 0
      %880 = vmatpush1.bf16.msra.mxu0 0
      %881 = vmatprep.subr.bf16.mxu0 0
      %882 = vmatpush1.bf16.msra.mxu0 0
      %883 = vmatprep.subr.bf16.mxu0 0
      %884 = vmatpush1.bf16.msra.mxu0 0
      %885 = vmatprep.subr.bf16.mxu0 0
      %886 = vmatpush1.bf16.msra.mxu0 0
      %887 = vmatprep.subr.bf16.mxu0 0
      %888 = vmatpush1.bf16.msra.mxu0 0
      %889 = vmatprep.subr.bf16.mxu0 0
      %890 = vmatpush1.bf16.msra.mxu0 0
      %891 = vmatprep.subr.bf16.mxu0 0
      %892 = vmatpush1.bf16.msra.mxu0 0
      %893 = vmatprep.subr.bf16.mxu0 0
      %894 = vmatpush1.bf16.msra.mxu0 0
      %895 = vmatprep.mubr.bf16.mxu0 0
      %896 = vmatmul.mubr.bf16.gmra.mrb[0].mxu0 %v846
      %v897 = vpop.f32.mrb[0].mxu0
      %v898 = vadd.f32 0.0, %v897
      %v899 = vpop.f32.mrb[0].mxu0
      %v900 = vpop.f32.mrb[0].mxu0
      %v901 = vadd.f32 0.0, %v900
      %v902 = vpop.f32.mrb[0].mxu0
      %903 = vmatprep.mubr.bf16.mxu0 0
      %904 = vmatmul.mubr.bf16.gmra.mrb[0].mxu0 %v849
      %v905 = vpop.f32.mrb[0].mxu0
      %v906 = vadd.f32 0.0, %v905
      %v907 = vpop.f32.mrb[0].mxu0
      %v908 = vpop.f32.mrb[0].mxu0
      %v909 = vadd.f32 0.0, %v908
      %v910 = vpop.f32.mrb[0].mxu0
      %911 = vmatprep.mubr.bf16.mxu0 0
      %912 = vmatmul.mubr.bf16.gmra.mrb[0].mxu0 %v852
      %v913 = vpop.f32.mrb[0].mxu0
      %v914 = vadd.f32 0.0, %v913
      %v915 = vpop.f32.mrb[0].mxu0
      %v916 = vpop.f32.mrb[0].mxu0
      %v917 = vadd.f32 0.0, %v916
      %v918 = vpop.f32.mrb[0].mxu0
      %919 = vmatprep.mubr.bf16.mxu0 0
      %920 = vmatmul.mubr.bf16.gmra.mrb[0].mxu0 %v855
      %v921 = vpop.f32.mrb[0].mxu0
      %v922 = vadd.f32 0.0, %v921
      %v923 = vpop.f32.mrb[0].mxu0
      %v924 = vpop.f32.mrb[0].mxu0
      %v925 = vadd.f32 0.0, %v924
      %v926 = vpop.f32.mrb[0].mxu0
      %927 = vmatprep.mubr.bf16.mxu0 0
      %928 = vmatmul.mubr.bf16.gmra.mrb[0].mxu0 %v858
      %v929 = vpop.f32.mrb[0].mxu0
      %v930 = vadd.f32 0.0, %v929
      %v931 = vpop.f32.mrb[0].mxu0
      %v932 = vpop.f32.mrb[0].mxu0
      %v933 = vadd.f32 0.0, %v932
      %v934 = vpop.f32.mrb[0].mxu0
      %935 = vmatprep.mubr.bf16.mxu0 0
      %936 = vmatmul.mubr.bf16.gmra.mrb[0].mxu0 %v861
      %v937 = vpop.f32.mrb[0].mxu0
      %v938 = vadd.f32 0.0, %v937
      %v939 = vpop.f32.mrb[0].mxu0
      %v940 = vpop.f32.mrb[0].mxu0
      %v941 = vpop.f32.mrb[0].mxu0
      %942 = vdwg.mxu0
      %v943 = vadd.f32 %v481, %v898
      %v944 = vadd.f32 %v484, %v901
      %v945 = vadd.f32 %v489, %v906
      %v946 = vadd.f32 %v492, %v909
      %v947 = vadd.f32 %v497, %v914
      %v948 = vadd.f32 %v500, %v917
      %v949 = vadd.f32 %v505, %v922
      %v950 = vadd.f32 %v508, %v925
      %v951 = vadd.f32 %v513, %v930
      %v952 = vadd.f32 %v516, %v933
      %v953 = vadd.f32 %v521, %v938
      %v956 = vunpack.c.l.b16 %v801
      %v957 = vunpack.c.l.b16 %v802
      %v958 = vpack.c.b16 %v538, %v956
      %v959 = vpack.c.b16 %v957, %v957
      %v960 = vrot.slane %v958, 1
      %v961 = vrot.slane %v549, 1
      %v962 = vsel %vm809, %v960, %v961
      %v963 = vrot.slane %v550, 1
      %v964 = vsel %vm809, %v961, %v963
      %v965 = vrot.slane %v551, 1
      %v966 = vsel %vm809, %v963, %v965
      %v967 = vrot.slane %v552, 1
      %v968 = vsel %vm809, %v965, %v967
      %v969 = vrot.slane %v959, 1
      %v970 = vsel %vm809, %v967, %v969
      %v972 = vsel %vm311, %v962, 0
      %v975 = vsel %vm311, %v964, 0
      %v978 = vsel %vm311, %v966, 0
      %v981 = vsel %vm311, %v968, 0
      %v984 = vsel %vm311, %v970, 0
      %v987 = vsel %vm311, %v969, 0
      %989 = vmatprep.subr.bf16.mxu0 0
      %990 = vmatpush1.bf16.msra.mxu0 %v837
      %991 = vmatprep.subr.bf16.mxu0 0
      %992 = vmatpush1.bf16.msra.mxu0 %v838
      %993 = vmatprep.subr.bf16.mxu0 0
      %994 = vmatpush1.bf16.msra.mxu0 %v839
      %995 = vmatprep.subr.bf16.mxu0 0
      %996 = vmatpush1.bf16.msra.mxu0 %v840
      %997 = vmatprep.subr.bf16.mxu0 0
      %998 = vmatpush1.bf16.msra.mxu0 0
      %999 = vmatprep.subr.bf16.mxu0 0
      %1000 = vmatpush1.bf16.msra.mxu0 0
      %1001 = vmatprep.subr.bf16.mxu0 0
      %1002 = vmatpush1.bf16.msra.mxu0 0
      %1003 = vmatprep.subr.bf16.mxu0 0
      %1004 = vmatpush1.bf16.msra.mxu0 0
      %1005 = vmatprep.subr.bf16.mxu0 0
      %1006 = vmatpush1.bf16.msra.mxu0 0
      %1007 = vmatprep.subr.bf16.mxu0 0
      %1008 = vmatpush1.bf16.msra.mxu0 0
      %1009 = vmatprep.subr.bf16.mxu0 0
      %1010 = vmatpush1.bf16.msra.mxu0 0
      %1011 = vmatprep.subr.bf16.mxu0 0
      %1012 = vmatpush1.bf16.msra.mxu0 0
      %1013 = vmatprep.subr.bf16.mxu0 0
      %1014 = vmatpush1.bf16.msra.mxu0 0
      %1015 = vmatprep.subr.bf16.mxu0 0
      %1016 = vmatpush1.bf16.msra.mxu0 0
      %1017 = vmatprep.subr.bf16.mxu0 0
      %1018 = vmatpush1.bf16.msra.mxu0 0
      %1019 = vmatprep.subr.bf16.mxu0 0
      %1020 = vmatpush1.bf16.msra.mxu0 0
      %1021 = vmatprep.mubr.bf16.mxu0 0
      %1022 = vmatmul.mubr.bf16.gmra.mrb[0].mxu0 %v972
      %v1023 = vpop.f32.mrb[0].mxu0
      %v1024 = vadd.f32 0.0, %v1023
      %v1025 = vpop.f32.mrb[0].mxu0
      %v1026 = vpop.f32.mrb[0].mxu0
      %v1027 = vadd.f32 0.0, %v1026
      %v1028 = vpop.f32.mrb[0].mxu0
      %1029 = vmatprep.mubr.bf16.mxu0 0
      %1030 = vmatmul.mubr.bf16.gmra.mrb[0].mxu0 %v975
      %v1031 = vpop.f32.mrb[0].mxu0
      %v1032 = vadd.f32 0.0, %v1031
      %v1033 = vpop.f32.mrb[0].mxu0
      %v1034 = vpop.f32.mrb[0].mxu0
      %v1035 = vadd.f32 0.0, %v1034
      %v1036 = vpop.f32.mrb[0].mxu0
      %1037 = vmatprep.mubr.bf16.mxu0 0
      %1038 = vmatmul.mubr.bf16.gmra.mrb[0].mxu0 %v978
      %v1039 = vpop.f32.mrb[0].mxu0
      %v1040 = vadd.f32 0.0, %v1039
      %v1041 = vpop.f32.mrb[0].mxu0
      %v1042 = vpop.f32.mrb[0].mxu0
      %v1043 = vadd.f32 0.0, %v1042
      %v1044 = vpop.f32.mrb[0].mxu0
      %1045 = vmatprep.mubr.bf16.mxu0 0
      %1046 = vmatmul.mubr.bf16.gmra.mrb[0].mxu0 %v981
      %v1047 = vpop.f32.mrb[0].mxu0
      %v1048 = vadd.f32 0.0, %v1047
      %v1049 = vpop.f32.mrb[0].mxu0
      %v1050 = vpop.f32.mrb[0].mxu0
      %v1051 = vadd.f32 0.0, %v1050
      %v1052 = vpop.f32.mrb[0].mxu0
      %1053 = vmatprep.mubr.bf16.mxu0 0
      %1054 = vmatmul.mubr.bf16.gmra.mrb[0].mxu0 %v984
      %v1055 = vpop.f32.mrb[0].mxu0
      %v1056 = vadd.f32 0.0, %v1055
      %v1057 = vpop.f32.mrb[0].mxu0
      %v1058 = vpop.f32.mrb[0].mxu0
      %v1059 = vadd.f32 0.0, %v1058
      %v1060 = vpop.f32.mrb[0].mxu0
      %1061 = vmatprep.mubr.bf16.mxu0 0
      %1062 = vmatmul.mubr.bf16.gmra.mrb[0].mxu0 %v987
      %v1063 = vpop.f32.mrb[0].mxu0
      %v1064 = vadd.f32 0.0, %v1063
      %v1065 = vpop.f32.mrb[0].mxu0
      %v1066 = vpop.f32.mrb[0].mxu0
      %v1067 = vpop.f32.mrb[0].mxu0
      %1068 = vdwg.mxu0
      %v1069 = vadd.f32 %v745, %v1024
      %v1070 = vadd.f32 %v748, %v1027
      %v1071 = vadd.f32 %v753, %v1032
      %v1072 = vadd.f32 %v756, %v1035
      %v1073 = vadd.f32 %v761, %v1040
      %v1074 = vadd.f32 %v764, %v1043
      %v1075 = vadd.f32 %v769, %v1048
      %v1076 = vadd.f32 %v772, %v1051
      %v1077 = vadd.f32 %v777, %v1056
      %v1078 = vadd.f32 %v780, %v1059
      %v1079 = vadd.f32 %v785, %v1064
      %s1080 = scalar_lea.vmem %s1, 96
      %v1081 = vld [vmem:[%s1080] sm:$0xf]
      %v1082 = vld [vmem:[%s1080 + $0x4] sm:$0xf]
      %v1083 = vld [vmem:[%s1080 + $0x8] sm:$0xf]
      %v1084 = vld [vmem:[%s1080 + $0xc] sm:$0xf]
      %v1085 = vld [vmem:[%s1080 + $0x10] sm:$0xf]
      %v1086 = vld [vmem:[%s1080 + $0x14] sm:$0xf]
      %v1087 = vld [vmem:[%s1080 + $0x18] sm:$0xf]
      %v1088 = vld [vmem:[%s1080 + $0x1c] sm:$0xf]
      %v1089 = vld [vmem:[%s165 + $0x4] sm:$0xf]
      %v1090 = vld [vmem:[%s165 + $0x8] sm:$0xf]
      %v1091 = vld [vmem:[%s165 + $0xc] sm:$0xf]
      %v1092 = vld [vmem:[%s165 + $0x10] sm:$0xf]
      %v1093 = vld [vmem:[%s165 + $0x14] sm:$0xf]
      %v1094 = vld [vmem:[%s165 + $0x18] sm:$0xf]
      %v1095 = vld [vmem:[%s165 + $0x1c] sm:$0xf]
      %v1096 = vld [vmem:[%s165 + $0x20] sm:$0xf]
      %v1097 = vld [vmem:[%s165 + $0x24] sm:$0xf]
      %v1098 = vld [vmem:[%s165 + $0x28] sm:$0xf]
      %v1099 = vld [vmem:[%s165 + $0x2c] sm:$0x1]
      %v1100 = vld [vmem:[%s191 + $0x4] sm:$0xf]
      %v1101 = vld [vmem:[%s191 + $0x8] sm:$0xf]
      %v1102 = vld [vmem:[%s191 + $0xc] sm:$0xf]
      %v1103 = vld [vmem:[%s191 + $0x10] sm:$0xf]
      %v1104 = vld [vmem:[%s191 + $0x14] sm:$0xf]
      %v1105 = vld [vmem:[%s191 + $0x18] sm:$0xf]
      %v1106 = vld [vmem:[%s191 + $0x1c] sm:$0xf]
      %v1107 = vld [vmem:[%s191 + $0x20] sm:$0xf]
      %v1108 = vld [vmem:[%s191 + $0x24] sm:$0xf]
      %v1109 = vld [vmem:[%s191 + $0x28] sm:$0xf]
      %v1110 = vld [vmem:[%s191 + $0x2c] sm:$0x1]
      %v1122 = vunpack.c.l.b16 %v1089
      %v1123 = vunpack.c.l.b16 %v1090
      %v1124 = vunpack.c.l.b16 %v1091
      %v1125 = vunpack.c.l.b16 %v1092
      %v1126 = vunpack.c.l.b16 %v1093
      %v1127 = vunpack.c.l.b16 %v1094
      %v1128 = vunpack.c.l.b16 %v1095
      %v1129 = vunpack.c.l.b16 %v1096
      %v1130 = vunpack.c.l.b16 %v1097
      %v1131 = vunpack.c.l.b16 %v1098
      %v1132 = vunpack.c.l.b16 %v1099
      %v1133 = vpack.c.b16 %v1123, %v1122
      %v1134 = vpack.c.b16 %v1125, %v1124
      %v1135 = vpack.c.b16 %v1127, %v1126
      %v1136 = vpack.c.b16 %v1129, %v1128
      %v1137 = vpack.c.b16 %v1131, %v1130
      %v1138 = vpack.c.b16 %v1132, %v1132
      %v1140 = vshrl.u32 %v1133, 16
      %v1142 = vshll.u32 %v1133, 16
      %v1144 = vrot.slane %v1142, 1
      %v1145 = vor.u32 %v1140, %v1144
      %v1147 = vshll.u32 %v1134, 16
      %v1149 = vrot.slane %v1147, 1
      %v1150 = vsel %vm240, %v1145, %v1149
      %v1151 = vshrl.u32 %v1134, 16
      %v1153 = vor.u32 %v1151, %v1149
      %v1155 = vshll.u32 %v1135, 16
      %v1157 = vrot.slane %v1155, 1
      %v1158 = vsel %vm240, %v1153, %v1157
      %v1159 = vshrl.u32 %v1135, 16
      %v1161 = vor.u32 %v1159, %v1157
      %v1163 = vshll.u32 %v1136, 16
      %v1165 = vrot.slane %v1163, 1
      %v1166 = vsel %vm240, %v1161, %v1165
      %v1167 = vshrl.u32 %v1136, 16
      %v1169 = vor.u32 %v1167, %v1165
      %v1171 = vshll.u32 %v1137, 16
      %v1173 = vrot.slane %v1171, 1
      %v1174 = vsel %vm240, %v1169, %v1173
      %v1175 = vshrl.u32 %v1137, 16
      %v1177 = vor.u32 %v1175, %v1173
      %v1179 = vshll.u32 %v1138, 16
      %v1181 = vrot.slane %v1179, 1
      %v1182 = vsel %vm240, %v1177, %v1181
      %v1183 = vshrl.u32 %v1138, 16
      %v1193 = vunpack.c.l.b16 %v1081
      %v1194 = vunpack.c.l.b16 %v1082
      %v1195 = vunpack.c.l.b16 %v1083
      %v1196 = vunpack.c.l.b16 %v1084
      %v1197 = vunpack.c.l.b16 %v1085
      %v1198 = vunpack.c.l.b16 %v1086
      %v1199 = vunpack.c.l.b16 %v1087
      %v1200 = vunpack.c.l.b16 %v1088
      %v1201 = vpack.c.b16 %v1194, %v1193
      %v1202 = vpack.c.b16 %v1196, %v1195
      %v1203 = vpack.c.b16 %v1198, %v1197
      %v1204 = vpack.c.b16 %v1200, %v1199
      %v1210 = vsel %vm311, %v1150, 0
      %v1213 = vsel %vm311, %v1158, 0
      %v1216 = vsel %vm311, %v1166, 0
      %v1219 = vsel %vm311, %v1174, 0
      %v1222 = vsel %vm311, %v1182, 0
      %v1225 = vsel %vm311, %v1183, 0
      %1227 = vmatprep.subr.bf16.mxu0 0
      %1228 = vmatpush1.bf16.msra.mxu0 %v1201
      %1229 = vmatprep.subr.bf16.mxu0 0
      %1230 = vmatpush1.bf16.msra.mxu0 %v1202
      %1231 = vmatprep.subr.bf16.mxu0 0
      %1232 = vmatpush1.bf16.msra.mxu0 %v1203
      %1233 = vmatprep.subr.bf16.mxu0 0
      %1234 = vmatpush1.bf16.msra.mxu0 %v1204
      %1235 = vmatprep.subr.bf16.mxu0 0
      %1236 = vmatpush1.bf16.msra.mxu0 0
      %1237 = vmatprep.subr.bf16.mxu0 0
      %1238 = vmatpush1.bf16.msra.mxu0 0
      %1239 = vmatprep.subr.bf16.mxu0 0
      %1240 = vmatpush1.bf16.msra.mxu0 0
      %1241 = vmatprep.subr.bf16.mxu0 0
      %1242 = vmatpush1.bf16.msra.mxu0 0
      %1243 = vmatprep.subr.bf16.mxu0 0
      %1244 = vmatpush1.bf16.msra.mxu0 0
      %1245 = vmatprep.subr.bf16.mxu0 0
      %1246 = vmatpush1.bf16.msra.mxu0 0
      %1247 = vmatprep.subr.bf16.mxu0 0
      %1248 = vmatpush1.bf16.msra.mxu0 0
      %1249 = vmatprep.subr.bf16.mxu0 0
      %1250 = vmatpush1.bf16.msra.mxu0 0
      %1251 = vmatprep.subr.bf16.mxu0 0
      %1252 = vmatpush1.bf16.msra.mxu0 0
      %1253 = vmatprep.subr.bf16.mxu0 0
      %1254 = vmatpush1.bf16.msra.mxu0 0
      %1255 = vmatprep.subr.bf16.mxu0 0
      %1256 = vmatpush1.bf16.msra.mxu0 0
      %1257 = vmatprep.subr.bf16.mxu0 0
      %1258 = vmatpush1.bf16.msra.mxu0 0
      %1259 = vmatprep.mubr.bf16.mxu0 0
      %1260 = vmatmul.mubr.bf16.gmra.mrb[0].mxu0 %v1210
      %v1261 = vpop.f32.mrb[0].mxu0
      %v1262 = vadd.f32 0.0, %v1261
      %v1263 = vpop.f32.mrb[0].mxu0
      %v1264 = vpop.f32.mrb[0].mxu0
      %v1265 = vadd.f32 0.0, %v1264
      %v1266 = vpop.f32.mrb[0].mxu0
      %1267 = vmatprep.mubr.bf16.mxu0 0
      %1268 = vmatmul.mubr.bf16.gmra.mrb[0].mxu0 %v1213
      %v1269 = vpop.f32.mrb[0].mxu0
      %v1270 = vadd.f32 0.0, %v1269
      %v1271 = vpop.f32.mrb[0].mxu0
      %v1272 = vpop.f32.mrb[0].mxu0
      %v1273 = vadd.f32 0.0, %v1272
      %v1274 = vpop.f32.mrb[0].mxu0
      %1275 = vmatprep.mubr.bf16.mxu0 0
      %1276 = vmatmul.mubr.bf16.gmra.mrb[0].mxu0 %v1216
      %v1277 = vpop.f32.mrb[0].mxu0
      %v1278 = vadd.f32 0.0, %v1277
      %v1279 = vpop.f32.mrb[0].mxu0
      %v1280 = vpop.f32.mrb[0].mxu0
      %v1281 = vadd.f32 0.0, %v1280
      %v1282 = vpop.f32.mrb[0].mxu0
      %1283 = vmatprep.mubr.bf16.mxu0 0
      %1284 = vmatmul.mubr.bf16.gmra.mrb[0].mxu0 %v1219
      %v1285 = vpop.f32.mrb[0].mxu0
      %v1286 = vadd.f32 0.0, %v1285
      %v1287 = vpop.f32.mrb[0].mxu0
      %v1288 = vpop.f32.mrb[0].mxu0
      %v1289 = vadd.f32 0.0, %v1288
      %v1290 = vpop.f32.mrb[0].mxu0
      %1291 = vmatprep.mubr.bf16.mxu0 0
      %1292 = vmatmul.mubr.bf16.gmra.mrb[0].mxu0 %v1222
      %v1293 = vpop.f32.mrb[0].mxu0
      %v1294 = vadd.f32 0.0, %v1293
      %v1295 = vpop.f32.mrb[0].mxu0
      %v1296 = vpop.f32.mrb[0].mxu0
      %v1297 = vadd.f32 0.0, %v1296
      %v1298 = vpop.f32.mrb[0].mxu0
      %1299 = vmatprep.mubr.bf16.mxu0 0
      %1300 = vmatmul.mubr.bf16.gmra.mrb[0].mxu0 %v1225
      %v1301 = vpop.f32.mrb[0].mxu0
      %v1302 = vadd.f32 0.0, %v1301
      %v1303 = vpop.f32.mrb[0].mxu0
      %v1304 = vpop.f32.mrb[0].mxu0
      %v1305 = vpop.f32.mrb[0].mxu0
      %1306 = vdwg.mxu0
      %v1307 = vadd.f32 %v943, %v1262
      %v1308 = vadd.f32 %v944, %v1265
      %v1309 = vadd.f32 %v945, %v1270
      %v1310 = vadd.f32 %v946, %v1273
      %v1311 = vadd.f32 %v947, %v1278
      %v1312 = vadd.f32 %v948, %v1281
      %v1313 = vadd.f32 %v949, %v1286
      %v1314 = vadd.f32 %v950, %v1289
      %v1315 = vadd.f32 %v951, %v1294
      %v1316 = vadd.f32 %v952, %v1297
      %v1317 = vadd.f32 %v953, %v1302
      %v1329 = vunpack.c.l.b16 %v1100
      %v1330 = vunpack.c.l.b16 %v1101
      %v1331 = vunpack.c.l.b16 %v1102
      %v1332 = vunpack.c.l.b16 %v1103
      %v1333 = vunpack.c.l.b16 %v1104
      %v1334 = vunpack.c.l.b16 %v1105
      %v1335 = vunpack.c.l.b16 %v1106
      %v1336 = vunpack.c.l.b16 %v1107
      %v1337 = vunpack.c.l.b16 %v1108
      %v1338 = vunpack.c.l.b16 %v1109
      %v1339 = vunpack.c.l.b16 %v1110
      %v1340 = vpack.c.b16 %v1330, %v1329
      %v1341 = vpack.c.b16 %v1332, %v1331
      %v1342 = vpack.c.b16 %v1334, %v1333
      %v1343 = vpack.c.b16 %v1336, %v1335
      %v1344 = vpack.c.b16 %v1338, %v1337
      %v1345 = vpack.c.b16 %v1339, %v1339
      %v1347 = vshrl.u32 %v1340, 16
      %v1349 = vshll.u32 %v1340, 16
      %v1351 = vrot.slane %v1349, 1
      %v1352 = vor.u32 %v1347, %v1351
      %v1354 = vshll.u32 %v1341, 16
      %v1356 = vrot.slane %v1354, 1
      %v1357 = vsel %vm240, %v1352, %v1356
      %v1358 = vshrl.u32 %v1341, 16
      %v1360 = vor.u32 %v1358, %v1356
      %v1362 = vshll.u32 %v1342, 16
      %v1364 = vrot.slane %v1362, 1
      %v1365 = vsel %vm240, %v1360, %v1364
      %v1366 = vshrl.u32 %v1342, 16
      %v1368 = vor.u32 %v1366, %v1364
      %v1370 = vshll.u32 %v1343, 16
      %v1372 = vrot.slane %v1370, 1
      %v1373 = vsel %vm240, %v1368, %v1372
      %v1374 = vshrl.u32 %v1343, 16
      %v1376 = vor.u32 %v1374, %v1372
      %v1378 = vshll.u32 %v1344, 16
      %v1380 = vrot.slane %v1378, 1
      %v1381 = vsel %vm240, %v1376, %v1380
      %v1382 = vshrl.u32 %v1344, 16
      %v1384 = vor.u32 %v1382, %v1380
      %v1386 = vshll.u32 %v1345, 16
      %v1388 = vrot.slane %v1386, 1
      %v1389 = vsel %vm240, %v1384, %v1388
      %v1390 = vshrl.u32 %v1345, 16
      %v1393 = vsel %vm311, %v1357, 0
      %v1396 = vsel %vm311, %v1365, 0
      %v1399 = vsel %vm311, %v1373, 0
      %v1402 = vsel %vm311, %v1381, 0
      %v1405 = vsel %vm311, %v1389, 0
      %v1408 = vsel %vm311, %v1390, 0
      %1410 = vmatprep.subr.bf16.mxu0 0
      %1411 = vmatpush1.bf16.msra.mxu0 %v1201
      %1412 = vmatprep.subr.bf16.mxu0 0
      %1413 = vmatpush1.bf16.msra.mxu0 %v1202
      %1414 = vmatprep.subr.bf16.mxu0 0
      %1415 = vmatpush1.bf16.msra.mxu0 %v1203
      %1416 = vmatprep.subr.bf16.mxu0 0
      %1417 = vmatpush1.bf16.msra.mxu0 %v1204
      %1418 = vmatprep.subr.bf16.mxu0 0
      %1419 = vmatpush1.bf16.msra.mxu0 0
      %1420 = vmatprep.subr.bf16.mxu0 0
      %1421 = vmatpush1.bf16.msra.mxu0 0
      %1422 = vmatprep.subr.bf16.mxu0 0
      %1423 = vmatpush1.bf16.msra.mxu0 0
      %1424 = vmatprep.subr.bf16.mxu0 0
      %1425 = vmatpush1.bf16.msra.mxu0 0
      %1426 = vmatprep.subr.bf16.mxu0 0
      %1427 = vmatpush1.bf16.msra.mxu0 0
      %1428 = vmatprep.subr.bf16.mxu0 0
      %1429 = vmatpush1.bf16.msra.mxu0 0
      %1430 = vmatprep.subr.bf16.mxu0 0
      %1431 = vmatpush1.bf16.msra.mxu0 0
      %1432 = vmatprep.subr.bf16.mxu0 0
      %1433 = vmatpush1.bf16.msra.mxu0 0
      %1434 = vmatprep.subr.bf16.mxu0 0
      %1435 = vmatpush1.bf16.msra.mxu0 0
      %1436 = vmatprep.subr.bf16.mxu0 0
      %1437 = vmatpush1.bf16.msra.mxu0 0
      %1438 = vmatprep.subr.bf16.mxu0 0
      %1439 = vmatpush1.bf16.msra.mxu0 0
      %1440 = vmatprep.subr.bf16.mxu0 0
      %1441 = vmatpush1.bf16.msra.mxu0 0
      %1442 = vmatprep.mubr.bf16.mxu0 0
      %1443 = vmatmul.mubr.bf16.gmra.mrb[0].mxu0 %v1393
      %v1444 = vpop.f32.mrb[0].mxu0
      %v1445 = vadd.f32 0.0, %v1444
      %v1446 = vpop.f32.mrb[0].mxu0
      %v1447 = vpop.f32.mrb[0].mxu0
      %v1448 = vadd.f32 0.0, %v1447
      %v1449 = vpop.f32.mrb[0].mxu0
      %1450 = vmatprep.mubr.bf16.mxu0 0
      %1451 = vmatmul.mubr.bf16.gmra.mrb[0].mxu0 %v1396
      %v1452 = vpop.f32.mrb[0].mxu0
      %v1453 = vadd.f32 0.0, %v1452
      %v1454 = vpop.f32.mrb[0].mxu0
      %v1455 = vpop.f32.mrb[0].mxu0
      %v1456 = vadd.f32 0.0, %v1455
      %v1457 = vpop.f32.mrb[0].mxu0
      %1458 = vmatprep.mubr.bf16.mxu0 0
      %1459 = vmatmul.mubr.bf16.gmra.mrb[0].mxu0 %v1399
      %v1460 = vpop.f32.mrb[0].mxu0
      %v1461 = vadd.f32 0.0, %v1460
      %v1462 = vpop.f32.mrb[0].mxu0
      %v1463 = vpop.f32.mrb[0].mxu0
      %v1464 = vadd.f32 0.0, %v1463
      %v1465 = vpop.f32.mrb[0].mxu0
      %1466 = vmatprep.mubr.bf16.mxu0 0
      %1467 = vmatmul.mubr.bf16.gmra.mrb[0].mxu0 %v1402
      %v1468 = vpop.f32.mrb[0].mxu0
      %v1469 = vadd.f32 0.0, %v1468
      %v1470 = vpop.f32.mrb[0].mxu0
      %v1471 = vpop.f32.mrb[0].mxu0
      %v1472 = vadd.f32 0.0, %v1471
      %v1473 = vpop.f32.mrb[0].mxu0
      %1474 = vmatprep.mubr.bf16.mxu0 0
      %1475 = vmatmul.mubr.bf16.gmra.mrb[0].mxu0 %v1405
      %v1476 = vpop.f32.mrb[0].mxu0
      %v1477 = vadd.f32 0.0, %v1476
      %v1478 = vpop.f32.mrb[0].mxu0
      %v1479 = vpop.f32.mrb[0].mxu0
      %v1480 = vadd.f32 0.0, %v1479
      %v1481 = vpop.f32.mrb[0].mxu0
      %1482 = vmatprep.mubr.bf16.mxu0 0
      %1483 = vmatmul.mubr.bf16.gmra.mrb[0].mxu0 %v1408
      %v1484 = vpop.f32.mrb[0].mxu0
      %v1485 = vadd.f32 0.0, %v1484
      %v1486 = vpop.f32.mrb[0].mxu0
      %v1487 = vpop.f32.mrb[0].mxu0
      %v1488 = vpop.f32.mrb[0].mxu0
      %1489 = vdwg.mxu0
      %v1490 = vadd.f32 %v1069, %v1445
      %v1491 = vadd.f32 %v1070, %v1448
      %v1492 = vadd.f32 %v1071, %v1453
      %v1493 = vadd.f32 %v1072, %v1456
      %v1494 = vadd.f32 %v1073, %v1461
      %v1495 = vadd.f32 %v1074, %v1464
      %v1496 = vadd.f32 %v1075, %v1469
      %v1497 = vadd.f32 %v1076, %v1472
      %v1498 = vadd.f32 %v1077, %v1477
      %v1499 = vadd.f32 %v1078, %v1480
      %v1500 = vadd.f32 %v1079, %v1485
      %s1501 = scalar_lea.vmem %s1, 128
      %v1502 = vld [vmem:[%s1501] sm:$0xf]
      %v1503 = vld [vmem:[%s1501 + $0x4] sm:$0xf]
      %v1504 = vld [vmem:[%s1501 + $0x8] sm:$0xf]
      %v1505 = vld [vmem:[%s1501 + $0xc] sm:$0xf]
      %v1506 = vld [vmem:[%s1501 + $0x10] sm:$0xf]
      %v1507 = vld [vmem:[%s1501 + $0x14] sm:$0xf]
      %v1508 = vld [vmem:[%s1501 + $0x18] sm:$0xf]
      %v1509 = vld [vmem:[%s1501 + $0x1c] sm:$0xf]
      %v1510 = vld [vmem:[%s165 + $0x4] sm:$0xe]
      %v1511 = vld [vmem:[%s165 + $0x2c] sm:$0x3]
      %v1512 = vld [vmem:[%s191 + $0x4] sm:$0xe]
      %v1513 = vld [vmem:[%s191 + $0x2c] sm:$0x3]
      %v1516 = vunpack.c.l.b16 %v1510
      %v1517 = vunpack.c.l.b16 %v1511
      %v1518 = vpack.c.b16 %v1123, %v1516
      %v1519 = vpack.c.b16 %v1517, %v1517
      %v1520 = vrot.slane %v1518, 1
      %v1521 = vrot.slane %v1134, 1
      %v1522 = vsel %vm809, %v1520, %v1521
      %v1523 = vrot.slane %v1135, 1
      %v1524 = vsel %vm809, %v1521, %v1523
      %v1525 = vrot.slane %v1136, 1
      %v1526 = vsel %vm809, %v1523, %v1525
      %v1527 = vrot.slane %v1137, 1
      %v1528 = vsel %vm809, %v1525, %v1527
      %v1529 = vrot.slane %v1519, 1
      %v1530 = vsel %vm809, %v1527, %v1529
      %v1539 = vunpack.c.l.b16 %v1502
      %v1540 = vunpack.c.l.b16 %v1503
      %v1541 = vunpack.c.l.b16 %v1504
      %v1542 = vunpack.c.l.b16 %v1505
      %v1543 = vunpack.c.l.b16 %v1506
      %v1544 = vunpack.c.l.b16 %v1507
      %v1545 = vunpack.c.l.b16 %v1508
      %v1546 = vunpack.c.l.b16 %v1509
      %v1547 = vpack.c.b16 %v1540, %v1539
      %v1548 = vpack.c.b16 %v1542, %v1541
      %v1549 = vpack.c.b16 %v1544, %v1543
      %v1550 = vpack.c.b16 %v1546, %v1545
      %v1556 = vsel %vm311, %v1522, 0
      %v1559 = vsel %vm311, %v1524, 0
      %v1562 = vsel %vm311, %v1526, 0
      %v1565 = vsel %vm311, %v1528, 0
      %v1568 = vsel %vm311, %v1530, 0
      %v1571 = vsel %vm311, %v1529, 0
      %1573 = vmatprep.subr.bf16.mxu0 0
      %1574 = vmatpush1.bf16.msra.mxu0 %v1547
      %1575 = vmatprep.subr.bf16.mxu0 0
      %1576 = vmatpush1.bf16.msra.mxu0 %v1548
      %1577 = vmatprep.subr.bf16.mxu0 0
      %1578 = vmatpush1.bf16.msra.mxu0 %v1549
      %1579 = vmatprep.subr.bf16.mxu0 0
      %1580 = vmatpush1.bf16.msra.mxu0 %v1550
      %1581 = vmatprep.subr.bf16.mxu0 0
      %1582 = vmatpush1.bf16.msra.mxu0 0
      %1583 = vmatprep.subr.bf16.mxu0 0
      %1584 = vmatpush1.bf16.msra.mxu0 0
      %1585 = vmatprep.subr.bf16.mxu0 0
      %1586 = vmatpush1.bf16.msra.mxu0 0
      %1587 = vmatprep.subr.bf16.mxu0 0
      %1588 = vmatpush1.bf16.msra.mxu0 0
      %1589 = vmatprep.subr.bf16.mxu0 0
      %1590 = vmatpush1.bf16.msra.mxu0 0
      %1591 = vmatprep.subr.bf16.mxu0 0
      %1592 = vmatpush1.bf16.msra.mxu0 0
      %1593 = vmatprep.subr.bf16.mxu0 0
      %1594 = vmatpush1.bf16.msra.mxu0 0
      %1595 = vmatprep.subr.bf16.mxu0 0
      %1596 = vmatpush1.bf16.msra.mxu0 0
      %1597 = vmatprep.subr.bf16.mxu0 0
      %1598 = vmatpush1.bf16.msra.mxu0 0
      %1599 = vmatprep.subr.bf16.mxu0 0
      %1600 = vmatpush1.bf16.msra.mxu0 0
      %1601 = vmatprep.subr.bf16.mxu0 0
      %1602 = vmatpush1.bf16.msra.mxu0 0
      %1603 = vmatprep.subr.bf16.mxu0 0
      %1604 = vmatpush1.bf16.msra.mxu0 0
      %1605 = vmatprep.mubr.bf16.mxu0 0
      %1606 = vmatmul.mubr.bf16.gmra.mrb[0].mxu0 %v1556
      %v1607 = vpop.f32.mrb[0].mxu0
      %v1608 = vadd.f32 0.0, %v1607
      %v1609 = vpop.f32.mrb[0].mxu0
      %v1610 = vpop.f32.mrb[0].mxu0
      %v1611 = vadd.f32 0.0, %v1610
      %v1612 = vpop.f32.mrb[0].mxu0
      %1613 = vmatprep.mubr.bf16.mxu0 0
      %1614 = vmatmul.mubr.bf16.gmra.mrb[0].mxu0 %v1559
      %v1615 = vpop.f32.mrb[0].mxu0
      %v1616 = vadd.f32 0.0, %v1615
      %v1617 = vpop.f32.mrb[0].mxu0
      %v1618 = vpop.f32.mrb[0].mxu0
      %v1619 = vadd.f32 0.0, %v1618
      %v1620 = vpop.f32.mrb[0].mxu0
      %1621 = vmatprep.mubr.bf16.mxu0 0
      %1622 = vmatmul.mubr.bf16.gmra.mrb[0].mxu0 %v1562
      %v1623 = vpop.f32.mrb[0].mxu0
      %v1624 = vadd.f32 0.0, %v1623
      %v1625 = vpop.f32.mrb[0].mxu0
      %v1626 = vpop.f32.mrb[0].mxu0
      %v1627 = vadd.f32 0.0, %v1626
      %v1628 = vpop.f32.mrb[0].mxu0
      %1629 = vmatprep.mubr.bf16.mxu0 0
      %1630 = vmatmul.mubr.bf16.gmra.mrb[0].mxu0 %v1565
      %v1631 = vpop.f32.mrb[0].mxu0
      %v1632 = vadd.f32 0.0, %v1631
      %v1633 = vpop.f32.mrb[0].mxu0
      %v1634 = vpop.f32.mrb[0].mxu0
      %v1635 = vadd.f32 0.0, %v1634
      %v1636 = vpop.f32.mrb[0].mxu0
      %1637 = vmatprep.mubr.bf16.mxu0 0
      %1638 = vmatmul.mubr.bf16.gmra.mrb[0].mxu0 %v1568
      %v1639 = vpop.f32.mrb[0].mxu0
      %v1640 = vadd.f32 0.0, %v1639
      %v1641 = vpop.f32.mrb[0].mxu0
      %v1642 = vpop.f32.mrb[0].mxu0
      %v1643 = vadd.f32 0.0, %v1642
      %v1644 = vpop.f32.mrb[0].mxu0
      %1645 = vmatprep.mubr.bf16.mxu0 0
      %1646 = vmatmul.mubr.bf16.gmra.mrb[0].mxu0 %v1571
      %v1647 = vpop.f32.mrb[0].mxu0
      %v1648 = vadd.f32 0.0, %v1647
      %v1649 = vpop.f32.mrb[0].mxu0
      %v1650 = vpop.f32.mrb[0].mxu0
      %v1651 = vpop.f32.mrb[0].mxu0
      %1652 = vdwg.mxu0
      %v1653 = vadd.f32 %v1307, %v1608
      %v1654 = vadd.f32 %v1308, %v1611
      %v1655 = vadd.f32 %v1309, %v1616
      %v1656 = vadd.f32 %v1310, %v1619
      %v1657 = vadd.f32 %v1311, %v1624
      %v1658 = vadd.f32 %v1312, %v1627
      %v1659 = vadd.f32 %v1313, %v1632
      %v1660 = vadd.f32 %v1314, %v1635
      %v1661 = vadd.f32 %v1315, %v1640
      %v1662 = vadd.f32 %v1316, %v1643
      %v1663 = vadd.f32 %v1317, %v1648
      %v1666 = vunpack.c.l.b16 %v1512
      %v1667 = vunpack.c.l.b16 %v1513
      %v1668 = vpack.c.b16 %v1330, %v1666
      %v1669 = vpack.c.b16 %v1667, %v1667
      %v1670 = vrot.slane %v1668, 1
      %v1671 = vrot.slane %v1341, 1
      %v1672 = vsel %vm809, %v1670, %v1671
      %v1673 = vrot.slane %v1342, 1
      %v1674 = vsel %vm809, %v1671, %v1673
      %v1675 = vrot.slane %v1343, 1
      %v1676 = vsel %vm809, %v1673, %v1675
      %v1677 = vrot.slane %v1344, 1
      %v1678 = vsel %vm809, %v1675, %v1677
      %v1679 = vrot.slane %v1669, 1
      %v1680 = vsel %vm809, %v1677, %v1679
      %v1682 = vsel %vm311, %v1672, 0
      %v1685 = vsel %vm311, %v1674, 0
      %v1688 = vsel %vm311, %v1676, 0
      %v1691 = vsel %vm311, %v1678, 0
      %v1694 = vsel %vm311, %v1680, 0
      %v1697 = vsel %vm311, %v1679, 0
      %1699 = vmatprep.subr.bf16.mxu0 0
      %1700 = vmatpush1.bf16.msra.mxu0 %v1547
      %1701 = vmatprep.subr.bf16.mxu0 0
      %1702 = vmatpush1.bf16.msra.mxu0 %v1548
      %1703 = vmatprep.subr.bf16.mxu0 0
      %1704 = vmatpush1.bf16.msra.mxu0 %v1549
      %1705 = vmatprep.subr.bf16.mxu0 0
      %1706 = vmatpush1.bf16.msra.mxu0 %v1550
      %1707 = vmatprep.subr.bf16.mxu0 0
      %1708 = vmatpush1.bf16.msra.mxu0 0
      %1709 = vmatprep.subr.bf16.mxu0 0
      %1710 = vmatpush1.bf16.msra.mxu0 0
      %1711 = vmatprep.subr.bf16.mxu0 0
      %1712 = vmatpush1.bf16.msra.mxu0 0
      %1713 = vmatprep.subr.bf16.mxu0 0
      %1714 = vmatpush1.bf16.msra.mxu0 0
      %1715 = vmatprep.subr.bf16.mxu0 0
      %1716 = vmatpush1.bf16.msra.mxu0 0
      %1717 = vmatprep.subr.bf16.mxu0 0
      %1718 = vmatpush1.bf16.msra.mxu0 0
      %1719 = vmatprep.subr.bf16.mxu0 0
      %1720 = vmatpush1.bf16.msra.mxu0 0
      %1721 = vmatprep.subr.bf16.mxu0 0
      %1722 = vmatpush1.bf16.msra.mxu0 0
      %1723 = vmatprep.subr.bf16.mxu0 0
      %1724 = vmatpush1.bf16.msra.mxu0 0
      %1725 = vmatprep.subr.bf16.mxu0 0
      %1726 = vmatpush1.bf16.msra.mxu0 0
      %1727 = vmatprep.subr.bf16.mxu0 0
      %1728 = vmatpush1.bf16.msra.mxu0 0
      %1729 = vmatprep.subr.bf16.mxu0 0
      %1730 = vmatpush1.bf16.msra.mxu0 0
      %1731 = vmatprep.mubr.bf16.mxu0 0
      %1732 = vmatmul.mubr.bf16.gmra.mrb[0].mxu0 %v1682
      %v1733 = vpop.f32.mrb[0].mxu0
      %v1734 = vadd.f32 0.0, %v1733
      %v1735 = vpop.f32.mrb[0].mxu0
      %v1736 = vpop.f32.mrb[0].mxu0
      %v1737 = vadd.f32 0.0, %v1736
      %v1738 = vpop.f32.mrb[0].mxu0
      %1739 = vmatprep.mubr.bf16.mxu0 0
      %1740 = vmatmul.mubr.bf16.gmra.mrb[0].mxu0 %v1685
      %v1741 = vpop.f32.mrb[0].mxu0
      %v1742 = vadd.f32 0.0, %v1741
      %v1743 = vpop.f32.mrb[0].mxu0
      %v1744 = vpop.f32.mrb[0].mxu0
      %v1745 = vadd.f32 0.0, %v1744
      %v1746 = vpop.f32.mrb[0].mxu0
      %1747 = vmatprep.mubr.bf16.mxu0 0
      %1748 = vmatmul.mubr.bf16.gmra.mrb[0].mxu0 %v1688
      %v1749 = vpop.f32.mrb[0].mxu0
      %v1750 = vadd.f32 0.0, %v1749
      %v1751 = vpop.f32.mrb[0].mxu0
      %v1752 = vpop.f32.mrb[0].mxu0
      %v1753 = vadd.f32 0.0, %v1752
      %v1754 = vpop.f32.mrb[0].mxu0
      %1755 = vmatprep.mubr.bf16.mxu0 0
      %1756 = vmatmul.mubr.bf16.gmra.mrb[0].mxu0 %v1691
      %v1757 = vpop.f32.mrb[0].mxu0
      %v1758 = vadd.f32 0.0, %v1757
      %v1759 = vpop.f32.mrb[0].mxu0
      %v1760 = vpop.f32.mrb[0].mxu0
      %v1761 = vadd.f32 0.0, %v1760
      %v1762 = vpop.f32.mrb[0].mxu0
      %1763 = vmatprep.mubr.bf16.mxu0 0
      %1764 = vmatmul.mubr.bf16.gmra.mrb[0].mxu0 %v1694
      %v1765 = vpop.f32.mrb[0].mxu0
      %v1766 = vadd.f32 0.0, %v1765
      %v1767 = vpop.f32.mrb[0].mxu0
      %v1768 = vpop.f32.mrb[0].mxu0
      %v1769 = vadd.f32 0.0, %v1768
      %v1770 = vpop.f32.mrb[0].mxu0
      %1771 = vmatprep.mubr.bf16.mxu0 0
      %1772 = vmatmul.mubr.bf16.gmra.mrb[0].mxu0 %v1697
      %v1773 = vpop.f32.mrb[0].mxu0
      %v1774 = vadd.f32 0.0, %v1773
      %v1775 = vpop.f32.mrb[0].mxu0
      %v1776 = vpop.f32.mrb[0].mxu0
      %v1777 = vpop.f32.mrb[0].mxu0
      %1778 = vdwg.mxu0
      %v1779 = vadd.f32 %v1490, %v1734
      %v1780 = vadd.f32 %v1491, %v1737
      %v1781 = vadd.f32 %v1492, %v1742
      %v1782 = vadd.f32 %v1493, %v1745
      %v1783 = vadd.f32 %v1494, %v1750
      %v1784 = vadd.f32 %v1495, %v1753
      %v1785 = vadd.f32 %v1496, %v1758
      %v1786 = vadd.f32 %v1497, %v1761
      %v1787 = vadd.f32 %v1498, %v1766
      %v1788 = vadd.f32 %v1499, %v1769
      %v1789 = vadd.f32 %v1500, %v1774
      %s1790 = scalar_lea.vmem %s1, 160
      %v1791 = vld [vmem:[%s1790] sm:$0xf]
      %v1792 = vld [vmem:[%s1790 + $0x4] sm:$0xf]
      %v1793 = vld [vmem:[%s1790 + $0x8] sm:$0xf]
      %v1794 = vld [vmem:[%s1790 + $0xc] sm:$0xf]
      %v1795 = vld [vmem:[%s1790 + $0x10] sm:$0xf]
      %v1796 = vld [vmem:[%s1790 + $0x14] sm:$0xf]
      %v1797 = vld [vmem:[%s1790 + $0x18] sm:$0xf]
      %v1798 = vld [vmem:[%s1790 + $0x1c] sm:$0xf]
      %vm1799 = vsmask.f32 6400
      %v1801 = vshrl.u32 %v1518, 16
      %v1803 = vrot.slane %v1801, 1
      %v1804 = vshll.u32 %v1518, 16
      %v1806 = vrot.slane %v1804, 2
      %v1807 = vor.u32 %v1803, %v1806
      %v1808 = vrot.slane %v1151, 1
      %v1809 = vrot.slane %v1147, 2
      %v1810 = vor.u32 %v1808, %v1809
      %v1811 = vsel %vm1799, %v1807, %v1810
      %v1812 = vrot.slane %v1159, 1
      %v1813 = vrot.slane %v1155, 2
      %v1814 = vor.u32 %v1812, %v1813
      %v1815 = vsel %vm1799, %v1810, %v1814
      %v1816 = vrot.slane %v1167, 1
      %v1817 = vrot.slane %v1163, 2
      %v1818 = vor.u32 %v1816, %v1817
      %v1819 = vsel %vm1799, %v1814, %v1818
      %v1820 = vrot.slane %v1175, 1
      %v1821 = vrot.slane %v1171, 2
      %v1822 = vor.u32 %v1820, %v1821
      %v1823 = vsel %vm1799, %v1818, %v1822
      %v1825 = vshrl.u32 %v1519, 16
      %v1827 = vrot.slane %v1825, 1
      %v1828 = vshll.u32 %v1519, 16
      %v1830 = vrot.slane %v1828, 2
      %v1831 = vor.u32 %v1827, %v1830
      %v1832 = vsel %vm1799, %v1822, %v1831
      %v1841 = vunpack.c.l.b16 %v1791
      %v1842 = vunpack.c.l.b16 %v1792
      %v1843 = vunpack.c.l.b16 %v1793
      %v1844 = vunpack.c.l.b16 %v1794
      %v1845 = vunpack.c.l.b16 %v1795
      %v1846 = vunpack.c.l.b16 %v1796
      %v1847 = vunpack.c.l.b16 %v1797
      %v1848 = vunpack.c.l.b16 %v1798
      %v1849 = vpack.c.b16 %v1842, %v1841
      %v1850 = vpack.c.b16 %v1844, %v1843
      %v1851 = vpack.c.b16 %v1846, %v1845
      %v1852 = vpack.c.b16 %v1848, %v1847
      %v1858 = vsel %vm311, %v1811, 0
      %v1861 = vsel %vm311, %v1815, 0
      %v1864 = vsel %vm311, %v1819, 0
      %v1867 = vsel %vm311, %v1823, 0
      %v1870 = vsel %vm311, %v1832, 0
      %v1873 = vsel %vm311, %v1827, 0
      %1875 = vmatprep.subr.bf16.mxu0 0
      %1876 = vmatpush1.bf16.msra.mxu0 %v1849
      %1877 = vmatprep.subr.bf16.mxu0 0
      %1878 = vmatpush1.bf16.msra.mxu0 %v1850
      %1879 = vmatprep.subr.bf16.mxu0 0
      %1880 = vmatpush1.bf16.msra.mxu0 %v1851
      %1881 = vmatprep.subr.bf16.mxu0 0
      %1882 = vmatpush1.bf16.msra.mxu0 %v1852
      %1883 = vmatprep.subr.bf16.mxu0 0
      %1884 = vmatpush1.bf16.msra.mxu0 0
      %1885 = vmatprep.subr.bf16.mxu0 0
      %1886 = vmatpush1.bf16.msra.mxu0 0
      %1887 = vmatprep.subr.bf16.mxu0 0
      %1888 = vmatpush1.bf16.msra.mxu0 0
      %1889 = vmatprep.subr.bf16.mxu0 0
      %1890 = vmatpush1.bf16.msra.mxu0 0
      %1891 = vmatprep.subr.bf16.mxu0 0
      %1892 = vmatpush1.bf16.msra.mxu0 0
      %1893 = vmatprep.subr.bf16.mxu0 0
      %1894 = vmatpush1.bf16.msra.mxu0 0
      %1895 = vmatprep.subr.bf16.mxu0 0
      %1896 = vmatpush1.bf16.msra.mxu0 0
      %1897 = vmatprep.subr.bf16.mxu0 0
      %1898 = vmatpush1.bf16.msra.mxu0 0
      %1899 = vmatprep.subr.bf16.mxu0 0
      %1900 = vmatpush1.bf16.msra.mxu0 0
      %1901 = vmatprep.subr.bf16.mxu0 0
      %1902 = vmatpush1.bf16.msra.mxu0 0
      %1903 = vmatprep.subr.bf16.mxu0 0
      %1904 = vmatpush1.bf16.msra.mxu0 0
      %1905 = vmatprep.subr.bf16.mxu0 0
      %1906 = vmatpush1.bf16.msra.mxu0 0
      %1907 = vmatprep.mubr.bf16.mxu0 0
      %1908 = vmatmul.mubr.bf16.gmra.mrb[0].mxu0 %v1858
      %v1909 = vpop.f32.mrb[0].mxu0
      %v1910 = vadd.f32 0.0, %v1909
      %v1911 = vpop.f32.mrb[0].mxu0
      %v1912 = vpop.f32.mrb[0].mxu0
      %v1913 = vadd.f32 0.0, %v1912
      %v1914 = vpop.f32.mrb[0].mxu0
      %1915 = vmatprep.mubr.bf16.mxu0 0
      %1916 = vmatmul.mubr.bf16.gmra.mrb[0].mxu0 %v1861
      %v1917 = vpop.f32.mrb[0].mxu0
      %v1918 = vadd.f32 0.0, %v1917
      %v1919 = vpop.f32.mrb[0].mxu0
      %v1920 = vpop.f32.mrb[0].mxu0
      %v1921 = vadd.f32 0.0, %v1920
      %v1922 = vpop.f32.mrb[0].mxu0
      %1923 = vmatprep.mubr.bf16.mxu0 0
      %1924 = vmatmul.mubr.bf16.gmra.mrb[0].mxu0 %v1864
      %v1925 = vpop.f32.mrb[0].mxu0
      %v1926 = vadd.f32 0.0, %v1925
      %v1927 = vpop.f32.mrb[0].mxu0
      %v1928 = vpop.f32.mrb[0].mxu0
      %v1929 = vadd.f32 0.0, %v1928
      %v1930 = vpop.f32.mrb[0].mxu0
      %1931 = vmatprep.mubr.bf16.mxu0 0
      %1932 = vmatmul.mubr.bf16.gmra.mrb[0].mxu0 %v1867
      %v1933 = vpop.f32.mrb[0].mxu0
      %v1934 = vadd.f32 0.0, %v1933
      %v1935 = vpop.f32.mrb[0].mxu0
      %v1936 = vpop.f32.mrb[0].mxu0
      %v1937 = vadd.f32 0.0, %v1936
      %v1938 = vpop.f32.mrb[0].mxu0
      %1939 = vmatprep.mubr.bf16.mxu0 0
      %1940 = vmatmul.mubr.bf16.gmra.mrb[0].mxu0 %v1870
      %v1941 = vpop.f32.mrb[0].mxu0
      %v1942 = vadd.f32 0.0, %v1941
      %v1943 = vpop.f32.mrb[0].mxu0
      %v1944 = vpop.f32.mrb[0].mxu0
      %v1945 = vadd.f32 0.0, %v1944
      %v1946 = vpop.f32.mrb[0].mxu0
      %1947 = vmatprep.mubr.bf16.mxu0 0
      %1948 = vmatmul.mubr.bf16.gmra.mrb[0].mxu0 %v1873
      %v1949 = vpop.f32.mrb[0].mxu0
      %v1950 = vadd.f32 0.0, %v1949
      %v1951 = vpop.f32.mrb[0].mxu0
      %v1952 = vpop.f32.mrb[0].mxu0
      %v1953 = vpop.f32.mrb[0].mxu0
      %1954 = vdwg.mxu0
      %v1955 = vadd.f32 %v1653, %v1910
      %v1956 = vadd.f32 %v1654, %v1913
      %v1957 = vadd.f32 %v1655, %v1918
      %v1958 = vadd.f32 %v1656, %v1921
      %v1959 = vadd.f32 %v1657, %v1926
      %v1960 = vadd.f32 %v1658, %v1929
      %v1961 = vadd.f32 %v1659, %v1934
      %v1962 = vadd.f32 %v1660, %v1937
      %v1963 = vadd.f32 %v1661, %v1942
      %v1964 = vadd.f32 %v1662, %v1945
      %v1965 = vadd.f32 %v1663, %v1950
      %v1967 = vshrl.u32 %v1668, 16
      %v1969 = vrot.slane %v1967, 1
      %v1970 = vshll.u32 %v1668, 16
      %v1972 = vrot.slane %v1970, 2
      %v1973 = vor.u32 %v1969, %v1972
      %v1974 = vrot.slane %v1358, 1
      %v1975 = vrot.slane %v1354, 2
      %v1976 = vor.u32 %v1974, %v1975
      %v1977 = vsel %vm1799, %v1973, %v1976
      %v1978 = vrot.slane %v1366, 1
      %v1979 = vrot.slane %v1362, 2
      %v1980 = vor.u32 %v1978, %v1979
      %v1981 = vsel %vm1799, %v1976, %v1980
      %v1982 = vrot.slane %v1374, 1
      %v1983 = vrot.slane %v1370, 2
      %v1984 = vor.u32 %v1982, %v1983
      %v1985 = vsel %vm1799, %v1980, %v1984
      %v1986 = vrot.slane %v1382, 1
      %v1987 = vrot.slane %v1378, 2
      %v1988 = vor.u32 %v1986, %v1987
      %v1989 = vsel %vm1799, %v1984, %v1988
      %v1991 = vshrl.u32 %v1669, 16
      %v1993 = vrot.slane %v1991, 1
      %v1994 = vshll.u32 %v1669, 16
      %v1996 = vrot.slane %v1994, 2
      %v1997 = vor.u32 %v1993, %v1996
      %v1998 = vsel %vm1799, %v1988, %v1997
      %v2000 = vsel %vm311, %v1977, 0
      %v2003 = vsel %vm311, %v1981, 0
      %v2006 = vsel %vm311, %v1985, 0
      %v2009 = vsel %vm311, %v1989, 0
      %v2012 = vsel %vm311, %v1998, 0
      %v2015 = vsel %vm311, %v1993, 0
      %2017 = vmatprep.subr.bf16.mxu0 0
      %2018 = vmatpush1.bf16.msra.mxu0 %v1849
      %2019 = vmatprep.subr.bf16.mxu0 0
      %2020 = vmatpush1.bf16.msra.mxu0 %v1850
      %2021 = vmatprep.subr.bf16.mxu0 0
      %2022 = vmatpush1.bf16.msra.mxu0 %v1851
      %2023 = vmatprep.subr.bf16.mxu0 0
      %2024 = vmatpush1.bf16.msra.mxu0 %v1852
      %2025 = vmatprep.subr.bf16.mxu0 0
      %2026 = vmatpush1.bf16.msra.mxu0 0
      %2027 = vmatprep.subr.bf16.mxu0 0
      %2028 = vmatpush1.bf16.msra.mxu0 0
      %2029 = vmatprep.subr.bf16.mxu0 0
      %2030 = vmatpush1.bf16.msra.mxu0 0
      %2031 = vmatprep.subr.bf16.mxu0 0
      %2032 = vmatpush1.bf16.msra.mxu0 0
      %2033 = vmatprep.subr.bf16.mxu0 0
      %2034 = vmatpush1.bf16.msra.mxu0 0
      %2035 = vmatprep.subr.bf16.mxu0 0
      %2036 = vmatpush1.bf16.msra.mxu0 0
      %2037 = vmatprep.subr.bf16.mxu0 0
      %2038 = vmatpush1.bf16.msra.mxu0 0
      %2039 = vmatprep.subr.bf16.mxu0 0
      %2040 = vmatpush1.bf16.msra.mxu0 0
      %2041 = vmatprep.subr.bf16.mxu0 0
      %2042 = vmatpush1.bf16.msra.mxu0 0
      %2043 = vmatprep.subr.bf16.mxu0 0
      %2044 = vmatpush1.bf16.msra.mxu0 0
      %2045 = vmatprep.subr.bf16.mxu0 0
      %2046 = vmatpush1.bf16.msra.mxu0 0
      %2047 = vmatprep.subr.bf16.mxu0 0
      %2048 = vmatpush1.bf16.msra.mxu0 0
      %2049 = vmatprep.mubr.bf16.mxu0 0
      %2050 = vmatmul.mubr.bf16.gmra.mrb[0].mxu0 %v2000
      %v2051 = vpop.f32.mrb[0].mxu0
      %v2052 = vadd.f32 0.0, %v2051
      %v2053 = vpop.f32.mrb[0].mxu0
      %v2054 = vpop.f32.mrb[0].mxu0
      %v2055 = vadd.f32 0.0, %v2054
      %v2056 = vpop.f32.mrb[0].mxu0
      %2057 = vmatprep.mubr.bf16.mxu0 0
      %2058 = vmatmul.mubr.bf16.gmra.mrb[0].mxu0 %v2003
      %v2059 = vpop.f32.mrb[0].mxu0
      %v2060 = vadd.f32 0.0, %v2059
      %v2061 = vpop.f32.mrb[0].mxu0
      %v2062 = vpop.f32.mrb[0].mxu0
      %v2063 = vadd.f32 0.0, %v2062
      %v2064 = vpop.f32.mrb[0].mxu0
      %2065 = vmatprep.mubr.bf16.mxu0 0
      %2066 = vmatmul.mubr.bf16.gmra.mrb[0].mxu0 %v2006
      %v2067 = vpop.f32.mrb[0].mxu0
      %v2068 = vadd.f32 0.0, %v2067
      %v2069 = vpop.f32.mrb[0].mxu0
      %v2070 = vpop.f32.mrb[0].mxu0
      %v2071 = vadd.f32 0.0, %v2070
      %v2072 = vpop.f32.mrb[0].mxu0
      %2073 = vmatprep.mubr.bf16.mxu0 0
      %2074 = vmatmul.mubr.bf16.gmra.mrb[0].mxu0 %v2009
      %v2075 = vpop.f32.mrb[0].mxu0
      %v2076 = vadd.f32 0.0, %v2075
      %v2077 = vpop.f32.mrb[0].mxu0
      %v2078 = vpop.f32.mrb[0].mxu0
      %v2079 = vadd.f32 0.0, %v2078
      %v2080 = vpop.f32.mrb[0].mxu0
      %2081 = vmatprep.mubr.bf16.mxu0 0
      %2082 = vmatmul.mubr.bf16.gmra.mrb[0].mxu0 %v2012
      %v2083 = vpop.f32.mrb[0].mxu0
      %v2084 = vadd.f32 0.0, %v2083
      %v2085 = vpop.f32.mrb[0].mxu0
      %v2086 = vpop.f32.mrb[0].mxu0
      %v2087 = vadd.f32 0.0, %v2086
      %v2088 = vpop.f32.mrb[0].mxu0
      %2089 = vmatprep.mubr.bf16.mxu0 0
      %2090 = vmatmul.mubr.bf16.gmra.mrb[0].mxu0 %v2015
      %v2091 = vpop.f32.mrb[0].mxu0
      %v2092 = vadd.f32 0.0, %v2091
      %v2093 = vpop.f32.mrb[0].mxu0
      %v2094 = vpop.f32.mrb[0].mxu0
      %v2095 = vpop.f32.mrb[0].mxu0
      %2096 = vdwg.mxu0
      %v2097 = vadd.f32 %v1779, %v2052
      %v2098 = vadd.f32 %v1780, %v2055
      %v2099 = vadd.f32 %v1781, %v2060
      %v2100 = vadd.f32 %v1782, %v2063
      %v2101 = vadd.f32 %v1783, %v2068
      %v2102 = vadd.f32 %v1784, %v2071
      %v2103 = vadd.f32 %v1785, %v2076
      %v2104 = vadd.f32 %v1786, %v2079
      %v2105 = vadd.f32 %v1787, %v2084
      %v2106 = vadd.f32 %v1788, %v2087
      %v2107 = vadd.f32 %v1789, %v2092
      %s2108 = scalar_lea.vmem %s1, 192
      %v2109 = vld [vmem:[%s2108] sm:$0xf]
      %v2110 = vld [vmem:[%s2108 + $0x4] sm:$0xf]
      %v2111 = vld [vmem:[%s2108 + $0x8] sm:$0xf]
      %v2112 = vld [vmem:[%s2108 + $0xc] sm:$0xf]
      %v2113 = vld [vmem:[%s2108 + $0x10] sm:$0xf]
      %v2114 = vld [vmem:[%s2108 + $0x14] sm:$0xf]
      %v2115 = vld [vmem:[%s2108 + $0x18] sm:$0xf]
      %v2116 = vld [vmem:[%s2108 + $0x1c] sm:$0xf]
      %v2117 = vld [vmem:[%s165 + $0x8] sm:$0xe]
      %v2118 = vld [vmem:[%s165 + $0xc] sm:$0xf]
      %v2119 = vld [vmem:[%s165 + $0x10] sm:$0xf]
      %v2120 = vld [vmem:[%s165 + $0x14] sm:$0xf]
      %v2121 = vld [vmem:[%s165 + $0x18] sm:$0xf]
      %v2122 = vld [vmem:[%s165 + $0x1c] sm:$0xf]
      %v2123 = vld [vmem:[%s165 + $0x20] sm:$0xf]
      %v2124 = vld [vmem:[%s165 + $0x24] sm:$0xf]
      %v2125 = vld [vmem:[%s165 + $0x28] sm:$0xf]
      %v2126 = vld [vmem:[%s165 + $0x2c] sm:$0xf]
      %v2127 = vld [vmem:[%s165 + $0x30] sm:$0x3]
      %v2128 = vld [vmem:[%s191 + $0x8] sm:$0xe]
      %v2129 = vld [vmem:[%s191 + $0xc] sm:$0xf]
      %v2130 = vld [vmem:[%s191 + $0x10] sm:$0xf]
      %v2131 = vld [vmem:[%s191 + $0x14] sm:$0xf]
      %v2132 = vld [vmem:[%s191 + $0x18] sm:$0xf]
      %v2133 = vld [vmem:[%s191 + $0x1c] sm:$0xf]
      %v2134 = vld [vmem:[%s191 + $0x20] sm:$0xf]
      %v2135 = vld [vmem:[%s191 + $0x24] sm:$0xf]
      %v2136 = vld [vmem:[%s191 + $0x28] sm:$0xf]
      %v2137 = vld [vmem:[%s191 + $0x2c] sm:$0xf]
      %v2138 = vld [vmem:[%s191 + $0x30] sm:$0x3]
      %v2150 = vunpack.c.l.b16 %v2117
      %v2151 = vunpack.c.l.b16 %v2118
      %v2152 = vunpack.c.l.b16 %v2119
      %v2153 = vunpack.c.l.b16 %v2120
      %v2154 = vunpack.c.l.b16 %v2121
      %v2155 = vunpack.c.l.b16 %v2122
      %v2156 = vunpack.c.l.b16 %v2123
      %v2157 = vunpack.c.l.b16 %v2124
      %v2158 = vunpack.c.l.b16 %v2125
      %v2159 = vunpack.c.l.b16 %v2126
      %v2160 = vunpack.c.l.b16 %v2127
      %v2161 = vpack.c.b16 %v2151, %v2150
      %v2162 = vpack.c.b16 %v2153, %v2152
      %v2163 = vpack.c.b16 %v2155, %v2154
      %v2164 = vpack.c.b16 %v2157, %v2156
      %v2165 = vpack.c.b16 %v2159, %v2158
      %v2166 = vpack.c.b16 %v2160, %v2160
      %v2167 = vrot.slane %v2161, 1
      %v2168 = vrot.slane %v2162, 1
      %v2169 = vsel %vm809, %v2167, %v2168
      %v2170 = vrot.slane %v2163, 1
      %v2171 = vsel %vm809, %v2168, %v2170
      %v2172 = vrot.slane %v2164, 1
      %v2173 = vsel %vm809, %v2170, %v2172
      %v2174 = vrot.slane %v2165, 1
      %v2175 = vsel %vm809, %v2172, %v2174
      %v2176 = vrot.slane %v2166, 1
      %v2177 = vsel %vm809, %v2174, %v2176
      %v2186 = vunpack.c.l.b16 %v2109
      %v2187 = vunpack.c.l.b16 %v2110
      %v2188 = vunpack.c.l.b16 %v2111
      %v2189 = vunpack.c.l.b16 %v2112
      %v2190 = vunpack.c.l.b16 %v2113
      %v2191 = vunpack.c.l.b16 %v2114
      %v2192 = vunpack.c.l.b16 %v2115
      %v2193 = vunpack.c.l.b16 %v2116
      %v2194 = vpack.c.b16 %v2187, %v2186
      %v2195 = vpack.c.b16 %v2189, %v2188
      %v2196 = vpack.c.b16 %v2191, %v2190
      %v2197 = vpack.c.b16 %v2193, %v2192
      %v2203 = vsel %vm311, %v2169, 0
      %v2206 = vsel %vm311, %v2171, 0
      %v2209 = vsel %vm311, %v2173, 0
      %v2212 = vsel %vm311, %v2175, 0
      %v2215 = vsel %vm311, %v2177, 0
      %v2218 = vsel %vm311, %v2176, 0
      %2220 = vmatprep.subr.bf16.mxu0 0
      %2221 = vmatpush1.bf16.msra.mxu0 %v2194
      %2222 = vmatprep.subr.bf16.mxu0 0
      %2223 = vmatpush1.bf16.msra.mxu0 %v2195
      %2224 = vmatprep.subr.bf16.mxu0 0
      %2225 = vmatpush1.bf16.msra.mxu0 %v2196
      %2226 = vmatprep.subr.bf16.mxu0 0
      %2227 = vmatpush1.bf16.msra.mxu0 %v2197
      %2228 = vmatprep.subr.bf16.mxu0 0
      %2229 = vmatpush1.bf16.msra.mxu0 0
      %2230 = vmatprep.subr.bf16.mxu0 0
      %2231 = vmatpush1.bf16.msra.mxu0 0
      %2232 = vmatprep.subr.bf16.mxu0 0
      %2233 = vmatpush1.bf16.msra.mxu0 0
      %2234 = vmatprep.subr.bf16.mxu0 0
      %2235 = vmatpush1.bf16.msra.mxu0 0
      %2236 = vmatprep.subr.bf16.mxu0 0
      %2237 = vmatpush1.bf16.msra.mxu0 0
      %2238 = vmatprep.subr.bf16.mxu0 0
      %2239 = vmatpush1.bf16.msra.mxu0 0
      %2240 = vmatprep.subr.bf16.mxu0 0
      %2241 = vmatpush1.bf16.msra.mxu0 0
      %2242 = vmatprep.subr.bf16.mxu0 0
      %2243 = vmatpush1.bf16.msra.mxu0 0
      %2244 = vmatprep.subr.bf16.mxu0 0
      %2245 = vmatpush1.bf16.msra.mxu0 0
      %2246 = vmatprep.subr.bf16.mxu0 0
      %2247 = vmatpush1.bf16.msra.mxu0 0
      %2248 = vmatprep.subr.bf16.mxu0 0
      %2249 = vmatpush1.bf16.msra.mxu0 0
      %2250 = vmatprep.subr.bf16.mxu0 0
      %2251 = vmatpush1.bf16.msra.mxu0 0
      %2252 = vmatprep.mubr.bf16.mxu0 0
      %2253 = vmatmul.mubr.bf16.gmra.mrb[0].mxu0 %v2203
      %v2254 = vpop.f32.mrb[0].mxu0
      %v2255 = vadd.f32 0.0, %v2254
      %v2256 = vpop.f32.mrb[0].mxu0
      %v2257 = vpop.f32.mrb[0].mxu0
      %v2258 = vadd.f32 0.0, %v2257
      %v2259 = vpop.f32.mrb[0].mxu0
      %2260 = vmatprep.mubr.bf16.mxu0 0
      %2261 = vmatmul.mubr.bf16.gmra.mrb[0].mxu0 %v2206
      %v2262 = vpop.f32.mrb[0].mxu0
      %v2263 = vadd.f32 0.0, %v2262
      %v2264 = vpop.f32.mrb[0].mxu0
      %v2265 = vpop.f32.mrb[0].mxu0
      %v2266 = vadd.f32 0.0, %v2265
      %v2267 = vpop.f32.mrb[0].mxu0
      %2268 = vmatprep.mubr.bf16.mxu0 0
      %2269 = vmatmul.mubr.bf16.gmra.mrb[0].mxu0 %v2209
      %v2270 = vpop.f32.mrb[0].mxu0
      %v2271 = vadd.f32 0.0, %v2270
      %v2272 = vpop.f32.mrb[0].mxu0
      %v2273 = vpop.f32.mrb[0].mxu0
      %v2274 = vadd.f32 0.0, %v2273
      %v2275 = vpop.f32.mrb[0].mxu0
      %2276 = vmatprep.mubr.bf16.mxu0 0
      %2277 = vmatmul.mubr.bf16.gmra.mrb[0].mxu0 %v2212
      %v2278 = vpop.f32.mrb[0].mxu0
      %v2279 = vadd.f32 0.0, %v2278
      %v2280 = vpop.f32.mrb[0].mxu0
      %v2281 = vpop.f32.mrb[0].mxu0
      %v2282 = vadd.f32 0.0, %v2281
      %v2283 = vpop.f32.mrb[0].mxu0
      %2284 = vmatprep.mubr.bf16.mxu0 0
      %2285 = vmatmul.mubr.bf16.gmra.mrb[0].mxu0 %v2215
      %v2286 = vpop.f32.mrb[0].mxu0
      %v2287 = vadd.f32 0.0, %v2286
      %v2288 = vpop.f32.mrb[0].mxu0
      %v2289 = vpop.f32.mrb[0].mxu0
      %v2290 = vadd.f32 0.0, %v2289
      %v2291 = vpop.f32.mrb[0].mxu0
      %2292 = vmatprep.mubr.bf16.mxu0 0
      %2293 = vmatmul.mubr.bf16.gmra.mrb[0].mxu0 %v2218
      %v2294 = vpop.f32.mrb[0].mxu0
      %v2295 = vadd.f32 0.0, %v2294
      %v2296 = vpop.f32.mrb[0].mxu0
      %v2297 = vpop.f32.mrb[0].mxu0
      %v2298 = vpop.f32.mrb[0].mxu0
      %2299 = vdwg.mxu0
      %v2300 = vadd.f32 %v1955, %v2255
      %v2301 = vadd.f32 %v1956, %v2258
      %v2302 = vadd.f32 %v1957, %v2263
      %v2303 = vadd.f32 %v1958, %v2266
      %v2304 = vadd.f32 %v1959, %v2271
      %v2305 = vadd.f32 %v1960, %v2274
      %v2306 = vadd.f32 %v1961, %v2279
      %v2307 = vadd.f32 %v1962, %v2282
      %v2308 = vadd.f32 %v1963, %v2287
      %v2309 = vadd.f32 %v1964, %v2290
      %v2310 = vadd.f32 %v1965, %v2295
      %v2322 = vunpack.c.l.b16 %v2128
      %v2323 = vunpack.c.l.b16 %v2129
      %v2324 = vunpack.c.l.b16 %v2130
      %v2325 = vunpack.c.l.b16 %v2131
      %v2326 = vunpack.c.l.b16 %v2132
      %v2327 = vunpack.c.l.b16 %v2133
      %v2328 = vunpack.c.l.b16 %v2134
      %v2329 = vunpack.c.l.b16 %v2135
      %v2330 = vunpack.c.l.b16 %v2136
      %v2331 = vunpack.c.l.b16 %v2137
      %v2332 = vunpack.c.l.b16 %v2138
      %v2333 = vpack.c.b16 %v2323, %v2322
      %v2334 = vpack.c.b16 %v2325, %v2324
      %v2335 = vpack.c.b16 %v2327, %v2326
      %v2336 = vpack.c.b16 %v2329, %v2328
      %v2337 = vpack.c.b16 %v2331, %v2330
      %v2338 = vpack.c.b16 %v2332, %v2332
      %v2339 = vrot.slane %v2333, 1
      %v2340 = vrot.slane %v2334, 1
      %v2341 = vsel %vm809, %v2339, %v2340
      %v2342 = vrot.slane %v2335, 1
      %v2343 = vsel %vm809, %v2340, %v2342
      %v2344 = vrot.slane %v2336, 1
      %v2345 = vsel %vm809, %v2342, %v2344
      %v2346 = vrot.slane %v2337, 1
      %v2347 = vsel %vm809, %v2344, %v2346
      %v2348 = vrot.slane %v2338, 1
      %v2349 = vsel %vm809, %v2346, %v2348
      %v2351 = vsel %vm311, %v2341, 0
      %v2354 = vsel %vm311, %v2343, 0
      %v2357 = vsel %vm311, %v2345, 0
      %v2360 = vsel %vm311, %v2347, 0
      %v2363 = vsel %vm311, %v2349, 0
      %v2366 = vsel %vm311, %v2348, 0
      %2368 = vmatprep.subr.bf16.mxu0 0
      %2369 = vmatpush1.bf16.msra.mxu0 %v2194
      %2370 = vmatprep.subr.bf16.mxu0 0
      %2371 = vmatpush1.bf16.msra.mxu0 %v2195
      %2372 = vmatprep.subr.bf16.mxu0 0
      %2373 = vmatpush1.bf16.msra.mxu0 %v2196
      %2374 = vmatprep.subr.bf16.mxu0 0
      %2375 = vmatpush1.bf16.msra.mxu0 %v2197
      %2376 = vmatprep.subr.bf16.mxu0 0
      %2377 = vmatpush1.bf16.msra.mxu0 0
      %2378 = vmatprep.subr.bf16.mxu0 0
      %2379 = vmatpush1.bf16.msra.mxu0 0
      %2380 = vmatprep.subr.bf16.mxu0 0
      %2381 = vmatpush1.bf16.msra.mxu0 0
      %2382 = vmatprep.subr.bf16.mxu0 0
      %2383 = vmatpush1.bf16.msra.mxu0 0
      %2384 = vmatprep.subr.bf16.mxu0 0
      %2385 = vmatpush1.bf16.msra.mxu0 0
      %2386 = vmatprep.subr.bf16.mxu0 0
      %2387 = vmatpush1.bf16.msra.mxu0 0
      %2388 = vmatprep.subr.bf16.mxu0 0
      %2389 = vmatpush1.bf16.msra.mxu0 0
      %2390 = vmatprep.subr.bf16.mxu0 0
      %2391 = vmatpush1.bf16.msra.mxu0 0
      %2392 = vmatprep.subr.bf16.mxu0 0
      %2393 = vmatpush1.bf16.msra.mxu0 0
      %2394 = vmatprep.subr.bf16.mxu0 0
      %2395 = vmatpush1.bf16.msra.mxu0 0
      %2396 = vmatprep.subr.bf16.mxu0 0
      %2397 = vmatpush1.bf16.msra.mxu0 0
      %2398 = vmatprep.subr.bf16.mxu0 0
      %2399 = vmatpush1.bf16.msra.mxu0 0
      %2400 = vmatprep.mubr.bf16.mxu0 0
      %2401 = vmatmul.mubr.bf16.gmra.mrb[0].mxu0 %v2351
      %v2402 = vpop.f32.mrb[0].mxu0
      %v2403 = vadd.f32 0.0, %v2402
      %v2404 = vpop.f32.mrb[0].mxu0
      %v2405 = vpop.f32.mrb[0].mxu0
      %v2406 = vadd.f32 0.0, %v2405
      %v2407 = vpop.f32.mrb[0].mxu0
      %2408 = vmatprep.mubr.bf16.mxu0 0
      %2409 = vmatmul.mubr.bf16.gmra.mrb[0].mxu0 %v2354
      %v2410 = vpop.f32.mrb[0].mxu0
      %v2411 = vadd.f32 0.0, %v2410
      %v2412 = vpop.f32.mrb[0].mxu0
      %v2413 = vpop.f32.mrb[0].mxu0
      %v2414 = vadd.f32 0.0, %v2413
      %v2415 = vpop.f32.mrb[0].mxu0
      %2416 = vmatprep.mubr.bf16.mxu0 0
      %2417 = vmatmul.mubr.bf16.gmra.mrb[0].mxu0 %v2357
      %v2418 = vpop.f32.mrb[0].mxu0
      %v2419 = vadd.f32 0.0, %v2418
      %v2420 = vpop.f32.mrb[0].mxu0
      %v2421 = vpop.f32.mrb[0].mxu0
      %v2422 = vadd.f32 0.0, %v2421
      %v2423 = vpop.f32.mrb[0].mxu0
      %2424 = vmatprep.mubr.bf16.mxu0 0
      %2425 = vmatmul.mubr.bf16.gmra.mrb[0].mxu0 %v2360
      %v2426 = vpop.f32.mrb[0].mxu0
      %v2427 = vadd.f32 0.0, %v2426
      %v2428 = vpop.f32.mrb[0].mxu0
      %v2429 = vpop.f32.mrb[0].mxu0
      %v2430 = vadd.f32 0.0, %v2429
      %v2431 = vpop.f32.mrb[0].mxu0
      %2432 = vmatprep.mubr.bf16.mxu0 0
      %2433 = vmatmul.mubr.bf16.gmra.mrb[0].mxu0 %v2363
      %v2434 = vpop.f32.mrb[0].mxu0
      %v2435 = vadd.f32 0.0, %v2434
      %v2436 = vpop.f32.mrb[0].mxu0
      %v2437 = vpop.f32.mrb[0].mxu0
      %v2438 = vadd.f32 0.0, %v2437
      %v2439 = vpop.f32.mrb[0].mxu0
      %2440 = vmatprep.mubr.bf16.mxu0 0
      %2441 = vmatmul.mubr.bf16.gmra.mrb[0].mxu0 %v2366
      %v2442 = vpop.f32.mrb[0].mxu0
      %v2443 = vadd.f32 0.0, %v2442
      %v2444 = vpop.f32.mrb[0].mxu0
      %v2445 = vpop.f32.mrb[0].mxu0
      %v2446 = vpop.f32.mrb[0].mxu0
      %2447 = vdwg.mxu0
      %v2448 = vadd.f32 %v2097, %v2403
      %v2449 = vadd.f32 %v2098, %v2406
      %v2450 = vadd.f32 %v2099, %v2411
      %v2451 = vadd.f32 %v2100, %v2414
      %v2452 = vadd.f32 %v2101, %v2419
      %v2453 = vadd.f32 %v2102, %v2422
      %v2454 = vadd.f32 %v2103, %v2427
      %v2455 = vadd.f32 %v2104, %v2430
      %v2456 = vadd.f32 %v2105, %v2435
      %v2457 = vadd.f32 %v2106, %v2438
      %v2458 = vadd.f32 %v2107, %v2443
      %s2459 = scalar_lea.vmem %s1, 224
      %v2460 = vld [vmem:[%s2459] sm:$0xf]
      %v2461 = vld [vmem:[%s2459 + $0x4] sm:$0xf]
      %v2462 = vld [vmem:[%s2459 + $0x8] sm:$0xf]
      %v2463 = vld [vmem:[%s2459 + $0xc] sm:$0xf]
      %v2464 = vld [vmem:[%s2459 + $0x10] sm:$0xf]
      %v2465 = vld [vmem:[%s2459 + $0x14] sm:$0xf]
      %v2466 = vld [vmem:[%s2459 + $0x18] sm:$0xf]
      %v2467 = vld [vmem:[%s2459 + $0x1c] sm:$0xf]
      %v2469 = vshrl.u32 %v2161, 16
      %v2471 = vrot.slane %v2469, 1
      %v2472 = vshll.u32 %v2161, 16
      %v2474 = vrot.slane %v2472, 2
      %v2475 = vor.u32 %v2471, %v2474
      %v2477 = vshrl.u32 %v2162, 16
      %v2479 = vrot.slane %v2477, 1
      %v2480 = vshll.u32 %v2162, 16
      %v2482 = vrot.slane %v2480, 2
      %v2483 = vor.u32 %v2479, %v2482
      %v2484 = vsel %vm1799, %v2475, %v2483
      %v2486 = vshrl.u32 %v2163, 16
      %v2488 = vrot.slane %v2486, 1
      %v2489 = vshll.u32 %v2163, 16
      %v2491 = vrot.slane %v2489, 2
      %v2492 = vor.u32 %v2488, %v2491
      %v2493 = vsel %vm1799, %v2483, %v2492
      %v2495 = vshrl.u32 %v2164, 16
      %v2497 = vrot.slane %v2495, 1
      %v2498 = vshll.u32 %v2164, 16
      %v2500 = vrot.slane %v2498, 2
      %v2501 = vor.u32 %v2497, %v2500
      %v2502 = vsel %vm1799, %v2492, %v2501
      %v2504 = vshrl.u32 %v2165, 16
      %v2506 = vrot.slane %v2504, 1
      %v2507 = vshll.u32 %v2165, 16
      %v2509 = vrot.slane %v2507, 2
      %v2510 = vor.u32 %v2506, %v2509
      %v2511 = vsel %vm1799, %v2501, %v2510
      %v2513 = vshrl.u32 %v2166, 16
      %v2515 = vrot.slane %v2513, 1
      %v2516 = vshll.u32 %v2166, 16
      %v2518 = vrot.slane %v2516, 2
      %v2519 = vor.u32 %v2515, %v2518
      %v2520 = vsel %vm1799, %v2510, %v2519
      %v2529 = vunpack.c.l.b16 %v2460
      %v2530 = vunpack.c.l.b16 %v2461
      %v2531 = vunpack.c.l.b16 %v2462
      %v2532 = vunpack.c.l.b16 %v2463
      %v2533 = vunpack.c.l.b16 %v2464
      %v2534 = vunpack.c.l.b16 %v2465
      %v2535 = vunpack.c.l.b16 %v2466
      %v2536 = vunpack.c.l.b16 %v2467
      %v2537 = vpack.c.b16 %v2530, %v2529
      %v2538 = vpack.c.b16 %v2532, %v2531
      %v2539 = vpack.c.b16 %v2534, %v2533
      %v2540 = vpack.c.b16 %v2536, %v2535
      %v2546 = vsel %vm311, %v2484, 0
      %v2549 = vsel %vm311, %v2493, 0
      %v2552 = vsel %vm311, %v2502, 0
      %v2555 = vsel %vm311, %v2511, 0
      %v2558 = vsel %vm311, %v2520, 0
      %v2561 = vsel %vm311, %v2515, 0
      %2563 = vmatprep.subr.bf16.mxu0 0
      %2564 = vmatpush1.bf16.msra.mxu0 %v2537
      %2565 = vmatprep.subr.bf16.mxu0 0
      %2566 = vmatpush1.bf16.msra.mxu0 %v2538
      %2567 = vmatprep.subr.bf16.mxu0 0
      %2568 = vmatpush1.bf16.msra.mxu0 %v2539
      %2569 = vmatprep.subr.bf16.mxu0 0
      %2570 = vmatpush1.bf16.msra.mxu0 %v2540
      %2571 = vmatprep.subr.bf16.mxu0 0
      %2572 = vmatpush1.bf16.msra.mxu0 0
      %2573 = vmatprep.subr.bf16.mxu0 0
      %2574 = vmatpush1.bf16.msra.mxu0 0
      %2575 = vmatprep.subr.bf16.mxu0 0
      %2576 = vmatpush1.bf16.msra.mxu0 0
      %2577 = vmatprep.subr.bf16.mxu0 0
      %2578 = vmatpush1.bf16.msra.mxu0 0
      %2579 = vmatprep.subr.bf16.mxu0 0
      %2580 = vmatpush1.bf16.msra.mxu0 0
      %2581 = vmatprep.subr.bf16.mxu0 0
      %2582 = vmatpush1.bf16.msra.mxu0 0
      %2583 = vmatprep.subr.bf16.mxu0 0
      %2584 = vmatpush1.bf16.msra.mxu0 0
      %2585 = vmatprep.subr.bf16.mxu0 0
      %2586 = vmatpush1.bf16.msra.mxu0 0
      %2587 = vmatprep.subr.bf16.mxu0 0
      %2588 = vmatpush1.bf16.msra.mxu0 0
      %2589 = vmatprep.subr.bf16.mxu0 0
      %2590 = vmatpush1.bf16.msra.mxu0 0
      %2591 = vmatprep.subr.bf16.mxu0 0
      %2592 = vmatpush1.bf16.msra.mxu0 0
      %2593 = vmatprep.subr.bf16.mxu0 0
      %2594 = vmatpush1.bf16.msra.mxu0 0
      %2595 = vmatprep.mubr.bf16.mxu0 0
      %2596 = vmatmul.mubr.bf16.gmra.mrb[0].mxu0 %v2546
      %v2597 = vpop.f32.mrb[0].mxu0
      %v2598 = vadd.f32 0.0, %v2597
      %v2599 = vpop.f32.mrb[0].mxu0
      %v2600 = vpop.f32.mrb[0].mxu0
      %v2601 = vadd.f32 0.0, %v2600
      %v2602 = vpop.f32.mrb[0].mxu0
      %2603 = vmatprep.mubr.bf16.mxu0 0
      %2604 = vmatmul.mubr.bf16.gmra.mrb[0].mxu0 %v2549
      %v2605 = vpop.f32.mrb[0].mxu0
      %v2606 = vadd.f32 0.0, %v2605
      %v2607 = vpop.f32.mrb[0].mxu0
      %v2608 = vpop.f32.mrb[0].mxu0
      %v2609 = vadd.f32 0.0, %v2608
      %v2610 = vpop.f32.mrb[0].mxu0
      %2611 = vmatprep.mubr.bf16.mxu0 0
      %2612 = vmatmul.mubr.bf16.gmra.mrb[0].mxu0 %v2552
      %v2613 = vpop.f32.mrb[0].mxu0
      %v2614 = vadd.f32 0.0, %v2613
      %v2615 = vpop.f32.mrb[0].mxu0
      %v2616 = vpop.f32.mrb[0].mxu0
      %v2617 = vadd.f32 0.0, %v2616
      %v2618 = vpop.f32.mrb[0].mxu0
      %2619 = vmatprep.mubr.bf16.mxu0 0
      %2620 = vmatmul.mubr.bf16.gmra.mrb[0].mxu0 %v2555
      %v2621 = vpop.f32.mrb[0].mxu0
      %v2622 = vadd.f32 0.0, %v2621
      %v2623 = vpop.f32.mrb[0].mxu0
      %v2624 = vpop.f32.mrb[0].mxu0
      %v2625 = vadd.f32 0.0, %v2624
      %v2626 = vpop.f32.mrb[0].mxu0
      %2627 = vmatprep.mubr.bf16.mxu0 0
      %2628 = vmatmul.mubr.bf16.gmra.mrb[0].mxu0 %v2558
      %v2629 = vpop.f32.mrb[0].mxu0
      %v2630 = vadd.f32 0.0, %v2629
      %v2631 = vpop.f32.mrb[0].mxu0
      %v2632 = vpop.f32.mrb[0].mxu0
      %v2633 = vadd.f32 0.0, %v2632
      %v2634 = vpop.f32.mrb[0].mxu0
      %2635 = vmatprep.mubr.bf16.mxu0 0
      %2636 = vmatmul.mubr.bf16.gmra.mrb[0].mxu0 %v2561
      %v2637 = vpop.f32.mrb[0].mxu0
      %v2638 = vadd.f32 0.0, %v2637
      %v2639 = vpop.f32.mrb[0].mxu0
      %v2640 = vpop.f32.mrb[0].mxu0
      %v2641 = vpop.f32.mrb[0].mxu0
      %2642 = vdwg.mxu0
      %v2643 = vadd.f32 %v2300, %v2598
      %v2644 = vadd.f32 %v2301, %v2601
      %v2645 = vadd.f32 %v2302, %v2606
      %v2646 = vadd.f32 %v2303, %v2609
      %v2647 = vadd.f32 %v2304, %v2614
      %v2648 = vadd.f32 %v2305, %v2617
      %v2649 = vadd.f32 %v2306, %v2622
      %v2650 = vadd.f32 %v2307, %v2625
      %v2651 = vadd.f32 %v2308, %v2630
      %v2652 = vadd.f32 %v2309, %v2633
      %v2653 = vadd.f32 %v2310, %v2638
      %v2655 = vshrl.u32 %v2333, 16
      %v2657 = vrot.slane %v2655, 1
      %v2658 = vshll.u32 %v2333, 16
      %v2660 = vrot.slane %v2658, 2
      %v2661 = vor.u32 %v2657, %v2660
      %v2663 = vshrl.u32 %v2334, 16
      %v2665 = vrot.slane %v2663, 1
      %v2666 = vshll.u32 %v2334, 16
      %v2668 = vrot.slane %v2666, 2
      %v2669 = vor.u32 %v2665, %v2668
      %v2670 = vsel %vm1799, %v2661, %v2669
      %v2672 = vshrl.u32 %v2335, 16
      %v2674 = vrot.slane %v2672, 1
      %v2675 = vshll.u32 %v2335, 16
      %v2677 = vrot.slane %v2675, 2
      %v2678 = vor.u32 %v2674, %v2677
      %v2679 = vsel %vm1799, %v2669, %v2678
      %v2681 = vshrl.u32 %v2336, 16
      %v2683 = vrot.slane %v2681, 1
      %v2684 = vshll.u32 %v2336, 16
      %v2686 = vrot.slane %v2684, 2
      %v2687 = vor.u32 %v2683, %v2686
      %v2688 = vsel %vm1799, %v2678, %v2687
      %v2690 = vshrl.u32 %v2337, 16
      %v2692 = vrot.slane %v2690, 1
      %v2693 = vshll.u32 %v2337, 16
      %v2695 = vrot.slane %v2693, 2
      %v2696 = vor.u32 %v2692, %v2695
      %v2697 = vsel %vm1799, %v2687, %v2696
      %v2699 = vshrl.u32 %v2338, 16
      %v2701 = vrot.slane %v2699, 1
      %v2702 = vshll.u32 %v2338, 16
      %v2704 = vrot.slane %v2702, 2
      %v2705 = vor.u32 %v2701, %v2704
      %v2706 = vsel %vm1799, %v2696, %v2705
      %v2708 = vsel %vm311, %v2670, 0
      %v2711 = vsel %vm311, %v2679, 0
      %v2714 = vsel %vm311, %v2688, 0
      %v2717 = vsel %vm311, %v2697, 0
      %v2720 = vsel %vm311, %v2706, 0
      %v2723 = vsel %vm311, %v2701, 0
      %2725 = vmatprep.subr.bf16.mxu0 0
      %2726 = vmatpush1.bf16.msra.mxu0 %v2537
      %2727 = vmatprep.subr.bf16.mxu0 0
      %2728 = vmatpush1.bf16.msra.mxu0 %v2538
      %2729 = vmatprep.subr.bf16.mxu0 0
      %2730 = vmatpush1.bf16.msra.mxu0 %v2539
      %2731 = vmatprep.subr.bf16.mxu0 0
      %2732 = vmatpush1.bf16.msra.mxu0 %v2540
      %2733 = vmatprep.subr.bf16.mxu0 0
      %2734 = vmatpush1.bf16.msra.mxu0 0
      %2735 = vmatprep.subr.bf16.mxu0 0
      %2736 = vmatpush1.bf16.msra.mxu0 0
      %2737 = vmatprep.subr.bf16.mxu0 0
      %2738 = vmatpush1.bf16.msra.mxu0 0
      %2739 = vmatprep.subr.bf16.mxu0 0
      %2740 = vmatpush1.bf16.msra.mxu0 0
      %2741 = vmatprep.subr.bf16.mxu0 0
      %2742 = vmatpush1.bf16.msra.mxu0 0
      %2743 = vmatprep.subr.bf16.mxu0 0
      %2744 = vmatpush1.bf16.msra.mxu0 0
      %2745 = vmatprep.subr.bf16.mxu0 0
      %2746 = vmatpush1.bf16.msra.mxu0 0
      %2747 = vmatprep.subr.bf16.mxu0 0
      %2748 = vmatpush1.bf16.msra.mxu0 0
      %2749 = vmatprep.subr.bf16.mxu0 0
      %2750 = vmatpush1.bf16.msra.mxu0 0
      %2751 = vmatprep.subr.bf16.mxu0 0
      %2752 = vmatpush1.bf16.msra.mxu0 0
      %2753 = vmatprep.subr.bf16.mxu0 0
      %2754 = vmatpush1.bf16.msra.mxu0 0
      %2755 = vmatprep.subr.bf16.mxu0 0
      %2756 = vmatpush1.bf16.msra.mxu0 0
      %2757 = vmatprep.mubr.bf16.mxu0 0
      %2758 = vmatmul.mubr.bf16.gmra.mrb[0].mxu0 %v2708
      %v2759 = vpop.f32.mrb[0].mxu0
      %v2760 = vadd.f32 0.0, %v2759
      %v2761 = vpop.f32.mrb[0].mxu0
      %v2762 = vpop.f32.mrb[0].mxu0
      %v2763 = vadd.f32 0.0, %v2762
      %v2764 = vpop.f32.mrb[0].mxu0
      %2765 = vmatprep.mubr.bf16.mxu0 0
      %2766 = vmatmul.mubr.bf16.gmra.mrb[0].mxu0 %v2711
      %v2767 = vpop.f32.mrb[0].mxu0
      %v2768 = vadd.f32 0.0, %v2767
      %v2769 = vpop.f32.mrb[0].mxu0
      %v2770 = vpop.f32.mrb[0].mxu0
      %v2771 = vadd.f32 0.0, %v2770
      %v2772 = vpop.f32.mrb[0].mxu0
      %2773 = vmatprep.mubr.bf16.mxu0 0
      %2774 = vmatmul.mubr.bf16.gmra.mrb[0].mxu0 %v2714
      %v2775 = vpop.f32.mrb[0].mxu0
      %v2776 = vadd.f32 0.0, %v2775
      %v2777 = vpop.f32.mrb[0].mxu0
      %v2778 = vpop.f32.mrb[0].mxu0
      %v2779 = vadd.f32 0.0, %v2778
      %v2780 = vpop.f32.mrb[0].mxu0
      %2781 = vmatprep.mubr.bf16.mxu0 0
      %2782 = vmatmul.mubr.bf16.gmra.mrb[0].mxu0 %v2717
      %v2783 = vpop.f32.mrb[0].mxu0
      %v2784 = vadd.f32 0.0, %v2783
      %v2785 = vpop.f32.mrb[0].mxu0
      %v2786 = vpop.f32.mrb[0].mxu0
      %v2787 = vadd.f32 0.0, %v2786
      %v2788 = vpop.f32.mrb[0].mxu0
      %2789 = vmatprep.mubr.bf16.mxu0 0
      %2790 = vmatmul.mubr.bf16.gmra.mrb[0].mxu0 %v2720
      %v2791 = vpop.f32.mrb[0].mxu0
      %v2792 = vadd.f32 0.0, %v2791
      %v2793 = vpop.f32.mrb[0].mxu0
      %v2794 = vpop.f32.mrb[0].mxu0
      %v2795 = vadd.f32 0.0, %v2794
      %v2796 = vpop.f32.mrb[0].mxu0
      %2797 = vmatprep.mubr.bf16.mxu0 0
      %2798 = vmatmul.mubr.bf16.gmra.mrb[0].mxu0 %v2723
      %v2799 = vpop.f32.mrb[0].mxu0
      %v2800 = vadd.f32 0.0, %v2799
      %v2801 = vpop.f32.mrb[0].mxu0
      %v2802 = vpop.f32.mrb[0].mxu0
      %v2803 = vpop.f32.mrb[0].mxu0
      %2804 = vdwg.mxu0
      %v2805 = vadd.f32 %v2448, %v2760
      %v2806 = vadd.f32 %v2449, %v2763
      %v2807 = vadd.f32 %v2450, %v2768
      %v2808 = vadd.f32 %v2451, %v2771
      %v2809 = vadd.f32 %v2452, %v2776
      %v2810 = vadd.f32 %v2453, %v2779
      %v2811 = vadd.f32 %v2454, %v2784
      %v2812 = vadd.f32 %v2455, %v2787
      %v2813 = vadd.f32 %v2456, %v2792
      %v2814 = vadd.f32 %v2457, %v2795
      %v2815 = vadd.f32 %v2458, %v2800
      %s2816 = scalar_lea.vmem %s1, 256
      %v2817 = vld [vmem:[%s2816] sm:$0xf]
      %v2818 = vld [vmem:[%s2816 + $0x4] sm:$0xf]
      %v2819 = vld [vmem:[%s2816 + $0x8] sm:$0xf]
      %v2820 = vld [vmem:[%s2816 + $0xc] sm:$0xf]
      %v2821 = vld [vmem:[%s2816 + $0x10] sm:$0xf]
      %v2822 = vld [vmem:[%s2816 + $0x14] sm:$0xf]
      %v2823 = vld [vmem:[%s2816 + $0x18] sm:$0xf]
      %v2824 = vld [vmem:[%s2816 + $0x1c] sm:$0xf]
      %v2825 = vld [vmem:[%s165 + $0x8] sm:$0xc]
      %v2826 = vld [vmem:[%s165 + $0x30] sm:$0x7]
      %v2827 = vld [vmem:[%s191 + $0x8] sm:$0xc]
      %v2828 = vld [vmem:[%s191 + $0x30] sm:$0x7]
      %v2831 = vunpack.c.l.b16 %v2825
      %v2832 = vunpack.c.l.b16 %v2826
      %v2833 = vpack.c.b16 %v2151, %v2831
      %v2834 = vpack.c.b16 %v2832, %v2832
      %vm2835 = vcmask 1045504
      %v2836 = vrot.slane %v2833, 2
      %v2837 = vrot.slane %v2162, 2
      %v2838 = vsel %vm2835, %v2836, %v2837
      %v2839 = vrot.slane %v2163, 2
      %v2840 = vsel %vm2835, %v2837, %v2839
      %v2841 = vrot.slane %v2164, 2
      %v2842 = vsel %vm2835, %v2839, %v2841
      %v2843 = vrot.slane %v2165, 2
      %v2844 = vsel %vm2835, %v2841, %v2843
      %v2845 = vrot.slane %v2834, 2
      %v2846 = vsel %vm2835, %v2843, %v2845
      %v2855 = vunpack.c.l.b16 %v2817
      %v2856 = vunpack.c.l.b16 %v2818
      %v2857 = vunpack.c.l.b16 %v2819
      %v2858 = vunpack.c.l.b16 %v2820
      %v2859 = vunpack.c.l.b16 %v2821
      %v2860 = vunpack.c.l.b16 %v2822
      %v2861 = vunpack.c.l.b16 %v2823
      %v2862 = vunpack.c.l.b16 %v2824
      %v2863 = vpack.c.b16 %v2856, %v2855
      %v2864 = vpack.c.b16 %v2858, %v2857
      %v2865 = vpack.c.b16 %v2860, %v2859
      %v2866 = vpack.c.b16 %v2862, %v2861
      %v2872 = vsel %vm311, %v2838, 0
      %v2875 = vsel %vm311, %v2840, 0
      %v2878 = vsel %vm311, %v2842, 0
      %v2881 = vsel %vm311, %v2844, 0
      %v2884 = vsel %vm311, %v2846, 0
      %v2887 = vsel %vm311, %v2845, 0
      %2889 = vmatprep.subr.bf16.mxu0 0
      %2890 = vmatpush1.bf16.msra.mxu0 %v2863
      %2891 = vmatprep.subr.bf16.mxu0 0
      %2892 = vmatpush1.bf16.msra.mxu0 %v2864
      %2893 = vmatprep.subr.bf16.mxu0 0
      %2894 = vmatpush1.bf16.msra.mxu0 %v2865
      %2895 = vmatprep.subr.bf16.mxu0 0
      %2896 = vmatpush1.bf16.msra.mxu0 %v2866
      %2897 = vmatprep.subr.bf16.mxu0 0
      %2898 = vmatpush1.bf16.msra.mxu0 0
      %2899 = vmatprep.subr.bf16.mxu0 0
      %2900 = vmatpush1.bf16.msra.mxu0 0
      %2901 = vmatprep.subr.bf16.mxu0 0
      %2902 = vmatpush1.bf16.msra.mxu0 0
      %2903 = vmatprep.subr.bf16.mxu0 0
      %2904 = vmatpush1.bf16.msra.mxu0 0
      %2905 = vmatprep.subr.bf16.mxu0 0
      %2906 = vmatpush1.bf16.msra.mxu0 0
      %2907 = vmatprep.subr.bf16.mxu0 0
      %2908 = vmatpush1.bf16.msra.mxu0 0
      %2909 = vmatprep.subr.bf16.mxu0 0
      %2910 = vmatpush1.bf16.msra.mxu0 0
      %2911 = vmatprep.subr.bf16.mxu0 0
      %2912 = vmatpush1.bf16.msra.mxu0 0
      %2913 = vmatprep.subr.bf16.mxu0 0
      %2914 = vmatpush1.bf16.msra.mxu0 0
      %2915 = vmatprep.subr.bf16.mxu0 0
      %2916 = vmatpush1.bf16.msra.mxu0 0
      %2917 = vmatprep.subr.bf16.mxu0 0
      %2918 = vmatpush1.bf16.msra.mxu0 0
      %2919 = vmatprep.subr.bf16.mxu0 0
      %2920 = vmatpush1.bf16.msra.mxu0 0
      %2921 = vmatprep.mubr.bf16.mxu0 0
      %2922 = vmatmul.mubr.bf16.gmra.mrb[0].mxu0 %v2872
      %v2923 = vpop.f32.mrb[0].mxu0
      %v2924 = vadd.f32 0.0, %v2923
      %v2925 = vpop.f32.mrb[0].mxu0
      %v2926 = vpop.f32.mrb[0].mxu0
      %v2927 = vadd.f32 0.0, %v2926
      %v2928 = vpop.f32.mrb[0].mxu0
      %2929 = vmatprep.mubr.bf16.mxu0 0
      %2930 = vmatmul.mubr.bf16.gmra.mrb[0].mxu0 %v2875
      %v2931 = vpop.f32.mrb[0].mxu0
      %v2932 = vadd.f32 0.0, %v2931
      %v2933 = vpop.f32.mrb[0].mxu0
      %v2934 = vpop.f32.mrb[0].mxu0
      %v2935 = vadd.f32 0.0, %v2934
      %v2936 = vpop.f32.mrb[0].mxu0
      %2937 = vmatprep.mubr.bf16.mxu0 0
      %2938 = vmatmul.mubr.bf16.gmra.mrb[0].mxu0 %v2878
      %v2939 = vpop.f32.mrb[0].mxu0
      %v2940 = vadd.f32 0.0, %v2939
      %v2941 = vpop.f32.mrb[0].mxu0
      %v2942 = vpop.f32.mrb[0].mxu0
      %v2943 = vadd.f32 0.0, %v2942
      %v2944 = vpop.f32.mrb[0].mxu0
      %2945 = vmatprep.mubr.bf16.mxu0 0
      %2946 = vmatmul.mubr.bf16.gmra.mrb[0].mxu0 %v2881
      %v2947 = vpop.f32.mrb[0].mxu0
      %v2948 = vadd.f32 0.0, %v2947
      %v2949 = vpop.f32.mrb[0].mxu0
      %v2950 = vpop.f32.mrb[0].mxu0
      %v2951 = vadd.f32 0.0, %v2950
      %v2952 = vpop.f32.mrb[0].mxu0
      %2953 = vmatprep.mubr.bf16.mxu0 0
      %2954 = vmatmul.mubr.bf16.gmra.mrb[0].mxu0 %v2884
      %v2955 = vpop.f32.mrb[0].mxu0
      %v2956 = vadd.f32 0.0, %v2955
      %v2957 = vpop.f32.mrb[0].mxu0
      %v2958 = vpop.f32.mrb[0].mxu0
      %v2959 = vadd.f32 0.0, %v2958
      %v2960 = vpop.f32.mrb[0].mxu0
      %2961 = vmatprep.mubr.bf16.mxu0 0
      %2962 = vmatmul.mubr.bf16.gmra.mrb[0].mxu0 %v2887
      %v2963 = vpop.f32.mrb[0].mxu0
      %v2964 = vadd.f32 0.0, %v2963
      %v2965 = vpop.f32.mrb[0].mxu0
      %v2966 = vpop.f32.mrb[0].mxu0
      %v2967 = vpop.f32.mrb[0].mxu0
      %2968 = vdwg.mxu0
      %v2969 = vadd.f32 %v2643, %v2924
      %v2970 = vadd.f32 %v2644, %v2927
      %v2971 = vadd.f32 %v2645, %v2932
      %v2972 = vadd.f32 %v2646, %v2935
      %v2973 = vadd.f32 %v2647, %v2940
      %v2974 = vadd.f32 %v2648, %v2943
      %v2975 = vadd.f32 %v2649, %v2948
      %v2976 = vadd.f32 %v2650, %v2951
      %v2977 = vadd.f32 %v2651, %v2956
      %v2978 = vadd.f32 %v2652, %v2959
      %v2979 = vadd.f32 %v2653, %v2964
      %v2982 = vunpack.c.l.b16 %v2827
      %v2983 = vunpack.c.l.b16 %v2828
      %v2984 = vpack.c.b16 %v2323, %v2982
      %v2985 = vpack.c.b16 %v2983, %v2983
      %v2986 = vrot.slane %v2984, 2
      %v2987 = vrot.slane %v2334, 2
      %v2988 = vsel %vm2835, %v2986, %v2987
      %v2989 = vrot.slane %v2335, 2
      %v2990 = vsel %vm2835, %v2987, %v2989
      %v2991 = vrot.slane %v2336, 2
      %v2992 = vsel %vm2835, %v2989, %v2991
      %v2993 = vrot.slane %v2337, 2
      %v2994 = vsel %vm2835, %v2991, %v2993
      %v2995 = vrot.slane %v2985, 2
      %v2996 = vsel %vm2835, %v2993, %v2995
      %v2998 = vsel %vm311, %v2988, 0
      %v3001 = vsel %vm311, %v2990, 0
      %v3004 = vsel %vm311, %v2992, 0
      %v3007 = vsel %vm311, %v2994, 0
      %v3010 = vsel %vm311, %v2996, 0
      %v3013 = vsel %vm311, %v2995, 0
      %3015 = vmatprep.subr.bf16.mxu0 0
      %3016 = vmatpush1.bf16.msra.mxu0 %v2863
      %3017 = vmatprep.subr.bf16.mxu0 0
      %3018 = vmatpush1.bf16.msra.mxu0 %v2864
      %3019 = vmatprep.subr.bf16.mxu0 0
      %3020 = vmatpush1.bf16.msra.mxu0 %v2865
      %3021 = vmatprep.subr.bf16.mxu0 0
      %3022 = vmatpush1.bf16.msra.mxu0 %v2866
      %3023 = vmatprep.subr.bf16.mxu0 0
      %3024 = vmatpush1.bf16.msra.mxu0 0
      %3025 = vmatprep.subr.bf16.mxu0 0
      %3026 = vmatpush1.bf16.msra.mxu0 0
      %3027 = vmatprep.subr.bf16.mxu0 0
      %3028 = vmatpush1.bf16.msra.mxu0 0
      %3029 = vmatprep.subr.bf16.mxu0 0
      %3030 = vmatpush1.bf16.msra.mxu0 0
      %3031 = vmatprep.subr.bf16.mxu0 0
      %3032 = vmatpush1.bf16.msra.mxu0 0
      %3033 = vmatprep.subr.bf16.mxu0 0
      %3034 = vmatpush1.bf16.msra.mxu0 0
      %3035 = vmatprep.subr.bf16.mxu0 0
      %3036 = vmatpush1.bf16.msra.mxu0 0
      %3037 = vmatprep.subr.bf16.mxu0 0
      %3038 = vmatpush1.bf16.msra.mxu0 0
      %3039 = vmatprep.subr.bf16.mxu0 0
      %3040 = vmatpush1.bf16.msra.mxu0 0
      %3041 = vmatprep.subr.bf16.mxu0 0
      %3042 = vmatpush1.bf16.msra.mxu0 0
      %3043 = vmatprep.subr.bf16.mxu0 0
      %3044 = vmatpush1.bf16.msra.mxu0 0
      %3045 = vmatprep.subr.bf16.mxu0 0
      %3046 = vmatpush1.bf16.msra.mxu0 0
      %3047 = vmatprep.mubr.bf16.mxu0 0
      %3048 = vmatmul.mubr.bf16.gmra.mrb[0].mxu0 %v2998
      %v3049 = vpop.f32.mrb[0].mxu0
      %v3050 = vadd.f32 0.0, %v3049
      %v3051 = vpop.f32.mrb[0].mxu0
      %v3052 = vpop.f32.mrb[0].mxu0
      %v3053 = vadd.f32 0.0, %v3052
      %v3054 = vpop.f32.mrb[0].mxu0
      %3055 = vmatprep.mubr.bf16.mxu0 0
      %3056 = vmatmul.mubr.bf16.gmra.mrb[0].mxu0 %v3001
      %v3057 = vpop.f32.mrb[0].mxu0
      %v3058 = vadd.f32 0.0, %v3057
      %v3059 = vpop.f32.mrb[0].mxu0
      %v3060 = vpop.f32.mrb[0].mxu0
      %v3061 = vadd.f32 0.0, %v3060
      %v3062 = vpop.f32.mrb[0].mxu0
      %3063 = vmatprep.mubr.bf16.mxu0 0
      %3064 = vmatmul.mubr.bf16.gmra.mrb[0].mxu0 %v3004
      %v3065 = vpop.f32.mrb[0].mxu0
      %v3066 = vadd.f32 0.0, %v3065
      %v3067 = vpop.f32.mrb[0].mxu0
      %v3068 = vpop.f32.mrb[0].mxu0
      %v3069 = vadd.f32 0.0, %v3068
      %v3070 = vpop.f32.mrb[0].mxu0
      %3071 = vmatprep.mubr.bf16.mxu0 0
      %3072 = vmatmul.mubr.bf16.gmra.mrb[0].mxu0 %v3007
      %v3073 = vpop.f32.mrb[0].mxu0
      %v3074 = vadd.f32 0.0, %v3073
      %v3075 = vpop.f32.mrb[0].mxu0
      %v3076 = vpop.f32.mrb[0].mxu0
      %v3077 = vadd.f32 0.0, %v3076
      %v3078 = vpop.f32.mrb[0].mxu0
      %3079 = vmatprep.mubr.bf16.mxu0 0
      %3080 = vmatmul.mubr.bf16.gmra.mrb[0].mxu0 %v3010
      %v3081 = vpop.f32.mrb[0].mxu0
      %v3082 = vadd.f32 0.0, %v3081
      %v3083 = vpop.f32.mrb[0].mxu0
      %v3084 = vpop.f32.mrb[0].mxu0
      %v3085 = vadd.f32 0.0, %v3084
      %v3086 = vpop.f32.mrb[0].mxu0
      %3087 = vmatprep.mubr.bf16.mxu0 0
      %3088 = vmatmul.mubr.bf16.gmra.mrb[0].mxu0 %v3013
      %v3089 = vpop.f32.mrb[0].mxu0
      %v3090 = vadd.f32 0.0, %v3089
      %v3091 = vpop.f32.mrb[0].mxu0
      %v3092 = vpop.f32.mrb[0].mxu0
      %v3093 = vpop.f32.mrb[0].mxu0
      %3094 = vdwg.mxu0
      %v3095 = vadd.f32 %v2805, %v3050
      %v3096 = vadd.f32 %v2806, %v3053
      %v3097 = vadd.f32 %v2807, %v3058
      %v3098 = vadd.f32 %v2808, %v3061
      %v3099 = vadd.f32 %v2809, %v3066
      %v3100 = vadd.f32 %v2810, %v3069
      %v3101 = vadd.f32 %v2811, %v3074
      %v3102 = vadd.f32 %v2812, %v3077
      %v3103 = vadd.f32 %v2813, %v3082
      %v3104 = vadd.f32 %v2814, %v3085
      %v3105 = vadd.f32 %v2815, %v3090
      %s3106 = scalar_lea.vmem %s1, 288
      %v3107 = vld [vmem:[%s3106] sm:$0xf]
      %v3108 = vld [vmem:[%s3106 + $0x4] sm:$0xf]
      %v3109 = vld [vmem:[%s3106 + $0x8] sm:$0xf]
      %v3110 = vld [vmem:[%s3106 + $0xc] sm:$0xf]
      %v3111 = vld [vmem:[%s3106 + $0x10] sm:$0xf]
      %v3112 = vld [vmem:[%s3106 + $0x14] sm:$0xf]
      %v3113 = vld [vmem:[%s3106 + $0x18] sm:$0xf]
      %v3114 = vld [vmem:[%s3106 + $0x1c] sm:$0xf]
      %s3115 = scalar_lea.vmem %s165, 104
      %v3116 = vld [vmem:[%s3115] sm:$0xf]
      %v3117 = vld [vmem:[%s3115 + $0x4] sm:$0xf]
      %v3118 = vld [vmem:[%s3115 + $0x8] sm:$0xf]
      %v3119 = vld [vmem:[%s3115 + $0xc] sm:$0xf]
      %v3120 = vld [vmem:[%s3115 + $0x10] sm:$0xf]
      %v3121 = vld [vmem:[%s3115 + $0x14] sm:$0xf]
      %v3122 = vld [vmem:[%s3115 + $0x18] sm:$0xf]
      %v3123 = vld [vmem:[%s3115 + $0x1c] sm:$0xf]
      %v3124 = vld [vmem:[%s3115 + $0x20] sm:$0xf]
      %v3125 = vld [vmem:[%s3115 + $0x24] sm:$0xf]
      %v3126 = vld [vmem:[%s3115 + $0x28] sm:$0x1]
      %v3135 = vunpack.c.l.b16 %v3107
      %v3136 = vunpack.c.l.b16 %v3108
      %v3137 = vunpack.c.l.b16 %v3109
      %v3138 = vunpack.c.l.b16 %v3110
      %v3139 = vunpack.c.l.b16 %v3111
      %v3140 = vunpack.c.l.b16 %v3112
      %v3141 = vunpack.c.l.b16 %v3113
      %v3142 = vunpack.c.l.b16 %v3114
      %v3143 = vpack.c.b16 %v3136, %v3135
      %v3144 = vpack.c.b16 %v3138, %v3137
      %v3145 = vpack.c.b16 %v3140, %v3139
      %v3146 = vpack.c.b16 %v3142, %v3141
      %3151 = vmatprep.subr.bf16.mxu0 0
      %3152 = vmatpush1.bf16.msra.mxu0 %v3143
      %3153 = vmatprep.subr.bf16.mxu0 0
      %3154 = vmatpush1.bf16.msra.mxu0 %v3144
      %3155 = vmatprep.subr.bf16.mxu0 0
      %3156 = vmatpush1.bf16.msra.mxu0 %v3145
      %3157 = vmatprep.subr.bf16.mxu0 0
      %3158 = vmatpush1.bf16.msra.mxu0 %v3146
      %3159 = vmatprep.subr.bf16.mxu0 0
      %3160 = vmatpush1.bf16.msra.mxu0 0
      %3161 = vmatprep.subr.bf16.mxu0 0
      %3162 = vmatpush1.bf16.msra.mxu0 0
      %3163 = vmatprep.subr.bf16.mxu0 0
      %3164 = vmatpush1.bf16.msra.mxu0 0
      %3165 = vmatprep.subr.bf16.mxu0 0
      %3166 = vmatpush1.bf16.msra.mxu0 0
      %3167 = vmatprep.subr.bf16.mxu0 0
      %3168 = vmatpush1.bf16.msra.mxu0 0
      %3169 = vmatprep.subr.bf16.mxu0 0
      %3170 = vmatpush1.bf16.msra.mxu0 0
      %3171 = vmatprep.subr.bf16.mxu0 0
      %3172 = vmatpush1.bf16.msra.mxu0 0
      %3173 = vmatprep.subr.bf16.mxu0 0
      %3174 = vmatpush1.bf16.msra.mxu0 0
      %3175 = vmatprep.subr.bf16.mxu0 0
      %3176 = vmatpush1.bf16.msra.mxu0 0
      %3177 = vmatprep.subr.bf16.mxu0 0
      %3178 = vmatpush1.bf16.msra.mxu0 0
      %3179 = vmatprep.subr.bf16.mxu0 0
      %3180 = vmatpush1.bf16.msra.mxu0 0
      %3181 = vmatprep.subr.bf16.mxu0 0
      %3182 = vmatpush1.bf16.msra.mxu0 0
      %3183 = vmatprep.mubr.bf16.mxu0 0
      %3184 = vmatmul.mubr.bf16.gmra.mrb[0].mxu0 %v698
      %v3185 = vpop.f32.mrb[0].mxu0
      %v3186 = vadd.f32 0.0, %v3185
      %v3187 = vpop.f32.mrb[0].mxu0
      %v3188 = vpop.f32.mrb[0].mxu0
      %v3189 = vadd.f32 0.0, %v3188
      %v3190 = vpop.f32.mrb[0].mxu0
      %3191 = vmatprep.mubr.bf16.mxu0 0
      %3192 = vmatmul.mubr.bf16.gmra.mrb[0].mxu0 %v700
      %v3193 = vpop.f32.mrb[0].mxu0
      %v3194 = vadd.f32 0.0, %v3193
      %v3195 = vpop.f32.mrb[0].mxu0
      %v3196 = vpop.f32.mrb[0].mxu0
      %v3197 = vadd.f32 0.0, %v3196
      %v3198 = vpop.f32.mrb[0].mxu0
      %3199 = vmatprep.mubr.bf16.mxu0 0
      %3200 = vmatmul.mubr.bf16.gmra.mrb[0].mxu0 %v702
      %v3201 = vpop.f32.mrb[0].mxu0
      %v3202 = vadd.f32 0.0, %v3201
      %v3203 = vpop.f32.mrb[0].mxu0
      %v3204 = vpop.f32.mrb[0].mxu0
      %v3205 = vadd.f32 0.0, %v3204
      %v3206 = vpop.f32.mrb[0].mxu0
      %3207 = vmatprep.mubr.bf16.mxu0 0
      %3208 = vmatmul.mubr.bf16.gmra.mrb[0].mxu0 %v704
      %v3209 = vpop.f32.mrb[0].mxu0
      %v3210 = vadd.f32 0.0, %v3209
      %v3211 = vpop.f32.mrb[0].mxu0
      %v3212 = vpop.f32.mrb[0].mxu0
      %v3213 = vadd.f32 0.0, %v3212
      %v3214 = vpop.f32.mrb[0].mxu0
      %3215 = vmatprep.mubr.bf16.mxu0 0
      %3216 = vmatmul.mubr.bf16.gmra.mrb[0].mxu0 %v706
      %v3217 = vpop.f32.mrb[0].mxu0
      %v3218 = vadd.f32 0.0, %v3217
      %v3219 = vpop.f32.mrb[0].mxu0
      %v3220 = vpop.f32.mrb[0].mxu0
      %v3221 = vadd.f32 0.0, %v3220
      %v3222 = vpop.f32.mrb[0].mxu0
      %3223 = vmatprep.mubr.bf16.mxu0 0
      %3224 = vmatmul.mubr.bf16.gmra.mrb[0].mxu0 %v708
      %v3225 = vpop.f32.mrb[0].mxu0
      %v3226 = vadd.f32 0.0, %v3225
      %v3227 = vpop.f32.mrb[0].mxu0
      %v3228 = vpop.f32.mrb[0].mxu0
      %v3229 = vpop.f32.mrb[0].mxu0
      %3230 = vdwg.mxu0
      %v3231 = vadd.f32 %v2969, %v3186
      %v3232 = vadd.f32 %v2970, %v3189
      %v3233 = vadd.f32 %v2971, %v3194
      %v3234 = vadd.f32 %v2972, %v3197
      %v3235 = vadd.f32 %v2973, %v3202
      %v3236 = vadd.f32 %v2974, %v3205
      %v3237 = vadd.f32 %v2975, %v3210
      %v3238 = vadd.f32 %v2976, %v3213
      %v3239 = vadd.f32 %v2977, %v3218
      %v3240 = vadd.f32 %v2978, %v3221
      %v3241 = vadd.f32 %v2979, %v3226
      %v3253 = vunpack.c.l.b16 %v3116
      %v3254 = vunpack.c.l.b16 %v3117
      %v3255 = vunpack.c.l.b16 %v3118
      %v3256 = vunpack.c.l.b16 %v3119
      %v3257 = vunpack.c.l.b16 %v3120
      %v3258 = vunpack.c.l.b16 %v3121
      %v3259 = vunpack.c.l.b16 %v3122
      %v3260 = vunpack.c.l.b16 %v3123
      %v3261 = vunpack.c.l.b16 %v3124
      %v3262 = vunpack.c.l.b16 %v3125
      %v3263 = vunpack.c.l.b16 %v3126
      %v3264 = vpack.c.b16 %v3254, %v3253
      %v3265 = vpack.c.b16 %v3256, %v3255
      %v3266 = vpack.c.b16 %v3258, %v3257
      %v3267 = vpack.c.b16 %v3260, %v3259
      %v3268 = vpack.c.b16 %v3262, %v3261
      %v3269 = vpack.c.b16 %v3263, %v3263
      %v3271 = vsel %vm311, %v3264, 0
      %v3274 = vsel %vm311, %v3265, 0
      %v3277 = vsel %vm311, %v3266, 0
      %v3280 = vsel %vm311, %v3267, 0
      %v3283 = vsel %vm311, %v3268, 0
      %v3286 = vsel %vm311, %v3269, 0
      %3288 = vmatprep.subr.bf16.mxu0 0
      %3289 = vmatpush1.bf16.msra.mxu0 %v3143
      %3290 = vmatprep.subr.bf16.mxu0 0
      %3291 = vmatpush1.bf16.msra.mxu0 %v3144
      %3292 = vmatprep.subr.bf16.mxu0 0
      %3293 = vmatpush1.bf16.msra.mxu0 %v3145
      %3294 = vmatprep.subr.bf16.mxu0 0
      %3295 = vmatpush1.bf16.msra.mxu0 %v3146
      %3296 = vmatprep.subr.bf16.mxu0 0
      %3297 = vmatpush1.bf16.msra.mxu0 0
      %3298 = vmatprep.subr.bf16.mxu0 0
      %3299 = vmatpush1.bf16.msra.mxu0 0
      %3300 = vmatprep.subr.bf16.mxu0 0
      %3301 = vmatpush1.bf16.msra.mxu0 0
      %3302 = vmatprep.subr.bf16.mxu0 0
      %3303 = vmatpush1.bf16.msra.mxu0 0
      %3304 = vmatprep.subr.bf16.mxu0 0
      %3305 = vmatpush1.bf16.msra.mxu0 0
      %3306 = vmatprep.subr.bf16.mxu0 0
      %3307 = vmatpush1.bf16.msra.mxu0 0
      %3308 = vmatprep.subr.bf16.mxu0 0
      %3309 = vmatpush1.bf16.msra.mxu0 0
      %3310 = vmatprep.subr.bf16.mxu0 0
      %3311 = vmatpush1.bf16.msra.mxu0 0
      %3312 = vmatprep.subr.bf16.mxu0 0
      %3313 = vmatpush1.bf16.msra.mxu0 0
      %3314 = vmatprep.subr.bf16.mxu0 0
      %3315 = vmatpush1.bf16.msra.mxu0 0
      %3316 = vmatprep.subr.bf16.mxu0 0
      %3317 = vmatpush1.bf16.msra.mxu0 0
      %3318 = vmatprep.subr.bf16.mxu0 0
      %3319 = vmatpush1.bf16.msra.mxu0 0
      %3320 = vmatprep.mubr.bf16.mxu0 0
      %3321 = vmatmul.mubr.bf16.gmra.mrb[0].mxu0 %v3271
      %v3322 = vpop.f32.mrb[0].mxu0
      %v3323 = vadd.f32 0.0, %v3322
      %v3324 = vpop.f32.mrb[0].mxu0
      %v3325 = vpop.f32.mrb[0].mxu0
      %v3326 = vadd.f32 0.0, %v3325
      %v3327 = vpop.f32.mrb[0].mxu0
      %3328 = vmatprep.mubr.bf16.mxu0 0
      %3329 = vmatmul.mubr.bf16.gmra.mrb[0].mxu0 %v3274
      %v3330 = vpop.f32.mrb[0].mxu0
      %v3331 = vadd.f32 0.0, %v3330
      %v3332 = vpop.f32.mrb[0].mxu0
      %v3333 = vpop.f32.mrb[0].mxu0
      %v3334 = vadd.f32 0.0, %v3333
      %v3335 = vpop.f32.mrb[0].mxu0
      %3336 = vmatprep.mubr.bf16.mxu0 0
      %3337 = vmatmul.mubr.bf16.gmra.mrb[0].mxu0 %v3277
      %v3338 = vpop.f32.mrb[0].mxu0
      %v3339 = vadd.f32 0.0, %v3338
      %v3340 = vpop.f32.mrb[0].mxu0
      %v3341 = vpop.f32.mrb[0].mxu0
      %v3342 = vadd.f32 0.0, %v3341
      %v3343 = vpop.f32.mrb[0].mxu0
      %3344 = vmatprep.mubr.bf16.mxu0 0
      %3345 = vmatmul.mubr.bf16.gmra.mrb[0].mxu0 %v3280
      %v3346 = vpop.f32.mrb[0].mxu0
      %v3347 = vadd.f32 0.0, %v3346
      %v3348 = vpop.f32.mrb[0].mxu0
      %v3349 = vpop.f32.mrb[0].mxu0
      %v3350 = vadd.f32 0.0, %v3349
      %v3351 = vpop.f32.mrb[0].mxu0
      %3352 = vmatprep.mubr.bf16.mxu0 0
      %3353 = vmatmul.mubr.bf16.gmra.mrb[0].mxu0 %v3283
      %v3354 = vpop.f32.mrb[0].mxu0
      %v3355 = vadd.f32 0.0, %v3354
      %v3356 = vpop.f32.mrb[0].mxu0
      %v3357 = vpop.f32.mrb[0].mxu0
      %v3358 = vadd.f32 0.0, %v3357
      %v3359 = vpop.f32.mrb[0].mxu0
      %3360 = vmatprep.mubr.bf16.mxu0 0
      %3361 = vmatmul.mubr.bf16.gmra.mrb[0].mxu0 %v3286
      %v3362 = vpop.f32.mrb[0].mxu0
      %v3363 = vadd.f32 0.0, %v3362
      %v3364 = vpop.f32.mrb[0].mxu0
      %v3365 = vpop.f32.mrb[0].mxu0
      %v3366 = vpop.f32.mrb[0].mxu0
      %3367 = vdwg.mxu0
      %v3368 = vadd.f32 %v3095, %v3323
      %v3369 = vadd.f32 %v3096, %v3326
      %v3370 = vadd.f32 %v3097, %v3331
      %v3371 = vadd.f32 %v3098, %v3334
      %v3372 = vadd.f32 %v3099, %v3339
      %v3373 = vadd.f32 %v3100, %v3342
      %v3374 = vadd.f32 %v3101, %v3347
      %v3375 = vadd.f32 %v3102, %v3350
      %v3376 = vadd.f32 %v3103, %v3355
      %v3377 = vadd.f32 %v3104, %v3358
      %v3378 = vadd.f32 %v3105, %v3363
      %s3379 = scalar_lea.vmem %s1, 320
      %v3380 = vld [vmem:[%s3379] sm:$0xf]
      %v3381 = vld [vmem:[%s3379 + $0x4] sm:$0xf]
      %v3382 = vld [vmem:[%s3379 + $0x8] sm:$0xf]
      %v3383 = vld [vmem:[%s3379 + $0xc] sm:$0xf]
      %v3384 = vld [vmem:[%s3379 + $0x10] sm:$0xf]
      %v3385 = vld [vmem:[%s3379 + $0x14] sm:$0xf]
      %v3386 = vld [vmem:[%s3379 + $0x18] sm:$0xf]
      %v3387 = vld [vmem:[%s3379 + $0x1c] sm:$0xf]
      %v3396 = vunpack.c.l.b16 %v3380
      %v3397 = vunpack.c.l.b16 %v3381
      %v3398 = vunpack.c.l.b16 %v3382
      %v3399 = vunpack.c.l.b16 %v3383
      %v3400 = vunpack.c.l.b16 %v3384
      %v3401 = vunpack.c.l.b16 %v3385
      %v3402 = vunpack.c.l.b16 %v3386
      %v3403 = vunpack.c.l.b16 %v3387
      %v3404 = vpack.c.b16 %v3397, %v3396
      %v3405 = vpack.c.b16 %v3399, %v3398
      %v3406 = vpack.c.b16 %v3401, %v3400
      %v3407 = vpack.c.b16 %v3403, %v3402
      %3412 = vmatprep.subr.bf16.mxu0 0
      %3413 = vmatpush1.bf16.msra.mxu0 %v3404
      %3414 = vmatprep.subr.bf16.mxu0 0
      %3415 = vmatpush1.bf16.msra.mxu0 %v3405
      %3416 = vmatprep.subr.bf16.mxu0 0
      %3417 = vmatpush1.bf16.msra.mxu0 %v3406
      %3418 = vmatprep.subr.bf16.mxu0 0
      %3419 = vmatpush1.bf16.msra.mxu0 %v3407
      %3420 = vmatprep.subr.bf16.mxu0 0
      %3421 = vmatpush1.bf16.msra.mxu0 0
      %3422 = vmatprep.subr.bf16.mxu0 0
      %3423 = vmatpush1.bf16.msra.mxu0 0
      %3424 = vmatprep.subr.bf16.mxu0 0
      %3425 = vmatpush1.bf16.msra.mxu0 0
      %3426 = vmatprep.subr.bf16.mxu0 0
      %3427 = vmatpush1.bf16.msra.mxu0 0
      %3428 = vmatprep.subr.bf16.mxu0 0
      %3429 = vmatpush1.bf16.msra.mxu0 0
      %3430 = vmatprep.subr.bf16.mxu0 0
      %3431 = vmatpush1.bf16.msra.mxu0 0
      %3432 = vmatprep.subr.bf16.mxu0 0
      %3433 = vmatpush1.bf16.msra.mxu0 0
      %3434 = vmatprep.subr.bf16.mxu0 0
      %3435 = vmatpush1.bf16.msra.mxu0 0
      %3436 = vmatprep.subr.bf16.mxu0 0
      %3437 = vmatpush1.bf16.msra.mxu0 0
      %3438 = vmatprep.subr.bf16.mxu0 0
      %3439 = vmatpush1.bf16.msra.mxu0 0
      %3440 = vmatprep.subr.bf16.mxu0 0
      %3441 = vmatpush1.bf16.msra.mxu0 0
      %3442 = vmatprep.subr.bf16.mxu0 0
      %3443 = vmatpush1.bf16.msra.mxu0 0
      %3444 = vmatprep.mubr.bf16.mxu0 0
      %3445 = vmatmul.mubr.bf16.gmra.mrb[0].mxu0 %v601
      %v3446 = vpop.f32.mrb[0].mxu0
      %v3447 = vadd.f32 0.0, %v3446
      %v3448 = vpop.f32.mrb[0].mxu0
      %v3449 = vpop.f32.mrb[0].mxu0
      %v3450 = vadd.f32 0.0, %v3449
      %v3451 = vpop.f32.mrb[0].mxu0
      %3452 = vmatprep.mubr.bf16.mxu0 0
      %3453 = vmatmul.mubr.bf16.gmra.mrb[0].mxu0 %v604
      %v3454 = vpop.f32.mrb[0].mxu0
      %v3455 = vadd.f32 0.0, %v3454
      %v3456 = vpop.f32.mrb[0].mxu0
      %v3457 = vpop.f32.mrb[0].mxu0
      %v3458 = vadd.f32 0.0, %v3457
      %v3459 = vpop.f32.mrb[0].mxu0
      %3460 = vmatprep.mubr.bf16.mxu0 0
      %3461 = vmatmul.mubr.bf16.gmra.mrb[0].mxu0 %v607
      %v3462 = vpop.f32.mrb[0].mxu0
      %v3463 = vadd.f32 0.0, %v3462
      %v3464 = vpop.f32.mrb[0].mxu0
      %v3465 = vpop.f32.mrb[0].mxu0
      %v3466 = vadd.f32 0.0, %v3465
      %v3467 = vpop.f32.mrb[0].mxu0
      %3468 = vmatprep.mubr.bf16.mxu0 0
      %3469 = vmatmul.mubr.bf16.gmra.mrb[0].mxu0 %v610
      %v3470 = vpop.f32.mrb[0].mxu0
      %v3471 = vadd.f32 0.0, %v3470
      %v3472 = vpop.f32.mrb[0].mxu0
      %v3473 = vpop.f32.mrb[0].mxu0
      %v3474 = vadd.f32 0.0, %v3473
      %v3475 = vpop.f32.mrb[0].mxu0
      %3476 = vmatprep.mubr.bf16.mxu0 0
      %3477 = vmatmul.mubr.bf16.gmra.mrb[0].mxu0 %v613
      %v3478 = vpop.f32.mrb[0].mxu0
      %v3479 = vadd.f32 0.0, %v3478
      %v3480 = vpop.f32.mrb[0].mxu0
      %v3481 = vpop.f32.mrb[0].mxu0
      %v3482 = vadd.f32 0.0, %v3481
      %v3483 = vpop.f32.mrb[0].mxu0
      %3484 = vmatprep.mubr.bf16.mxu0 0
      %3485 = vmatmul.mubr.bf16.gmra.mrb[0].mxu0 %v616
      %v3486 = vpop.f32.mrb[0].mxu0
      %v3487 = vadd.f32 0.0, %v3486
      %v3488 = vpop.f32.mrb[0].mxu0
      %v3489 = vpop.f32.mrb[0].mxu0
      %v3490 = vpop.f32.mrb[0].mxu0
      %3491 = vdwg.mxu0
      %v3492 = vadd.f32 %v3231, %v3447
      %v3493 = vadd.f32 %v3232, %v3450
      %v3494 = vadd.f32 %v3233, %v3455
      %v3495 = vadd.f32 %v3234, %v3458
      %v3496 = vadd.f32 %v3235, %v3463
      %v3497 = vadd.f32 %v3236, %v3466
      %v3498 = vadd.f32 %v3237, %v3471
      %v3499 = vadd.f32 %v3238, %v3474
      %v3500 = vadd.f32 %v3239, %v3479
      %v3501 = vadd.f32 %v3240, %v3482
      %v3502 = vadd.f32 %v3241, %v3487
      %v3503 = vshrl.u32 %v3264, 16
      %v3505 = vshll.u32 %v3264, 16
      %v3507 = vrot.slane %v3505, 1
      %v3508 = vor.u32 %v3503, %v3507
      %v3509 = vshll.u32 %v3265, 16
      %v3511 = vrot.slane %v3509, 1
      %v3512 = vsel %vm240, %v3508, %v3511
      %v3513 = vshrl.u32 %v3265, 16
      %v3515 = vor.u32 %v3513, %v3511
      %v3516 = vshll.u32 %v3266, 16
      %v3518 = vrot.slane %v3516, 1
      %v3519 = vsel %vm240, %v3515, %v3518
      %v3520 = vshrl.u32 %v3266, 16
      %v3522 = vor.u32 %v3520, %v3518
      %v3523 = vshll.u32 %v3267, 16
      %v3525 = vrot.slane %v3523, 1
      %v3526 = vsel %vm240, %v3522, %v3525
      %v3527 = vshrl.u32 %v3267, 16
      %v3529 = vor.u32 %v3527, %v3525
      %v3530 = vshll.u32 %v3268, 16
      %v3532 = vrot.slane %v3530, 1
      %v3533 = vsel %vm240, %v3529, %v3532
      %v3534 = vshrl.u32 %v3268, 16
      %v3536 = vor.u32 %v3534, %v3532
      %v3537 = vshll.u32 %v3269, 16
      %v3539 = vrot.slane %v3537, 1
      %v3540 = vsel %vm240, %v3536, %v3539
      %v3541 = vshrl.u32 %v3269, 16
      %v3544 = vsel %vm311, %v3512, 0
      %v3547 = vsel %vm311, %v3519, 0
      %v3550 = vsel %vm311, %v3526, 0
      %v3553 = vsel %vm311, %v3533, 0
      %v3556 = vsel %vm311, %v3540, 0
      %v3559 = vsel %vm311, %v3541, 0
      %3561 = vmatprep.subr.bf16.mxu0 0
      %3562 = vmatpush1.bf16.msra.mxu0 %v3404
      %3563 = vmatprep.subr.bf16.mxu0 0
      %3564 = vmatpush1.bf16.msra.mxu0 %v3405
      %3565 = vmatprep.subr.bf16.mxu0 0
      %3566 = vmatpush1.bf16.msra.mxu0 %v3406
      %3567 = vmatprep.subr.bf16.mxu0 0
      %3568 = vmatpush1.bf16.msra.mxu0 %v3407
      %3569 = vmatprep.subr.bf16.mxu0 0
      %3570 = vmatpush1.bf16.msra.mxu0 0
      %3571 = vmatprep.subr.bf16.mxu0 0
      %3572 = vmatpush1.bf16.msra.mxu0 0
      %3573 = vmatprep.subr.bf16.mxu0 0
      %3574 = vmatpush1.bf16.msra.mxu0 0
      %3575 = vmatprep.subr.bf16.mxu0 0
      %3576 = vmatpush1.bf16.msra.mxu0 0
      %3577 = vmatprep.subr.bf16.mxu0 0
      %3578 = vmatpush1.bf16.msra.mxu0 0
      %3579 = vmatprep.subr.bf16.mxu0 0
      %3580 = vmatpush1.bf16.msra.mxu0 0
      %3581 = vmatprep.subr.bf16.mxu0 0
      %3582 = vmatpush1.bf16.msra.mxu0 0
      %3583 = vmatprep.subr.bf16.mxu0 0
      %3584 = vmatpush1.bf16.msra.mxu0 0
      %3585 = vmatprep.subr.bf16.mxu0 0
      %3586 = vmatpush1.bf16.msra.mxu0 0
      %3587 = vmatprep.subr.bf16.mxu0 0
      %3588 = vmatpush1.bf16.msra.mxu0 0
      %3589 = vmatprep.subr.bf16.mxu0 0
      %3590 = vmatpush1.bf16.msra.mxu0 0
      %3591 = vmatprep.subr.bf16.mxu0 0
      %3592 = vmatpush1.bf16.msra.mxu0 0
      %3593 = vmatprep.mubr.bf16.mxu0 0
      %3594 = vmatmul.mubr.bf16.gmra.mrb[0].mxu0 %v3544
      %v3595 = vpop.f32.mrb[0].mxu0
      %v3596 = vadd.f32 0.0, %v3595
      %v3597 = vpop.f32.mrb[0].mxu0
      %v3598 = vpop.f32.mrb[0].mxu0
      %v3599 = vadd.f32 0.0, %v3598
      %v3600 = vpop.f32.mrb[0].mxu0
      %3601 = vmatprep.mubr.bf16.mxu0 0
      %3602 = vmatmul.mubr.bf16.gmra.mrb[0].mxu0 %v3547
      %v3603 = vpop.f32.mrb[0].mxu0
      %v3604 = vadd.f32 0.0, %v3603
      %v3605 = vpop.f32.mrb[0].mxu0
      %v3606 = vpop.f32.mrb[0].mxu0
      %v3607 = vadd.f32 0.0, %v3606
      %v3608 = vpop.f32.mrb[0].mxu0
      %3609 = vmatprep.mubr.bf16.mxu0 0
      %3610 = vmatmul.mubr.bf16.gmra.mrb[0].mxu0 %v3550
      %v3611 = vpop.f32.mrb[0].mxu0
      %v3612 = vadd.f32 0.0, %v3611
      %v3613 = vpop.f32.mrb[0].mxu0
      %v3614 = vpop.f32.mrb[0].mxu0
      %v3615 = vadd.f32 0.0, %v3614
      %v3616 = vpop.f32.mrb[0].mxu0
      %3617 = vmatprep.mubr.bf16.mxu0 0
      %3618 = vmatmul.mubr.bf16.gmra.mrb[0].mxu0 %v3553
      %v3619 = vpop.f32.mrb[0].mxu0
      %v3620 = vadd.f32 0.0, %v3619
      %v3621 = vpop.f32.mrb[0].mxu0
      %v3622 = vpop.f32.mrb[0].mxu0
      %v3623 = vadd.f32 0.0, %v3622
      %v3624 = vpop.f32.mrb[0].mxu0
      %3625 = vmatprep.mubr.bf16.mxu0 0
      %3626 = vmatmul.mubr.bf16.gmra.mrb[0].mxu0 %v3556
      %v3627 = vpop.f32.mrb[0].mxu0
      %v3628 = vadd.f32 0.0, %v3627
      %v3629 = vpop.f32.mrb[0].mxu0
      %v3630 = vpop.f32.mrb[0].mxu0
      %v3631 = vadd.f32 0.0, %v3630
      %v3632 = vpop.f32.mrb[0].mxu0
      %3633 = vmatprep.mubr.bf16.mxu0 0
      %3634 = vmatmul.mubr.bf16.gmra.mrb[0].mxu0 %v3559
      %v3635 = vpop.f32.mrb[0].mxu0
      %v3636 = vadd.f32 0.0, %v3635
      %v3637 = vpop.f32.mrb[0].mxu0
      %v3638 = vpop.f32.mrb[0].mxu0
      %v3639 = vpop.f32.mrb[0].mxu0
      %3640 = vdwg.mxu0
      %v3641 = vadd.f32 %v3368, %v3596
      %v3642 = vadd.f32 %v3369, %v3599
      %v3643 = vadd.f32 %v3370, %v3604
      %v3644 = vadd.f32 %v3371, %v3607
      %v3645 = vadd.f32 %v3372, %v3612
      %v3646 = vadd.f32 %v3373, %v3615
      %v3647 = vadd.f32 %v3374, %v3620
      %v3648 = vadd.f32 %v3375, %v3623
      %v3649 = vadd.f32 %v3376, %v3628
      %v3650 = vadd.f32 %v3377, %v3631
      %v3651 = vadd.f32 %v3378, %v3636
      %s3652 = scalar_lea.vmem %s1, 352
      %v3653 = vld [vmem:[%s3652] sm:$0xf]
      %v3654 = vld [vmem:[%s3652 + $0x4] sm:$0xf]
      %v3655 = vld [vmem:[%s3652 + $0x8] sm:$0xf]
      %v3656 = vld [vmem:[%s3652 + $0xc] sm:$0xf]
      %v3657 = vld [vmem:[%s3652 + $0x10] sm:$0xf]
      %v3658 = vld [vmem:[%s3652 + $0x14] sm:$0xf]
      %v3659 = vld [vmem:[%s3652 + $0x18] sm:$0xf]
      %v3660 = vld [vmem:[%s3652 + $0x1c] sm:$0xf]
      %v3661 = vld [vmem:[%s3115] sm:$0xe]
      %v3662 = vld [vmem:[%s3115 + $0x28] sm:$0x3]
      %v3671 = vunpack.c.l.b16 %v3653
      %v3672 = vunpack.c.l.b16 %v3654
      %v3673 = vunpack.c.l.b16 %v3655
      %v3674 = vunpack.c.l.b16 %v3656
      %v3675 = vunpack.c.l.b16 %v3657
      %v3676 = vunpack.c.l.b16 %v3658
      %v3677 = vunpack.c.l.b16 %v3659
      %v3678 = vunpack.c.l.b16 %v3660
      %v3679 = vpack.c.b16 %v3672, %v3671
      %v3680 = vpack.c.b16 %v3674, %v3673
      %v3681 = vpack.c.b16 %v3676, %v3675
      %v3682 = vpack.c.b16 %v3678, %v3677
      %3687 = vmatprep.subr.bf16.mxu0 0
      %3688 = vmatpush1.bf16.msra.mxu0 %v3679
      %3689 = vmatprep.subr.bf16.mxu0 0
      %3690 = vmatpush1.bf16.msra.mxu0 %v3680
      %3691 = vmatprep.subr.bf16.mxu0 0
      %3692 = vmatpush1.bf16.msra.mxu0 %v3681
      %3693 = vmatprep.subr.bf16.mxu0 0
      %3694 = vmatpush1.bf16.msra.mxu0 %v3682
      %3695 = vmatprep.subr.bf16.mxu0 0
      %3696 = vmatpush1.bf16.msra.mxu0 0
      %3697 = vmatprep.subr.bf16.mxu0 0
      %3698 = vmatpush1.bf16.msra.mxu0 0
      %3699 = vmatprep.subr.bf16.mxu0 0
      %3700 = vmatpush1.bf16.msra.mxu0 0
      %3701 = vmatprep.subr.bf16.mxu0 0
      %3702 = vmatpush1.bf16.msra.mxu0 0
      %3703 = vmatprep.subr.bf16.mxu0 0
      %3704 = vmatpush1.bf16.msra.mxu0 0
      %3705 = vmatprep.subr.bf16.mxu0 0
      %3706 = vmatpush1.bf16.msra.mxu0 0
      %3707 = vmatprep.subr.bf16.mxu0 0
      %3708 = vmatpush1.bf16.msra.mxu0 0
      %3709 = vmatprep.subr.bf16.mxu0 0
      %3710 = vmatpush1.bf16.msra.mxu0 0
      %3711 = vmatprep.subr.bf16.mxu0 0
      %3712 = vmatpush1.bf16.msra.mxu0 0
      %3713 = vmatprep.subr.bf16.mxu0 0
      %3714 = vmatpush1.bf16.msra.mxu0 0
      %3715 = vmatprep.subr.bf16.mxu0 0
      %3716 = vmatpush1.bf16.msra.mxu0 0
      %3717 = vmatprep.subr.bf16.mxu0 0
      %3718 = vmatpush1.bf16.msra.mxu0 0
      %3719 = vmatprep.mubr.bf16.mxu0 0
      %3720 = vmatmul.mubr.bf16.gmra.mrb[0].mxu0 %v972
      %v3721 = vpop.f32.mrb[0].mxu0
      %v3722 = vadd.f32 0.0, %v3721
      %v3723 = vpop.f32.mrb[0].mxu0
      %v3724 = vpop.f32.mrb[0].mxu0
      %v3725 = vadd.f32 0.0, %v3724
      %v3726 = vpop.f32.mrb[0].mxu0
      %3727 = vmatprep.mubr.bf16.mxu0 0
      %3728 = vmatmul.mubr.bf16.gmra.mrb[0].mxu0 %v975
      %v3729 = vpop.f32.mrb[0].mxu0
      %v3730 = vadd.f32 0.0, %v3729
      %v3731 = vpop.f32.mrb[0].mxu0
      %v3732 = vpop.f32.mrb[0].mxu0
      %v3733 = vadd.f32 0.0, %v3732
      %v3734 = vpop.f32.mrb[0].mxu0
      %3735 = vmatprep.mubr.bf16.mxu0 0
      %3736 = vmatmul.mubr.bf16.gmra.mrb[0].mxu0 %v978
      %v3737 = vpop.f32.mrb[0].mxu0
      %v3738 = vadd.f32 0.0, %v3737
      %v3739 = vpop.f32.mrb[0].mxu0
      %v3740 = vpop.f32.mrb[0].mxu0
      %v3741 = vadd.f32 0.0, %v3740
      %v3742 = vpop.f32.mrb[0].mxu0
      %3743 = vmatprep.mubr.bf16.mxu0 0
      %3744 = vmatmul.mubr.bf16.gmra.mrb[0].mxu0 %v981
      %v3745 = vpop.f32.mrb[0].mxu0
      %v3746 = vadd.f32 0.0, %v3745
      %v3747 = vpop.f32.mrb[0].mxu0
      %v3748 = vpop.f32.mrb[0].mxu0
      %v3749 = vadd.f32 0.0, %v3748
      %v3750 = vpop.f32.mrb[0].mxu0
      %3751 = vmatprep.mubr.bf16.mxu0 0
      %3752 = vmatmul.mubr.bf16.gmra.mrb[0].mxu0 %v984
      %v3753 = vpop.f32.mrb[0].mxu0
      %v3754 = vadd.f32 0.0, %v3753
      %v3755 = vpop.f32.mrb[0].mxu0
      %v3756 = vpop.f32.mrb[0].mxu0
      %v3757 = vadd.f32 0.0, %v3756
      %v3758 = vpop.f32.mrb[0].mxu0
      %3759 = vmatprep.mubr.bf16.mxu0 0
      %3760 = vmatmul.mubr.bf16.gmra.mrb[0].mxu0 %v987
      %v3761 = vpop.f32.mrb[0].mxu0
      %v3762 = vadd.f32 0.0, %v3761
      %v3763 = vpop.f32.mrb[0].mxu0
      %v3764 = vpop.f32.mrb[0].mxu0
      %v3765 = vpop.f32.mrb[0].mxu0
      %3766 = vdwg.mxu0
      %v3767 = vadd.f32 %v3492, %v3722
      %v3768 = vadd.f32 %v3493, %v3725
      %v3769 = vadd.f32 %v3494, %v3730
      %v3770 = vadd.f32 %v3495, %v3733
      %v3771 = vadd.f32 %v3496, %v3738
      %v3772 = vadd.f32 %v3497, %v3741
      %v3773 = vadd.f32 %v3498, %v3746
      %v3774 = vadd.f32 %v3499, %v3749
      %v3775 = vadd.f32 %v3500, %v3754
      %v3776 = vadd.f32 %v3501, %v3757
      %v3777 = vadd.f32 %v3502, %v3762
      %v3780 = vunpack.c.l.b16 %v3661
      %v3781 = vunpack.c.l.b16 %v3662
      %v3782 = vpack.c.b16 %v3254, %v3780
      %v3783 = vpack.c.b16 %v3781, %v3781
      %v3784 = vrot.slane %v3782, 1
      %v3785 = vrot.slane %v3265, 1
      %v3786 = vsel %vm809, %v3784, %v3785
      %v3787 = vrot.slane %v3266, 1
      %v3788 = vsel %vm809, %v3785, %v3787
      %v3789 = vrot.slane %v3267, 1
      %v3790 = vsel %vm809, %v3787, %v3789
      %v3791 = vrot.slane %v3268, 1
      %v3792 = vsel %vm809, %v3789, %v3791
      %v3793 = vrot.slane %v3783, 1
      %v3794 = vsel %vm809, %v3791, %v3793
      %v3796 = vsel %vm311, %v3786, 0
      %v3799 = vsel %vm311, %v3788, 0
      %v3802 = vsel %vm311, %v3790, 0
      %v3805 = vsel %vm311, %v3792, 0
      %v3808 = vsel %vm311, %v3794, 0
      %v3811 = vsel %vm311, %v3793, 0
      %3813 = vmatprep.subr.bf16.mxu0 0
      %3814 = vmatpush1.bf16.msra.mxu0 %v3679
      %3815 = vmatprep.subr.bf16.mxu0 0
      %3816 = vmatpush1.bf16.msra.mxu0 %v3680
      %3817 = vmatprep.subr.bf16.mxu0 0
      %3818 = vmatpush1.bf16.msra.mxu0 %v3681
      %3819 = vmatprep.subr.bf16.mxu0 0
      %3820 = vmatpush1.bf16.msra.mxu0 %v3682
      %3821 = vmatprep.subr.bf16.mxu0 0
      %3822 = vmatpush1.bf16.msra.mxu0 0
      %3823 = vmatprep.subr.bf16.mxu0 0
      %3824 = vmatpush1.bf16.msra.mxu0 0
      %3825 = vmatprep.subr.bf16.mxu0 0
      %3826 = vmatpush1.bf16.msra.mxu0 0
      %3827 = vmatprep.subr.bf16.mxu0 0
      %3828 = vmatpush1.bf16.msra.mxu0 0
      %3829 = vmatprep.subr.bf16.mxu0 0
      %3830 = vmatpush1.bf16.msra.mxu0 0
      %3831 = vmatprep.subr.bf16.mxu0 0
      %3832 = vmatpush1.bf16.msra.mxu0 0
      %3833 = vmatprep.subr.bf16.mxu0 0
      %3834 = vmatpush1.bf16.msra.mxu0 0
      %3835 = vmatprep.subr.bf16.mxu0 0
      %3836 = vmatpush1.bf16.msra.mxu0 0
      %3837 = vmatprep.subr.bf16.mxu0 0
      %3838 = vmatpush1.bf16.msra.mxu0 0
      %3839 = vmatprep.subr.bf16.mxu0 0
      %3840 = vmatpush1.bf16.msra.mxu0 0
      %3841 = vmatprep.subr.bf16.mxu0 0
      %3842 = vmatpush1.bf16.msra.mxu0 0
      %3843 = vmatprep.subr.bf16.mxu0 0
      %3844 = vmatpush1.bf16.msra.mxu0 0
      %3845 = vmatprep.mubr.bf16.mxu0 0
      %3846 = vmatmul.mubr.bf16.gmra.mrb[0].mxu0 %v3796
      %v3847 = vpop.f32.mrb[0].mxu0
      %v3848 = vadd.f32 0.0, %v3847
      %v3849 = vpop.f32.mrb[0].mxu0
      %v3850 = vpop.f32.mrb[0].mxu0
      %v3851 = vadd.f32 0.0, %v3850
      %v3852 = vpop.f32.mrb[0].mxu0
      %3853 = vmatprep.mubr.bf16.mxu0 0
      %3854 = vmatmul.mubr.bf16.gmra.mrb[0].mxu0 %v3799
      %v3855 = vpop.f32.mrb[0].mxu0
      %v3856 = vadd.f32 0.0, %v3855
      %v3857 = vpop.f32.mrb[0].mxu0
      %v3858 = vpop.f32.mrb[0].mxu0
      %v3859 = vadd.f32 0.0, %v3858
      %v3860 = vpop.f32.mrb[0].mxu0
      %3861 = vmatprep.mubr.bf16.mxu0 0
      %3862 = vmatmul.mubr.bf16.gmra.mrb[0].mxu0 %v3802
      %v3863 = vpop.f32.mrb[0].mxu0
      %v3864 = vadd.f32 0.0, %v3863
      %v3865 = vpop.f32.mrb[0].mxu0
      %v3866 = vpop.f32.mrb[0].mxu0
      %v3867 = vadd.f32 0.0, %v3866
      %v3868 = vpop.f32.mrb[0].mxu0
      %3869 = vmatprep.mubr.bf16.mxu0 0
      %3870 = vmatmul.mubr.bf16.gmra.mrb[0].mxu0 %v3805
      %v3871 = vpop.f32.mrb[0].mxu0
      %v3872 = vadd.f32 0.0, %v3871
      %v3873 = vpop.f32.mrb[0].mxu0
      %v3874 = vpop.f32.mrb[0].mxu0
      %v3875 = vadd.f32 0.0, %v3874
      %v3876 = vpop.f32.mrb[0].mxu0
      %3877 = vmatprep.mubr.bf16.mxu0 0
      %3878 = vmatmul.mubr.bf16.gmra.mrb[0].mxu0 %v3808
      %v3879 = vpop.f32.mrb[0].mxu0
      %v3880 = vadd.f32 0.0, %v3879
      %v3881 = vpop.f32.mrb[0].mxu0
      %v3882 = vpop.f32.mrb[0].mxu0
      %v3883 = vadd.f32 0.0, %v3882
      %v3884 = vpop.f32.mrb[0].mxu0
      %3885 = vmatprep.mubr.bf16.mxu0 0
      %3886 = vmatmul.mubr.bf16.gmra.mrb[0].mxu0 %v3811
      %v3887 = vpop.f32.mrb[0].mxu0
      %v3888 = vadd.f32 0.0, %v3887
      %v3889 = vpop.f32.mrb[0].mxu0
      %v3890 = vpop.f32.mrb[0].mxu0
      %v3891 = vpop.f32.mrb[0].mxu0
      %3892 = vdwg.mxu0
      %v3893 = vadd.f32 %v3641, %v3848
      %v3894 = vadd.f32 %v3642, %v3851
      %v3895 = vadd.f32 %v3643, %v3856
      %v3896 = vadd.f32 %v3644, %v3859
      %v3897 = vadd.f32 %v3645, %v3864
      %v3898 = vadd.f32 %v3646, %v3867
      %v3899 = vadd.f32 %v3647, %v3872
      %v3900 = vadd.f32 %v3648, %v3875
      %v3901 = vadd.f32 %v3649, %v3880
      %v3902 = vadd.f32 %v3650, %v3883
      %v3903 = vadd.f32 %v3651, %v3888
      %s3904 = scalar_lea.vmem %s1, 384
      %v3905 = vld [vmem:[%s3904] sm:$0xf]
      %v3906 = vld [vmem:[%s3904 + $0x4] sm:$0xf]
      %v3907 = vld [vmem:[%s3904 + $0x8] sm:$0xf]
      %v3908 = vld [vmem:[%s3904 + $0xc] sm:$0xf]
      %v3909 = vld [vmem:[%s3904 + $0x10] sm:$0xf]
      %v3910 = vld [vmem:[%s3904 + $0x14] sm:$0xf]
      %v3911 = vld [vmem:[%s3904 + $0x18] sm:$0xf]
      %v3912 = vld [vmem:[%s3904 + $0x1c] sm:$0xf]
      %v3913 = vld [vmem:[%s3115 + $0x4] sm:$0xf]
      %v3914 = vld [vmem:[%s3115 + $0x8] sm:$0xf]
      %v3915 = vld [vmem:[%s3115 + $0xc] sm:$0xf]
      %v3916 = vld [vmem:[%s3115 + $0x10] sm:$0xf]
      %v3917 = vld [vmem:[%s3115 + $0x14] sm:$0xf]
      %v3918 = vld [vmem:[%s3115 + $0x18] sm:$0xf]
      %v3919 = vld [vmem:[%s3115 + $0x1c] sm:$0xf]
      %v3920 = vld [vmem:[%s3115 + $0x20] sm:$0xf]
      %v3921 = vld [vmem:[%s3115 + $0x24] sm:$0xf]
      %v3922 = vld [vmem:[%s3115 + $0x28] sm:$0xf]
      %v3923 = vld [vmem:[%s3115 + $0x2c] sm:$0x1]
      %v3932 = vunpack.c.l.b16 %v3905
      %v3933 = vunpack.c.l.b16 %v3906
      %v3934 = vunpack.c.l.b16 %v3907
      %v3935 = vunpack.c.l.b16 %v3908
      %v3936 = vunpack.c.l.b16 %v3909
      %v3937 = vunpack.c.l.b16 %v3910
      %v3938 = vunpack.c.l.b16 %v3911
      %v3939 = vunpack.c.l.b16 %v3912
      %v3940 = vpack.c.b16 %v3933, %v3932
      %v3941 = vpack.c.b16 %v3935, %v3934
      %v3942 = vpack.c.b16 %v3937, %v3936
      %v3943 = vpack.c.b16 %v3939, %v3938
      %3948 = vmatprep.subr.bf16.mxu0 0
      %3949 = vmatpush1.bf16.msra.mxu0 %v3940
      %3950 = vmatprep.subr.bf16.mxu0 0
      %3951 = vmatpush1.bf16.msra.mxu0 %v3941
      %3952 = vmatprep.subr.bf16.mxu0 0
      %3953 = vmatpush1.bf16.msra.mxu0 %v3942
      %3954 = vmatprep.subr.bf16.mxu0 0
      %3955 = vmatpush1.bf16.msra.mxu0 %v3943
      %3956 = vmatprep.subr.bf16.mxu0 0
      %3957 = vmatpush1.bf16.msra.mxu0 0
      %3958 = vmatprep.subr.bf16.mxu0 0
      %3959 = vmatpush1.bf16.msra.mxu0 0
      %3960 = vmatprep.subr.bf16.mxu0 0
      %3961 = vmatpush1.bf16.msra.mxu0 0
      %3962 = vmatprep.subr.bf16.mxu0 0
      %3963 = vmatpush1.bf16.msra.mxu0 0
      %3964 = vmatprep.subr.bf16.mxu0 0
      %3965 = vmatpush1.bf16.msra.mxu0 0
      %3966 = vmatprep.subr.bf16.mxu0 0
      %3967 = vmatpush1.bf16.msra.mxu0 0
      %3968 = vmatprep.subr.bf16.mxu0 0
      %3969 = vmatpush1.bf16.msra.mxu0 0
      %3970 = vmatprep.subr.bf16.mxu0 0
      %3971 = vmatpush1.bf16.msra.mxu0 0
      %3972 = vmatprep.subr.bf16.mxu0 0
      %3973 = vmatpush1.bf16.msra.mxu0 0
      %3974 = vmatprep.subr.bf16.mxu0 0
      %3975 = vmatpush1.bf16.msra.mxu0 0
      %3976 = vmatprep.subr.bf16.mxu0 0
      %3977 = vmatpush1.bf16.msra.mxu0 0
      %3978 = vmatprep.subr.bf16.mxu0 0
      %3979 = vmatpush1.bf16.msra.mxu0 0
      %3980 = vmatprep.mubr.bf16.mxu0 0
      %3981 = vmatmul.mubr.bf16.gmra.mrb[0].mxu0 %v1393
      %v3982 = vpop.f32.mrb[0].mxu0
      %v3983 = vadd.f32 0.0, %v3982
      %v3984 = vpop.f32.mrb[0].mxu0
      %v3985 = vpop.f32.mrb[0].mxu0
      %v3986 = vadd.f32 0.0, %v3985
      %v3987 = vpop.f32.mrb[0].mxu0
      %3988 = vmatprep.mubr.bf16.mxu0 0
      %3989 = vmatmul.mubr.bf16.gmra.mrb[0].mxu0 %v1396
      %v3990 = vpop.f32.mrb[0].mxu0
      %v3991 = vadd.f32 0.0, %v3990
      %v3992 = vpop.f32.mrb[0].mxu0
      %v3993 = vpop.f32.mrb[0].mxu0
      %v3994 = vadd.f32 0.0, %v3993
      %v3995 = vpop.f32.mrb[0].mxu0
      %3996 = vmatprep.mubr.bf16.mxu0 0
      %3997 = vmatmul.mubr.bf16.gmra.mrb[0].mxu0 %v1399
      %v3998 = vpop.f32.mrb[0].mxu0
      %v3999 = vadd.f32 0.0, %v3998
      %v4000 = vpop.f32.mrb[0].mxu0
      %v4001 = vpop.f32.mrb[0].mxu0
      %v4002 = vadd.f32 0.0, %v4001
      %v4003 = vpop.f32.mrb[0].mxu0
      %4004 = vmatprep.mubr.bf16.mxu0 0
      %4005 = vmatmul.mubr.bf16.gmra.mrb[0].mxu0 %v1402
      %v4006 = vpop.f32.mrb[0].mxu0
      %v4007 = vadd.f32 0.0, %v4006
      %v4008 = vpop.f32.mrb[0].mxu0
      %v4009 = vpop.f32.mrb[0].mxu0
      %v4010 = vadd.f32 0.0, %v4009
      %v4011 = vpop.f32.mrb[0].mxu0
      %4012 = vmatprep.mubr.bf16.mxu0 0
      %4013 = vmatmul.mubr.bf16.gmra.mrb[0].mxu0 %v1405
      %v4014 = vpop.f32.mrb[0].mxu0
      %v4015 = vadd.f32 0.0, %v4014
      %v4016 = vpop.f32.mrb[0].mxu0
      %v4017 = vpop.f32.mrb[0].mxu0
      %v4018 = vadd.f32 0.0, %v4017
      %v4019 = vpop.f32.mrb[0].mxu0
      %4020 = vmatprep.mubr.bf16.mxu0 0
      %4021 = vmatmul.mubr.bf16.gmra.mrb[0].mxu0 %v1408
      %v4022 = vpop.f32.mrb[0].mxu0
      %v4023 = vadd.f32 0.0, %v4022
      %v4024 = vpop.f32.mrb[0].mxu0
      %v4025 = vpop.f32.mrb[0].mxu0
      %v4026 = vpop.f32.mrb[0].mxu0
      %4027 = vdwg.mxu0
      %v4028 = vadd.f32 %v3767, %v3983
      %v4029 = vadd.f32 %v3768, %v3986
      %v4030 = vadd.f32 %v3769, %v3991
      %v4031 = vadd.f32 %v3770, %v3994
      %v4032 = vadd.f32 %v3771, %v3999
      %v4033 = vadd.f32 %v3772, %v4002
      %v4034 = vadd.f32 %v3773, %v4007
      %v4035 = vadd.f32 %v3774, %v4010
      %v4036 = vadd.f32 %v3775, %v4015
      %v4037 = vadd.f32 %v3776, %v4018
      %v4038 = vadd.f32 %v3777, %v4023
      %v4050 = vunpack.c.l.b16 %v3913
      %v4051 = vunpack.c.l.b16 %v3914
      %v4052 = vunpack.c.l.b16 %v3915
      %v4053 = vunpack.c.l.b16 %v3916
      %v4054 = vunpack.c.l.b16 %v3917
      %v4055 = vunpack.c.l.b16 %v3918
      %v4056 = vunpack.c.l.b16 %v3919
      %v4057 = vunpack.c.l.b16 %v3920
      %v4058 = vunpack.c.l.b16 %v3921
      %v4059 = vunpack.c.l.b16 %v3922
      %v4060 = vunpack.c.l.b16 %v3923
      %v4061 = vpack.c.b16 %v4051, %v4050
      %v4062 = vpack.c.b16 %v4053, %v4052
      %v4063 = vpack.c.b16 %v4055, %v4054
      %v4064 = vpack.c.b16 %v4057, %v4056
      %v4065 = vpack.c.b16 %v4059, %v4058
      %v4066 = vpack.c.b16 %v4060, %v4060
      %v4068 = vshrl.u32 %v4061, 16
      %v4070 = vshll.u32 %v4061, 16
      %v4072 = vrot.slane %v4070, 1
      %v4073 = vor.u32 %v4068, %v4072
      %v4075 = vshll.u32 %v4062, 16
      %v4077 = vrot.slane %v4075, 1
      %v4078 = vsel %vm240, %v4073, %v4077
      %v4079 = vshrl.u32 %v4062, 16
      %v4081 = vor.u32 %v4079, %v4077
      %v4083 = vshll.u32 %v4063, 16
      %v4085 = vrot.slane %v4083, 1
      %v4086 = vsel %vm240, %v4081, %v4085
      %v4087 = vshrl.u32 %v4063, 16
      %v4089 = vor.u32 %v4087, %v4085
      %v4091 = vshll.u32 %v4064, 16
      %v4093 = vrot.slane %v4091, 1
      %v4094 = vsel %vm240, %v4089, %v4093
      %v4095 = vshrl.u32 %v4064, 16
      %v4097 = vor.u32 %v4095, %v4093
      %v4099 = vshll.u32 %v4065, 16
      %v4101 = vrot.slane %v4099, 1
      %v4102 = vsel %vm240, %v4097, %v4101
      %v4103 = vshrl.u32 %v4065, 16
      %v4105 = vor.u32 %v4103, %v4101
      %v4107 = vshll.u32 %v4066, 16
      %v4109 = vrot.slane %v4107, 1
      %v4110 = vsel %vm240, %v4105, %v4109
      %v4111 = vshrl.u32 %v4066, 16
      %v4114 = vsel %vm311, %v4078, 0
      %v4117 = vsel %vm311, %v4086, 0
      %v4120 = vsel %vm311, %v4094, 0
      %v4123 = vsel %vm311, %v4102, 0
      %v4126 = vsel %vm311, %v4110, 0
      %v4129 = vsel %vm311, %v4111, 0
      %4131 = vmatprep.subr.bf16.mxu0 0
      %4132 = vmatpush1.bf16.msra.mxu0 %v3940
      %4133 = vmatprep.subr.bf16.mxu0 0
      %4134 = vmatpush1.bf16.msra.mxu0 %v3941
      %4135 = vmatprep.subr.bf16.mxu0 0
      %4136 = vmatpush1.bf16.msra.mxu0 %v3942
      %4137 = vmatprep.subr.bf16.mxu0 0
      %4138 = vmatpush1.bf16.msra.mxu0 %v3943
      %4139 = vmatprep.subr.bf16.mxu0 0
      %4140 = vmatpush1.bf16.msra.mxu0 0
      %4141 = vmatprep.subr.bf16.mxu0 0
      %4142 = vmatpush1.bf16.msra.mxu0 0
      %4143 = vmatprep.subr.bf16.mxu0 0
      %4144 = vmatpush1.bf16.msra.mxu0 0
      %4145 = vmatprep.subr.bf16.mxu0 0
      %4146 = vmatpush1.bf16.msra.mxu0 0
      %4147 = vmatprep.subr.bf16.mxu0 0
      %4148 = vmatpush1.bf16.msra.mxu0 0
      %4149 = vmatprep.subr.bf16.mxu0 0
      %4150 = vmatpush1.bf16.msra.mxu0 0
      %4151 = vmatprep.subr.bf16.mxu0 0
      %4152 = vmatpush1.bf16.msra.mxu0 0
      %4153 = vmatprep.subr.bf16.mxu0 0
      %4154 = vmatpush1.bf16.msra.mxu0 0
      %4155 = vmatprep.subr.bf16.mxu0 0
      %4156 = vmatpush1.bf16.msra.mxu0 0
      %4157 = vmatprep.subr.bf16.mxu0 0
      %4158 = vmatpush1.bf16.msra.mxu0 0
      %4159 = vmatprep.subr.bf16.mxu0 0
      %4160 = vmatpush1.bf16.msra.mxu0 0
      %4161 = vmatprep.subr.bf16.mxu0 0
      %4162 = vmatpush1.bf16.msra.mxu0 0
      %4163 = vmatprep.mubr.bf16.mxu0 0
      %4164 = vmatmul.mubr.bf16.gmra.mrb[0].mxu0 %v4114
      %v4165 = vpop.f32.mrb[0].mxu0
      %v4166 = vadd.f32 0.0, %v4165
      %v4167 = vpop.f32.mrb[0].mxu0
      %v4168 = vpop.f32.mrb[0].mxu0
      %v4169 = vadd.f32 0.0, %v4168
      %v4170 = vpop.f32.mrb[0].mxu0
      %4171 = vmatprep.mubr.bf16.mxu0 0
      %4172 = vmatmul.mubr.bf16.gmra.mrb[0].mxu0 %v4117
      %v4173 = vpop.f32.mrb[0].mxu0
      %v4174 = vadd.f32 0.0, %v4173
      %v4175 = vpop.f32.mrb[0].mxu0
      %v4176 = vpop.f32.mrb[0].mxu0
      %v4177 = vadd.f32 0.0, %v4176
      %v4178 = vpop.f32.mrb[0].mxu0
      %4179 = vmatprep.mubr.bf16.mxu0 0
      %4180 = vmatmul.mubr.bf16.gmra.mrb[0].mxu0 %v4120
      %v4181 = vpop.f32.mrb[0].mxu0
      %v4182 = vadd.f32 0.0, %v4181
      %v4183 = vpop.f32.mrb[0].mxu0
      %v4184 = vpop.f32.mrb[0].mxu0
      %v4185 = vadd.f32 0.0, %v4184
      %v4186 = vpop.f32.mrb[0].mxu0
      %4187 = vmatprep.mubr.bf16.mxu0 0
      %4188 = vmatmul.mubr.bf16.gmra.mrb[0].mxu0 %v4123
      %v4189 = vpop.f32.mrb[0].mxu0
      %v4190 = vadd.f32 0.0, %v4189
      %v4191 = vpop.f32.mrb[0].mxu0
      %v4192 = vpop.f32.mrb[0].mxu0
      %v4193 = vadd.f32 0.0, %v4192
      %v4194 = vpop.f32.mrb[0].mxu0
      %4195 = vmatprep.mubr.bf16.mxu0 0
      %4196 = vmatmul.mubr.bf16.gmra.mrb[0].mxu0 %v4126
      %v4197 = vpop.f32.mrb[0].mxu0
      %v4198 = vadd.f32 0.0, %v4197
      %v4199 = vpop.f32.mrb[0].mxu0
      %v4200 = vpop.f32.mrb[0].mxu0
      %v4201 = vadd.f32 0.0, %v4200
      %v4202 = vpop.f32.mrb[0].mxu0
      %4203 = vmatprep.mubr.bf16.mxu0 0
      %4204 = vmatmul.mubr.bf16.gmra.mrb[0].mxu0 %v4129
      %v4205 = vpop.f32.mrb[0].mxu0
      %v4206 = vadd.f32 0.0, %v4205
      %v4207 = vpop.f32.mrb[0].mxu0
      %v4208 = vpop.f32.mrb[0].mxu0
      %v4209 = vpop.f32.mrb[0].mxu0
      %4210 = vdwg.mxu0
      %v4211 = vadd.f32 %v3893, %v4166
      %v4212 = vadd.f32 %v3894, %v4169
      %v4213 = vadd.f32 %v3895, %v4174
      %v4214 = vadd.f32 %v3896, %v4177
      %v4215 = vadd.f32 %v3897, %v4182
      %v4216 = vadd.f32 %v3898, %v4185
      %v4217 = vadd.f32 %v3899, %v4190
      %v4218 = vadd.f32 %v3900, %v4193
      %v4219 = vadd.f32 %v3901, %v4198
      %v4220 = vadd.f32 %v3902, %v4201
      %v4221 = vadd.f32 %v3903, %v4206
      %s4222 = scalar_lea.vmem %s1, 416
      %v4223 = vld [vmem:[%s4222] sm:$0xf]
      %v4224 = vld [vmem:[%s4222 + $0x4] sm:$0xf]
      %v4225 = vld [vmem:[%s4222 + $0x8] sm:$0xf]
      %v4226 = vld [vmem:[%s4222 + $0xc] sm:$0xf]
      %v4227 = vld [vmem:[%s4222 + $0x10] sm:$0xf]
      %v4228 = vld [vmem:[%s4222 + $0x14] sm:$0xf]
      %v4229 = vld [vmem:[%s4222 + $0x18] sm:$0xf]
      %v4230 = vld [vmem:[%s4222 + $0x1c] sm:$0xf]
      %v4231 = vld [vmem:[%s3115 + $0x4] sm:$0xe]
      %v4232 = vld [vmem:[%s3115 + $0x2c] sm:$0x3]
      %v4241 = vunpack.c.l.b16 %v4223
      %v4242 = vunpack.c.l.b16 %v4224
      %v4243 = vunpack.c.l.b16 %v4225
      %v4244 = vunpack.c.l.b16 %v4226
      %v4245 = vunpack.c.l.b16 %v4227
      %v4246 = vunpack.c.l.b16 %v4228
      %v4247 = vunpack.c.l.b16 %v4229
      %v4248 = vunpack.c.l.b16 %v4230
      %v4249 = vpack.c.b16 %v4242, %v4241
      %v4250 = vpack.c.b16 %v4244, %v4243
      %v4251 = vpack.c.b16 %v4246, %v4245
      %v4252 = vpack.c.b16 %v4248, %v4247
      %4257 = vmatprep.subr.bf16.mxu0 0
      %4258 = vmatpush1.bf16.msra.mxu0 %v4249
      %4259 = vmatprep.subr.bf16.mxu0 0
      %4260 = vmatpush1.bf16.msra.mxu0 %v4250
      %4261 = vmatprep.subr.bf16.mxu0 0
      %4262 = vmatpush1.bf16.msra.mxu0 %v4251
      %4263 = vmatprep.subr.bf16.mxu0 0
      %4264 = vmatpush1.bf16.msra.mxu0 %v4252
      %4265 = vmatprep.subr.bf16.mxu0 0
      %4266 = vmatpush1.bf16.msra.mxu0 0
      %4267 = vmatprep.subr.bf16.mxu0 0
      %4268 = vmatpush1.bf16.msra.mxu0 0
      %4269 = vmatprep.subr.bf16.mxu0 0
      %4270 = vmatpush1.bf16.msra.mxu0 0
      %4271 = vmatprep.subr.bf16.mxu0 0
      %4272 = vmatpush1.bf16.msra.mxu0 0
      %4273 = vmatprep.subr.bf16.mxu0 0
      %4274 = vmatpush1.bf16.msra.mxu0 0
      %4275 = vmatprep.subr.bf16.mxu0 0
      %4276 = vmatpush1.bf16.msra.mxu0 0
      %4277 = vmatprep.subr.bf16.mxu0 0
      %4278 = vmatpush1.bf16.msra.mxu0 0
      %4279 = vmatprep.subr.bf16.mxu0 0
      %4280 = vmatpush1.bf16.msra.mxu0 0
      %4281 = vmatprep.subr.bf16.mxu0 0
      %4282 = vmatpush1.bf16.msra.mxu0 0
      %4283 = vmatprep.subr.bf16.mxu0 0
      %4284 = vmatpush1.bf16.msra.mxu0 0
      %4285 = vmatprep.subr.bf16.mxu0 0
      %4286 = vmatpush1.bf16.msra.mxu0 0
      %4287 = vmatprep.subr.bf16.mxu0 0
      %4288 = vmatpush1.bf16.msra.mxu0 0
      %4289 = vmatprep.mubr.bf16.mxu0 0
      %4290 = vmatmul.mubr.bf16.gmra.mrb[0].mxu0 %v1682
      %v4291 = vpop.f32.mrb[0].mxu0
      %v4292 = vadd.f32 0.0, %v4291
      %v4293 = vpop.f32.mrb[0].mxu0
      %v4294 = vpop.f32.mrb[0].mxu0
      %v4295 = vadd.f32 0.0, %v4294
      %v4296 = vpop.f32.mrb[0].mxu0
      %4297 = vmatprep.mubr.bf16.mxu0 0
      %4298 = vmatmul.mubr.bf16.gmra.mrb[0].mxu0 %v1685
      %v4299 = vpop.f32.mrb[0].mxu0
      %v4300 = vadd.f32 0.0, %v4299
      %v4301 = vpop.f32.mrb[0].mxu0
      %v4302 = vpop.f32.mrb[0].mxu0
      %v4303 = vadd.f32 0.0, %v4302
      %v4304 = vpop.f32.mrb[0].mxu0
      %4305 = vmatprep.mubr.bf16.mxu0 0
      %4306 = vmatmul.mubr.bf16.gmra.mrb[0].mxu0 %v1688
      %v4307 = vpop.f32.mrb[0].mxu0
      %v4308 = vadd.f32 0.0, %v4307
      %v4309 = vpop.f32.mrb[0].mxu0
      %v4310 = vpop.f32.mrb[0].mxu0
      %v4311 = vadd.f32 0.0, %v4310
      %v4312 = vpop.f32.mrb[0].mxu0
      %4313 = vmatprep.mubr.bf16.mxu0 0
      %4314 = vmatmul.mubr.bf16.gmra.mrb[0].mxu0 %v1691
      %v4315 = vpop.f32.mrb[0].mxu0
      %v4316 = vadd.f32 0.0, %v4315
      %v4317 = vpop.f32.mrb[0].mxu0
      %v4318 = vpop.f32.mrb[0].mxu0
      %v4319 = vadd.f32 0.0, %v4318
      %v4320 = vpop.f32.mrb[0].mxu0
      %4321 = vmatprep.mubr.bf16.mxu0 0
      %4322 = vmatmul.mubr.bf16.gmra.mrb[0].mxu0 %v1694
      %v4323 = vpop.f32.mrb[0].mxu0
      %v4324 = vadd.f32 0.0, %v4323
      %v4325 = vpop.f32.mrb[0].mxu0
      %v4326 = vpop.f32.mrb[0].mxu0
      %v4327 = vadd.f32 0.0, %v4326
      %v4328 = vpop.f32.mrb[0].mxu0
      %4329 = vmatprep.mubr.bf16.mxu0 0
      %4330 = vmatmul.mubr.bf16.gmra.mrb[0].mxu0 %v1697
      %v4331 = vpop.f32.mrb[0].mxu0
      %v4332 = vadd.f32 0.0, %v4331
      %v4333 = vpop.f32.mrb[0].mxu0
      %v4334 = vpop.f32.mrb[0].mxu0
      %v4335 = vpop.f32.mrb[0].mxu0
      %4336 = vdwg.mxu0
      %v4337 = vadd.f32 %v4028, %v4292
      %v4338 = vadd.f32 %v4029, %v4295
      %v4339 = vadd.f32 %v4030, %v4300
      %v4340 = vadd.f32 %v4031, %v4303
      %v4341 = vadd.f32 %v4032, %v4308
      %v4342 = vadd.f32 %v4033, %v4311
      %v4343 = vadd.f32 %v4034, %v4316
      %v4344 = vadd.f32 %v4035, %v4319
      %v4345 = vadd.f32 %v4036, %v4324
      %v4346 = vadd.f32 %v4037, %v4327
      %v4347 = vadd.f32 %v4038, %v4332
      %v4350 = vunpack.c.l.b16 %v4231
      %v4351 = vunpack.c.l.b16 %v4232
      %v4352 = vpack.c.b16 %v4051, %v4350
      %v4353 = vpack.c.b16 %v4351, %v4351
      %v4354 = vrot.slane %v4352, 1
      %v4355 = vrot.slane %v4062, 1
      %v4356 = vsel %vm809, %v4354, %v4355
      %v4357 = vrot.slane %v4063, 1
      %v4358 = vsel %vm809, %v4355, %v4357
      %v4359 = vrot.slane %v4064, 1
      %v4360 = vsel %vm809, %v4357, %v4359
      %v4361 = vrot.slane %v4065, 1
      %v4362 = vsel %vm809, %v4359, %v4361
      %v4363 = vrot.slane %v4353, 1
      %v4364 = vsel %vm809, %v4361, %v4363
      %v4366 = vsel %vm311, %v4356, 0
      %v4369 = vsel %vm311, %v4358, 0
      %v4372 = vsel %vm311, %v4360, 0
      %v4375 = vsel %vm311, %v4362, 0
      %v4378 = vsel %vm311, %v4364, 0
      %v4381 = vsel %vm311, %v4363, 0
      %4383 = vmatprep.subr.bf16.mxu0 0
      %4384 = vmatpush1.bf16.msra.mxu0 %v4249
      %4385 = vmatprep.subr.bf16.mxu0 0
      %4386 = vmatpush1.bf16.msra.mxu0 %v4250
      %4387 = vmatprep.subr.bf16.mxu0 0
      %4388 = vmatpush1.bf16.msra.mxu0 %v4251
      %4389 = vmatprep.subr.bf16.mxu0 0
      %4390 = vmatpush1.bf16.msra.mxu0 %v4252
      %4391 = vmatprep.subr.bf16.mxu0 0
      %4392 = vmatpush1.bf16.msra.mxu0 0
      %4393 = vmatprep.subr.bf16.mxu0 0
      %4394 = vmatpush1.bf16.msra.mxu0 0
      %4395 = vmatprep.subr.bf16.mxu0 0
      %4396 = vmatpush1.bf16.msra.mxu0 0
      %4397 = vmatprep.subr.bf16.mxu0 0
      %4398 = vmatpush1.bf16.msra.mxu0 0
      %4399 = vmatprep.subr.bf16.mxu0 0
      %4400 = vmatpush1.bf16.msra.mxu0 0
      %4401 = vmatprep.subr.bf16.mxu0 0
      %4402 = vmatpush1.bf16.msra.mxu0 0
      %4403 = vmatprep.subr.bf16.mxu0 0
      %4404 = vmatpush1.bf16.msra.mxu0 0
      %4405 = vmatprep.subr.bf16.mxu0 0
      %4406 = vmatpush1.bf16.msra.mxu0 0
      %4407 = vmatprep.subr.bf16.mxu0 0
      %4408 = vmatpush1.bf16.msra.mxu0 0
      %4409 = vmatprep.subr.bf16.mxu0 0
      %4410 = vmatpush1.bf16.msra.mxu0 0
      %4411 = vmatprep.subr.bf16.mxu0 0
      %4412 = vmatpush1.bf16.msra.mxu0 0
      %4413 = vmatprep.subr.bf16.mxu0 0
      %4414 = vmatpush1.bf16.msra.mxu0 0
      %4415 = vmatprep.mubr.bf16.mxu0 0
      %4416 = vmatmul.mubr.bf16.gmra.mrb[0].mxu0 %v4366
      %v4417 = vpop.f32.mrb[0].mxu0
      %v4418 = vadd.f32 0.0, %v4417
      %v4419 = vpop.f32.mrb[0].mxu0
      %v4420 = vpop.f32.mrb[0].mxu0
      %v4421 = vadd.f32 0.0, %v4420
      %v4422 = vpop.f32.mrb[0].mxu0
      %4423 = vmatprep.mubr.bf16.mxu0 0
      %4424 = vmatmul.mubr.bf16.gmra.mrb[0].mxu0 %v4369
      %v4425 = vpop.f32.mrb[0].mxu0
      %v4426 = vadd.f32 0.0, %v4425
      %v4427 = vpop.f32.mrb[0].mxu0
      %v4428 = vpop.f32.mrb[0].mxu0
      %v4429 = vadd.f32 0.0, %v4428
      %v4430 = vpop.f32.mrb[0].mxu0
      %4431 = vmatprep.mubr.bf16.mxu0 0
      %4432 = vmatmul.mubr.bf16.gmra.mrb[0].mxu0 %v4372
      %v4433 = vpop.f32.mrb[0].mxu0
      %v4434 = vadd.f32 0.0, %v4433
      %v4435 = vpop.f32.mrb[0].mxu0
      %v4436 = vpop.f32.mrb[0].mxu0
      %v4437 = vadd.f32 0.0, %v4436
      %v4438 = vpop.f32.mrb[0].mxu0
      %4439 = vmatprep.mubr.bf16.mxu0 0
      %4440 = vmatmul.mubr.bf16.gmra.mrb[0].mxu0 %v4375
      %v4441 = vpop.f32.mrb[0].mxu0
      %v4442 = vadd.f32 0.0, %v4441
      %v4443 = vpop.f32.mrb[0].mxu0
      %v4444 = vpop.f32.mrb[0].mxu0
      %v4445 = vadd.f32 0.0, %v4444
      %v4446 = vpop.f32.mrb[0].mxu0
      %4447 = vmatprep.mubr.bf16.mxu0 0
      %4448 = vmatmul.mubr.bf16.gmra.mrb[0].mxu0 %v4378
      %v4449 = vpop.f32.mrb[0].mxu0
      %v4450 = vadd.f32 0.0, %v4449
      %v4451 = vpop.f32.mrb[0].mxu0
      %v4452 = vpop.f32.mrb[0].mxu0
      %v4453 = vadd.f32 0.0, %v4452
      %v4454 = vpop.f32.mrb[0].mxu0
      %4455 = vmatprep.mubr.bf16.mxu0 0
      %4456 = vmatmul.mubr.bf16.gmra.mrb[0].mxu0 %v4381
      %v4457 = vpop.f32.mrb[0].mxu0
      %v4458 = vadd.f32 0.0, %v4457
      %v4459 = vpop.f32.mrb[0].mxu0
      %v4460 = vpop.f32.mrb[0].mxu0
      %v4461 = vpop.f32.mrb[0].mxu0
      %4462 = vdwg.mxu0
      %v4463 = vadd.f32 %v4211, %v4418
      %v4464 = vadd.f32 %v4212, %v4421
      %v4465 = vadd.f32 %v4213, %v4426
      %v4466 = vadd.f32 %v4214, %v4429
      %v4467 = vadd.f32 %v4215, %v4434
      %v4468 = vadd.f32 %v4216, %v4437
      %v4469 = vadd.f32 %v4217, %v4442
      %v4470 = vadd.f32 %v4218, %v4445
      %v4471 = vadd.f32 %v4219, %v4450
      %v4472 = vadd.f32 %v4220, %v4453
      %v4473 = vadd.f32 %v4221, %v4458
      %s4474 = scalar_lea.vmem %s1, 448
      %v4475 = vld [vmem:[%s4474] sm:$0xf]
      %v4476 = vld [vmem:[%s4474 + $0x4] sm:$0xf]
      %v4477 = vld [vmem:[%s4474 + $0x8] sm:$0xf]
      %v4478 = vld [vmem:[%s4474 + $0xc] sm:$0xf]
      %v4479 = vld [vmem:[%s4474 + $0x10] sm:$0xf]
      %v4480 = vld [vmem:[%s4474 + $0x14] sm:$0xf]
      %v4481 = vld [vmem:[%s4474 + $0x18] sm:$0xf]
      %v4482 = vld [vmem:[%s4474 + $0x1c] sm:$0xf]
      %v4491 = vunpack.c.l.b16 %v4475
      %v4492 = vunpack.c.l.b16 %v4476
      %v4493 = vunpack.c.l.b16 %v4477
      %v4494 = vunpack.c.l.b16 %v4478
      %v4495 = vunpack.c.l.b16 %v4479
      %v4496 = vunpack.c.l.b16 %v4480
      %v4497 = vunpack.c.l.b16 %v4481
      %v4498 = vunpack.c.l.b16 %v4482
      %v4499 = vpack.c.b16 %v4492, %v4491
      %v4500 = vpack.c.b16 %v4494, %v4493
      %v4501 = vpack.c.b16 %v4496, %v4495
      %v4502 = vpack.c.b16 %v4498, %v4497
      %4507 = vmatprep.subr.bf16.mxu0 0
      %4508 = vmatpush1.bf16.msra.mxu0 %v4499
      %4509 = vmatprep.subr.bf16.mxu0 0
      %4510 = vmatpush1.bf16.msra.mxu0 %v4500
      %4511 = vmatprep.subr.bf16.mxu0 0
      %4512 = vmatpush1.bf16.msra.mxu0 %v4501
      %4513 = vmatprep.subr.bf16.mxu0 0
      %4514 = vmatpush1.bf16.msra.mxu0 %v4502
      %4515 = vmatprep.subr.bf16.mxu0 0
      %4516 = vmatpush1.bf16.msra.mxu0 0
      %4517 = vmatprep.subr.bf16.mxu0 0
      %4518 = vmatpush1.bf16.msra.mxu0 0
      %4519 = vmatprep.subr.bf16.mxu0 0
      %4520 = vmatpush1.bf16.msra.mxu0 0
      %4521 = vmatprep.subr.bf16.mxu0 0
      %4522 = vmatpush1.bf16.msra.mxu0 0
      %4523 = vmatprep.subr.bf16.mxu0 0
      %4524 = vmatpush1.bf16.msra.mxu0 0
      %4525 = vmatprep.subr.bf16.mxu0 0
      %4526 = vmatpush1.bf16.msra.mxu0 0
      %4527 = vmatprep.subr.bf16.mxu0 0
      %4528 = vmatpush1.bf16.msra.mxu0 0
      %4529 = vmatprep.subr.bf16.mxu0 0
      %4530 = vmatpush1.bf16.msra.mxu0 0
      %4531 = vmatprep.subr.bf16.mxu0 0
      %4532 = vmatpush1.bf16.msra.mxu0 0
      %4533 = vmatprep.subr.bf16.mxu0 0
      %4534 = vmatpush1.bf16.msra.mxu0 0
      %4535 = vmatprep.subr.bf16.mxu0 0
      %4536 = vmatpush1.bf16.msra.mxu0 0
      %4537 = vmatprep.subr.bf16.mxu0 0
      %4538 = vmatpush1.bf16.msra.mxu0 0
      %4539 = vmatprep.mubr.bf16.mxu0 0
      %4540 = vmatmul.mubr.bf16.gmra.mrb[0].mxu0 %v2000
      %v4541 = vpop.f32.mrb[0].mxu0
      %v4542 = vadd.f32 0.0, %v4541
      %v4543 = vpop.f32.mrb[0].mxu0
      %v4544 = vpop.f32.mrb[0].mxu0
      %v4545 = vadd.f32 0.0, %v4544
      %v4546 = vpop.f32.mrb[0].mxu0
      %4547 = vmatprep.mubr.bf16.mxu0 0
      %4548 = vmatmul.mubr.bf16.gmra.mrb[0].mxu0 %v2003
      %v4549 = vpop.f32.mrb[0].mxu0
      %v4550 = vadd.f32 0.0, %v4549
      %v4551 = vpop.f32.mrb[0].mxu0
      %v4552 = vpop.f32.mrb[0].mxu0
      %v4553 = vadd.f32 0.0, %v4552
      %v4554 = vpop.f32.mrb[0].mxu0
      %4555 = vmatprep.mubr.bf16.mxu0 0
      %4556 = vmatmul.mubr.bf16.gmra.mrb[0].mxu0 %v2006
      %v4557 = vpop.f32.mrb[0].mxu0
      %v4558 = vadd.f32 0.0, %v4557
      %v4559 = vpop.f32.mrb[0].mxu0
      %v4560 = vpop.f32.mrb[0].mxu0
      %v4561 = vadd.f32 0.0, %v4560
      %v4562 = vpop.f32.mrb[0].mxu0
      %4563 = vmatprep.mubr.bf16.mxu0 0
      %4564 = vmatmul.mubr.bf16.gmra.mrb[0].mxu0 %v2009
      %v4565 = vpop.f32.mrb[0].mxu0
      %v4566 = vadd.f32 0.0, %v4565
      %v4567 = vpop.f32.mrb[0].mxu0
      %v4568 = vpop.f32.mrb[0].mxu0
      %v4569 = vadd.f32 0.0, %v4568
      %v4570 = vpop.f32.mrb[0].mxu0
      %4571 = vmatprep.mubr.bf16.mxu0 0
      %4572 = vmatmul.mubr.bf16.gmra.mrb[0].mxu0 %v2012
      %v4573 = vpop.f32.mrb[0].mxu0
      %v4574 = vadd.f32 0.0, %v4573
      %v4575 = vpop.f32.mrb[0].mxu0
      %v4576 = vpop.f32.mrb[0].mxu0
      %v4577 = vadd.f32 0.0, %v4576
      %v4578 = vpop.f32.mrb[0].mxu0
      %4579 = vmatprep.mubr.bf16.mxu0 0
      %4580 = vmatmul.mubr.bf16.gmra.mrb[0].mxu0 %v2015
      %v4581 = vpop.f32.mrb[0].mxu0
      %v4582 = vadd.f32 0.0, %v4581
      %v4583 = vpop.f32.mrb[0].mxu0
      %v4584 = vpop.f32.mrb[0].mxu0
      %v4585 = vpop.f32.mrb[0].mxu0
      %4586 = vdwg.mxu0
      %v4587 = vadd.f32 %v4337, %v4542
      %v4588 = vadd.f32 %v4338, %v4545
      %v4589 = vadd.f32 %v4339, %v4550
      %v4590 = vadd.f32 %v4340, %v4553
      %v4591 = vadd.f32 %v4341, %v4558
      %v4592 = vadd.f32 %v4342, %v4561
      %v4593 = vadd.f32 %v4343, %v4566
      %v4594 = vadd.f32 %v4344, %v4569
      %v4595 = vadd.f32 %v4345, %v4574
      %v4596 = vadd.f32 %v4346, %v4577
      %v4597 = vadd.f32 %v4347, %v4582
      %v4599 = vshrl.u32 %v4352, 16
      %v4601 = vrot.slane %v4599, 1
      %v4602 = vshll.u32 %v4352, 16
      %v4604 = vrot.slane %v4602, 2
      %v4605 = vor.u32 %v4601, %v4604
      %v4606 = vrot.slane %v4079, 1
      %v4607 = vrot.slane %v4075, 2
      %v4608 = vor.u32 %v4606, %v4607
      %v4609 = vsel %vm1799, %v4605, %v4608
      %v4610 = vrot.slane %v4087, 1
      %v4611 = vrot.slane %v4083, 2
      %v4612 = vor.u32 %v4610, %v4611
      %v4613 = vsel %vm1799, %v4608, %v4612
      %v4614 = vrot.slane %v4095, 1
      %v4615 = vrot.slane %v4091, 2
      %v4616 = vor.u32 %v4614, %v4615
      %v4617 = vsel %vm1799, %v4612, %v4616
      %v4618 = vrot.slane %v4103, 1
      %v4619 = vrot.slane %v4099, 2
      %v4620 = vor.u32 %v4618, %v4619
      %v4621 = vsel %vm1799, %v4616, %v4620
      %v4623 = vshrl.u32 %v4353, 16
      %v4625 = vrot.slane %v4623, 1
      %v4626 = vshll.u32 %v4353, 16
      %v4628 = vrot.slane %v4626, 2
      %v4629 = vor.u32 %v4625, %v4628
      %v4630 = vsel %vm1799, %v4620, %v4629
      %v4632 = vsel %vm311, %v4609, 0
      %v4635 = vsel %vm311, %v4613, 0
      %v4638 = vsel %vm311, %v4617, 0
      %v4641 = vsel %vm311, %v4621, 0
      %v4644 = vsel %vm311, %v4630, 0
      %v4647 = vsel %vm311, %v4625, 0
      %4649 = vmatprep.subr.bf16.mxu0 0
      %4650 = vmatpush1.bf16.msra.mxu0 %v4499
      %4651 = vmatprep.subr.bf16.mxu0 0
      %4652 = vmatpush1.bf16.msra.mxu0 %v4500
      %4653 = vmatprep.subr.bf16.mxu0 0
      %4654 = vmatpush1.bf16.msra.mxu0 %v4501
      %4655 = vmatprep.subr.bf16.mxu0 0
      %4656 = vmatpush1.bf16.msra.mxu0 %v4502
      %4657 = vmatprep.subr.bf16.mxu0 0
      %4658 = vmatpush1.bf16.msra.mxu0 0
      %4659 = vmatprep.subr.bf16.mxu0 0
      %4660 = vmatpush1.bf16.msra.mxu0 0
      %4661 = vmatprep.subr.bf16.mxu0 0
      %4662 = vmatpush1.bf16.msra.mxu0 0
      %4663 = vmatprep.subr.bf16.mxu0 0
      %4664 = vmatpush1.bf16.msra.mxu0 0
      %4665 = vmatprep.subr.bf16.mxu0 0
      %4666 = vmatpush1.bf16.msra.mxu0 0
      %4667 = vmatprep.subr.bf16.mxu0 0
      %4668 = vmatpush1.bf16.msra.mxu0 0
      %4669 = vmatprep.subr.bf16.mxu0 0
      %4670 = vmatpush1.bf16.msra.mxu0 0
      %4671 = vmatprep.subr.bf16.mxu0 0
      %4672 = vmatpush1.bf16.msra.mxu0 0
      %4673 = vmatprep.subr.bf16.mxu0 0
      %4674 = vmatpush1.bf16.msra.mxu0 0
      %4675 = vmatprep.subr.bf16.mxu0 0
      %4676 = vmatpush1.bf16.msra.mxu0 0
      %4677 = vmatprep.subr.bf16.mxu0 0
      %4678 = vmatpush1.bf16.msra.mxu0 0
      %4679 = vmatprep.subr.bf16.mxu0 0
      %4680 = vmatpush1.bf16.msra.mxu0 0
      %4681 = vmatprep.mubr.bf16.mxu0 0
      %4682 = vmatmul.mubr.bf16.gmra.mrb[0].mxu0 %v4632
      %v4683 = vpop.f32.mrb[0].mxu0
      %v4684 = vadd.f32 0.0, %v4683
      %v4685 = vpop.f32.mrb[0].mxu0
      %v4686 = vpop.f32.mrb[0].mxu0
      %v4687 = vadd.f32 0.0, %v4686
      %v4688 = vpop.f32.mrb[0].mxu0
      %4689 = vmatprep.mubr.bf16.mxu0 0
      %4690 = vmatmul.mubr.bf16.gmra.mrb[0].mxu0 %v4635
      %v4691 = vpop.f32.mrb[0].mxu0
      %v4692 = vadd.f32 0.0, %v4691
      %v4693 = vpop.f32.mrb[0].mxu0
      %v4694 = vpop.f32.mrb[0].mxu0
      %v4695 = vadd.f32 0.0, %v4694
      %v4696 = vpop.f32.mrb[0].mxu0
      %4697 = vmatprep.mubr.bf16.mxu0 0
      %4698 = vmatmul.mubr.bf16.gmra.mrb[0].mxu0 %v4638
      %v4699 = vpop.f32.mrb[0].mxu0
      %v4700 = vadd.f32 0.0, %v4699
      %v4701 = vpop.f32.mrb[0].mxu0
      %v4702 = vpop.f32.mrb[0].mxu0
      %v4703 = vadd.f32 0.0, %v4702
      %v4704 = vpop.f32.mrb[0].mxu0
      %4705 = vmatprep.mubr.bf16.mxu0 0
      %4706 = vmatmul.mubr.bf16.gmra.mrb[0].mxu0 %v4641
      %v4707 = vpop.f32.mrb[0].mxu0
      %v4708 = vadd.f32 0.0, %v4707
      %v4709 = vpop.f32.mrb[0].mxu0
      %v4710 = vpop.f32.mrb[0].mxu0
      %v4711 = vadd.f32 0.0, %v4710
      %v4712 = vpop.f32.mrb[0].mxu0
      %4713 = vmatprep.mubr.bf16.mxu0 0
      %4714 = vmatmul.mubr.bf16.gmra.mrb[0].mxu0 %v4644
      %v4715 = vpop.f32.mrb[0].mxu0
      %v4716 = vadd.f32 0.0, %v4715
      %v4717 = vpop.f32.mrb[0].mxu0
      %v4718 = vpop.f32.mrb[0].mxu0
      %v4719 = vadd.f32 0.0, %v4718
      %v4720 = vpop.f32.mrb[0].mxu0
      %4721 = vmatprep.mubr.bf16.mxu0 0
      %4722 = vmatmul.mubr.bf16.gmra.mrb[0].mxu0 %v4647
      %v4723 = vpop.f32.mrb[0].mxu0
      %v4724 = vadd.f32 0.0, %v4723
      %v4725 = vpop.f32.mrb[0].mxu0
      %v4726 = vpop.f32.mrb[0].mxu0
      %v4727 = vpop.f32.mrb[0].mxu0
      %4728 = vdwg.mxu0
      %v4729 = vadd.f32 %v4463, %v4684
      %v4730 = vadd.f32 %v4464, %v4687
      %v4731 = vadd.f32 %v4465, %v4692
      %v4732 = vadd.f32 %v4466, %v4695
      %v4733 = vadd.f32 %v4467, %v4700
      %v4734 = vadd.f32 %v4468, %v4703
      %v4735 = vadd.f32 %v4469, %v4708
      %v4736 = vadd.f32 %v4470, %v4711
      %v4737 = vadd.f32 %v4471, %v4716
      %v4738 = vadd.f32 %v4472, %v4719
      %v4739 = vadd.f32 %v4473, %v4724
      %s4740 = scalar_lea.vmem %s1, 480
      %v4741 = vld [vmem:[%s4740] sm:$0xf]
      %v4742 = vld [vmem:[%s4740 + $0x4] sm:$0xf]
      %v4743 = vld [vmem:[%s4740 + $0x8] sm:$0xf]
      %v4744 = vld [vmem:[%s4740 + $0xc] sm:$0xf]
      %v4745 = vld [vmem:[%s4740 + $0x10] sm:$0xf]
      %v4746 = vld [vmem:[%s4740 + $0x14] sm:$0xf]
      %v4747 = vld [vmem:[%s4740 + $0x18] sm:$0xf]
      %v4748 = vld [vmem:[%s4740 + $0x1c] sm:$0xf]
      %v4749 = vld [vmem:[%s3115 + $0x8] sm:$0xe]
      %v4750 = vld [vmem:[%s3115 + $0xc] sm:$0xf]
      %v4751 = vld [vmem:[%s3115 + $0x10] sm:$0xf]
      %v4752 = vld [vmem:[%s3115 + $0x14] sm:$0xf]
      %v4753 = vld [vmem:[%s3115 + $0x18] sm:$0xf]
      %v4754 = vld [vmem:[%s3115 + $0x1c] sm:$0xf]
      %v4755 = vld [vmem:[%s3115 + $0x20] sm:$0xf]
      %v4756 = vld [vmem:[%s3115 + $0x24] sm:$0xf]
      %v4757 = vld [vmem:[%s3115 + $0x28] sm:$0xf]
      %v4758 = vld [vmem:[%s3115 + $0x2c] sm:$0xf]
      %v4759 = vld [vmem:[%s3115 + $0x30] sm:$0x3]
      %v4768 = vunpack.c.l.b16 %v4741
      %v4769 = vunpack.c.l.b16 %v4742
      %v4770 = vunpack.c.l.b16 %v4743
      %v4771 = vunpack.c.l.b16 %v4744
      %v4772 = vunpack.c.l.b16 %v4745
      %v4773 = vunpack.c.l.b16 %v4746
      %v4774 = vunpack.c.l.b16 %v4747
      %v4775 = vunpack.c.l.b16 %v4748
      %v4776 = vpack.c.b16 %v4769, %v4768
      %v4777 = vpack.c.b16 %v4771, %v4770
      %v4778 = vpack.c.b16 %v4773, %v4772
      %v4779 = vpack.c.b16 %v4775, %v4774
      %4784 = vmatprep.subr.bf16.mxu0 0
      %4785 = vmatpush1.bf16.msra.mxu0 %v4776
      %4786 = vmatprep.subr.bf16.mxu0 0
      %4787 = vmatpush1.bf16.msra.mxu0 %v4777
      %4788 = vmatprep.subr.bf16.mxu0 0
      %4789 = vmatpush1.bf16.msra.mxu0 %v4778
      %4790 = vmatprep.subr.bf16.mxu0 0
      %4791 = vmatpush1.bf16.msra.mxu0 %v4779
      %4792 = vmatprep.subr.bf16.mxu0 0
      %4793 = vmatpush1.bf16.msra.mxu0 0
      %4794 = vmatprep.subr.bf16.mxu0 0
      %4795 = vmatpush1.bf16.msra.mxu0 0
      %4796 = vmatprep.subr.bf16.mxu0 0
      %4797 = vmatpush1.bf16.msra.mxu0 0
      %4798 = vmatprep.subr.bf16.mxu0 0
      %4799 = vmatpush1.bf16.msra.mxu0 0
      %4800 = vmatprep.subr.bf16.mxu0 0
      %4801 = vmatpush1.bf16.msra.mxu0 0
      %4802 = vmatprep.subr.bf16.mxu0 0
      %4803 = vmatpush1.bf16.msra.mxu0 0
      %4804 = vmatprep.subr.bf16.mxu0 0
      %4805 = vmatpush1.bf16.msra.mxu0 0
      %4806 = vmatprep.subr.bf16.mxu0 0
      %4807 = vmatpush1.bf16.msra.mxu0 0
      %4808 = vmatprep.subr.bf16.mxu0 0
      %4809 = vmatpush1.bf16.msra.mxu0 0
      %4810 = vmatprep.subr.bf16.mxu0 0
      %4811 = vmatpush1.bf16.msra.mxu0 0
      %4812 = vmatprep.subr.bf16.mxu0 0
      %4813 = vmatpush1.bf16.msra.mxu0 0
      %4814 = vmatprep.subr.bf16.mxu0 0
      %4815 = vmatpush1.bf16.msra.mxu0 0
      %4816 = vmatprep.mubr.bf16.mxu0 0
      %4817 = vmatmul.mubr.bf16.gmra.mrb[0].mxu0 %v2351
      %v4818 = vpop.f32.mrb[0].mxu0
      %v4819 = vadd.f32 0.0, %v4818
      %v4820 = vpop.f32.mrb[0].mxu0
      %v4821 = vpop.f32.mrb[0].mxu0
      %v4822 = vadd.f32 0.0, %v4821
      %v4823 = vpop.f32.mrb[0].mxu0
      %4824 = vmatprep.mubr.bf16.mxu0 0
      %4825 = vmatmul.mubr.bf16.gmra.mrb[0].mxu0 %v2354
      %v4826 = vpop.f32.mrb[0].mxu0
      %v4827 = vadd.f32 0.0, %v4826
      %v4828 = vpop.f32.mrb[0].mxu0
      %v4829 = vpop.f32.mrb[0].mxu0
      %v4830 = vadd.f32 0.0, %v4829
      %v4831 = vpop.f32.mrb[0].mxu0
      %4832 = vmatprep.mubr.bf16.mxu0 0
      %4833 = vmatmul.mubr.bf16.gmra.mrb[0].mxu0 %v2357
      %v4834 = vpop.f32.mrb[0].mxu0
      %v4835 = vadd.f32 0.0, %v4834
      %v4836 = vpop.f32.mrb[0].mxu0
      %v4837 = vpop.f32.mrb[0].mxu0
      %v4838 = vadd.f32 0.0, %v4837
      %v4839 = vpop.f32.mrb[0].mxu0
      %4840 = vmatprep.mubr.bf16.mxu0 0
      %4841 = vmatmul.mubr.bf16.gmra.mrb[0].mxu0 %v2360
      %v4842 = vpop.f32.mrb[0].mxu0
      %v4843 = vadd.f32 0.0, %v4842
      %v4844 = vpop.f32.mrb[0].mxu0
      %v4845 = vpop.f32.mrb[0].mxu0
      %v4846 = vadd.f32 0.0, %v4845
      %v4847 = vpop.f32.mrb[0].mxu0
      %4848 = vmatprep.mubr.bf16.mxu0 0
      %4849 = vmatmul.mubr.bf16.gmra.mrb[0].mxu0 %v2363
      %v4850 = vpop.f32.mrb[0].mxu0
      %v4851 = vadd.f32 0.0, %v4850
      %v4852 = vpop.f32.mrb[0].mxu0
      %v4853 = vpop.f32.mrb[0].mxu0
      %v4854 = vadd.f32 0.0, %v4853
      %v4855 = vpop.f32.mrb[0].mxu0
      %4856 = vmatprep.mubr.bf16.mxu0 0
      %4857 = vmatmul.mubr.bf16.gmra.mrb[0].mxu0 %v2366
      %v4858 = vpop.f32.mrb[0].mxu0
      %v4859 = vadd.f32 0.0, %v4858
      %v4860 = vpop.f32.mrb[0].mxu0
      %v4861 = vpop.f32.mrb[0].mxu0
      %v4862 = vpop.f32.mrb[0].mxu0
      %4863 = vdwg.mxu0
      %v4864 = vadd.f32 %v4587, %v4819
      %v4865 = vadd.f32 %v4588, %v4822
      %v4866 = vadd.f32 %v4589, %v4827
      %v4867 = vadd.f32 %v4590, %v4830
      %v4868 = vadd.f32 %v4591, %v4835
      %v4869 = vadd.f32 %v4592, %v4838
      %v4870 = vadd.f32 %v4593, %v4843
      %v4871 = vadd.f32 %v4594, %v4846
      %v4872 = vadd.f32 %v4595, %v4851
      %v4873 = vadd.f32 %v4596, %v4854
      %v4874 = vadd.f32 %v4597, %v4859
      %v4886 = vunpack.c.l.b16 %v4749
      %v4887 = vunpack.c.l.b16 %v4750
      %v4888 = vunpack.c.l.b16 %v4751
      %v4889 = vunpack.c.l.b16 %v4752
      %v4890 = vunpack.c.l.b16 %v4753
      %v4891 = vunpack.c.l.b16 %v4754
      %v4892 = vunpack.c.l.b16 %v4755
      %v4893 = vunpack.c.l.b16 %v4756
      %v4894 = vunpack.c.l.b16 %v4757
      %v4895 = vunpack.c.l.b16 %v4758
      %v4896 = vunpack.c.l.b16 %v4759
      %v4897 = vpack.c.b16 %v4887, %v4886
      %v4898 = vpack.c.b16 %v4889, %v4888
      %v4899 = vpack.c.b16 %v4891, %v4890
      %v4900 = vpack.c.b16 %v4893, %v4892
      %v4901 = vpack.c.b16 %v4895, %v4894
      %v4902 = vpack.c.b16 %v4896, %v4896
      %v4903 = vrot.slane %v4897, 1
      %v4904 = vrot.slane %v4898, 1
      %v4905 = vsel %vm809, %v4903, %v4904
      %v4906 = vrot.slane %v4899, 1
      %v4907 = vsel %vm809, %v4904, %v4906
      %v4908 = vrot.slane %v4900, 1
      %v4909 = vsel %vm809, %v4906, %v4908
      %v4910 = vrot.slane %v4901, 1
      %v4911 = vsel %vm809, %v4908, %v4910
      %v4912 = vrot.slane %v4902, 1
      %v4913 = vsel %vm809, %v4910, %v4912
      %v4915 = vsel %vm311, %v4905, 0
      %v4918 = vsel %vm311, %v4907, 0
      %v4921 = vsel %vm311, %v4909, 0
      %v4924 = vsel %vm311, %v4911, 0
      %v4927 = vsel %vm311, %v4913, 0
      %v4930 = vsel %vm311, %v4912, 0
      %4932 = vmatprep.subr.bf16.mxu0 0
      %4933 = vmatpush1.bf16.msra.mxu0 %v4776
      %4934 = vmatprep.subr.bf16.mxu0 0
      %4935 = vmatpush1.bf16.msra.mxu0 %v4777
      %4936 = vmatprep.subr.bf16.mxu0 0
      %4937 = vmatpush1.bf16.msra.mxu0 %v4778
      %4938 = vmatprep.subr.bf16.mxu0 0
      %4939 = vmatpush1.bf16.msra.mxu0 %v4779
      %4940 = vmatprep.subr.bf16.mxu0 0
      %4941 = vmatpush1.bf16.msra.mxu0 0
      %4942 = vmatprep.subr.bf16.mxu0 0
      %4943 = vmatpush1.bf16.msra.mxu0 0
      %4944 = vmatprep.subr.bf16.mxu0 0
      %4945 = vmatpush1.bf16.msra.mxu0 0
      %4946 = vmatprep.subr.bf16.mxu0 0
      %4947 = vmatpush1.bf16.msra.mxu0 0
      %4948 = vmatprep.subr.bf16.mxu0 0
      %4949 = vmatpush1.bf16.msra.mxu0 0
      %4950 = vmatprep.subr.bf16.mxu0 0
      %4951 = vmatpush1.bf16.msra.mxu0 0
      %4952 = vmatprep.subr.bf16.mxu0 0
      %4953 = vmatpush1.bf16.msra.mxu0 0
      %4954 = vmatprep.subr.bf16.mxu0 0
      %4955 = vmatpush1.bf16.msra.mxu0 0
      %4956 = vmatprep.subr.bf16.mxu0 0
      %4957 = vmatpush1.bf16.msra.mxu0 0
      %4958 = vmatprep.subr.bf16.mxu0 0
      %4959 = vmatpush1.bf16.msra.mxu0 0
      %4960 = vmatprep.subr.bf16.mxu0 0
      %4961 = vmatpush1.bf16.msra.mxu0 0
      %4962 = vmatprep.subr.bf16.mxu0 0
      %4963 = vmatpush1.bf16.msra.mxu0 0
      %4964 = vmatprep.mubr.bf16.mxu0 0
      %4965 = vmatmul.mubr.bf16.gmra.mrb[0].mxu0 %v4915
      %v4966 = vpop.f32.mrb[0].mxu0
      %v4967 = vadd.f32 0.0, %v4966
      %v4968 = vpop.f32.mrb[0].mxu0
      %v4969 = vpop.f32.mrb[0].mxu0
      %v4970 = vadd.f32 0.0, %v4969
      %v4971 = vpop.f32.mrb[0].mxu0
      %4972 = vmatprep.mubr.bf16.mxu0 0
      %4973 = vmatmul.mubr.bf16.gmra.mrb[0].mxu0 %v4918
      %v4974 = vpop.f32.mrb[0].mxu0
      %v4975 = vadd.f32 0.0, %v4974
      %v4976 = vpop.f32.mrb[0].mxu0
      %v4977 = vpop.f32.mrb[0].mxu0
      %v4978 = vadd.f32 0.0, %v4977
      %v4979 = vpop.f32.mrb[0].mxu0
      %4980 = vmatprep.mubr.bf16.mxu0 0
      %4981 = vmatmul.mubr.bf16.gmra.mrb[0].mxu0 %v4921
      %v4982 = vpop.f32.mrb[0].mxu0
      %v4983 = vadd.f32 0.0, %v4982
      %v4984 = vpop.f32.mrb[0].mxu0
      %v4985 = vpop.f32.mrb[0].mxu0
      %v4986 = vadd.f32 0.0, %v4985
      %v4987 = vpop.f32.mrb[0].mxu0
      %4988 = vmatprep.mubr.bf16.mxu0 0
      %4989 = vmatmul.mubr.bf16.gmra.mrb[0].mxu0 %v4924
      %v4990 = vpop.f32.mrb[0].mxu0
      %v4991 = vadd.f32 0.0, %v4990
      %v4992 = vpop.f32.mrb[0].mxu0
      %v4993 = vpop.f32.mrb[0].mxu0
      %v4994 = vadd.f32 0.0, %v4993
      %v4995 = vpop.f32.mrb[0].mxu0
      %4996 = vmatprep.mubr.bf16.mxu0 0
      %4997 = vmatmul.mubr.bf16.gmra.mrb[0].mxu0 %v4927
      %v4998 = vpop.f32.mrb[0].mxu0
      %v4999 = vadd.f32 0.0, %v4998
      %v5000 = vpop.f32.mrb[0].mxu0
      %v5001 = vpop.f32.mrb[0].mxu0
      %v5002 = vadd.f32 0.0, %v5001
      %v5003 = vpop.f32.mrb[0].mxu0
      %5004 = vmatprep.mubr.bf16.mxu0 0
      %5005 = vmatmul.mubr.bf16.gmra.mrb[0].mxu0 %v4930
      %v5006 = vpop.f32.mrb[0].mxu0
      %v5007 = vadd.f32 0.0, %v5006
      %v5008 = vpop.f32.mrb[0].mxu0
      %v5009 = vpop.f32.mrb[0].mxu0
      %v5010 = vpop.f32.mrb[0].mxu0
      %5011 = vdwg.mxu0
      %v5012 = vadd.f32 %v4729, %v4967
      %v5013 = vadd.f32 %v4730, %v4970
      %v5014 = vadd.f32 %v4731, %v4975
      %v5015 = vadd.f32 %v4732, %v4978
      %v5016 = vadd.f32 %v4733, %v4983
      %v5017 = vadd.f32 %v4734, %v4986
      %v5018 = vadd.f32 %v4735, %v4991
      %v5019 = vadd.f32 %v4736, %v4994
      %v5020 = vadd.f32 %v4737, %v4999
      %v5021 = vadd.f32 %v4738, %v5002
      %v5022 = vadd.f32 %v4739, %v5007
      %s5023 = scalar_lea.vmem %s1, 512
      %v5024 = vld [vmem:[%s5023] sm:$0xf]
      %v5025 = vld [vmem:[%s5023 + $0x4] sm:$0xf]
      %v5026 = vld [vmem:[%s5023 + $0x8] sm:$0xf]
      %v5027 = vld [vmem:[%s5023 + $0xc] sm:$0xf]
      %v5028 = vld [vmem:[%s5023 + $0x10] sm:$0xf]
      %v5029 = vld [vmem:[%s5023 + $0x14] sm:$0xf]
      %v5030 = vld [vmem:[%s5023 + $0x18] sm:$0xf]
      %v5031 = vld [vmem:[%s5023 + $0x1c] sm:$0xf]
      %v5040 = vunpack.c.l.b16 %v5024
      %v5041 = vunpack.c.l.b16 %v5025
      %v5042 = vunpack.c.l.b16 %v5026
      %v5043 = vunpack.c.l.b16 %v5027
      %v5044 = vunpack.c.l.b16 %v5028
      %v5045 = vunpack.c.l.b16 %v5029
      %v5046 = vunpack.c.l.b16 %v5030
      %v5047 = vunpack.c.l.b16 %v5031
      %v5048 = vpack.c.b16 %v5041, %v5040
      %v5049 = vpack.c.b16 %v5043, %v5042
      %v5050 = vpack.c.b16 %v5045, %v5044
      %v5051 = vpack.c.b16 %v5047, %v5046
      %5056 = vmatprep.subr.bf16.mxu0 0
      %5057 = vmatpush1.bf16.msra.mxu0 %v5048
      %5058 = vmatprep.subr.bf16.mxu0 0
      %5059 = vmatpush1.bf16.msra.mxu0 %v5049
      %5060 = vmatprep.subr.bf16.mxu0 0
      %5061 = vmatpush1.bf16.msra.mxu0 %v5050
      %5062 = vmatprep.subr.bf16.mxu0 0
      %5063 = vmatpush1.bf16.msra.mxu0 %v5051
      %5064 = vmatprep.subr.bf16.mxu0 0
      %5065 = vmatpush1.bf16.msra.mxu0 0
      %5066 = vmatprep.subr.bf16.mxu0 0
      %5067 = vmatpush1.bf16.msra.mxu0 0
      %5068 = vmatprep.subr.bf16.mxu0 0
      %5069 = vmatpush1.bf16.msra.mxu0 0
      %5070 = vmatprep.subr.bf16.mxu0 0
      %5071 = vmatpush1.bf16.msra.mxu0 0
      %5072 = vmatprep.subr.bf16.mxu0 0
      %5073 = vmatpush1.bf16.msra.mxu0 0
      %5074 = vmatprep.subr.bf16.mxu0 0
      %5075 = vmatpush1.bf16.msra.mxu0 0
      %5076 = vmatprep.subr.bf16.mxu0 0
      %5077 = vmatpush1.bf16.msra.mxu0 0
      %5078 = vmatprep.subr.bf16.mxu0 0
      %5079 = vmatpush1.bf16.msra.mxu0 0
      %5080 = vmatprep.subr.bf16.mxu0 0
      %5081 = vmatpush1.bf16.msra.mxu0 0
      %5082 = vmatprep.subr.bf16.mxu0 0
      %5083 = vmatpush1.bf16.msra.mxu0 0
      %5084 = vmatprep.subr.bf16.mxu0 0
      %5085 = vmatpush1.bf16.msra.mxu0 0
      %5086 = vmatprep.subr.bf16.mxu0 0
      %5087 = vmatpush1.bf16.msra.mxu0 0
      %5088 = vmatprep.mubr.bf16.mxu0 0
      %5089 = vmatmul.mubr.bf16.gmra.mrb[0].mxu0 %v2708
      %v5090 = vpop.f32.mrb[0].mxu0
      %v5091 = vadd.f32 0.0, %v5090
      %v5092 = vpop.f32.mrb[0].mxu0
      %v5093 = vpop.f32.mrb[0].mxu0
      %v5094 = vadd.f32 0.0, %v5093
      %v5095 = vpop.f32.mrb[0].mxu0
      %5096 = vmatprep.mubr.bf16.mxu0 0
      %5097 = vmatmul.mubr.bf16.gmra.mrb[0].mxu0 %v2711
      %v5098 = vpop.f32.mrb[0].mxu0
      %v5099 = vadd.f32 0.0, %v5098
      %v5100 = vpop.f32.mrb[0].mxu0
      %v5101 = vpop.f32.mrb[0].mxu0
      %v5102 = vadd.f32 0.0, %v5101
      %v5103 = vpop.f32.mrb[0].mxu0
      %5104 = vmatprep.mubr.bf16.mxu0 0
      %5105 = vmatmul.mubr.bf16.gmra.mrb[0].mxu0 %v2714
      %v5106 = vpop.f32.mrb[0].mxu0
      %v5107 = vadd.f32 0.0, %v5106
      %v5108 = vpop.f32.mrb[0].mxu0
      %v5109 = vpop.f32.mrb[0].mxu0
      %v5110 = vadd.f32 0.0, %v5109
      %v5111 = vpop.f32.mrb[0].mxu0
      %5112 = vmatprep.mubr.bf16.mxu0 0
      %5113 = vmatmul.mubr.bf16.gmra.mrb[0].mxu0 %v2717
      %v5114 = vpop.f32.mrb[0].mxu0
      %v5115 = vadd.f32 0.0, %v5114
      %v5116 = vpop.f32.mrb[0].mxu0
      %v5117 = vpop.f32.mrb[0].mxu0
      %v5118 = vadd.f32 0.0, %v5117
      %v5119 = vpop.f32.mrb[0].mxu0
      %5120 = vmatprep.mubr.bf16.mxu0 0
      %5121 = vmatmul.mubr.bf16.gmra.mrb[0].mxu0 %v2720
      %v5122 = vpop.f32.mrb[0].mxu0
      %v5123 = vadd.f32 0.0, %v5122
      %v5124 = vpop.f32.mrb[0].mxu0
      %v5125 = vpop.f32.mrb[0].mxu0
      %v5126 = vadd.f32 0.0, %v5125
      %v5127 = vpop.f32.mrb[0].mxu0
      %5128 = vmatprep.mubr.bf16.mxu0 0
      %5129 = vmatmul.mubr.bf16.gmra.mrb[0].mxu0 %v2723
      %v5130 = vpop.f32.mrb[0].mxu0
      %v5131 = vadd.f32 0.0, %v5130
      %v5132 = vpop.f32.mrb[0].mxu0
      %v5133 = vpop.f32.mrb[0].mxu0
      %v5134 = vpop.f32.mrb[0].mxu0
      %5135 = vdwg.mxu0
      %v5136 = vadd.f32 %v4864, %v5091
      %v5137 = vadd.f32 %v4865, %v5094
      %v5138 = vadd.f32 %v4866, %v5099
      %v5139 = vadd.f32 %v4867, %v5102
      %v5140 = vadd.f32 %v4868, %v5107
      %v5141 = vadd.f32 %v4869, %v5110
      %v5142 = vadd.f32 %v4870, %v5115
      %v5143 = vadd.f32 %v4871, %v5118
      %v5144 = vadd.f32 %v4872, %v5123
      %v5145 = vadd.f32 %v4873, %v5126
      %v5146 = vadd.f32 %v4874, %v5131
      %v5148 = vshrl.u32 %v4897, 16
      %v5150 = vrot.slane %v5148, 1
      %v5151 = vshll.u32 %v4897, 16
      %v5153 = vrot.slane %v5151, 2
      %v5154 = vor.u32 %v5150, %v5153
      %v5156 = vshrl.u32 %v4898, 16
      %v5158 = vrot.slane %v5156, 1
      %v5159 = vshll.u32 %v4898, 16
      %v5161 = vrot.slane %v5159, 2
      %v5162 = vor.u32 %v5158, %v5161
      %v5163 = vsel %vm1799, %v5154, %v5162
      %v5165 = vshrl.u32 %v4899, 16
      %v5167 = vrot.slane %v5165, 1
      %v5168 = vshll.u32 %v4899, 16
      %v5170 = vrot.slane %v5168, 2
      %v5171 = vor.u32 %v5167, %v5170
      %v5172 = vsel %vm1799, %v5162, %v5171
      %v5174 = vshrl.u32 %v4900, 16
      %v5176 = vrot.slane %v5174, 1
      %v5177 = vshll.u32 %v4900, 16
      %v5179 = vrot.slane %v5177, 2
      %v5180 = vor.u32 %v5176, %v5179
      %v5181 = vsel %vm1799, %v5171, %v5180
      %v5183 = vshrl.u32 %v4901, 16
      %v5185 = vrot.slane %v5183, 1
      %v5186 = vshll.u32 %v4901, 16
      %v5188 = vrot.slane %v5186, 2
      %v5189 = vor.u32 %v5185, %v5188
      %v5190 = vsel %vm1799, %v5180, %v5189
      %v5192 = vshrl.u32 %v4902, 16
      %v5194 = vrot.slane %v5192, 1
      %v5195 = vshll.u32 %v4902, 16
      %v5197 = vrot.slane %v5195, 2
      %v5198 = vor.u32 %v5194, %v5197
      %v5199 = vsel %vm1799, %v5189, %v5198
      %v5201 = vsel %vm311, %v5163, 0
      %v5204 = vsel %vm311, %v5172, 0
      %v5207 = vsel %vm311, %v5181, 0
      %v5210 = vsel %vm311, %v5190, 0
      %v5213 = vsel %vm311, %v5199, 0
      %v5216 = vsel %vm311, %v5194, 0
      %5218 = vmatprep.subr.bf16.mxu0 0
      %5219 = vmatpush1.bf16.msra.mxu0 %v5048
      %5220 = vmatprep.subr.bf16.mxu0 0
      %5221 = vmatpush1.bf16.msra.mxu0 %v5049
      %5222 = vmatprep.subr.bf16.mxu0 0
      %5223 = vmatpush1.bf16.msra.mxu0 %v5050
      %5224 = vmatprep.subr.bf16.mxu0 0
      %5225 = vmatpush1.bf16.msra.mxu0 %v5051
      %5226 = vmatprep.subr.bf16.mxu0 0
      %5227 = vmatpush1.bf16.msra.mxu0 0
      %5228 = vmatprep.subr.bf16.mxu0 0
      %5229 = vmatpush1.bf16.msra.mxu0 0
      %5230 = vmatprep.subr.bf16.mxu0 0
      %5231 = vmatpush1.bf16.msra.mxu0 0
      %5232 = vmatprep.subr.bf16.mxu0 0
      %5233 = vmatpush1.bf16.msra.mxu0 0
      %5234 = vmatprep.subr.bf16.mxu0 0
      %5235 = vmatpush1.bf16.msra.mxu0 0
      %5236 = vmatprep.subr.bf16.mxu0 0
      %5237 = vmatpush1.bf16.msra.mxu0 0
      %5238 = vmatprep.subr.bf16.mxu0 0
      %5239 = vmatpush1.bf16.msra.mxu0 0
      %5240 = vmatprep.subr.bf16.mxu0 0
      %5241 = vmatpush1.bf16.msra.mxu0 0
      %5242 = vmatprep.subr.bf16.mxu0 0
      %5243 = vmatpush1.bf16.msra.mxu0 0
      %5244 = vmatprep.subr.bf16.mxu0 0
      %5245 = vmatpush1.bf16.msra.mxu0 0
      %5246 = vmatprep.subr.bf16.mxu0 0
      %5247 = vmatpush1.bf16.msra.mxu0 0
      %5248 = vmatprep.subr.bf16.mxu0 0
      %5249 = vmatpush1.bf16.msra.mxu0 0
      %5250 = vmatprep.mubr.bf16.mxu0 0
      %5251 = vmatmul.mubr.bf16.gmra.mrb[0].mxu0 %v5201
      %v5252 = vpop.f32.mrb[0].mxu0
      %v5253 = vadd.f32 0.0, %v5252
      %v5254 = vpop.f32.mrb[0].mxu0
      %v5255 = vpop.f32.mrb[0].mxu0
      %v5256 = vadd.f32 0.0, %v5255
      %v5257 = vpop.f32.mrb[0].mxu0
      %5258 = vmatprep.mubr.bf16.mxu0 0
      %5259 = vmatmul.mubr.bf16.gmra.mrb[0].mxu0 %v5204
      %v5260 = vpop.f32.mrb[0].mxu0
      %v5261 = vadd.f32 0.0, %v5260
      %v5262 = vpop.f32.mrb[0].mxu0
      %v5263 = vpop.f32.mrb[0].mxu0
      %v5264 = vadd.f32 0.0, %v5263
      %v5265 = vpop.f32.mrb[0].mxu0
      %5266 = vmatprep.mubr.bf16.mxu0 0
      %5267 = vmatmul.mubr.bf16.gmra.mrb[0].mxu0 %v5207
      %v5268 = vpop.f32.mrb[0].mxu0
      %v5269 = vadd.f32 0.0, %v5268
      %v5270 = vpop.f32.mrb[0].mxu0
      %v5271 = vpop.f32.mrb[0].mxu0
      %v5272 = vadd.f32 0.0, %v5271
      %v5273 = vpop.f32.mrb[0].mxu0
      %5274 = vmatprep.mubr.bf16.mxu0 0
      %5275 = vmatmul.mubr.bf16.gmra.mrb[0].mxu0 %v5210
      %v5276 = vpop.f32.mrb[0].mxu0
      %v5277 = vadd.f32 0.0, %v5276
      %v5278 = vpop.f32.mrb[0].mxu0
      %v5279 = vpop.f32.mrb[0].mxu0
      %v5280 = vadd.f32 0.0, %v5279
      %v5281 = vpop.f32.mrb[0].mxu0
      %5282 = vmatprep.mubr.bf16.mxu0 0
      %5283 = vmatmul.mubr.bf16.gmra.mrb[0].mxu0 %v5213
      %v5284 = vpop.f32.mrb[0].mxu0
      %v5285 = vadd.f32 0.0, %v5284
      %v5286 = vpop.f32.mrb[0].mxu0
      %v5287 = vpop.f32.mrb[0].mxu0
      %v5288 = vadd.f32 0.0, %v5287
      %v5289 = vpop.f32.mrb[0].mxu0
      %5290 = vmatprep.mubr.bf16.mxu0 0
      %5291 = vmatmul.mubr.bf16.gmra.mrb[0].mxu0 %v5216
      %v5292 = vpop.f32.mrb[0].mxu0
      %v5293 = vadd.f32 0.0, %v5292
      %v5294 = vpop.f32.mrb[0].mxu0
      %v5295 = vpop.f32.mrb[0].mxu0
      %v5296 = vpop.f32.mrb[0].mxu0
      %5297 = vdwg.mxu0
      %v5298 = vadd.f32 %v5012, %v5253
      %v5299 = vadd.f32 %v5013, %v5256
      %v5300 = vadd.f32 %v5014, %v5261
      %v5301 = vadd.f32 %v5015, %v5264
      %v5302 = vadd.f32 %v5016, %v5269
      %v5303 = vadd.f32 %v5017, %v5272
      %v5304 = vadd.f32 %v5018, %v5277
      %v5305 = vadd.f32 %v5019, %v5280
      %v5306 = vadd.f32 %v5020, %v5285
      %v5307 = vadd.f32 %v5021, %v5288
      %v5308 = vadd.f32 %v5022, %v5293
      %s5309 = scalar_lea.vmem %s1, 544
      %v5310 = vld [vmem:[%s5309] sm:$0xf]
      %v5311 = vld [vmem:[%s5309 + $0x4] sm:$0xf]
      %v5312 = vld [vmem:[%s5309 + $0x8] sm:$0xf]
      %v5313 = vld [vmem:[%s5309 + $0xc] sm:$0xf]
      %v5314 = vld [vmem:[%s5309 + $0x10] sm:$0xf]
      %v5315 = vld [vmem:[%s5309 + $0x14] sm:$0xf]
      %v5316 = vld [vmem:[%s5309 + $0x18] sm:$0xf]
      %v5317 = vld [vmem:[%s5309 + $0x1c] sm:$0xf]
      %v5318 = vld [vmem:[%s3115 + $0x8] sm:$0xc]
      %v5319 = vld [vmem:[%s3115 + $0x30] sm:$0x7]
      %v5328 = vunpack.c.l.b16 %v5310
      %v5329 = vunpack.c.l.b16 %v5311
      %v5330 = vunpack.c.l.b16 %v5312
      %v5331 = vunpack.c.l.b16 %v5313
      %v5332 = vunpack.c.l.b16 %v5314
      %v5333 = vunpack.c.l.b16 %v5315
      %v5334 = vunpack.c.l.b16 %v5316
      %v5335 = vunpack.c.l.b16 %v5317
      %v5336 = vpack.c.b16 %v5329, %v5328
      %v5337 = vpack.c.b16 %v5331, %v5330
      %v5338 = vpack.c.b16 %v5333, %v5332
      %v5339 = vpack.c.b16 %v5335, %v5334
      %5344 = vmatprep.subr.bf16.mxu0 0
      %5345 = vmatpush1.bf16.msra.mxu0 %v5336
      %5346 = vmatprep.subr.bf16.mxu0 0
      %5347 = vmatpush1.bf16.msra.mxu0 %v5337
      %5348 = vmatprep.subr.bf16.mxu0 0
      %5349 = vmatpush1.bf16.msra.mxu0 %v5338
      %5350 = vmatprep.subr.bf16.mxu0 0
      %5351 = vmatpush1.bf16.msra.mxu0 %v5339
      %5352 = vmatprep.subr.bf16.mxu0 0
      %5353 = vmatpush1.bf16.msra.mxu0 0
      %5354 = vmatprep.subr.bf16.mxu0 0
      %5355 = vmatpush1.bf16.msra.mxu0 0
      %5356 = vmatprep.subr.bf16.mxu0 0
      %5357 = vmatpush1.bf16.msra.mxu0 0
      %5358 = vmatprep.subr.bf16.mxu0 0
      %5359 = vmatpush1.bf16.msra.mxu0 0
      %5360 = vmatprep.subr.bf16.mxu0 0
      %5361 = vmatpush1.bf16.msra.mxu0 0
      %5362 = vmatprep.subr.bf16.mxu0 0
      %5363 = vmatpush1.bf16.msra.mxu0 0
      %5364 = vmatprep.subr.bf16.mxu0 0
      %5365 = vmatpush1.bf16.msra.mxu0 0
      %5366 = vmatprep.subr.bf16.mxu0 0
      %5367 = vmatpush1.bf16.msra.mxu0 0
      %5368 = vmatprep.subr.bf16.mxu0 0
      %5369 = vmatpush1.bf16.msra.mxu0 0
      %5370 = vmatprep.subr.bf16.mxu0 0
      %5371 = vmatpush1.bf16.msra.mxu0 0
      %5372 = vmatprep.subr.bf16.mxu0 0
      %5373 = vmatpush1.bf16.msra.mxu0 0
      %5374 = vmatprep.subr.bf16.mxu0 0
      %5375 = vmatpush1.bf16.msra.mxu0 0
      %5376 = vmatprep.mubr.bf16.mxu0 0
      %5377 = vmatmul.mubr.bf16.gmra.mrb[0].mxu0 %v2998
      %v5378 = vpop.f32.mrb[0].mxu0
      %v5379 = vadd.f32 0.0, %v5378
      %v5380 = vpop.f32.mrb[0].mxu0
      %v5381 = vpop.f32.mrb[0].mxu0
      %v5382 = vadd.f32 0.0, %v5381
      %v5383 = vpop.f32.mrb[0].mxu0
      %5384 = vmatprep.mubr.bf16.mxu0 0
      %5385 = vmatmul.mubr.bf16.gmra.mrb[0].mxu0 %v3001
      %v5386 = vpop.f32.mrb[0].mxu0
      %v5387 = vadd.f32 0.0, %v5386
      %v5388 = vpop.f32.mrb[0].mxu0
      %v5389 = vpop.f32.mrb[0].mxu0
      %v5390 = vadd.f32 0.0, %v5389
      %v5391 = vpop.f32.mrb[0].mxu0
      %5392 = vmatprep.mubr.bf16.mxu0 0
      %5393 = vmatmul.mubr.bf16.gmra.mrb[0].mxu0 %v3004
      %v5394 = vpop.f32.mrb[0].mxu0
      %v5395 = vadd.f32 0.0, %v5394
      %v5396 = vpop.f32.mrb[0].mxu0
      %v5397 = vpop.f32.mrb[0].mxu0
      %v5398 = vadd.f32 0.0, %v5397
      %v5399 = vpop.f32.mrb[0].mxu0
      %5400 = vmatprep.mubr.bf16.mxu0 0
      %5401 = vmatmul.mubr.bf16.gmra.mrb[0].mxu0 %v3007
      %v5402 = vpop.f32.mrb[0].mxu0
      %v5403 = vadd.f32 0.0, %v5402
      %v5404 = vpop.f32.mrb[0].mxu0
      %v5405 = vpop.f32.mrb[0].mxu0
      %v5406 = vadd.f32 0.0, %v5405
      %v5407 = vpop.f32.mrb[0].mxu0
      %5408 = vmatprep.mubr.bf16.mxu0 0
      %5409 = vmatmul.mubr.bf16.gmra.mrb[0].mxu0 %v3010
      %v5410 = vpop.f32.mrb[0].mxu0
      %v5411 = vadd.f32 0.0, %v5410
      %v5412 = vpop.f32.mrb[0].mxu0
      %v5413 = vpop.f32.mrb[0].mxu0
      %v5414 = vadd.f32 0.0, %v5413
      %v5415 = vpop.f32.mrb[0].mxu0
      %5416 = vmatprep.mubr.bf16.mxu0 0
      %5417 = vmatmul.mubr.bf16.gmra.mrb[0].mxu0 %v3013
      %v5418 = vpop.f32.mrb[0].mxu0
      %v5419 = vadd.f32 0.0, %v5418
      %v5420 = vpop.f32.mrb[0].mxu0
      %v5421 = vpop.f32.mrb[0].mxu0
      %v5422 = vpop.f32.mrb[0].mxu0
      %5423 = vdwg.mxu0
      %v5424 = vadd.f32 %v5136, %v5379
      %v5425 = vadd.f32 %v5137, %v5382
      %v5426 = vadd.f32 %v5138, %v5387
      %v5427 = vadd.f32 %v5139, %v5390
      %v5428 = vadd.f32 %v5140, %v5395
      %v5429 = vadd.f32 %v5141, %v5398
      %v5430 = vadd.f32 %v5142, %v5403
      %v5431 = vadd.f32 %v5143, %v5406
      %v5432 = vadd.f32 %v5144, %v5411
      %v5433 = vadd.f32 %v5145, %v5414
      %v5434 = vadd.f32 %v5146, %v5419
      %v5437 = vunpack.c.l.b16 %v5318
      %v5438 = vunpack.c.l.b16 %v5319
      %v5439 = vpack.c.b16 %v4887, %v5437
      %v5440 = vpack.c.b16 %v5438, %v5438
      %v5441 = vrot.slane %v5439, 2
      %v5442 = vrot.slane %v4898, 2
      %v5443 = vsel %vm2835, %v5441, %v5442
      %v5444 = vrot.slane %v4899, 2
      %v5445 = vsel %vm2835, %v5442, %v5444
      %v5446 = vrot.slane %v4900, 2
      %v5447 = vsel %vm2835, %v5444, %v5446
      %v5448 = vrot.slane %v4901, 2
      %v5449 = vsel %vm2835, %v5446, %v5448
      %v5450 = vrot.slane %v5440, 2
      %v5451 = vsel %vm2835, %v5448, %v5450
      %v5453 = vsel %vm311, %v5443, 0
      %v5456 = vsel %vm311, %v5445, 0
      %v5459 = vsel %vm311, %v5447, 0
      %v5462 = vsel %vm311, %v5449, 0
      %v5465 = vsel %vm311, %v5451, 0
      %v5468 = vsel %vm311, %v5450, 0
      %5470 = vmatprep.subr.bf16.mxu0 0
      %5471 = vmatpush1.bf16.msra.mxu0 %v5336
      %5472 = vmatprep.subr.bf16.mxu0 0
      %5473 = vmatpush1.bf16.msra.mxu0 %v5337
      %5474 = vmatprep.subr.bf16.mxu0 0
      %5475 = vmatpush1.bf16.msra.mxu0 %v5338
      %5476 = vmatprep.subr.bf16.mxu0 0
      %5477 = vmatpush1.bf16.msra.mxu0 %v5339
      %5478 = vmatprep.subr.bf16.mxu0 0
      %5479 = vmatpush1.bf16.msra.mxu0 0
      %5480 = vmatprep.subr.bf16.mxu0 0
      %5481 = vmatpush1.bf16.msra.mxu0 0
      %5482 = vmatprep.subr.bf16.mxu0 0
      %5483 = vmatpush1.bf16.msra.mxu0 0
      %5484 = vmatprep.subr.bf16.mxu0 0
      %5485 = vmatpush1.bf16.msra.mxu0 0
      %5486 = vmatprep.subr.bf16.mxu0 0
      %5487 = vmatpush1.bf16.msra.mxu0 0
      %5488 = vmatprep.subr.bf16.mxu0 0
      %5489 = vmatpush1.bf16.msra.mxu0 0
      %5490 = vmatprep.subr.bf16.mxu0 0
      %5491 = vmatpush1.bf16.msra.mxu0 0
      %5492 = vmatprep.subr.bf16.mxu0 0
      %5493 = vmatpush1.bf16.msra.mxu0 0
      %5494 = vmatprep.subr.bf16.mxu0 0
      %5495 = vmatpush1.bf16.msra.mxu0 0
      %5496 = vmatprep.subr.bf16.mxu0 0
      %5497 = vmatpush1.bf16.msra.mxu0 0
      %5498 = vmatprep.subr.bf16.mxu0 0
      %5499 = vmatpush1.bf16.msra.mxu0 0
      %5500 = vmatprep.subr.bf16.mxu0 0
      %5501 = vmatpush1.bf16.msra.mxu0 0
      %5502 = vmatprep.mubr.bf16.mxu0 0
      %5503 = vmatmul.mubr.bf16.gmra.mrb[0].mxu0 %v5453
      %v5504 = vpop.f32.mrb[0].mxu0
      %v5505 = vadd.f32 0.0, %v5504
      %v5506 = vpop.f32.mrb[0].mxu0
      %v5507 = vpop.f32.mrb[0].mxu0
      %v5508 = vadd.f32 0.0, %v5507
      %v5509 = vpop.f32.mrb[0].mxu0
      %5510 = vmatprep.mubr.bf16.mxu0 0
      %5511 = vmatmul.mubr.bf16.gmra.mrb[0].mxu0 %v5456
      %v5512 = vpop.f32.mrb[0].mxu0
      %v5513 = vadd.f32 0.0, %v5512
      %v5514 = vpop.f32.mrb[0].mxu0
      %v5515 = vpop.f32.mrb[0].mxu0
      %v5516 = vadd.f32 0.0, %v5515
      %v5517 = vpop.f32.mrb[0].mxu0
      %5518 = vmatprep.mubr.bf16.mxu0 0
      %5519 = vmatmul.mubr.bf16.gmra.mrb[0].mxu0 %v5459
      %v5520 = vpop.f32.mrb[0].mxu0
      %v5521 = vadd.f32 0.0, %v5520
      %v5522 = vpop.f32.mrb[0].mxu0
      %v5523 = vpop.f32.mrb[0].mxu0
      %v5524 = vadd.f32 0.0, %v5523
      %v5525 = vpop.f32.mrb[0].mxu0
      %5526 = vmatprep.mubr.bf16.mxu0 0
      %5527 = vmatmul.mubr.bf16.gmra.mrb[0].mxu0 %v5462
      %v5528 = vpop.f32.mrb[0].mxu0
      %v5529 = vadd.f32 0.0, %v5528
      %v5530 = vpop.f32.mrb[0].mxu0
      %v5531 = vpop.f32.mrb[0].mxu0
      %v5532 = vadd.f32 0.0, %v5531
      %v5533 = vpop.f32.mrb[0].mxu0
      %5534 = vmatprep.mubr.bf16.mxu0 0
      %5535 = vmatmul.mubr.bf16.gmra.mrb[0].mxu0 %v5465
      %v5536 = vpop.f32.mrb[0].mxu0
      %v5537 = vadd.f32 0.0, %v5536
      %v5538 = vpop.f32.mrb[0].mxu0
      %v5539 = vpop.f32.mrb[0].mxu0
      %v5540 = vadd.f32 0.0, %v5539
      %v5541 = vpop.f32.mrb[0].mxu0
      %5542 = vmatprep.mubr.bf16.mxu0 0
      %5543 = vmatmul.mubr.bf16.gmra.mrb[0].mxu0 %v5468
      %v5544 = vpop.f32.mrb[0].mxu0
      %v5545 = vadd.f32 0.0, %v5544
      %v5546 = vpop.f32.mrb[0].mxu0
      %v5547 = vpop.f32.mrb[0].mxu0
      %v5548 = vpop.f32.mrb[0].mxu0
      %5549 = vdwg.mxu0
      %v5550 = vadd.f32 %v5298, %v5505
      %v5551 = vadd.f32 %v5299, %v5508
      %v5552 = vadd.f32 %v5300, %v5513
      %v5553 = vadd.f32 %v5301, %v5516
      %v5554 = vadd.f32 %v5302, %v5521
      %v5555 = vadd.f32 %v5303, %v5524
      %v5556 = vadd.f32 %v5304, %v5529
      %v5557 = vadd.f32 %v5305, %v5532
      %v5558 = vadd.f32 %v5306, %v5537
      %v5559 = vadd.f32 %v5307, %v5540
      %v5560 = vadd.f32 %v5308, %v5545
      %s5561 = scalar_lea.vmem %s1, 576
      %v5562 = vld [vmem:[%s5561] sm:$0xf]
      %v5563 = vld [vmem:[%s5561 + $0x4] sm:$0xf]
      %v5564 = vld [vmem:[%s5561 + $0x8] sm:$0xf]
      %v5565 = vld [vmem:[%s5561 + $0xc] sm:$0xf]
      %v5566 = vld [vmem:[%s5561 + $0x10] sm:$0xf]
      %v5567 = vld [vmem:[%s5561 + $0x14] sm:$0xf]
      %v5568 = vld [vmem:[%s5561 + $0x18] sm:$0xf]
      %v5569 = vld [vmem:[%s5561 + $0x1c] sm:$0xf]
      %s5570 = scalar_lea.vmem %s165, 156
      %v5571 = vld [vmem:[%s5570] sm:$0xf]
      %v5572 = vld [vmem:[%s5570 + $0x4] sm:$0xf]
      %v5573 = vld [vmem:[%s5570 + $0x8] sm:$0xf]
      %v5574 = vld [vmem:[%s5570 + $0xc] sm:$0xf]
      %v5575 = vld [vmem:[%s5570 + $0x10] sm:$0xf]
      %v5576 = vld [vmem:[%s5570 + $0x14] sm:$0xf]
      %v5577 = vld [vmem:[%s5570 + $0x18] sm:$0xf]
      %v5578 = vld [vmem:[%s5570 + $0x1c] sm:$0xf]
      %v5579 = vld [vmem:[%s5570 + $0x20] sm:$0xf]
      %v5580 = vld [vmem:[%s5570 + $0x24] sm:$0xf]
      %v5581 = vld [vmem:[%s5570 + $0x28] sm:$0x1]
      %v5590 = vunpack.c.l.b16 %v5562
      %v5591 = vunpack.c.l.b16 %v5563
      %v5592 = vunpack.c.l.b16 %v5564
      %v5593 = vunpack.c.l.b16 %v5565
      %v5594 = vunpack.c.l.b16 %v5566
      %v5595 = vunpack.c.l.b16 %v5567
      %v5596 = vunpack.c.l.b16 %v5568
      %v5597 = vunpack.c.l.b16 %v5569
      %v5598 = vpack.c.b16 %v5591, %v5590
      %v5599 = vpack.c.b16 %v5593, %v5592
      %v5600 = vpack.c.b16 %v5595, %v5594
      %v5601 = vpack.c.b16 %v5597, %v5596
      %5606 = vmatprep.subr.bf16.mxu0 0
      %5607 = vmatpush1.bf16.msra.mxu0 %v5598
      %5608 = vmatprep.subr.bf16.mxu0 0
      %5609 = vmatpush1.bf16.msra.mxu0 %v5599
      %5610 = vmatprep.subr.bf16.mxu0 0
      %5611 = vmatpush1.bf16.msra.mxu0 %v5600
      %5612 = vmatprep.subr.bf16.mxu0 0
      %5613 = vmatpush1.bf16.msra.mxu0 %v5601
      %5614 = vmatprep.subr.bf16.mxu0 0
      %5615 = vmatpush1.bf16.msra.mxu0 0
      %5616 = vmatprep.subr.bf16.mxu0 0
      %5617 = vmatpush1.bf16.msra.mxu0 0
      %5618 = vmatprep.subr.bf16.mxu0 0
      %5619 = vmatpush1.bf16.msra.mxu0 0
      %5620 = vmatprep.subr.bf16.mxu0 0
      %5621 = vmatpush1.bf16.msra.mxu0 0
      %5622 = vmatprep.subr.bf16.mxu0 0
      %5623 = vmatpush1.bf16.msra.mxu0 0
      %5624 = vmatprep.subr.bf16.mxu0 0
      %5625 = vmatpush1.bf16.msra.mxu0 0
      %5626 = vmatprep.subr.bf16.mxu0 0
      %5627 = vmatpush1.bf16.msra.mxu0 0
      %5628 = vmatprep.subr.bf16.mxu0 0
      %5629 = vmatpush1.bf16.msra.mxu0 0
      %5630 = vmatprep.subr.bf16.mxu0 0
      %5631 = vmatpush1.bf16.msra.mxu0 0
      %5632 = vmatprep.subr.bf16.mxu0 0
      %5633 = vmatpush1.bf16.msra.mxu0 0
      %5634 = vmatprep.subr.bf16.mxu0 0
      %5635 = vmatpush1.bf16.msra.mxu0 0
      %5636 = vmatprep.subr.bf16.mxu0 0
      %5637 = vmatpush1.bf16.msra.mxu0 0
      %5638 = vmatprep.mubr.bf16.mxu0 0
      %5639 = vmatmul.mubr.bf16.gmra.mrb[0].mxu0 %v3271
      %v5640 = vpop.f32.mrb[0].mxu0
      %v5641 = vadd.f32 0.0, %v5640
      %v5642 = vpop.f32.mrb[0].mxu0
      %v5643 = vpop.f32.mrb[0].mxu0
      %v5644 = vadd.f32 0.0, %v5643
      %v5645 = vpop.f32.mrb[0].mxu0
      %5646 = vmatprep.mubr.bf16.mxu0 0
      %5647 = vmatmul.mubr.bf16.gmra.mrb[0].mxu0 %v3274
      %v5648 = vpop.f32.mrb[0].mxu0
      %v5649 = vadd.f32 0.0, %v5648
      %v5650 = vpop.f32.mrb[0].mxu0
      %v5651 = vpop.f32.mrb[0].mxu0
      %v5652 = vadd.f32 0.0, %v5651
      %v5653 = vpop.f32.mrb[0].mxu0
      %5654 = vmatprep.mubr.bf16.mxu0 0
      %5655 = vmatmul.mubr.bf16.gmra.mrb[0].mxu0 %v3277
      %v5656 = vpop.f32.mrb[0].mxu0
      %v5657 = vadd.f32 0.0, %v5656
      %v5658 = vpop.f32.mrb[0].mxu0
      %v5659 = vpop.f32.mrb[0].mxu0
      %v5660 = vadd.f32 0.0, %v5659
      %v5661 = vpop.f32.mrb[0].mxu0
      %5662 = vmatprep.mubr.bf16.mxu0 0
      %5663 = vmatmul.mubr.bf16.gmra.mrb[0].mxu0 %v3280
      %v5664 = vpop.f32.mrb[0].mxu0
      %v5665 = vadd.f32 0.0, %v5664
      %v5666 = vpop.f32.mrb[0].mxu0
      %v5667 = vpop.f32.mrb[0].mxu0
      %v5668 = vadd.f32 0.0, %v5667
      %v5669 = vpop.f32.mrb[0].mxu0
      %5670 = vmatprep.mubr.bf16.mxu0 0
      %5671 = vmatmul.mubr.bf16.gmra.mrb[0].mxu0 %v3283
      %v5672 = vpop.f32.mrb[0].mxu0
      %v5673 = vadd.f32 0.0, %v5672
      %v5674 = vpop.f32.mrb[0].mxu0
      %v5675 = vpop.f32.mrb[0].mxu0
      %v5676 = vadd.f32 0.0, %v5675
      %v5677 = vpop.f32.mrb[0].mxu0
      %5678 = vmatprep.mubr.bf16.mxu0 0
      %5679 = vmatmul.mubr.bf16.gmra.mrb[0].mxu0 %v3286
      %v5680 = vpop.f32.mrb[0].mxu0
      %v5681 = vadd.f32 0.0, %v5680
      %v5682 = vpop.f32.mrb[0].mxu0
      %v5683 = vpop.f32.mrb[0].mxu0
      %v5684 = vpop.f32.mrb[0].mxu0
      %5685 = vdwg.mxu0
      %v5686 = vadd.f32 %v5424, %v5641
      %v5687 = vadd.f32 %v5425, %v5644
      %v5688 = vadd.f32 %v5426, %v5649
      %v5689 = vadd.f32 %v5427, %v5652
      %v5690 = vadd.f32 %v5428, %v5657
      %v5691 = vadd.f32 %v5429, %v5660
      %v5692 = vadd.f32 %v5430, %v5665
      %v5693 = vadd.f32 %v5431, %v5668
      %v5694 = vadd.f32 %v5432, %v5673
      %v5695 = vadd.f32 %v5433, %v5676
      %v5696 = vadd.f32 %v5434, %v5681
      %v5708 = vunpack.c.l.b16 %v5571
      %v5709 = vunpack.c.l.b16 %v5572
      %v5710 = vunpack.c.l.b16 %v5573
      %v5711 = vunpack.c.l.b16 %v5574
      %v5712 = vunpack.c.l.b16 %v5575
      %v5713 = vunpack.c.l.b16 %v5576
      %v5714 = vunpack.c.l.b16 %v5577
      %v5715 = vunpack.c.l.b16 %v5578
      %v5716 = vunpack.c.l.b16 %v5579
      %v5717 = vunpack.c.l.b16 %v5580
      %v5718 = vunpack.c.l.b16 %v5581
      %v5719 = vpack.c.b16 %v5709, %v5708
      %v5720 = vpack.c.b16 %v5711, %v5710
      %v5721 = vpack.c.b16 %v5713, %v5712
      %v5722 = vpack.c.b16 %v5715, %v5714
      %v5723 = vpack.c.b16 %v5717, %v5716
      %v5724 = vpack.c.b16 %v5718, %v5718
      %v5726 = vsel %vm311, %v5719, 0
      %v5729 = vsel %vm311, %v5720, 0
      %v5732 = vsel %vm311, %v5721, 0
      %v5735 = vsel %vm311, %v5722, 0
      %v5738 = vsel %vm311, %v5723, 0
      %v5741 = vsel %vm311, %v5724, 0
      %5743 = vmatprep.subr.bf16.mxu0 0
      %5744 = vmatpush1.bf16.msra.mxu0 %v5598
      %5745 = vmatprep.subr.bf16.mxu0 0
      %5746 = vmatpush1.bf16.msra.mxu0 %v5599
      %5747 = vmatprep.subr.bf16.mxu0 0
      %5748 = vmatpush1.bf16.msra.mxu0 %v5600
      %5749 = vmatprep.subr.bf16.mxu0 0
      %5750 = vmatpush1.bf16.msra.mxu0 %v5601
      %5751 = vmatprep.subr.bf16.mxu0 0
      %5752 = vmatpush1.bf16.msra.mxu0 0
      %5753 = vmatprep.subr.bf16.mxu0 0
      %5754 = vmatpush1.bf16.msra.mxu0 0
      %5755 = vmatprep.subr.bf16.mxu0 0
      %5756 = vmatpush1.bf16.msra.mxu0 0
      %5757 = vmatprep.subr.bf16.mxu0 0
      %5758 = vmatpush1.bf16.msra.mxu0 0
      %5759 = vmatprep.subr.bf16.mxu0 0
      %5760 = vmatpush1.bf16.msra.mxu0 0
      %5761 = vmatprep.subr.bf16.mxu0 0
      %5762 = vmatpush1.bf16.msra.mxu0 0
      %5763 = vmatprep.subr.bf16.mxu0 0
      %5764 = vmatpush1.bf16.msra.mxu0 0
      %5765 = vmatprep.subr.bf16.mxu0 0
      %5766 = vmatpush1.bf16.msra.mxu0 0
      %5767 = vmatprep.subr.bf16.mxu0 0
      %5768 = vmatpush1.bf16.msra.mxu0 0
      %5769 = vmatprep.subr.bf16.mxu0 0
      %5770 = vmatpush1.bf16.msra.mxu0 0
      %5771 = vmatprep.subr.bf16.mxu0 0
      %5772 = vmatpush1.bf16.msra.mxu0 0
      %5773 = vmatprep.subr.bf16.mxu0 0
      %5774 = vmatpush1.bf16.msra.mxu0 0
      %5775 = vmatprep.mubr.bf16.mxu0 0
      %5776 = vmatmul.mubr.bf16.gmra.mrb[0].mxu0 %v5726
      %v5777 = vpop.f32.mrb[0].mxu0
      %v5778 = vadd.f32 0.0, %v5777
      %v5779 = vpop.f32.mrb[0].mxu0
      %v5780 = vpop.f32.mrb[0].mxu0
      %v5781 = vadd.f32 0.0, %v5780
      %v5782 = vpop.f32.mrb[0].mxu0
      %5783 = vmatprep.mubr.bf16.mxu0 0
      %5784 = vmatmul.mubr.bf16.gmra.mrb[0].mxu0 %v5729
      %v5785 = vpop.f32.mrb[0].mxu0
      %v5786 = vadd.f32 0.0, %v5785
      %v5787 = vpop.f32.mrb[0].mxu0
      %v5788 = vpop.f32.mrb[0].mxu0
      %v5789 = vadd.f32 0.0, %v5788
      %v5790 = vpop.f32.mrb[0].mxu0
      %5791 = vmatprep.mubr.bf16.mxu0 0
      %5792 = vmatmul.mubr.bf16.gmra.mrb[0].mxu0 %v5732
      %v5793 = vpop.f32.mrb[0].mxu0
      %v5794 = vadd.f32 0.0, %v5793
      %v5795 = vpop.f32.mrb[0].mxu0
      %v5796 = vpop.f32.mrb[0].mxu0
      %v5797 = vadd.f32 0.0, %v5796
      %v5798 = vpop.f32.mrb[0].mxu0
      %5799 = vmatprep.mubr.bf16.mxu0 0
      %5800 = vmatmul.mubr.bf16.gmra.mrb[0].mxu0 %v5735
      %v5801 = vpop.f32.mrb[0].mxu0
      %v5802 = vadd.f32 0.0, %v5801
      %v5803 = vpop.f32.mrb[0].mxu0
      %v5804 = vpop.f32.mrb[0].mxu0
      %v5805 = vadd.f32 0.0, %v5804
      %v5806 = vpop.f32.mrb[0].mxu0
      %5807 = vmatprep.mubr.bf16.mxu0 0
      %5808 = vmatmul.mubr.bf16.gmra.mrb[0].mxu0 %v5738
      %v5809 = vpop.f32.mrb[0].mxu0
      %v5810 = vadd.f32 0.0, %v5809
      %v5811 = vpop.f32.mrb[0].mxu0
      %v5812 = vpop.f32.mrb[0].mxu0
      %v5813 = vadd.f32 0.0, %v5812
      %v5814 = vpop.f32.mrb[0].mxu0
      %5815 = vmatprep.mubr.bf16.mxu0 0
      %5816 = vmatmul.mubr.bf16.gmra.mrb[0].mxu0 %v5741
      %v5817 = vpop.f32.mrb[0].mxu0
      %v5818 = vadd.f32 0.0, %v5817
      %v5819 = vpop.f32.mrb[0].mxu0
      %v5820 = vpop.f32.mrb[0].mxu0
      %v5821 = vpop.f32.mrb[0].mxu0
      %5822 = vdwg.mxu0
      %v5823 = vadd.f32 %v5550, %v5778
      %v5824 = vadd.f32 %v5551, %v5781
      %v5825 = vadd.f32 %v5552, %v5786
      %v5826 = vadd.f32 %v5553, %v5789
      %v5827 = vadd.f32 %v5554, %v5794
      %v5828 = vadd.f32 %v5555, %v5797
      %v5829 = vadd.f32 %v5556, %v5802
      %v5830 = vadd.f32 %v5557, %v5805
      %v5831 = vadd.f32 %v5558, %v5810
      %v5832 = vadd.f32 %v5559, %v5813
      %v5833 = vadd.f32 %v5560, %v5818
      %s5834 = scalar_lea.vmem %s1, 608
      %v5835 = vld [vmem:[%s5834] sm:$0xf]
      %v5836 = vld [vmem:[%s5834 + $0x4] sm:$0xf]
      %v5837 = vld [vmem:[%s5834 + $0x8] sm:$0xf]
      %v5838 = vld [vmem:[%s5834 + $0xc] sm:$0xf]
      %v5839 = vld [vmem:[%s5834 + $0x10] sm:$0xf]
      %v5840 = vld [vmem:[%s5834 + $0x14] sm:$0xf]
      %v5841 = vld [vmem:[%s5834 + $0x18] sm:$0xf]
      %v5842 = vld [vmem:[%s5834 + $0x1c] sm:$0xf]
      %v5851 = vunpack.c.l.b16 %v5835
      %v5852 = vunpack.c.l.b16 %v5836
      %v5853 = vunpack.c.l.b16 %v5837
      %v5854 = vunpack.c.l.b16 %v5838
      %v5855 = vunpack.c.l.b16 %v5839
      %v5856 = vunpack.c.l.b16 %v5840
      %v5857 = vunpack.c.l.b16 %v5841
      %v5858 = vunpack.c.l.b16 %v5842
      %v5859 = vpack.c.b16 %v5852, %v5851
      %v5860 = vpack.c.b16 %v5854, %v5853
      %v5861 = vpack.c.b16 %v5856, %v5855
      %v5862 = vpack.c.b16 %v5858, %v5857
      %5867 = vmatprep.subr.bf16.mxu0 0
      %5868 = vmatpush1.bf16.msra.mxu0 %v5859
      %5869 = vmatprep.subr.bf16.mxu0 0
      %5870 = vmatpush1.bf16.msra.mxu0 %v5860
      %5871 = vmatprep.subr.bf16.mxu0 0
      %5872 = vmatpush1.bf16.msra.mxu0 %v5861
      %5873 = vmatprep.subr.bf16.mxu0 0
      %5874 = vmatpush1.bf16.msra.mxu0 %v5862
      %5875 = vmatprep.subr.bf16.mxu0 0
      %5876 = vmatpush1.bf16.msra.mxu0 0
      %5877 = vmatprep.subr.bf16.mxu0 0
      %5878 = vmatpush1.bf16.msra.mxu0 0
      %5879 = vmatprep.subr.bf16.mxu0 0
      %5880 = vmatpush1.bf16.msra.mxu0 0
      %5881 = vmatprep.subr.bf16.mxu0 0
      %5882 = vmatpush1.bf16.msra.mxu0 0
      %5883 = vmatprep.subr.bf16.mxu0 0
      %5884 = vmatpush1.bf16.msra.mxu0 0
      %5885 = vmatprep.subr.bf16.mxu0 0
      %5886 = vmatpush1.bf16.msra.mxu0 0
      %5887 = vmatprep.subr.bf16.mxu0 0
      %5888 = vmatpush1.bf16.msra.mxu0 0
      %5889 = vmatprep.subr.bf16.mxu0 0
      %5890 = vmatpush1.bf16.msra.mxu0 0
      %5891 = vmatprep.subr.bf16.mxu0 0
      %5892 = vmatpush1.bf16.msra.mxu0 0
      %5893 = vmatprep.subr.bf16.mxu0 0
      %5894 = vmatpush1.bf16.msra.mxu0 0
      %5895 = vmatprep.subr.bf16.mxu0 0
      %5896 = vmatpush1.bf16.msra.mxu0 0
      %5897 = vmatprep.subr.bf16.mxu0 0
      %5898 = vmatpush1.bf16.msra.mxu0 0
      %5899 = vmatprep.mubr.bf16.mxu0 0
      %5900 = vmatmul.mubr.bf16.gmra.mrb[0].mxu0 %v3544
      %v5901 = vpop.f32.mrb[0].mxu0
      %v5902 = vadd.f32 0.0, %v5901
      %v5903 = vpop.f32.mrb[0].mxu0
      %v5904 = vpop.f32.mrb[0].mxu0
      %v5905 = vadd.f32 0.0, %v5904
      %v5906 = vpop.f32.mrb[0].mxu0
      %5907 = vmatprep.mubr.bf16.mxu0 0
      %5908 = vmatmul.mubr.bf16.gmra.mrb[0].mxu0 %v3547
      %v5909 = vpop.f32.mrb[0].mxu0
      %v5910 = vadd.f32 0.0, %v5909
      %v5911 = vpop.f32.mrb[0].mxu0
      %v5912 = vpop.f32.mrb[0].mxu0
      %v5913 = vadd.f32 0.0, %v5912
      %v5914 = vpop.f32.mrb[0].mxu0
      %5915 = vmatprep.mubr.bf16.mxu0 0
      %5916 = vmatmul.mubr.bf16.gmra.mrb[0].mxu0 %v3550
      %v5917 = vpop.f32.mrb[0].mxu0
      %v5918 = vadd.f32 0.0, %v5917
      %v5919 = vpop.f32.mrb[0].mxu0
      %v5920 = vpop.f32.mrb[0].mxu0
      %v5921 = vadd.f32 0.0, %v5920
      %v5922 = vpop.f32.mrb[0].mxu0
      %5923 = vmatprep.mubr.bf16.mxu0 0
      %5924 = vmatmul.mubr.bf16.gmra.mrb[0].mxu0 %v3553
      %v5925 = vpop.f32.mrb[0].mxu0
      %v5926 = vadd.f32 0.0, %v5925
      %v5927 = vpop.f32.mrb[0].mxu0
      %v5928 = vpop.f32.mrb[0].mxu0
      %v5929 = vadd.f32 0.0, %v5928
      %v5930 = vpop.f32.mrb[0].mxu0
      %5931 = vmatprep.mubr.bf16.mxu0 0
      %5932 = vmatmul.mubr.bf16.gmra.mrb[0].mxu0 %v3556
      %v5933 = vpop.f32.mrb[0].mxu0
      %v5934 = vadd.f32 0.0, %v5933
      %v5935 = vpop.f32.mrb[0].mxu0
      %v5936 = vpop.f32.mrb[0].mxu0
      %v5937 = vadd.f32 0.0, %v5936
      %v5938 = vpop.f32.mrb[0].mxu0
      %5939 = vmatprep.mubr.bf16.mxu0 0
      %5940 = vmatmul.mubr.bf16.gmra.mrb[0].mxu0 %v3559
      %v5941 = vpop.f32.mrb[0].mxu0
      %v5942 = vadd.f32 0.0, %v5941
      %v5943 = vpop.f32.mrb[0].mxu0
      %v5944 = vpop.f32.mrb[0].mxu0
      %v5945 = vpop.f32.mrb[0].mxu0
      %5946 = vdwg.mxu0
      %v5947 = vadd.f32 %v5686, %v5902
      %v5948 = vadd.f32 %v5687, %v5905
      %v5949 = vadd.f32 %v5688, %v5910
      %v5950 = vadd.f32 %v5689, %v5913
      %v5951 = vadd.f32 %v5690, %v5918
      %v5952 = vadd.f32 %v5691, %v5921
      %v5953 = vadd.f32 %v5692, %v5926
      %v5954 = vadd.f32 %v5693, %v5929
      %v5955 = vadd.f32 %v5694, %v5934
      %v5956 = vadd.f32 %v5695, %v5937
      %v5957 = vadd.f32 %v5696, %v5942
      %v5958 = vshrl.u32 %v5719, 16
      %v5960 = vshll.u32 %v5719, 16
      %v5962 = vrot.slane %v5960, 1
      %v5963 = vor.u32 %v5958, %v5962
      %v5964 = vshll.u32 %v5720, 16
      %v5966 = vrot.slane %v5964, 1
      %v5967 = vsel %vm240, %v5963, %v5966
      %v5968 = vshrl.u32 %v5720, 16
      %v5970 = vor.u32 %v5968, %v5966
      %v5971 = vshll.u32 %v5721, 16
      %v5973 = vrot.slane %v5971, 1
      %v5974 = vsel %vm240, %v5970, %v5973
      %v5975 = vshrl.u32 %v5721, 16
      %v5977 = vor.u32 %v5975, %v5973
      %v5978 = vshll.u32 %v5722, 16
      %v5980 = vrot.slane %v5978, 1
      %v5981 = vsel %vm240, %v5977, %v5980
      %v5982 = vshrl.u32 %v5722, 16
      %v5984 = vor.u32 %v5982, %v5980
      %v5985 = vshll.u32 %v5723, 16
      %v5987 = vrot.slane %v5985, 1
      %v5988 = vsel %vm240, %v5984, %v5987
      %v5989 = vshrl.u32 %v5723, 16
      %v5991 = vor.u32 %v5989, %v5987
      %v5992 = vshll.u32 %v5724, 16
      %v5994 = vrot.slane %v5992, 1
      %v5995 = vsel %vm240, %v5991, %v5994
      %v5996 = vshrl.u32 %v5724, 16
      %v5999 = vsel %vm311, %v5967, 0
      %v6002 = vsel %vm311, %v5974, 0
      %v6005 = vsel %vm311, %v5981, 0
      %v6008 = vsel %vm311, %v5988, 0
      %v6011 = vsel %vm311, %v5995, 0
      %v6014 = vsel %vm311, %v5996, 0
      %6016 = vmatprep.subr.bf16.mxu0 0
      %6017 = vmatpush1.bf16.msra.mxu0 %v5859
      %6018 = vmatprep.subr.bf16.mxu0 0
      %6019 = vmatpush1.bf16.msra.mxu0 %v5860
      %6020 = vmatprep.subr.bf16.mxu0 0
      %6021 = vmatpush1.bf16.msra.mxu0 %v5861
      %6022 = vmatprep.subr.bf16.mxu0 0
      %6023 = vmatpush1.bf16.msra.mxu0 %v5862
      %6024 = vmatprep.subr.bf16.mxu0 0
      %6025 = vmatpush1.bf16.msra.mxu0 0
      %6026 = vmatprep.subr.bf16.mxu0 0
      %6027 = vmatpush1.bf16.msra.mxu0 0
      %6028 = vmatprep.subr.bf16.mxu0 0
      %6029 = vmatpush1.bf16.msra.mxu0 0
      %6030 = vmatprep.subr.bf16.mxu0 0
      %6031 = vmatpush1.bf16.msra.mxu0 0
      %6032 = vmatprep.subr.bf16.mxu0 0
      %6033 = vmatpush1.bf16.msra.mxu0 0
      %6034 = vmatprep.subr.bf16.mxu0 0
      %6035 = vmatpush1.bf16.msra.mxu0 0
      %6036 = vmatprep.subr.bf16.mxu0 0
      %6037 = vmatpush1.bf16.msra.mxu0 0
      %6038 = vmatprep.subr.bf16.mxu0 0
      %6039 = vmatpush1.bf16.msra.mxu0 0
      %6040 = vmatprep.subr.bf16.mxu0 0
      %6041 = vmatpush1.bf16.msra.mxu0 0
      %6042 = vmatprep.subr.bf16.mxu0 0
      %6043 = vmatpush1.bf16.msra.mxu0 0
      %6044 = vmatprep.subr.bf16.mxu0 0
      %6045 = vmatpush1.bf16.msra.mxu0 0
      %6046 = vmatprep.subr.bf16.mxu0 0
      %6047 = vmatpush1.bf16.msra.mxu0 0
      %6048 = vmatprep.mubr.bf16.mxu0 0
      %6049 = vmatmul.mubr.bf16.gmra.mrb[0].mxu0 %v5999
      %v6050 = vpop.f32.mrb[0].mxu0
      %v6051 = vadd.f32 0.0, %v6050
      %v6052 = vpop.f32.mrb[0].mxu0
      %v6053 = vpop.f32.mrb[0].mxu0
      %v6054 = vadd.f32 0.0, %v6053
      %v6055 = vpop.f32.mrb[0].mxu0
      %6056 = vmatprep.mubr.bf16.mxu0 0
      %6057 = vmatmul.mubr.bf16.gmra.mrb[0].mxu0 %v6002
      %v6058 = vpop.f32.mrb[0].mxu0
      %v6059 = vadd.f32 0.0, %v6058
      %v6060 = vpop.f32.mrb[0].mxu0
      %v6061 = vpop.f32.mrb[0].mxu0
      %v6062 = vadd.f32 0.0, %v6061
      %v6063 = vpop.f32.mrb[0].mxu0
      %6064 = vmatprep.mubr.bf16.mxu0 0
      %6065 = vmatmul.mubr.bf16.gmra.mrb[0].mxu0 %v6005
      %v6066 = vpop.f32.mrb[0].mxu0
      %v6067 = vadd.f32 0.0, %v6066
      %v6068 = vpop.f32.mrb[0].mxu0
      %v6069 = vpop.f32.mrb[0].mxu0
      %v6070 = vadd.f32 0.0, %v6069
      %v6071 = vpop.f32.mrb[0].mxu0
      %6072 = vmatprep.mubr.bf16.mxu0 0
      %6073 = vmatmul.mubr.bf16.gmra.mrb[0].mxu0 %v6008
      %v6074 = vpop.f32.mrb[0].mxu0
      %v6075 = vadd.f32 0.0, %v6074
      %v6076 = vpop.f32.mrb[0].mxu0
      %v6077 = vpop.f32.mrb[0].mxu0
      %v6078 = vadd.f32 0.0, %v6077
      %v6079 = vpop.f32.mrb[0].mxu0
      %6080 = vmatprep.mubr.bf16.mxu0 0
      %6081 = vmatmul.mubr.bf16.gmra.mrb[0].mxu0 %v6011
      %v6082 = vpop.f32.mrb[0].mxu0
      %v6083 = vadd.f32 0.0, %v6082
      %v6084 = vpop.f32.mrb[0].mxu0
      %v6085 = vpop.f32.mrb[0].mxu0
      %v6086 = vadd.f32 0.0, %v6085
      %v6087 = vpop.f32.mrb[0].mxu0
      %6088 = vmatprep.mubr.bf16.mxu0 0
      %6089 = vmatmul.mubr.bf16.gmra.mrb[0].mxu0 %v6014
      %v6090 = vpop.f32.mrb[0].mxu0
      %v6091 = vadd.f32 0.0, %v6090
      %v6092 = vpop.f32.mrb[0].mxu0
      %v6093 = vpop.f32.mrb[0].mxu0
      %v6094 = vpop.f32.mrb[0].mxu0
      %6095 = vdwg.mxu0
      %v6096 = vadd.f32 %v5823, %v6051
      %v6097 = vadd.f32 %v5824, %v6054
      %v6098 = vadd.f32 %v5825, %v6059
      %v6099 = vadd.f32 %v5826, %v6062
      %v6100 = vadd.f32 %v5827, %v6067
      %v6101 = vadd.f32 %v5828, %v6070
      %v6102 = vadd.f32 %v5829, %v6075
      %v6103 = vadd.f32 %v5830, %v6078
      %v6104 = vadd.f32 %v5831, %v6083
      %v6105 = vadd.f32 %v5832, %v6086
      %v6106 = vadd.f32 %v5833, %v6091
      %s6107 = scalar_lea.vmem %s1, 640
      %v6108 = vld [vmem:[%s6107] sm:$0xf]
      %v6109 = vld [vmem:[%s6107 + $0x4] sm:$0xf]
      %v6110 = vld [vmem:[%s6107 + $0x8] sm:$0xf]
      %v6111 = vld [vmem:[%s6107 + $0xc] sm:$0xf]
      %v6112 = vld [vmem:[%s6107 + $0x10] sm:$0xf]
      %v6113 = vld [vmem:[%s6107 + $0x14] sm:$0xf]
      %v6114 = vld [vmem:[%s6107 + $0x18] sm:$0xf]
      %v6115 = vld [vmem:[%s6107 + $0x1c] sm:$0xf]
      %v6116 = vld [vmem:[%s5570] sm:$0xe]
      %v6117 = vld [vmem:[%s5570 + $0x28] sm:$0x3]
      %v6126 = vunpack.c.l.b16 %v6108
      %v6127 = vunpack.c.l.b16 %v6109
      %v6128 = vunpack.c.l.b16 %v6110
      %v6129 = vunpack.c.l.b16 %v6111
      %v6130 = vunpack.c.l.b16 %v6112
      %v6131 = vunpack.c.l.b16 %v6113
      %v6132 = vunpack.c.l.b16 %v6114
      %v6133 = vunpack.c.l.b16 %v6115
      %v6134 = vpack.c.b16 %v6127, %v6126
      %v6135 = vpack.c.b16 %v6129, %v6128
      %v6136 = vpack.c.b16 %v6131, %v6130
      %v6137 = vpack.c.b16 %v6133, %v6132
      %6142 = vmatprep.subr.bf16.mxu0 0
      %6143 = vmatpush1.bf16.msra.mxu0 %v6134
      %6144 = vmatprep.subr.bf16.mxu0 0
      %6145 = vmatpush1.bf16.msra.mxu0 %v6135
      %6146 = vmatprep.subr.bf16.mxu0 0
      %6147 = vmatpush1.bf16.msra.mxu0 %v6136
      %6148 = vmatprep.subr.bf16.mxu0 0
      %6149 = vmatpush1.bf16.msra.mxu0 %v6137
      %6150 = vmatprep.subr.bf16.mxu0 0
      %6151 = vmatpush1.bf16.msra.mxu0 0
      %6152 = vmatprep.subr.bf16.mxu0 0
      %6153 = vmatpush1.bf16.msra.mxu0 0
      %6154 = vmatprep.subr.bf16.mxu0 0
      %6155 = vmatpush1.bf16.msra.mxu0 0
      %6156 = vmatprep.subr.bf16.mxu0 0
      %6157 = vmatpush1.bf16.msra.mxu0 0
      %6158 = vmatprep.subr.bf16.mxu0 0
      %6159 = vmatpush1.bf16.msra.mxu0 0
      %6160 = vmatprep.subr.bf16.mxu0 0
      %6161 = vmatpush1.bf16.msra.mxu0 0
      %6162 = vmatprep.subr.bf16.mxu0 0
      %6163 = vmatpush1.bf16.msra.mxu0 0
      %6164 = vmatprep.subr.bf16.mxu0 0
      %6165 = vmatpush1.bf16.msra.mxu0 0
      %6166 = vmatprep.subr.bf16.mxu0 0
      %6167 = vmatpush1.bf16.msra.mxu0 0
      %6168 = vmatprep.subr.bf16.mxu0 0
      %6169 = vmatpush1.bf16.msra.mxu0 0
      %6170 = vmatprep.subr.bf16.mxu0 0
      %6171 = vmatpush1.bf16.msra.mxu0 0
      %6172 = vmatprep.subr.bf16.mxu0 0
      %6173 = vmatpush1.bf16.msra.mxu0 0
      %6174 = vmatprep.mubr.bf16.mxu0 0
      %6175 = vmatmul.mubr.bf16.gmra.mrb[0].mxu0 %v3796
      %v6176 = vpop.f32.mrb[0].mxu0
      %v6177 = vadd.f32 0.0, %v6176
      %v6178 = vpop.f32.mrb[0].mxu0
      %v6179 = vpop.f32.mrb[0].mxu0
      %v6180 = vadd.f32 0.0, %v6179
      %v6181 = vpop.f32.mrb[0].mxu0
      %6182 = vmatprep.mubr.bf16.mxu0 0
      %6183 = vmatmul.mubr.bf16.gmra.mrb[0].mxu0 %v3799
      %v6184 = vpop.f32.mrb[0].mxu0
      %v6185 = vadd.f32 0.0, %v6184
      %v6186 = vpop.f32.mrb[0].mxu0
      %v6187 = vpop.f32.mrb[0].mxu0
      %v6188 = vadd.f32 0.0, %v6187
      %v6189 = vpop.f32.mrb[0].mxu0
      %6190 = vmatprep.mubr.bf16.mxu0 0
      %6191 = vmatmul.mubr.bf16.gmra.mrb[0].mxu0 %v3802
      %v6192 = vpop.f32.mrb[0].mxu0
      %v6193 = vadd.f32 0.0, %v6192
      %v6194 = vpop.f32.mrb[0].mxu0
      %v6195 = vpop.f32.mrb[0].mxu0
      %v6196 = vadd.f32 0.0, %v6195
      %v6197 = vpop.f32.mrb[0].mxu0
      %6198 = vmatprep.mubr.bf16.mxu0 0
      %6199 = vmatmul.mubr.bf16.gmra.mrb[0].mxu0 %v3805
      %v6200 = vpop.f32.mrb[0].mxu0
      %v6201 = vadd.f32 0.0, %v6200
      %v6202 = vpop.f32.mrb[0].mxu0
      %v6203 = vpop.f32.mrb[0].mxu0
      %v6204 = vadd.f32 0.0, %v6203
      %v6205 = vpop.f32.mrb[0].mxu0
      %6206 = vmatprep.mubr.bf16.mxu0 0
      %6207 = vmatmul.mubr.bf16.gmra.mrb[0].mxu0 %v3808
      %v6208 = vpop.f32.mrb[0].mxu0
      %v6209 = vadd.f32 0.0, %v6208
      %v6210 = vpop.f32.mrb[0].mxu0
      %v6211 = vpop.f32.mrb[0].mxu0
      %v6212 = vadd.f32 0.0, %v6211
      %v6213 = vpop.f32.mrb[0].mxu0
      %6214 = vmatprep.mubr.bf16.mxu0 0
      %6215 = vmatmul.mubr.bf16.gmra.mrb[0].mxu0 %v3811
      %v6216 = vpop.f32.mrb[0].mxu0
      %v6217 = vadd.f32 0.0, %v6216
      %v6218 = vpop.f32.mrb[0].mxu0
      %v6219 = vpop.f32.mrb[0].mxu0
      %v6220 = vpop.f32.mrb[0].mxu0
      %6221 = vdwg.mxu0
      %v6222 = vadd.f32 %v5947, %v6177
      %v6223 = vadd.f32 %v5948, %v6180
      %v6224 = vadd.f32 %v5949, %v6185
      %v6225 = vadd.f32 %v5950, %v6188
      %v6226 = vadd.f32 %v5951, %v6193
      %v6227 = vadd.f32 %v5952, %v6196
      %v6228 = vadd.f32 %v5953, %v6201
      %v6229 = vadd.f32 %v5954, %v6204
      %v6230 = vadd.f32 %v5955, %v6209
      %v6231 = vadd.f32 %v5956, %v6212
      %v6232 = vadd.f32 %v5957, %v6217
      %v6235 = vunpack.c.l.b16 %v6116
      %v6236 = vunpack.c.l.b16 %v6117
      %v6237 = vpack.c.b16 %v5709, %v6235
      %v6238 = vpack.c.b16 %v6236, %v6236
      %v6239 = vrot.slane %v6237, 1
      %v6240 = vrot.slane %v5720, 1
      %v6241 = vsel %vm809, %v6239, %v6240
      %v6242 = vrot.slane %v5721, 1
      %v6243 = vsel %vm809, %v6240, %v6242
      %v6244 = vrot.slane %v5722, 1
      %v6245 = vsel %vm809, %v6242, %v6244
      %v6246 = vrot.slane %v5723, 1
      %v6247 = vsel %vm809, %v6244, %v6246
      %v6248 = vrot.slane %v6238, 1
      %v6249 = vsel %vm809, %v6246, %v6248
      %v6251 = vsel %vm311, %v6241, 0
      %v6254 = vsel %vm311, %v6243, 0
      %v6257 = vsel %vm311, %v6245, 0
      %v6260 = vsel %vm311, %v6247, 0
      %v6263 = vsel %vm311, %v6249, 0
      %v6266 = vsel %vm311, %v6248, 0
      %6268 = vmatprep.subr.bf16.mxu0 0
      %6269 = vmatpush1.bf16.msra.mxu0 %v6134
      %6270 = vmatprep.subr.bf16.mxu0 0
      %6271 = vmatpush1.bf16.msra.mxu0 %v6135
      %6272 = vmatprep.subr.bf16.mxu0 0
      %6273 = vmatpush1.bf16.msra.mxu0 %v6136
      %6274 = vmatprep.subr.bf16.mxu0 0
      %6275 = vmatpush1.bf16.msra.mxu0 %v6137
      %6276 = vmatprep.subr.bf16.mxu0 0
      %6277 = vmatpush1.bf16.msra.mxu0 0
      %6278 = vmatprep.subr.bf16.mxu0 0
      %6279 = vmatpush1.bf16.msra.mxu0 0
      %6280 = vmatprep.subr.bf16.mxu0 0
      %6281 = vmatpush1.bf16.msra.mxu0 0
      %6282 = vmatprep.subr.bf16.mxu0 0
      %6283 = vmatpush1.bf16.msra.mxu0 0
      %6284 = vmatprep.subr.bf16.mxu0 0
      %6285 = vmatpush1.bf16.msra.mxu0 0
      %6286 = vmatprep.subr.bf16.mxu0 0
      %6287 = vmatpush1.bf16.msra.mxu0 0
      %6288 = vmatprep.subr.bf16.mxu0 0
      %6289 = vmatpush1.bf16.msra.mxu0 0
      %6290 = vmatprep.subr.bf16.mxu0 0
      %6291 = vmatpush1.bf16.msra.mxu0 0
      %6292 = vmatprep.subr.bf16.mxu0 0
      %6293 = vmatpush1.bf16.msra.mxu0 0
      %6294 = vmatprep.subr.bf16.mxu0 0
      %6295 = vmatpush1.bf16.msra.mxu0 0
      %6296 = vmatprep.subr.bf16.mxu0 0
      %6297 = vmatpush1.bf16.msra.mxu0 0
      %6298 = vmatprep.subr.bf16.mxu0 0
      %6299 = vmatpush1.bf16.msra.mxu0 0
      %6300 = vmatprep.mubr.bf16.mxu0 0
      %6301 = vmatmul.mubr.bf16.gmra.mrb[0].mxu0 %v6251
      %v6302 = vpop.f32.mrb[0].mxu0
      %v6303 = vadd.f32 0.0, %v6302
      %v6304 = vpop.f32.mrb[0].mxu0
      %v6305 = vpop.f32.mrb[0].mxu0
      %v6306 = vadd.f32 0.0, %v6305
      %v6307 = vpop.f32.mrb[0].mxu0
      %6308 = vmatprep.mubr.bf16.mxu0 0
      %6309 = vmatmul.mubr.bf16.gmra.mrb[0].mxu0 %v6254
      %v6310 = vpop.f32.mrb[0].mxu0
      %v6311 = vadd.f32 0.0, %v6310
      %v6312 = vpop.f32.mrb[0].mxu0
      %v6313 = vpop.f32.mrb[0].mxu0
      %v6314 = vadd.f32 0.0, %v6313
      %v6315 = vpop.f32.mrb[0].mxu0
      %6316 = vmatprep.mubr.bf16.mxu0 0
      %6317 = vmatmul.mubr.bf16.gmra.mrb[0].mxu0 %v6257
      %v6318 = vpop.f32.mrb[0].mxu0
      %v6319 = vadd.f32 0.0, %v6318
      %v6320 = vpop.f32.mrb[0].mxu0
      %v6321 = vpop.f32.mrb[0].mxu0
      %v6322 = vadd.f32 0.0, %v6321
      %v6323 = vpop.f32.mrb[0].mxu0
      %6324 = vmatprep.mubr.bf16.mxu0 0
      %6325 = vmatmul.mubr.bf16.gmra.mrb[0].mxu0 %v6260
      %v6326 = vpop.f32.mrb[0].mxu0
      %v6327 = vadd.f32 0.0, %v6326
      %v6328 = vpop.f32.mrb[0].mxu0
      %v6329 = vpop.f32.mrb[0].mxu0
      %v6330 = vadd.f32 0.0, %v6329
      %v6331 = vpop.f32.mrb[0].mxu0
      %6332 = vmatprep.mubr.bf16.mxu0 0
      %6333 = vmatmul.mubr.bf16.gmra.mrb[0].mxu0 %v6263
      %v6334 = vpop.f32.mrb[0].mxu0
      %v6335 = vadd.f32 0.0, %v6334
      %v6336 = vpop.f32.mrb[0].mxu0
      %v6337 = vpop.f32.mrb[0].mxu0
      %v6338 = vadd.f32 0.0, %v6337
      %v6339 = vpop.f32.mrb[0].mxu0
      %6340 = vmatprep.mubr.bf16.mxu0 0
      %6341 = vmatmul.mubr.bf16.gmra.mrb[0].mxu0 %v6266
      %v6342 = vpop.f32.mrb[0].mxu0
      %v6343 = vadd.f32 0.0, %v6342
      %v6344 = vpop.f32.mrb[0].mxu0
      %v6345 = vpop.f32.mrb[0].mxu0
      %v6346 = vpop.f32.mrb[0].mxu0
      %6347 = vdwg.mxu0
      %v6348 = vadd.f32 %v6096, %v6303
      %v6349 = vadd.f32 %v6097, %v6306
      %v6350 = vadd.f32 %v6098, %v6311
      %v6351 = vadd.f32 %v6099, %v6314
      %v6352 = vadd.f32 %v6100, %v6319
      %v6353 = vadd.f32 %v6101, %v6322
      %v6354 = vadd.f32 %v6102, %v6327
      %v6355 = vadd.f32 %v6103, %v6330
      %v6356 = vadd.f32 %v6104, %v6335
      %v6357 = vadd.f32 %v6105, %v6338
      %v6358 = vadd.f32 %v6106, %v6343
      %s6359 = scalar_lea.vmem %s1, 672
      %v6360 = vld [vmem:[%s6359] sm:$0xf]
      %v6361 = vld [vmem:[%s6359 + $0x4] sm:$0xf]
      %v6362 = vld [vmem:[%s6359 + $0x8] sm:$0xf]
      %v6363 = vld [vmem:[%s6359 + $0xc] sm:$0xf]
      %v6364 = vld [vmem:[%s6359 + $0x10] sm:$0xf]
      %v6365 = vld [vmem:[%s6359 + $0x14] sm:$0xf]
      %v6366 = vld [vmem:[%s6359 + $0x18] sm:$0xf]
      %v6367 = vld [vmem:[%s6359 + $0x1c] sm:$0xf]
      %v6368 = vld [vmem:[%s5570 + $0x4] sm:$0xf]
      %v6369 = vld [vmem:[%s5570 + $0x8] sm:$0xf]
      %v6370 = vld [vmem:[%s5570 + $0xc] sm:$0xf]
      %v6371 = vld [vmem:[%s5570 + $0x10] sm:$0xf]
      %v6372 = vld [vmem:[%s5570 + $0x14] sm:$0xf]
      %v6373 = vld [vmem:[%s5570 + $0x18] sm:$0xf]
      %v6374 = vld [vmem:[%s5570 + $0x1c] sm:$0xf]
      %v6375 = vld [vmem:[%s5570 + $0x20] sm:$0xf]
      %v6376 = vld [vmem:[%s5570 + $0x24] sm:$0xf]
      %v6377 = vld [vmem:[%s5570 + $0x28] sm:$0xf]
      %v6378 = vld [vmem:[%s5570 + $0x2c] sm:$0x1]
      %v6387 = vunpack.c.l.b16 %v6360
      %v6388 = vunpack.c.l.b16 %v6361
      %v6389 = vunpack.c.l.b16 %v6362
      %v6390 = vunpack.c.l.b16 %v6363
      %v6391 = vunpack.c.l.b16 %v6364
      %v6392 = vunpack.c.l.b16 %v6365
      %v6393 = vunpack.c.l.b16 %v6366
      %v6394 = vunpack.c.l.b16 %v6367
      %v6395 = vpack.c.b16 %v6388, %v6387
      %v6396 = vpack.c.b16 %v6390, %v6389
      %v6397 = vpack.c.b16 %v6392, %v6391
      %v6398 = vpack.c.b16 %v6394, %v6393
      %6403 = vmatprep.subr.bf16.mxu0 0
      %6404 = vmatpush1.bf16.msra.mxu0 %v6395
      %6405 = vmatprep.subr.bf16.mxu0 0
      %6406 = vmatpush1.bf16.msra.mxu0 %v6396
      %6407 = vmatprep.subr.bf16.mxu0 0
      %6408 = vmatpush1.bf16.msra.mxu0 %v6397
      %6409 = vmatprep.subr.bf16.mxu0 0
      %6410 = vmatpush1.bf16.msra.mxu0 %v6398
      %6411 = vmatprep.subr.bf16.mxu0 0
      %6412 = vmatpush1.bf16.msra.mxu0 0
      %6413 = vmatprep.subr.bf16.mxu0 0
      %6414 = vmatpush1.bf16.msra.mxu0 0
      %6415 = vmatprep.subr.bf16.mxu0 0
      %6416 = vmatpush1.bf16.msra.mxu0 0
      %6417 = vmatprep.subr.bf16.mxu0 0
      %6418 = vmatpush1.bf16.msra.mxu0 0
      %6419 = vmatprep.subr.bf16.mxu0 0
      %6420 = vmatpush1.bf16.msra.mxu0 0
      %6421 = vmatprep.subr.bf16.mxu0 0
      %6422 = vmatpush1.bf16.msra.mxu0 0
      %6423 = vmatprep.subr.bf16.mxu0 0
      %6424 = vmatpush1.bf16.msra.mxu0 0
      %6425 = vmatprep.subr.bf16.mxu0 0
      %6426 = vmatpush1.bf16.msra.mxu0 0
      %6427 = vmatprep.subr.bf16.mxu0 0
      %6428 = vmatpush1.bf16.msra.mxu0 0
      %6429 = vmatprep.subr.bf16.mxu0 0
      %6430 = vmatpush1.bf16.msra.mxu0 0
      %6431 = vmatprep.subr.bf16.mxu0 0
      %6432 = vmatpush1.bf16.msra.mxu0 0
      %6433 = vmatprep.subr.bf16.mxu0 0
      %6434 = vmatpush1.bf16.msra.mxu0 0
      %6435 = vmatprep.mubr.bf16.mxu0 0
      %6436 = vmatmul.mubr.bf16.gmra.mrb[0].mxu0 %v4114
      %v6437 = vpop.f32.mrb[0].mxu0
      %v6438 = vadd.f32 0.0, %v6437
      %v6439 = vpop.f32.mrb[0].mxu0
      %v6440 = vpop.f32.mrb[0].mxu0
      %v6441 = vadd.f32 0.0, %v6440
      %v6442 = vpop.f32.mrb[0].mxu0
      %6443 = vmatprep.mubr.bf16.mxu0 0
      %6444 = vmatmul.mubr.bf16.gmra.mrb[0].mxu0 %v4117
      %v6445 = vpop.f32.mrb[0].mxu0
      %v6446 = vadd.f32 0.0, %v6445
      %v6447 = vpop.f32.mrb[0].mxu0
      %v6448 = vpop.f32.mrb[0].mxu0
      %v6449 = vadd.f32 0.0, %v6448
      %v6450 = vpop.f32.mrb[0].mxu0
      %6451 = vmatprep.mubr.bf16.mxu0 0
      %6452 = vmatmul.mubr.bf16.gmra.mrb[0].mxu0 %v4120
      %v6453 = vpop.f32.mrb[0].mxu0
      %v6454 = vadd.f32 0.0, %v6453
      %v6455 = vpop.f32.mrb[0].mxu0
      %v6456 = vpop.f32.mrb[0].mxu0
      %v6457 = vadd.f32 0.0, %v6456
      %v6458 = vpop.f32.mrb[0].mxu0
      %6459 = vmatprep.mubr.bf16.mxu0 0
      %6460 = vmatmul.mubr.bf16.gmra.mrb[0].mxu0 %v4123
      %v6461 = vpop.f32.mrb[0].mxu0
      %v6462 = vadd.f32 0.0, %v6461
      %v6463 = vpop.f32.mrb[0].mxu0
      %v6464 = vpop.f32.mrb[0].mxu0
      %v6465 = vadd.f32 0.0, %v6464
      %v6466 = vpop.f32.mrb[0].mxu0
      %6467 = vmatprep.mubr.bf16.mxu0 0
      %6468 = vmatmul.mubr.bf16.gmra.mrb[0].mxu0 %v4126
      %v6469 = vpop.f32.mrb[0].mxu0
      %v6470 = vadd.f32 0.0, %v6469
      %v6471 = vpop.f32.mrb[0].mxu0
      %v6472 = vpop.f32.mrb[0].mxu0
      %v6473 = vadd.f32 0.0, %v6472
      %v6474 = vpop.f32.mrb[0].mxu0
      %6475 = vmatprep.mubr.bf16.mxu0 0
      %6476 = vmatmul.mubr.bf16.gmra.mrb[0].mxu0 %v4129
      %v6477 = vpop.f32.mrb[0].mxu0
      %v6478 = vadd.f32 0.0, %v6477
      %v6479 = vpop.f32.mrb[0].mxu0
      %v6480 = vpop.f32.mrb[0].mxu0
      %v6481 = vpop.f32.mrb[0].mxu0
      %6482 = vdwg.mxu0
      %v6483 = vadd.f32 %v6222, %v6438
      %v6484 = vadd.f32 %v6223, %v6441
      %v6485 = vadd.f32 %v6224, %v6446
      %v6486 = vadd.f32 %v6225, %v6449
      %v6487 = vadd.f32 %v6226, %v6454
      %v6488 = vadd.f32 %v6227, %v6457
      %v6489 = vadd.f32 %v6228, %v6462
      %v6490 = vadd.f32 %v6229, %v6465
      %v6491 = vadd.f32 %v6230, %v6470
      %v6492 = vadd.f32 %v6231, %v6473
      %v6493 = vadd.f32 %v6232, %v6478
      %v6505 = vunpack.c.l.b16 %v6368
      %v6506 = vunpack.c.l.b16 %v6369
      %v6507 = vunpack.c.l.b16 %v6370
      %v6508 = vunpack.c.l.b16 %v6371
      %v6509 = vunpack.c.l.b16 %v6372
      %v6510 = vunpack.c.l.b16 %v6373
      %v6511 = vunpack.c.l.b16 %v6374
      %v6512 = vunpack.c.l.b16 %v6375
      %v6513 = vunpack.c.l.b16 %v6376
      %v6514 = vunpack.c.l.b16 %v6377
      %v6515 = vunpack.c.l.b16 %v6378
      %v6516 = vpack.c.b16 %v6506, %v6505
      %v6517 = vpack.c.b16 %v6508, %v6507
      %v6518 = vpack.c.b16 %v6510, %v6509
      %v6519 = vpack.c.b16 %v6512, %v6511
      %v6520 = vpack.c.b16 %v6514, %v6513
      %v6521 = vpack.c.b16 %v6515, %v6515
      %v6523 = vshrl.u32 %v6516, 16
      %v6525 = vshll.u32 %v6516, 16
      %v6527 = vrot.slane %v6525, 1
      %v6528 = vor.u32 %v6523, %v6527
      %v6530 = vshll.u32 %v6517, 16
      %v6532 = vrot.slane %v6530, 1
      %v6533 = vsel %vm240, %v6528, %v6532
      %v6534 = vshrl.u32 %v6517, 16
      %v6536 = vor.u32 %v6534, %v6532
      %v6538 = vshll.u32 %v6518, 16
      %v6540 = vrot.slane %v6538, 1
      %v6541 = vsel %vm240, %v6536, %v6540
      %v6542 = vshrl.u32 %v6518, 16
      %v6544 = vor.u32 %v6542, %v6540
      %v6546 = vshll.u32 %v6519, 16
      %v6548 = vrot.slane %v6546, 1
      %v6549 = vsel %vm240, %v6544, %v6548
      %v6550 = vshrl.u32 %v6519, 16
      %v6552 = vor.u32 %v6550, %v6548
      %v6554 = vshll.u32 %v6520, 16
      %v6556 = vrot.slane %v6554, 1
      %v6557 = vsel %vm240, %v6552, %v6556
      %v6558 = vshrl.u32 %v6520, 16
      %v6560 = vor.u32 %v6558, %v6556
      %v6562 = vshll.u32 %v6521, 16
      %v6564 = vrot.slane %v6562, 1
      %v6565 = vsel %vm240, %v6560, %v6564
      %v6566 = vshrl.u32 %v6521, 16
      %v6569 = vsel %vm311, %v6533, 0
      %v6572 = vsel %vm311, %v6541, 0
      %v6575 = vsel %vm311, %v6549, 0
      %v6578 = vsel %vm311, %v6557, 0
      %v6581 = vsel %vm311, %v6565, 0
      %v6584 = vsel %vm311, %v6566, 0
      %6586 = vmatprep.subr.bf16.mxu0 0
      %6587 = vmatpush1.bf16.msra.mxu0 %v6395
      %6588 = vmatprep.subr.bf16.mxu0 0
      %6589 = vmatpush1.bf16.msra.mxu0 %v6396
      %6590 = vmatprep.subr.bf16.mxu0 0
      %6591 = vmatpush1.bf16.msra.mxu0 %v6397
      %6592 = vmatprep.subr.bf16.mxu0 0
      %6593 = vmatpush1.bf16.msra.mxu0 %v6398
      %6594 = vmatprep.subr.bf16.mxu0 0
      %6595 = vmatpush1.bf16.msra.mxu0 0
      %6596 = vmatprep.subr.bf16.mxu0 0
      %6597 = vmatpush1.bf16.msra.mxu0 0
      %6598 = vmatprep.subr.bf16.mxu0 0
      %6599 = vmatpush1.bf16.msra.mxu0 0
      %6600 = vmatprep.subr.bf16.mxu0 0
      %6601 = vmatpush1.bf16.msra.mxu0 0
      %6602 = vmatprep.subr.bf16.mxu0 0
      %6603 = vmatpush1.bf16.msra.mxu0 0
      %6604 = vmatprep.subr.bf16.mxu0 0
      %6605 = vmatpush1.bf16.msra.mxu0 0
      %6606 = vmatprep.subr.bf16.mxu0 0
      %6607 = vmatpush1.bf16.msra.mxu0 0
      %6608 = vmatprep.subr.bf16.mxu0 0
      %6609 = vmatpush1.bf16.msra.mxu0 0
      %6610 = vmatprep.subr.bf16.mxu0 0
      %6611 = vmatpush1.bf16.msra.mxu0 0
      %6612 = vmatprep.subr.bf16.mxu0 0
      %6613 = vmatpush1.bf16.msra.mxu0 0
      %6614 = vmatprep.subr.bf16.mxu0 0
      %6615 = vmatpush1.bf16.msra.mxu0 0
      %6616 = vmatprep.subr.bf16.mxu0 0
      %6617 = vmatpush1.bf16.msra.mxu0 0
      %6618 = vmatprep.mubr.bf16.mxu0 0
      %6619 = vmatmul.mubr.bf16.gmra.mrb[0].mxu0 %v6569
      %v6620 = vpop.f32.mrb[0].mxu0
      %v6621 = vadd.f32 0.0, %v6620
      %v6622 = vpop.f32.mrb[0].mxu0
      %v6623 = vpop.f32.mrb[0].mxu0
      %v6624 = vadd.f32 0.0, %v6623
      %v6625 = vpop.f32.mrb[0].mxu0
      %6626 = vmatprep.mubr.bf16.mxu0 0
      %6627 = vmatmul.mubr.bf16.gmra.mrb[0].mxu0 %v6572
      %v6628 = vpop.f32.mrb[0].mxu0
      %v6629 = vadd.f32 0.0, %v6628
      %v6630 = vpop.f32.mrb[0].mxu0
      %v6631 = vpop.f32.mrb[0].mxu0
      %v6632 = vadd.f32 0.0, %v6631
      %v6633 = vpop.f32.mrb[0].mxu0
      %6634 = vmatprep.mubr.bf16.mxu0 0
      %6635 = vmatmul.mubr.bf16.gmra.mrb[0].mxu0 %v6575
      %v6636 = vpop.f32.mrb[0].mxu0
      %v6637 = vadd.f32 0.0, %v6636
      %v6638 = vpop.f32.mrb[0].mxu0
      %v6639 = vpop.f32.mrb[0].mxu0
      %v6640 = vadd.f32 0.0, %v6639
      %v6641 = vpop.f32.mrb[0].mxu0
      %6642 = vmatprep.mubr.bf16.mxu0 0
      %6643 = vmatmul.mubr.bf16.gmra.mrb[0].mxu0 %v6578
      %v6644 = vpop.f32.mrb[0].mxu0
      %v6645 = vadd.f32 0.0, %v6644
      %v6646 = vpop.f32.mrb[0].mxu0
      %v6647 = vpop.f32.mrb[0].mxu0
      %v6648 = vadd.f32 0.0, %v6647
      %v6649 = vpop.f32.mrb[0].mxu0
      %6650 = vmatprep.mubr.bf16.mxu0 0
      %6651 = vmatmul.mubr.bf16.gmra.mrb[0].mxu0 %v6581
      %v6652 = vpop.f32.mrb[0].mxu0
      %v6653 = vadd.f32 0.0, %v6652
      %v6654 = vpop.f32.mrb[0].mxu0
      %v6655 = vpop.f32.mrb[0].mxu0
      %v6656 = vadd.f32 0.0, %v6655
      %v6657 = vpop.f32.mrb[0].mxu0
      %6658 = vmatprep.mubr.bf16.mxu0 0
      %6659 = vmatmul.mubr.bf16.gmra.mrb[0].mxu0 %v6584
      %v6660 = vpop.f32.mrb[0].mxu0
      %v6661 = vadd.f32 0.0, %v6660
      %v6662 = vpop.f32.mrb[0].mxu0
      %v6663 = vpop.f32.mrb[0].mxu0
      %v6664 = vpop.f32.mrb[0].mxu0
      %6665 = vdwg.mxu0
      %v6666 = vadd.f32 %v6348, %v6621
      %v6667 = vadd.f32 %v6349, %v6624
      %v6668 = vadd.f32 %v6350, %v6629
      %v6669 = vadd.f32 %v6351, %v6632
      %v6670 = vadd.f32 %v6352, %v6637
      %v6671 = vadd.f32 %v6353, %v6640
      %v6672 = vadd.f32 %v6354, %v6645
      %v6673 = vadd.f32 %v6355, %v6648
      %v6674 = vadd.f32 %v6356, %v6653
      %v6675 = vadd.f32 %v6357, %v6656
      %v6676 = vadd.f32 %v6358, %v6661
      %s6677 = scalar_lea.vmem %s1, 704
      %v6678 = vld [vmem:[%s6677] sm:$0xf]
      %v6679 = vld [vmem:[%s6677 + $0x4] sm:$0xf]
      %v6680 = vld [vmem:[%s6677 + $0x8] sm:$0xf]
      %v6681 = vld [vmem:[%s6677 + $0xc] sm:$0xf]
      %v6682 = vld [vmem:[%s6677 + $0x10] sm:$0xf]
      %v6683 = vld [vmem:[%s6677 + $0x14] sm:$0xf]
      %v6684 = vld [vmem:[%s6677 + $0x18] sm:$0xf]
      %v6685 = vld [vmem:[%s6677 + $0x1c] sm:$0xf]
      %v6686 = vld [vmem:[%s5570 + $0x4] sm:$0xe]
      %v6687 = vld [vmem:[%s5570 + $0x2c] sm:$0x3]
      %v6696 = vunpack.c.l.b16 %v6678
      %v6697 = vunpack.c.l.b16 %v6679
      %v6698 = vunpack.c.l.b16 %v6680
      %v6699 = vunpack.c.l.b16 %v6681
      %v6700 = vunpack.c.l.b16 %v6682
      %v6701 = vunpack.c.l.b16 %v6683
      %v6702 = vunpack.c.l.b16 %v6684
      %v6703 = vunpack.c.l.b16 %v6685
      %v6704 = vpack.c.b16 %v6697, %v6696
      %v6705 = vpack.c.b16 %v6699, %v6698
      %v6706 = vpack.c.b16 %v6701, %v6700
      %v6707 = vpack.c.b16 %v6703, %v6702
      %6712 = vmatprep.subr.bf16.mxu0 0
      %6713 = vmatpush1.bf16.msra.mxu0 %v6704
      %6714 = vmatprep.subr.bf16.mxu0 0
      %6715 = vmatpush1.bf16.msra.mxu0 %v6705
      %6716 = vmatprep.subr.bf16.mxu0 0
      %6717 = vmatpush1.bf16.msra.mxu0 %v6706
      %6718 = vmatprep.subr.bf16.mxu0 0
      %6719 = vmatpush1.bf16.msra.mxu0 %v6707
      %6720 = vmatprep.subr.bf16.mxu0 0
      %6721 = vmatpush1.bf16.msra.mxu0 0
      %6722 = vmatprep.subr.bf16.mxu0 0
      %6723 = vmatpush1.bf16.msra.mxu0 0
      %6724 = vmatprep.subr.bf16.mxu0 0
      %6725 = vmatpush1.bf16.msra.mxu0 0
      %6726 = vmatprep.subr.bf16.mxu0 0
      %6727 = vmatpush1.bf16.msra.mxu0 0
      %6728 = vmatprep.subr.bf16.mxu0 0
      %6729 = vmatpush1.bf16.msra.mxu0 0
      %6730 = vmatprep.subr.bf16.mxu0 0
      %6731 = vmatpush1.bf16.msra.mxu0 0
      %6732 = vmatprep.subr.bf16.mxu0 0
      %6733 = vmatpush1.bf16.msra.mxu0 0
      %6734 = vmatprep.subr.bf16.mxu0 0
      %6735 = vmatpush1.bf16.msra.mxu0 0
      %6736 = vmatprep.subr.bf16.mxu0 0
      %6737 = vmatpush1.bf16.msra.mxu0 0
      %6738 = vmatprep.subr.bf16.mxu0 0
      %6739 = vmatpush1.bf16.msra.mxu0 0
      %6740 = vmatprep.subr.bf16.mxu0 0
      %6741 = vmatpush1.bf16.msra.mxu0 0
      %6742 = vmatprep.subr.bf16.mxu0 0
      %6743 = vmatpush1.bf16.msra.mxu0 0
      %6744 = vmatprep.mubr.bf16.mxu0 0
      %6745 = vmatmul.mubr.bf16.gmra.mrb[0].mxu0 %v4366
      %v6746 = vpop.f32.mrb[0].mxu0
      %v6747 = vadd.f32 0.0, %v6746
      %v6748 = vpop.f32.mrb[0].mxu0
      %v6749 = vpop.f32.mrb[0].mxu0
      %v6750 = vadd.f32 0.0, %v6749
      %v6751 = vpop.f32.mrb[0].mxu0
      %6752 = vmatprep.mubr.bf16.mxu0 0
      %6753 = vmatmul.mubr.bf16.gmra.mrb[0].mxu0 %v4369
      %v6754 = vpop.f32.mrb[0].mxu0
      %v6755 = vadd.f32 0.0, %v6754
      %v6756 = vpop.f32.mrb[0].mxu0
      %v6757 = vpop.f32.mrb[0].mxu0
      %v6758 = vadd.f32 0.0, %v6757
      %v6759 = vpop.f32.mrb[0].mxu0
      %6760 = vmatprep.mubr.bf16.mxu0 0
      %6761 = vmatmul.mubr.bf16.gmra.mrb[0].mxu0 %v4372
      %v6762 = vpop.f32.mrb[0].mxu0
      %v6763 = vadd.f32 0.0, %v6762
      %v6764 = vpop.f32.mrb[0].mxu0
      %v6765 = vpop.f32.mrb[0].mxu0
      %v6766 = vadd.f32 0.0, %v6765
      %v6767 = vpop.f32.mrb[0].mxu0
      %6768 = vmatprep.mubr.bf16.mxu0 0
      %6769 = vmatmul.mubr.bf16.gmra.mrb[0].mxu0 %v4375
      %v6770 = vpop.f32.mrb[0].mxu0
      %v6771 = vadd.f32 0.0, %v6770
      %v6772 = vpop.f32.mrb[0].mxu0
      %v6773 = vpop.f32.mrb[0].mxu0
      %v6774 = vadd.f32 0.0, %v6773
      %v6775 = vpop.f32.mrb[0].mxu0
      %6776 = vmatprep.mubr.bf16.mxu0 0
      %6777 = vmatmul.mubr.bf16.gmra.mrb[0].mxu0 %v4378
      %v6778 = vpop.f32.mrb[0].mxu0
      %v6779 = vadd.f32 0.0, %v6778
      %v6780 = vpop.f32.mrb[0].mxu0
      %v6781 = vpop.f32.mrb[0].mxu0
      %v6782 = vadd.f32 0.0, %v6781
      %v6783 = vpop.f32.mrb[0].mxu0
      %6784 = vmatprep.mubr.bf16.mxu0 0
      %6785 = vmatmul.mubr.bf16.gmra.mrb[0].mxu0 %v4381
      %v6786 = vpop.f32.mrb[0].mxu0
      %v6787 = vadd.f32 0.0, %v6786
      %v6788 = vpop.f32.mrb[0].mxu0
      %v6789 = vpop.f32.mrb[0].mxu0
      %v6790 = vpop.f32.mrb[0].mxu0
      %6791 = vdwg.mxu0
      %v6792 = vadd.f32 %v6483, %v6747
      %v6793 = vadd.f32 %v6484, %v6750
      %v6794 = vadd.f32 %v6485, %v6755
      %v6795 = vadd.f32 %v6486, %v6758
      %v6796 = vadd.f32 %v6487, %v6763
      %v6797 = vadd.f32 %v6488, %v6766
      %v6798 = vadd.f32 %v6489, %v6771
      %v6799 = vadd.f32 %v6490, %v6774
      %v6800 = vadd.f32 %v6491, %v6779
      %v6801 = vadd.f32 %v6492, %v6782
      %v6802 = vadd.f32 %v6493, %v6787
      %v6805 = vunpack.c.l.b16 %v6686
      %v6806 = vunpack.c.l.b16 %v6687
      %v6807 = vpack.c.b16 %v6506, %v6805
      %v6808 = vpack.c.b16 %v6806, %v6806
      %v6809 = vrot.slane %v6807, 1
      %v6810 = vrot.slane %v6517, 1
      %v6811 = vsel %vm809, %v6809, %v6810
      %v6812 = vrot.slane %v6518, 1
      %v6813 = vsel %vm809, %v6810, %v6812
      %v6814 = vrot.slane %v6519, 1
      %v6815 = vsel %vm809, %v6812, %v6814
      %v6816 = vrot.slane %v6520, 1
      %v6817 = vsel %vm809, %v6814, %v6816
      %v6818 = vrot.slane %v6808, 1
      %v6819 = vsel %vm809, %v6816, %v6818
      %v6821 = vsel %vm311, %v6811, 0
      %v6824 = vsel %vm311, %v6813, 0
      %v6827 = vsel %vm311, %v6815, 0
      %v6830 = vsel %vm311, %v6817, 0
      %v6833 = vsel %vm311, %v6819, 0
      %v6836 = vsel %vm311, %v6818, 0
      %6838 = vmatprep.subr.bf16.mxu0 0
      %6839 = vmatpush1.bf16.msra.mxu0 %v6704
      %6840 = vmatprep.subr.bf16.mxu0 0
      %6841 = vmatpush1.bf16.msra.mxu0 %v6705
      %6842 = vmatprep.subr.bf16.mxu0 0
      %6843 = vmatpush1.bf16.msra.mxu0 %v6706
      %6844 = vmatprep.subr.bf16.mxu0 0
      %6845 = vmatpush1.bf16.msra.mxu0 %v6707
      %6846 = vmatprep.subr.bf16.mxu0 0
      %6847 = vmatpush1.bf16.msra.mxu0 0
      %6848 = vmatprep.subr.bf16.mxu0 0
      %6849 = vmatpush1.bf16.msra.mxu0 0
      %6850 = vmatprep.subr.bf16.mxu0 0
      %6851 = vmatpush1.bf16.msra.mxu0 0
      %6852 = vmatprep.subr.bf16.mxu0 0
      %6853 = vmatpush1.bf16.msra.mxu0 0
      %6854 = vmatprep.subr.bf16.mxu0 0
      %6855 = vmatpush1.bf16.msra.mxu0 0
      %6856 = vmatprep.subr.bf16.mxu0 0
      %6857 = vmatpush1.bf16.msra.mxu0 0
      %6858 = vmatprep.subr.bf16.mxu0 0
      %6859 = vmatpush1.bf16.msra.mxu0 0
      %6860 = vmatprep.subr.bf16.mxu0 0
      %6861 = vmatpush1.bf16.msra.mxu0 0
      %6862 = vmatprep.subr.bf16.mxu0 0
      %6863 = vmatpush1.bf16.msra.mxu0 0
      %6864 = vmatprep.subr.bf16.mxu0 0
      %6865 = vmatpush1.bf16.msra.mxu0 0
      %6866 = vmatprep.subr.bf16.mxu0 0
      %6867 = vmatpush1.bf16.msra.mxu0 0
      %6868 = vmatprep.subr.bf16.mxu0 0
      %6869 = vmatpush1.bf16.msra.mxu0 0
      %6870 = vmatprep.mubr.bf16.mxu0 0
      %6871 = vmatmul.mubr.bf16.gmra.mrb[0].mxu0 %v6821
      %v6872 = vpop.f32.mrb[0].mxu0
      %v6873 = vadd.f32 0.0, %v6872
      %v6874 = vpop.f32.mrb[0].mxu0
      %v6875 = vpop.f32.mrb[0].mxu0
      %v6876 = vadd.f32 0.0, %v6875
      %v6877 = vpop.f32.mrb[0].mxu0
      %6878 = vmatprep.mubr.bf16.mxu0 0
      %6879 = vmatmul.mubr.bf16.gmra.mrb[0].mxu0 %v6824
      %v6880 = vpop.f32.mrb[0].mxu0
      %v6881 = vadd.f32 0.0, %v6880
      %v6882 = vpop.f32.mrb[0].mxu0
      %v6883 = vpop.f32.mrb[0].mxu0
      %v6884 = vadd.f32 0.0, %v6883
      %v6885 = vpop.f32.mrb[0].mxu0
      %6886 = vmatprep.mubr.bf16.mxu0 0
      %6887 = vmatmul.mubr.bf16.gmra.mrb[0].mxu0 %v6827
      %v6888 = vpop.f32.mrb[0].mxu0
      %v6889 = vadd.f32 0.0, %v6888
      %v6890 = vpop.f32.mrb[0].mxu0
      %v6891 = vpop.f32.mrb[0].mxu0
      %v6892 = vadd.f32 0.0, %v6891
      %v6893 = vpop.f32.mrb[0].mxu0
      %6894 = vmatprep.mubr.bf16.mxu0 0
      %6895 = vmatmul.mubr.bf16.gmra.mrb[0].mxu0 %v6830
      %v6896 = vpop.f32.mrb[0].mxu0
      %v6897 = vadd.f32 0.0, %v6896
      %v6898 = vpop.f32.mrb[0].mxu0
      %v6899 = vpop.f32.mrb[0].mxu0
      %v6900 = vadd.f32 0.0, %v6899
      %v6901 = vpop.f32.mrb[0].mxu0
      %6902 = vmatprep.mubr.bf16.mxu0 0
      %6903 = vmatmul.mubr.bf16.gmra.mrb[0].mxu0 %v6833
      %v6904 = vpop.f32.mrb[0].mxu0
      %v6905 = vadd.f32 0.0, %v6904
      %v6906 = vpop.f32.mrb[0].mxu0
      %v6907 = vpop.f32.mrb[0].mxu0
      %v6908 = vadd.f32 0.0, %v6907
      %v6909 = vpop.f32.mrb[0].mxu0
      %6910 = vmatprep.mubr.bf16.mxu0 0
      %6911 = vmatmul.mubr.bf16.gmra.mrb[0].mxu0 %v6836
      %v6912 = vpop.f32.mrb[0].mxu0
      %v6913 = vadd.f32 0.0, %v6912
      %v6914 = vpop.f32.mrb[0].mxu0
      %v6915 = vpop.f32.mrb[0].mxu0
      %v6916 = vpop.f32.mrb[0].mxu0
      %6917 = vdwg.mxu0
      %v6918 = vadd.f32 %v6666, %v6873
      %v6919 = vadd.f32 %v6667, %v6876
      %v6920 = vadd.f32 %v6668, %v6881
      %v6921 = vadd.f32 %v6669, %v6884
      %v6922 = vadd.f32 %v6670, %v6889
      %v6923 = vadd.f32 %v6671, %v6892
      %v6924 = vadd.f32 %v6672, %v6897
      %v6925 = vadd.f32 %v6673, %v6900
      %v6926 = vadd.f32 %v6674, %v6905
      %v6927 = vadd.f32 %v6675, %v6908
      %v6928 = vadd.f32 %v6676, %v6913
      %s6929 = scalar_lea.vmem %s1, 736
      %v6930 = vld [vmem:[%s6929] sm:$0xf]
      %v6931 = vld [vmem:[%s6929 + $0x4] sm:$0xf]
      %v6932 = vld [vmem:[%s6929 + $0x8] sm:$0xf]
      %v6933 = vld [vmem:[%s6929 + $0xc] sm:$0xf]
      %v6934 = vld [vmem:[%s6929 + $0x10] sm:$0xf]
      %v6935 = vld [vmem:[%s6929 + $0x14] sm:$0xf]
      %v6936 = vld [vmem:[%s6929 + $0x18] sm:$0xf]
      %v6937 = vld [vmem:[%s6929 + $0x1c] sm:$0xf]
      %v6946 = vunpack.c.l.b16 %v6930
      %v6947 = vunpack.c.l.b16 %v6931
      %v6948 = vunpack.c.l.b16 %v6932
      %v6949 = vunpack.c.l.b16 %v6933
      %v6950 = vunpack.c.l.b16 %v6934
      %v6951 = vunpack.c.l.b16 %v6935
      %v6952 = vunpack.c.l.b16 %v6936
      %v6953 = vunpack.c.l.b16 %v6937
      %v6954 = vpack.c.b16 %v6947, %v6946
      %v6955 = vpack.c.b16 %v6949, %v6948
      %v6956 = vpack.c.b16 %v6951, %v6950
      %v6957 = vpack.c.b16 %v6953, %v6952
      %6962 = vmatprep.subr.bf16.mxu0 0
      %6963 = vmatpush1.bf16.msra.mxu0 %v6954
      %6964 = vmatprep.subr.bf16.mxu0 0
      %6965 = vmatpush1.bf16.msra.mxu0 %v6955
      %6966 = vmatprep.subr.bf16.mxu0 0
      %6967 = vmatpush1.bf16.msra.mxu0 %v6956
      %6968 = vmatprep.subr.bf16.mxu0 0
      %6969 = vmatpush1.bf16.msra.mxu0 %v6957
      %6970 = vmatprep.subr.bf16.mxu0 0
      %6971 = vmatpush1.bf16.msra.mxu0 0
      %6972 = vmatprep.subr.bf16.mxu0 0
      %6973 = vmatpush1.bf16.msra.mxu0 0
      %6974 = vmatprep.subr.bf16.mxu0 0
      %6975 = vmatpush1.bf16.msra.mxu0 0
      %6976 = vmatprep.subr.bf16.mxu0 0
      %6977 = vmatpush1.bf16.msra.mxu0 0
      %6978 = vmatprep.subr.bf16.mxu0 0
      %6979 = vmatpush1.bf16.msra.mxu0 0
      %6980 = vmatprep.subr.bf16.mxu0 0
      %6981 = vmatpush1.bf16.msra.mxu0 0
      %6982 = vmatprep.subr.bf16.mxu0 0
      %6983 = vmatpush1.bf16.msra.mxu0 0
      %6984 = vmatprep.subr.bf16.mxu0 0
      %6985 = vmatpush1.bf16.msra.mxu0 0
      %6986 = vmatprep.subr.bf16.mxu0 0
      %6987 = vmatpush1.bf16.msra.mxu0 0
      %6988 = vmatprep.subr.bf16.mxu0 0
      %6989 = vmatpush1.bf16.msra.mxu0 0
      %6990 = vmatprep.subr.bf16.mxu0 0
      %6991 = vmatpush1.bf16.msra.mxu0 0
      %6992 = vmatprep.subr.bf16.mxu0 0
      %6993 = vmatpush1.bf16.msra.mxu0 0
      %6994 = vmatprep.mubr.bf16.mxu0 0
      %6995 = vmatmul.mubr.bf16.gmra.mrb[0].mxu0 %v4632
      %v6996 = vpop.f32.mrb[0].mxu0
      %v6997 = vadd.f32 0.0, %v6996
      %v6998 = vpop.f32.mrb[0].mxu0
      %v6999 = vpop.f32.mrb[0].mxu0
      %v7000 = vadd.f32 0.0, %v6999
      %v7001 = vpop.f32.mrb[0].mxu0
      %7002 = vmatprep.mubr.bf16.mxu0 0
      %7003 = vmatmul.mubr.bf16.gmra.mrb[0].mxu0 %v4635
      %v7004 = vpop.f32.mrb[0].mxu0
      %v7005 = vadd.f32 0.0, %v7004
      %v7006 = vpop.f32.mrb[0].mxu0
      %v7007 = vpop.f32.mrb[0].mxu0
      %v7008 = vadd.f32 0.0, %v7007
      %v7009 = vpop.f32.mrb[0].mxu0
      %7010 = vmatprep.mubr.bf16.mxu0 0
      %7011 = vmatmul.mubr.bf16.gmra.mrb[0].mxu0 %v4638
      %v7012 = vpop.f32.mrb[0].mxu0
      %v7013 = vadd.f32 0.0, %v7012
      %v7014 = vpop.f32.mrb[0].mxu0
      %v7015 = vpop.f32.mrb[0].mxu0
      %v7016 = vadd.f32 0.0, %v7015
      %v7017 = vpop.f32.mrb[0].mxu0
      %7018 = vmatprep.mubr.bf16.mxu0 0
      %7019 = vmatmul.mubr.bf16.gmra.mrb[0].mxu0 %v4641
      %v7020 = vpop.f32.mrb[0].mxu0
      %v7021 = vadd.f32 0.0, %v7020
      %v7022 = vpop.f32.mrb[0].mxu0
      %v7023 = vpop.f32.mrb[0].mxu0
      %v7024 = vadd.f32 0.0, %v7023
      %v7025 = vpop.f32.mrb[0].mxu0
      %7026 = vmatprep.mubr.bf16.mxu0 0
      %7027 = vmatmul.mubr.bf16.gmra.mrb[0].mxu0 %v4644
      %v7028 = vpop.f32.mrb[0].mxu0
      %v7029 = vadd.f32 0.0, %v7028
      %v7030 = vpop.f32.mrb[0].mxu0
      %v7031 = vpop.f32.mrb[0].mxu0
      %v7032 = vadd.f32 0.0, %v7031
      %v7033 = vpop.f32.mrb[0].mxu0
      %7034 = vmatprep.mubr.bf16.mxu0 0
      %7035 = vmatmul.mubr.bf16.gmra.mrb[0].mxu0 %v4647
      %v7036 = vpop.f32.mrb[0].mxu0
      %v7037 = vadd.f32 0.0, %v7036
      %v7038 = vpop.f32.mrb[0].mxu0
      %v7039 = vpop.f32.mrb[0].mxu0
      %v7040 = vpop.f32.mrb[0].mxu0
      %7041 = vdwg.mxu0
      %v7042 = vadd.f32 %v6792, %v6997
      %v7043 = vadd.f32 %v6793, %v7000
      %v7044 = vadd.f32 %v6794, %v7005
      %v7045 = vadd.f32 %v6795, %v7008
      %v7046 = vadd.f32 %v6796, %v7013
      %v7047 = vadd.f32 %v6797, %v7016
      %v7048 = vadd.f32 %v6798, %v7021
      %v7049 = vadd.f32 %v6799, %v7024
      %v7050 = vadd.f32 %v6800, %v7029
      %v7051 = vadd.f32 %v6801, %v7032
      %v7052 = vadd.f32 %v6802, %v7037
      %v7054 = vshrl.u32 %v6807, 16
      %v7056 = vrot.slane %v7054, 1
      %v7057 = vshll.u32 %v6807, 16
      %v7059 = vrot.slane %v7057, 2
      %v7060 = vor.u32 %v7056, %v7059
      %v7061 = vrot.slane %v6534, 1
      %v7062 = vrot.slane %v6530, 2
      %v7063 = vor.u32 %v7061, %v7062
      %v7064 = vsel %vm1799, %v7060, %v7063
      %v7065 = vrot.slane %v6542, 1
      %v7066 = vrot.slane %v6538, 2
      %v7067 = vor.u32 %v7065, %v7066
      %v7068 = vsel %vm1799, %v7063, %v7067
      %v7069 = vrot.slane %v6550, 1
      %v7070 = vrot.slane %v6546, 2
      %v7071 = vor.u32 %v7069, %v7070
      %v7072 = vsel %vm1799, %v7067, %v7071
      %v7073 = vrot.slane %v6558, 1
      %v7074 = vrot.slane %v6554, 2
      %v7075 = vor.u32 %v7073, %v7074
      %v7076 = vsel %vm1799, %v7071, %v7075
      %v7078 = vshrl.u32 %v6808, 16
      %v7080 = vrot.slane %v7078, 1
      %v7081 = vshll.u32 %v6808, 16
      %v7083 = vrot.slane %v7081, 2
      %v7084 = vor.u32 %v7080, %v7083
      %v7085 = vsel %vm1799, %v7075, %v7084
      %v7087 = vsel %vm311, %v7064, 0
      %v7090 = vsel %vm311, %v7068, 0
      %v7093 = vsel %vm311, %v7072, 0
      %v7096 = vsel %vm311, %v7076, 0
      %v7099 = vsel %vm311, %v7085, 0
      %v7102 = vsel %vm311, %v7080, 0
      %7104 = vmatprep.subr.bf16.mxu0 0
      %7105 = vmatpush1.bf16.msra.mxu0 %v6954
      %7106 = vmatprep.subr.bf16.mxu0 0
      %7107 = vmatpush1.bf16.msra.mxu0 %v6955
      %7108 = vmatprep.subr.bf16.mxu0 0
      %7109 = vmatpush1.bf16.msra.mxu0 %v6956
      %7110 = vmatprep.subr.bf16.mxu0 0
      %7111 = vmatpush1.bf16.msra.mxu0 %v6957
      %7112 = vmatprep.subr.bf16.mxu0 0
      %7113 = vmatpush1.bf16.msra.mxu0 0
      %7114 = vmatprep.subr.bf16.mxu0 0
      %7115 = vmatpush1.bf16.msra.mxu0 0
      %7116 = vmatprep.subr.bf16.mxu0 0
      %7117 = vmatpush1.bf16.msra.mxu0 0
      %7118 = vmatprep.subr.bf16.mxu0 0
      %7119 = vmatpush1.bf16.msra.mxu0 0
      %7120 = vmatprep.subr.bf16.mxu0 0
      %7121 = vmatpush1.bf16.msra.mxu0 0
      %7122 = vmatprep.subr.bf16.mxu0 0
      %7123 = vmatpush1.bf16.msra.mxu0 0
      %7124 = vmatprep.subr.bf16.mxu0 0
      %7125 = vmatpush1.bf16.msra.mxu0 0
      %7126 = vmatprep.subr.bf16.mxu0 0
      %7127 = vmatpush1.bf16.msra.mxu0 0
      %7128 = vmatprep.subr.bf16.mxu0 0
      %7129 = vmatpush1.bf16.msra.mxu0 0
      %7130 = vmatprep.subr.bf16.mxu0 0
      %7131 = vmatpush1.bf16.msra.mxu0 0
      %7132 = vmatprep.subr.bf16.mxu0 0
      %7133 = vmatpush1.bf16.msra.mxu0 0
      %7134 = vmatprep.subr.bf16.mxu0 0
      %7135 = vmatpush1.bf16.msra.mxu0 0
      %7136 = vmatprep.mubr.bf16.mxu0 0
      %7137 = vmatmul.mubr.bf16.gmra.mrb[0].mxu0 %v7087
      %v7138 = vpop.f32.mrb[0].mxu0
      %v7139 = vadd.f32 0.0, %v7138
      %v7140 = vpop.f32.mrb[0].mxu0
      %v7141 = vpop.f32.mrb[0].mxu0
      %v7142 = vadd.f32 0.0, %v7141
      %v7143 = vpop.f32.mrb[0].mxu0
      %7144 = vmatprep.mubr.bf16.mxu0 0
      %7145 = vmatmul.mubr.bf16.gmra.mrb[0].mxu0 %v7090
      %v7146 = vpop.f32.mrb[0].mxu0
      %v7147 = vadd.f32 0.0, %v7146
      %v7148 = vpop.f32.mrb[0].mxu0
      %v7149 = vpop.f32.mrb[0].mxu0
      %v7150 = vadd.f32 0.0, %v7149
      %v7151 = vpop.f32.mrb[0].mxu0
      %7152 = vmatprep.mubr.bf16.mxu0 0
      %7153 = vmatmul.mubr.bf16.gmra.mrb[0].mxu0 %v7093
      %v7154 = vpop.f32.mrb[0].mxu0
      %v7155 = vadd.f32 0.0, %v7154
      %v7156 = vpop.f32.mrb[0].mxu0
      %v7157 = vpop.f32.mrb[0].mxu0
      %v7158 = vadd.f32 0.0, %v7157
      %v7159 = vpop.f32.mrb[0].mxu0
      %7160 = vmatprep.mubr.bf16.mxu0 0
      %7161 = vmatmul.mubr.bf16.gmra.mrb[0].mxu0 %v7096
      %v7162 = vpop.f32.mrb[0].mxu0
      %v7163 = vadd.f32 0.0, %v7162
      %v7164 = vpop.f32.mrb[0].mxu0
      %v7165 = vpop.f32.mrb[0].mxu0
      %v7166 = vadd.f32 0.0, %v7165
      %v7167 = vpop.f32.mrb[0].mxu0
      %7168 = vmatprep.mubr.bf16.mxu0 0
      %7169 = vmatmul.mubr.bf16.gmra.mrb[0].mxu0 %v7099
      %v7170 = vpop.f32.mrb[0].mxu0
      %v7171 = vadd.f32 0.0, %v7170
      %v7172 = vpop.f32.mrb[0].mxu0
      %v7173 = vpop.f32.mrb[0].mxu0
      %v7174 = vadd.f32 0.0, %v7173
      %v7175 = vpop.f32.mrb[0].mxu0
      %7176 = vmatprep.mubr.bf16.mxu0 0
      %7177 = vmatmul.mubr.bf16.gmra.mrb[0].mxu0 %v7102
      %v7178 = vpop.f32.mrb[0].mxu0
      %v7179 = vadd.f32 0.0, %v7178
      %v7180 = vpop.f32.mrb[0].mxu0
      %v7181 = vpop.f32.mrb[0].mxu0
      %v7182 = vpop.f32.mrb[0].mxu0
      %7183 = vdwg.mxu0
      %v7184 = vadd.f32 %v6918, %v7139
      %v7185 = vadd.f32 %v6919, %v7142
      %v7186 = vadd.f32 %v6920, %v7147
      %v7187 = vadd.f32 %v6921, %v7150
      %v7188 = vadd.f32 %v6922, %v7155
      %v7189 = vadd.f32 %v6923, %v7158
      %v7190 = vadd.f32 %v6924, %v7163
      %v7191 = vadd.f32 %v6925, %v7166
      %v7192 = vadd.f32 %v6926, %v7171
      %v7193 = vadd.f32 %v6927, %v7174
      %v7194 = vadd.f32 %v6928, %v7179
      %s7195 = scalar_lea.vmem %s1, 768
      %v7196 = vld [vmem:[%s7195] sm:$0xf]
      %v7197 = vld [vmem:[%s7195 + $0x4] sm:$0xf]
      %v7198 = vld [vmem:[%s7195 + $0x8] sm:$0xf]
      %v7199 = vld [vmem:[%s7195 + $0xc] sm:$0xf]
      %v7200 = vld [vmem:[%s7195 + $0x10] sm:$0xf]
      %v7201 = vld [vmem:[%s7195 + $0x14] sm:$0xf]
      %v7202 = vld [vmem:[%s7195 + $0x18] sm:$0xf]
      %v7203 = vld [vmem:[%s7195 + $0x1c] sm:$0xf]
      %v7204 = vld [vmem:[%s5570 + $0x8] sm:$0xe]
      %v7205 = vld [vmem:[%s5570 + $0xc] sm:$0xf]
      %v7206 = vld [vmem:[%s5570 + $0x10] sm:$0xf]
      %v7207 = vld [vmem:[%s5570 + $0x14] sm:$0xf]
      %v7208 = vld [vmem:[%s5570 + $0x18] sm:$0xf]
      %v7209 = vld [vmem:[%s5570 + $0x1c] sm:$0xf]
      %v7210 = vld [vmem:[%s5570 + $0x20] sm:$0xf]
      %v7211 = vld [vmem:[%s5570 + $0x24] sm:$0xf]
      %v7212 = vld [vmem:[%s5570 + $0x28] sm:$0xf]
      %v7213 = vld [vmem:[%s5570 + $0x2c] sm:$0xf]
      %v7214 = vld [vmem:[%s5570 + $0x30] sm:$0x3]
      %v7223 = vunpack.c.l.b16 %v7196
      %v7224 = vunpack.c.l.b16 %v7197
      %v7225 = vunpack.c.l.b16 %v7198
      %v7226 = vunpack.c.l.b16 %v7199
      %v7227 = vunpack.c.l.b16 %v7200
      %v7228 = vunpack.c.l.b16 %v7201
      %v7229 = vunpack.c.l.b16 %v7202
      %v7230 = vunpack.c.l.b16 %v7203
      %v7231 = vpack.c.b16 %v7224, %v7223
      %v7232 = vpack.c.b16 %v7226, %v7225
      %v7233 = vpack.c.b16 %v7228, %v7227
      %v7234 = vpack.c.b16 %v7230, %v7229
      %7239 = vmatprep.subr.bf16.mxu0 0
      %7240 = vmatpush1.bf16.msra.mxu0 %v7231
      %7241 = vmatprep.subr.bf16.mxu0 0
      %7242 = vmatpush1.bf16.msra.mxu0 %v7232
      %7243 = vmatprep.subr.bf16.mxu0 0
      %7244 = vmatpush1.bf16.msra.mxu0 %v7233
      %7245 = vmatprep.subr.bf16.mxu0 0
      %7246 = vmatpush1.bf16.msra.mxu0 %v7234
      %7247 = vmatprep.subr.bf16.mxu0 0
      %7248 = vmatpush1.bf16.msra.mxu0 0
      %7249 = vmatprep.subr.bf16.mxu0 0
      %7250 = vmatpush1.bf16.msra.mxu0 0
      %7251 = vmatprep.subr.bf16.mxu0 0
      %7252 = vmatpush1.bf16.msra.mxu0 0
      %7253 = vmatprep.subr.bf16.mxu0 0
      %7254 = vmatpush1.bf16.msra.mxu0 0
      %7255 = vmatprep.subr.bf16.mxu0 0
      %7256 = vmatpush1.bf16.msra.mxu0 0
      %7257 = vmatprep.subr.bf16.mxu0 0
      %7258 = vmatpush1.bf16.msra.mxu0 0
      %7259 = vmatprep.subr.bf16.mxu0 0
      %7260 = vmatpush1.bf16.msra.mxu0 0
      %7261 = vmatprep.subr.bf16.mxu0 0
      %7262 = vmatpush1.bf16.msra.mxu0 0
      %7263 = vmatprep.subr.bf16.mxu0 0
      %7264 = vmatpush1.bf16.msra.mxu0 0
      %7265 = vmatprep.subr.bf16.mxu0 0
      %7266 = vmatpush1.bf16.msra.mxu0 0
      %7267 = vmatprep.subr.bf16.mxu0 0
      %7268 = vmatpush1.bf16.msra.mxu0 0
      %7269 = vmatprep.subr.bf16.mxu0 0
      %7270 = vmatpush1.bf16.msra.mxu0 0
      %7271 = vmatprep.mubr.bf16.mxu0 0
      %7272 = vmatmul.mubr.bf16.gmra.mrb[0].mxu0 %v4915
      %v7273 = vpop.f32.mrb[0].mxu0
      %v7274 = vadd.f32 0.0, %v7273
      %v7275 = vpop.f32.mrb[0].mxu0
      %v7276 = vpop.f32.mrb[0].mxu0
      %v7277 = vadd.f32 0.0, %v7276
      %v7278 = vpop.f32.mrb[0].mxu0
      %7279 = vmatprep.mubr.bf16.mxu0 0
      %7280 = vmatmul.mubr.bf16.gmra.mrb[0].mxu0 %v4918
      %v7281 = vpop.f32.mrb[0].mxu0
      %v7282 = vadd.f32 0.0, %v7281
      %v7283 = vpop.f32.mrb[0].mxu0
      %v7284 = vpop.f32.mrb[0].mxu0
      %v7285 = vadd.f32 0.0, %v7284
      %v7286 = vpop.f32.mrb[0].mxu0
      %7287 = vmatprep.mubr.bf16.mxu0 0
      %7288 = vmatmul.mubr.bf16.gmra.mrb[0].mxu0 %v4921
      %v7289 = vpop.f32.mrb[0].mxu0
      %v7290 = vadd.f32 0.0, %v7289
      %v7291 = vpop.f32.mrb[0].mxu0
      %v7292 = vpop.f32.mrb[0].mxu0
      %v7293 = vadd.f32 0.0, %v7292
      %v7294 = vpop.f32.mrb[0].mxu0
      %7295 = vmatprep.mubr.bf16.mxu0 0
      %7296 = vmatmul.mubr.bf16.gmra.mrb[0].mxu0 %v4924
      %v7297 = vpop.f32.mrb[0].mxu0
      %v7298 = vadd.f32 0.0, %v7297
      %v7299 = vpop.f32.mrb[0].mxu0
      %v7300 = vpop.f32.mrb[0].mxu0
      %v7301 = vadd.f32 0.0, %v7300
      %v7302 = vpop.f32.mrb[0].mxu0
      %7303 = vmatprep.mubr.bf16.mxu0 0
      %7304 = vmatmul.mubr.bf16.gmra.mrb[0].mxu0 %v4927
      %v7305 = vpop.f32.mrb[0].mxu0
      %v7306 = vadd.f32 0.0, %v7305
      %v7307 = vpop.f32.mrb[0].mxu0
      %v7308 = vpop.f32.mrb[0].mxu0
      %v7309 = vadd.f32 0.0, %v7308
      %v7310 = vpop.f32.mrb[0].mxu0
      %7311 = vmatprep.mubr.bf16.mxu0 0
      %7312 = vmatmul.mubr.bf16.gmra.mrb[0].mxu0 %v4930
      %v7313 = vpop.f32.mrb[0].mxu0
      %v7314 = vadd.f32 0.0, %v7313
      %v7315 = vpop.f32.mrb[0].mxu0
      %v7316 = vpop.f32.mrb[0].mxu0
      %v7317 = vpop.f32.mrb[0].mxu0
      %7318 = vdwg.mxu0
      %v7319 = vadd.f32 %v7042, %v7274
      %v7320 = vadd.f32 %v7043, %v7277
      %v7321 = vadd.f32 %v7044, %v7282
      %v7322 = vadd.f32 %v7045, %v7285
      %v7323 = vadd.f32 %v7046, %v7290
      %v7324 = vadd.f32 %v7047, %v7293
      %v7325 = vadd.f32 %v7048, %v7298
      %v7326 = vadd.f32 %v7049, %v7301
      %v7327 = vadd.f32 %v7050, %v7306
      %v7328 = vadd.f32 %v7051, %v7309
      %v7329 = vadd.f32 %v7052, %v7314
      %v7341 = vunpack.c.l.b16 %v7204
      %v7342 = vunpack.c.l.b16 %v7205
      %v7343 = vunpack.c.l.b16 %v7206
      %v7344 = vunpack.c.l.b16 %v7207
      %v7345 = vunpack.c.l.b16 %v7208
      %v7346 = vunpack.c.l.b16 %v7209
      %v7347 = vunpack.c.l.b16 %v7210
      %v7348 = vunpack.c.l.b16 %v7211
      %v7349 = vunpack.c.l.b16 %v7212
      %v7350 = vunpack.c.l.b16 %v7213
      %v7351 = vunpack.c.l.b16 %v7214
      %v7352 = vpack.c.b16 %v7342, %v7341
      %v7353 = vpack.c.b16 %v7344, %v7343
      %v7354 = vpack.c.b16 %v7346, %v7345
      %v7355 = vpack.c.b16 %v7348, %v7347
      %v7356 = vpack.c.b16 %v7350, %v7349
      %v7357 = vpack.c.b16 %v7351, %v7351
      %v7358 = vrot.slane %v7352, 1
      %v7359 = vrot.slane %v7353, 1
      %v7360 = vsel %vm809, %v7358, %v7359
      %v7361 = vrot.slane %v7354, 1
      %v7362 = vsel %vm809, %v7359, %v7361
      %v7363 = vrot.slane %v7355, 1
      %v7364 = vsel %vm809, %v7361, %v7363
      %v7365 = vrot.slane %v7356, 1
      %v7366 = vsel %vm809, %v7363, %v7365
      %v7367 = vrot.slane %v7357, 1
      %v7368 = vsel %vm809, %v7365, %v7367
      %v7370 = vsel %vm311, %v7360, 0
      %v7373 = vsel %vm311, %v7362, 0
      %v7376 = vsel %vm311, %v7364, 0
      %v7379 = vsel %vm311, %v7366, 0
      %v7382 = vsel %vm311, %v7368, 0
      %v7385 = vsel %vm311, %v7367, 0
      %7387 = vmatprep.subr.bf16.mxu0 0
      %7388 = vmatpush1.bf16.msra.mxu0 %v7231
      %7389 = vmatprep.subr.bf16.mxu0 0
      %7390 = vmatpush1.bf16.msra.mxu0 %v7232
      %7391 = vmatprep.subr.bf16.mxu0 0
      %7392 = vmatpush1.bf16.msra.mxu0 %v7233
      %7393 = vmatprep.subr.bf16.mxu0 0
      %7394 = vmatpush1.bf16.msra.mxu0 %v7234
      %7395 = vmatprep.subr.bf16.mxu0 0
      %7396 = vmatpush1.bf16.msra.mxu0 0
      %7397 = vmatprep.subr.bf16.mxu0 0
      %7398 = vmatpush1.bf16.msra.mxu0 0
      %7399 = vmatprep.subr.bf16.mxu0 0
      %7400 = vmatpush1.bf16.msra.mxu0 0
      %7401 = vmatprep.subr.bf16.mxu0 0
      %7402 = vmatpush1.bf16.msra.mxu0 0
      %7403 = vmatprep.subr.bf16.mxu0 0
      %7404 = vmatpush1.bf16.msra.mxu0 0
      %7405 = vmatprep.subr.bf16.mxu0 0
      %7406 = vmatpush1.bf16.msra.mxu0 0
      %7407 = vmatprep.subr.bf16.mxu0 0
      %7408 = vmatpush1.bf16.msra.mxu0 0
      %7409 = vmatprep.subr.bf16.mxu0 0
      %7410 = vmatpush1.bf16.msra.mxu0 0
      %7411 = vmatprep.subr.bf16.mxu0 0
      %7412 = vmatpush1.bf16.msra.mxu0 0
      %7413 = vmatprep.subr.bf16.mxu0 0
      %7414 = vmatpush1.bf16.msra.mxu0 0
      %7415 = vmatprep.subr.bf16.mxu0 0
      %7416 = vmatpush1.bf16.msra.mxu0 0
      %7417 = vmatprep.subr.bf16.mxu0 0
      %7418 = vmatpush1.bf16.msra.mxu0 0
      %7419 = vmatprep.mubr.bf16.mxu0 0
      %7420 = vmatmul.mubr.bf16.gmra.mrb[0].mxu0 %v7370
      %v7421 = vpop.f32.mrb[0].mxu0
      %v7422 = vadd.f32 0.0, %v7421
      %v7423 = vpop.f32.mrb[0].mxu0
      %v7424 = vpop.f32.mrb[0].mxu0
      %v7425 = vadd.f32 0.0, %v7424
      %v7426 = vpop.f32.mrb[0].mxu0
      %7427 = vmatprep.mubr.bf16.mxu0 0
      %7428 = vmatmul.mubr.bf16.gmra.mrb[0].mxu0 %v7373
      %v7429 = vpop.f32.mrb[0].mxu0
      %v7430 = vadd.f32 0.0, %v7429
      %v7431 = vpop.f32.mrb[0].mxu0
      %v7432 = vpop.f32.mrb[0].mxu0
      %v7433 = vadd.f32 0.0, %v7432
      %v7434 = vpop.f32.mrb[0].mxu0
      %7435 = vmatprep.mubr.bf16.mxu0 0
      %7436 = vmatmul.mubr.bf16.gmra.mrb[0].mxu0 %v7376
      %v7437 = vpop.f32.mrb[0].mxu0
      %v7438 = vadd.f32 0.0, %v7437
      %v7439 = vpop.f32.mrb[0].mxu0
      %v7440 = vpop.f32.mrb[0].mxu0
      %v7441 = vadd.f32 0.0, %v7440
      %v7442 = vpop.f32.mrb[0].mxu0
      %7443 = vmatprep.mubr.bf16.mxu0 0
      %7444 = vmatmul.mubr.bf16.gmra.mrb[0].mxu0 %v7379
      %v7445 = vpop.f32.mrb[0].mxu0
      %v7446 = vadd.f32 0.0, %v7445
      %v7447 = vpop.f32.mrb[0].mxu0
      %v7448 = vpop.f32.mrb[0].mxu0
      %v7449 = vadd.f32 0.0, %v7448
      %v7450 = vpop.f32.mrb[0].mxu0
      %7451 = vmatprep.mubr.bf16.mxu0 0
      %7452 = vmatmul.mubr.bf16.gmra.mrb[0].mxu0 %v7382
      %v7453 = vpop.f32.mrb[0].mxu0
      %v7454 = vadd.f32 0.0, %v7453
      %v7455 = vpop.f32.mrb[0].mxu0
      %v7456 = vpop.f32.mrb[0].mxu0
      %v7457 = vadd.f32 0.0, %v7456
      %v7458 = vpop.f32.mrb[0].mxu0
      %7459 = vmatprep.mubr.bf16.mxu0 0
      %7460 = vmatmul.mubr.bf16.gmra.mrb[0].mxu0 %v7385
      %v7461 = vpop.f32.mrb[0].mxu0
      %v7462 = vadd.f32 0.0, %v7461
      %v7463 = vpop.f32.mrb[0].mxu0
      %v7464 = vpop.f32.mrb[0].mxu0
      %v7465 = vpop.f32.mrb[0].mxu0
      %7466 = vdwg.mxu0
      %v7467 = vadd.f32 %v7184, %v7422
      %v7468 = vadd.f32 %v7185, %v7425
      %v7469 = vadd.f32 %v7186, %v7430
      %v7470 = vadd.f32 %v7187, %v7433
      %v7471 = vadd.f32 %v7188, %v7438
      %v7472 = vadd.f32 %v7189, %v7441
      %v7473 = vadd.f32 %v7190, %v7446
      %v7474 = vadd.f32 %v7191, %v7449
      %v7475 = vadd.f32 %v7192, %v7454
      %v7476 = vadd.f32 %v7193, %v7457
      %v7477 = vadd.f32 %v7194, %v7462
      %s7478 = scalar_lea.vmem %s1, 800
      %v7479 = vld [vmem:[%s7478] sm:$0xf]
      %v7480 = vld [vmem:[%s7478 + $0x4] sm:$0xf]
      %v7481 = vld [vmem:[%s7478 + $0x8] sm:$0xf]
      %v7482 = vld [vmem:[%s7478 + $0xc] sm:$0xf]
      %v7483 = vld [vmem:[%s7478 + $0x10] sm:$0xf]
      %v7484 = vld [vmem:[%s7478 + $0x14] sm:$0xf]
      %v7485 = vld [vmem:[%s7478 + $0x18] sm:$0xf]
      %v7486 = vld [vmem:[%s7478 + $0x1c] sm:$0xf]
      %v7495 = vunpack.c.l.b16 %v7479
      %v7496 = vunpack.c.l.b16 %v7480
      %v7497 = vunpack.c.l.b16 %v7481
      %v7498 = vunpack.c.l.b16 %v7482
      %v7499 = vunpack.c.l.b16 %v7483
      %v7500 = vunpack.c.l.b16 %v7484
      %v7501 = vunpack.c.l.b16 %v7485
      %v7502 = vunpack.c.l.b16 %v7486
      %v7503 = vpack.c.b16 %v7496, %v7495
      %v7504 = vpack.c.b16 %v7498, %v7497
      %v7505 = vpack.c.b16 %v7500, %v7499
      %v7506 = vpack.c.b16 %v7502, %v7501
      %7511 = vmatprep.subr.bf16.mxu0 0
      %7512 = vmatpush1.bf16.msra.mxu0 %v7503
      %7513 = vmatprep.subr.bf16.mxu0 0
      %7514 = vmatpush1.bf16.msra.mxu0 %v7504
      %7515 = vmatprep.subr.bf16.mxu0 0
      %7516 = vmatpush1.bf16.msra.mxu0 %v7505
      %7517 = vmatprep.subr.bf16.mxu0 0
      %7518 = vmatpush1.bf16.msra.mxu0 %v7506
      %7519 = vmatprep.subr.bf16.mxu0 0
      %7520 = vmatpush1.bf16.msra.mxu0 0
      %7521 = vmatprep.subr.bf16.mxu0 0
      %7522 = vmatpush1.bf16.msra.mxu0 0
      %7523 = vmatprep.subr.bf16.mxu0 0
      %7524 = vmatpush1.bf16.msra.mxu0 0
      %7525 = vmatprep.subr.bf16.mxu0 0
      %7526 = vmatpush1.bf16.msra.mxu0 0
      %7527 = vmatprep.subr.bf16.mxu0 0
      %7528 = vmatpush1.bf16.msra.mxu0 0
      %7529 = vmatprep.subr.bf16.mxu0 0
      %7530 = vmatpush1.bf16.msra.mxu0 0
      %7531 = vmatprep.subr.bf16.mxu0 0
      %7532 = vmatpush1.bf16.msra.mxu0 0
      %7533 = vmatprep.subr.bf16.mxu0 0
      %7534 = vmatpush1.bf16.msra.mxu0 0
      %7535 = vmatprep.subr.bf16.mxu0 0
      %7536 = vmatpush1.bf16.msra.mxu0 0
      %7537 = vmatprep.subr.bf16.mxu0 0
      %7538 = vmatpush1.bf16.msra.mxu0 0
      %7539 = vmatprep.subr.bf16.mxu0 0
      %7540 = vmatpush1.bf16.msra.mxu0 0
      %7541 = vmatprep.subr.bf16.mxu0 0
      %7542 = vmatpush1.bf16.msra.mxu0 0
      %7543 = vmatprep.mubr.bf16.mxu0 0
      %7544 = vmatmul.mubr.bf16.gmra.mrb[0].mxu0 %v5201
      %v7545 = vpop.f32.mrb[0].mxu0
      %v7546 = vadd.f32 0.0, %v7545
      %v7547 = vpop.f32.mrb[0].mxu0
      %v7548 = vpop.f32.mrb[0].mxu0
      %v7549 = vadd.f32 0.0, %v7548
      %v7550 = vpop.f32.mrb[0].mxu0
      %7551 = vmatprep.mubr.bf16.mxu0 0
      %7552 = vmatmul.mubr.bf16.gmra.mrb[0].mxu0 %v5204
      %v7553 = vpop.f32.mrb[0].mxu0
      %v7554 = vadd.f32 0.0, %v7553
      %v7555 = vpop.f32.mrb[0].mxu0
      %v7556 = vpop.f32.mrb[0].mxu0
      %v7557 = vadd.f32 0.0, %v7556
      %v7558 = vpop.f32.mrb[0].mxu0
      %7559 = vmatprep.mubr.bf16.mxu0 0
      %7560 = vmatmul.mubr.bf16.gmra.mrb[0].mxu0 %v5207
      %v7561 = vpop.f32.mrb[0].mxu0
      %v7562 = vadd.f32 0.0, %v7561
      %v7563 = vpop.f32.mrb[0].mxu0
      %v7564 = vpop.f32.mrb[0].mxu0
      %v7565 = vadd.f32 0.0, %v7564
      %v7566 = vpop.f32.mrb[0].mxu0
      %7567 = vmatprep.mubr.bf16.mxu0 0
      %7568 = vmatmul.mubr.bf16.gmra.mrb[0].mxu0 %v5210
      %v7569 = vpop.f32.mrb[0].mxu0
      %v7570 = vadd.f32 0.0, %v7569
      %v7571 = vpop.f32.mrb[0].mxu0
      %v7572 = vpop.f32.mrb[0].mxu0
      %v7573 = vadd.f32 0.0, %v7572
      %v7574 = vpop.f32.mrb[0].mxu0
      %7575 = vmatprep.mubr.bf16.mxu0 0
      %7576 = vmatmul.mubr.bf16.gmra.mrb[0].mxu0 %v5213
      %v7577 = vpop.f32.mrb[0].mxu0
      %v7578 = vadd.f32 0.0, %v7577
      %v7579 = vpop.f32.mrb[0].mxu0
      %v7580 = vpop.f32.mrb[0].mxu0
      %v7581 = vadd.f32 0.0, %v7580
      %v7582 = vpop.f32.mrb[0].mxu0
      %7583 = vmatprep.mubr.bf16.mxu0 0
      %7584 = vmatmul.mubr.bf16.gmra.mrb[0].mxu0 %v5216
      %v7585 = vpop.f32.mrb[0].mxu0
      %v7586 = vadd.f32 0.0, %v7585
      %v7587 = vpop.f32.mrb[0].mxu0
      %v7588 = vpop.f32.mrb[0].mxu0
      %v7589 = vpop.f32.mrb[0].mxu0
      %7590 = vdwg.mxu0
      %v7591 = vadd.f32 %v7319, %v7546
      %v7592 = vadd.f32 %v7320, %v7549
      %v7593 = vadd.f32 %v7321, %v7554
      %v7594 = vadd.f32 %v7322, %v7557
      %v7595 = vadd.f32 %v7323, %v7562
      %v7596 = vadd.f32 %v7324, %v7565
      %v7597 = vadd.f32 %v7325, %v7570
      %v7598 = vadd.f32 %v7326, %v7573
      %v7599 = vadd.f32 %v7327, %v7578
      %v7600 = vadd.f32 %v7328, %v7581
      %v7601 = vadd.f32 %v7329, %v7586
      %v7603 = vshrl.u32 %v7352, 16
      %v7605 = vrot.slane %v7603, 1
      %v7606 = vshll.u32 %v7352, 16
      %v7608 = vrot.slane %v7606, 2
      %v7609 = vor.u32 %v7605, %v7608
      %v7611 = vshrl.u32 %v7353, 16
      %v7613 = vrot.slane %v7611, 1
      %v7614 = vshll.u32 %v7353, 16
      %v7616 = vrot.slane %v7614, 2
      %v7617 = vor.u32 %v7613, %v7616
      %v7618 = vsel %vm1799, %v7609, %v7617
      %v7620 = vshrl.u32 %v7354, 16
      %v7622 = vrot.slane %v7620, 1
      %v7623 = vshll.u32 %v7354, 16
      %v7625 = vrot.slane %v7623, 2
      %v7626 = vor.u32 %v7622, %v7625
      %v7627 = vsel %vm1799, %v7617, %v7626
      %v7629 = vshrl.u32 %v7355, 16
      %v7631 = vrot.slane %v7629, 1
      %v7632 = vshll.u32 %v7355, 16
      %v7634 = vrot.slane %v7632, 2
      %v7635 = vor.u32 %v7631, %v7634
      %v7636 = vsel %vm1799, %v7626, %v7635
      %v7638 = vshrl.u32 %v7356, 16
      %v7640 = vrot.slane %v7638, 1
      %v7641 = vshll.u32 %v7356, 16
      %v7643 = vrot.slane %v7641, 2
      %v7644 = vor.u32 %v7640, %v7643
      %v7645 = vsel %vm1799, %v7635, %v7644
      %v7647 = vshrl.u32 %v7357, 16
      %v7649 = vrot.slane %v7647, 1
      %v7650 = vshll.u32 %v7357, 16
      %v7652 = vrot.slane %v7650, 2
      %v7653 = vor.u32 %v7649, %v7652
      %v7654 = vsel %vm1799, %v7644, %v7653
      %v7656 = vsel %vm311, %v7618, 0
      %v7659 = vsel %vm311, %v7627, 0
      %v7662 = vsel %vm311, %v7636, 0
      %v7665 = vsel %vm311, %v7645, 0
      %v7668 = vsel %vm311, %v7654, 0
      %v7671 = vsel %vm311, %v7649, 0
      %7673 = vmatprep.subr.bf16.mxu0 0
      %7674 = vmatpush1.bf16.msra.mxu0 %v7503
      %7675 = vmatprep.subr.bf16.mxu0 0
      %7676 = vmatpush1.bf16.msra.mxu0 %v7504
      %7677 = vmatprep.subr.bf16.mxu0 0
      %7678 = vmatpush1.bf16.msra.mxu0 %v7505
      %7679 = vmatprep.subr.bf16.mxu0 0
      %7680 = vmatpush1.bf16.msra.mxu0 %v7506
      %7681 = vmatprep.subr.bf16.mxu0 0
      %7682 = vmatpush1.bf16.msra.mxu0 0
      %7683 = vmatprep.subr.bf16.mxu0 0
      %7684 = vmatpush1.bf16.msra.mxu0 0
      %7685 = vmatprep.subr.bf16.mxu0 0
      %7686 = vmatpush1.bf16.msra.mxu0 0
      %7687 = vmatprep.subr.bf16.mxu0 0
      %7688 = vmatpush1.bf16.msra.mxu0 0
      %7689 = vmatprep.subr.bf16.mxu0 0
      %7690 = vmatpush1.bf16.msra.mxu0 0
      %7691 = vmatprep.subr.bf16.mxu0 0
      %7692 = vmatpush1.bf16.msra.mxu0 0
      %7693 = vmatprep.subr.bf16.mxu0 0
      %7694 = vmatpush1.bf16.msra.mxu0 0
      %7695 = vmatprep.subr.bf16.mxu0 0
      %7696 = vmatpush1.bf16.msra.mxu0 0
      %7697 = vmatprep.subr.bf16.mxu0 0
      %7698 = vmatpush1.bf16.msra.mxu0 0
      %7699 = vmatprep.subr.bf16.mxu0 0
      %7700 = vmatpush1.bf16.msra.mxu0 0
      %7701 = vmatprep.subr.bf16.mxu0 0
      %7702 = vmatpush1.bf16.msra.mxu0 0
      %7703 = vmatprep.subr.bf16.mxu0 0
      %7704 = vmatpush1.bf16.msra.mxu0 0
      %7705 = vmatprep.mubr.bf16.mxu0 0
      %7706 = vmatmul.mubr.bf16.gmra.mrb[0].mxu0 %v7656
      %v7707 = vpop.f32.mrb[0].mxu0
      %v7708 = vadd.f32 0.0, %v7707
      %v7709 = vpop.f32.mrb[0].mxu0
      %v7710 = vpop.f32.mrb[0].mxu0
      %v7711 = vadd.f32 0.0, %v7710
      %v7712 = vpop.f32.mrb[0].mxu0
      %7713 = vmatprep.mubr.bf16.mxu0 0
      %7714 = vmatmul.mubr.bf16.gmra.mrb[0].mxu0 %v7659
      %v7715 = vpop.f32.mrb[0].mxu0
      %v7716 = vadd.f32 0.0, %v7715
      %v7717 = vpop.f32.mrb[0].mxu0
      %v7718 = vpop.f32.mrb[0].mxu0
      %v7719 = vadd.f32 0.0, %v7718
      %v7720 = vpop.f32.mrb[0].mxu0
      %7721 = vmatprep.mubr.bf16.mxu0 0
      %7722 = vmatmul.mubr.bf16.gmra.mrb[0].mxu0 %v7662
      %v7723 = vpop.f32.mrb[0].mxu0
      %v7724 = vadd.f32 0.0, %v7723
      %v7725 = vpop.f32.mrb[0].mxu0
      %v7726 = vpop.f32.mrb[0].mxu0
      %v7727 = vadd.f32 0.0, %v7726
      %v7728 = vpop.f32.mrb[0].mxu0
      %7729 = vmatprep.mubr.bf16.mxu0 0
      %7730 = vmatmul.mubr.bf16.gmra.mrb[0].mxu0 %v7665
      %v7731 = vpop.f32.mrb[0].mxu0
      %v7732 = vadd.f32 0.0, %v7731
      %v7733 = vpop.f32.mrb[0].mxu0
      %v7734 = vpop.f32.mrb[0].mxu0
      %v7735 = vadd.f32 0.0, %v7734
      %v7736 = vpop.f32.mrb[0].mxu0
      %7737 = vmatprep.mubr.bf16.mxu0 0
      %7738 = vmatmul.mubr.bf16.gmra.mrb[0].mxu0 %v7668
      %v7739 = vpop.f32.mrb[0].mxu0
      %v7740 = vadd.f32 0.0, %v7739
      %v7741 = vpop.f32.mrb[0].mxu0
      %v7742 = vpop.f32.mrb[0].mxu0
      %v7743 = vadd.f32 0.0, %v7742
      %v7744 = vpop.f32.mrb[0].mxu0
      %7745 = vmatprep.mubr.bf16.mxu0 0
      %7746 = vmatmul.mubr.bf16.gmra.mrb[0].mxu0 %v7671
      %v7747 = vpop.f32.mrb[0].mxu0
      %v7748 = vadd.f32 0.0, %v7747
      %v7749 = vpop.f32.mrb[0].mxu0
      %v7750 = vpop.f32.mrb[0].mxu0
      %v7751 = vpop.f32.mrb[0].mxu0
      %7752 = vdwg.mxu0
      %v7753 = vadd.f32 %v7467, %v7708
      %v7754 = vadd.f32 %v7468, %v7711
      %v7755 = vadd.f32 %v7469, %v7716
      %v7756 = vadd.f32 %v7470, %v7719
      %v7757 = vadd.f32 %v7471, %v7724
      %v7758 = vadd.f32 %v7472, %v7727
      %v7759 = vadd.f32 %v7473, %v7732
      %v7760 = vadd.f32 %v7474, %v7735
      %v7761 = vadd.f32 %v7475, %v7740
      %v7762 = vadd.f32 %v7476, %v7743
      %v7763 = vadd.f32 %v7477, %v7748
      %s7764 = scalar_lea.vmem %s1, 832
      %v7765 = vld [vmem:[%s7764] sm:$0xf]
      %v7766 = vld [vmem:[%s7764 + $0x4] sm:$0xf]
      %v7767 = vld [vmem:[%s7764 + $0x8] sm:$0xf]
      %v7768 = vld [vmem:[%s7764 + $0xc] sm:$0xf]
      %v7769 = vld [vmem:[%s7764 + $0x10] sm:$0xf]
      %v7770 = vld [vmem:[%s7764 + $0x14] sm:$0xf]
      %v7771 = vld [vmem:[%s7764 + $0x18] sm:$0xf]
      %v7772 = vld [vmem:[%s7764 + $0x1c] sm:$0xf]
      %v7773 = vld [vmem:[%s5570 + $0x8] sm:$0xc]
      %v7774 = vld [vmem:[%s5570 + $0x30] sm:$0x7]
      %v7783 = vunpack.c.l.b16 %v7765
      %v7784 = vunpack.c.l.b16 %v7766
      %v7785 = vunpack.c.l.b16 %v7767
      %v7786 = vunpack.c.l.b16 %v7768
      %v7787 = vunpack.c.l.b16 %v7769
      %v7788 = vunpack.c.l.b16 %v7770
      %v7789 = vunpack.c.l.b16 %v7771
      %v7790 = vunpack.c.l.b16 %v7772
      %v7791 = vpack.c.b16 %v7784, %v7783
      %v7792 = vpack.c.b16 %v7786, %v7785
      %v7793 = vpack.c.b16 %v7788, %v7787
      %v7794 = vpack.c.b16 %v7790, %v7789
      %7799 = vmatprep.subr.bf16.mxu0 0
      %7800 = vmatpush1.bf16.msra.mxu0 %v7791
      %7801 = vmatprep.subr.bf16.mxu0 0
      %7802 = vmatpush1.bf16.msra.mxu0 %v7792
      %7803 = vmatprep.subr.bf16.mxu0 0
      %7804 = vmatpush1.bf16.msra.mxu0 %v7793
      %7805 = vmatprep.subr.bf16.mxu0 0
      %7806 = vmatpush1.bf16.msra.mxu0 %v7794
      %7807 = vmatprep.subr.bf16.mxu0 0
      %7808 = vmatpush1.bf16.msra.mxu0 0
      %7809 = vmatprep.subr.bf16.mxu0 0
      %7810 = vmatpush1.bf16.msra.mxu0 0
      %7811 = vmatprep.subr.bf16.mxu0 0
      %7812 = vmatpush1.bf16.msra.mxu0 0
      %7813 = vmatprep.subr.bf16.mxu0 0
      %7814 = vmatpush1.bf16.msra.mxu0 0
      %7815 = vmatprep.subr.bf16.mxu0 0
      %7816 = vmatpush1.bf16.msra.mxu0 0
      %7817 = vmatprep.subr.bf16.mxu0 0
      %7818 = vmatpush1.bf16.msra.mxu0 0
      %7819 = vmatprep.subr.bf16.mxu0 0
      %7820 = vmatpush1.bf16.msra.mxu0 0
      %7821 = vmatprep.subr.bf16.mxu0 0
      %7822 = vmatpush1.bf16.msra.mxu0 0
      %7823 = vmatprep.subr.bf16.mxu0 0
      %7824 = vmatpush1.bf16.msra.mxu0 0
      %7825 = vmatprep.subr.bf16.mxu0 0
      %7826 = vmatpush1.bf16.msra.mxu0 0
      %7827 = vmatprep.subr.bf16.mxu0 0
      %7828 = vmatpush1.bf16.msra.mxu0 0
      %7829 = vmatprep.subr.bf16.mxu0 0
      %7830 = vmatpush1.bf16.msra.mxu0 0
      %7831 = vmatprep.mubr.bf16.mxu0 0
      %7832 = vmatmul.mubr.bf16.gmra.mrb[0].mxu0 %v5453
      %v7833 = vpop.f32.mrb[0].mxu0
      %v7834 = vadd.f32 0.0, %v7833
      %v7835 = vpop.f32.mrb[0].mxu0
      %v7836 = vpop.f32.mrb[0].mxu0
      %v7837 = vadd.f32 0.0, %v7836
      %v7838 = vpop.f32.mrb[0].mxu0
      %7839 = vmatprep.mubr.bf16.mxu0 0
      %7840 = vmatmul.mubr.bf16.gmra.mrb[0].mxu0 %v5456
      %v7841 = vpop.f32.mrb[0].mxu0
      %v7842 = vadd.f32 0.0, %v7841
      %v7843 = vpop.f32.mrb[0].mxu0
      %v7844 = vpop.f32.mrb[0].mxu0
      %v7845 = vadd.f32 0.0, %v7844
      %v7846 = vpop.f32.mrb[0].mxu0
      %7847 = vmatprep.mubr.bf16.mxu0 0
      %7848 = vmatmul.mubr.bf16.gmra.mrb[0].mxu0 %v5459
      %v7849 = vpop.f32.mrb[0].mxu0
      %v7850 = vadd.f32 0.0, %v7849
      %v7851 = vpop.f32.mrb[0].mxu0
      %v7852 = vpop.f32.mrb[0].mxu0
      %v7853 = vadd.f32 0.0, %v7852
      %v7854 = vpop.f32.mrb[0].mxu0
      %7855 = vmatprep.mubr.bf16.mxu0 0
      %7856 = vmatmul.mubr.bf16.gmra.mrb[0].mxu0 %v5462
      %v7857 = vpop.f32.mrb[0].mxu0
      %v7858 = vadd.f32 0.0, %v7857
      %v7859 = vpop.f32.mrb[0].mxu0
      %v7860 = vpop.f32.mrb[0].mxu0
      %v7861 = vadd.f32 0.0, %v7860
      %v7862 = vpop.f32.mrb[0].mxu0
      %7863 = vmatprep.mubr.bf16.mxu0 0
      %7864 = vmatmul.mubr.bf16.gmra.mrb[0].mxu0 %v5465
      %v7865 = vpop.f32.mrb[0].mxu0
      %v7866 = vadd.f32 0.0, %v7865
      %v7867 = vpop.f32.mrb[0].mxu0
      %v7868 = vpop.f32.mrb[0].mxu0
      %v7869 = vadd.f32 0.0, %v7868
      %v7870 = vpop.f32.mrb[0].mxu0
      %7871 = vmatprep.mubr.bf16.mxu0 0
      %7872 = vmatmul.mubr.bf16.gmra.mrb[0].mxu0 %v5468
      %v7873 = vpop.f32.mrb[0].mxu0
      %v7874 = vadd.f32 0.0, %v7873
      %v7875 = vpop.f32.mrb[0].mxu0
      %v7876 = vpop.f32.mrb[0].mxu0
      %v7877 = vpop.f32.mrb[0].mxu0
      %7878 = vdwg.mxu0
      %v7879 = vadd.f32 %v7591, %v7834
      %v7880 = vadd.f32 %v7592, %v7837
      %v7881 = vadd.f32 %v7593, %v7842
      %v7882 = vadd.f32 %v7594, %v7845
      %v7883 = vadd.f32 %v7595, %v7850
      %v7884 = vadd.f32 %v7596, %v7853
      %v7885 = vadd.f32 %v7597, %v7858
      %v7886 = vadd.f32 %v7598, %v7861
      %v7887 = vadd.f32 %v7599, %v7866
      %v7888 = vadd.f32 %v7600, %v7869
      %v7889 = vadd.f32 %v7601, %v7874
      %v7892 = vunpack.c.l.b16 %v7773
      %v7893 = vunpack.c.l.b16 %v7774
      %v7894 = vpack.c.b16 %v7342, %v7892
      %v7895 = vpack.c.b16 %v7893, %v7893
      %v7896 = vrot.slane %v7894, 2
      %v7897 = vrot.slane %v7353, 2
      %v7898 = vsel %vm2835, %v7896, %v7897
      %v7899 = vrot.slane %v7354, 2
      %v7900 = vsel %vm2835, %v7897, %v7899
      %v7901 = vrot.slane %v7355, 2
      %v7902 = vsel %vm2835, %v7899, %v7901
      %v7903 = vrot.slane %v7356, 2
      %v7904 = vsel %vm2835, %v7901, %v7903
      %v7905 = vrot.slane %v7895, 2
      %v7906 = vsel %vm2835, %v7903, %v7905
      %v7908 = vsel %vm311, %v7898, 0
      %v7911 = vsel %vm311, %v7900, 0
      %v7914 = vsel %vm311, %v7902, 0
      %v7917 = vsel %vm311, %v7904, 0
      %v7920 = vsel %vm311, %v7906, 0
      %v7923 = vsel %vm311, %v7905, 0
      %7925 = vmatprep.subr.bf16.mxu0 0
      %7926 = vmatpush1.bf16.msra.mxu0 %v7791
      %7927 = vmatprep.subr.bf16.mxu0 0
      %7928 = vmatpush1.bf16.msra.mxu0 %v7792
      %7929 = vmatprep.subr.bf16.mxu0 0
      %7930 = vmatpush1.bf16.msra.mxu0 %v7793
      %7931 = vmatprep.subr.bf16.mxu0 0
      %7932 = vmatpush1.bf16.msra.mxu0 %v7794
      %7933 = vmatprep.subr.bf16.mxu0 0
      %7934 = vmatpush1.bf16.msra.mxu0 0
      %7935 = vmatprep.subr.bf16.mxu0 0
      %7936 = vmatpush1.bf16.msra.mxu0 0
      %7937 = vmatprep.subr.bf16.mxu0 0
      %7938 = vmatpush1.bf16.msra.mxu0 0
      %7939 = vmatprep.subr.bf16.mxu0 0
      %7940 = vmatpush1.bf16.msra.mxu0 0
      %7941 = vmatprep.subr.bf16.mxu0 0
      %7942 = vmatpush1.bf16.msra.mxu0 0
      %7943 = vmatprep.subr.bf16.mxu0 0
      %7944 = vmatpush1.bf16.msra.mxu0 0
      %7945 = vmatprep.subr.bf16.mxu0 0
      %7946 = vmatpush1.bf16.msra.mxu0 0
      %7947 = vmatprep.subr.bf16.mxu0 0
      %7948 = vmatpush1.bf16.msra.mxu0 0
      %7949 = vmatprep.subr.bf16.mxu0 0
      %7950 = vmatpush1.bf16.msra.mxu0 0
      %7951 = vmatprep.subr.bf16.mxu0 0
      %7952 = vmatpush1.bf16.msra.mxu0 0
      %7953 = vmatprep.subr.bf16.mxu0 0
      %7954 = vmatpush1.bf16.msra.mxu0 0
      %7955 = vmatprep.subr.bf16.mxu0 0
      %7956 = vmatpush1.bf16.msra.mxu0 0
      %7957 = vmatprep.mubr.bf16.mxu0 0
      %7958 = vmatmul.mubr.bf16.gmra.mrb[0].mxu0 %v7908
      %v7959 = vpop.f32.mrb[0].mxu0
      %v7960 = vadd.f32 0.0, %v7959
      %v7961 = vpop.f32.mrb[0].mxu0
      %v7962 = vpop.f32.mrb[0].mxu0
      %v7963 = vadd.f32 0.0, %v7962
      %v7964 = vpop.f32.mrb[0].mxu0
      %7965 = vmatprep.mubr.bf16.mxu0 0
      %7966 = vmatmul.mubr.bf16.gmra.mrb[0].mxu0 %v7911
      %v7967 = vpop.f32.mrb[0].mxu0
      %v7968 = vadd.f32 0.0, %v7967
      %v7969 = vpop.f32.mrb[0].mxu0
      %v7970 = vpop.f32.mrb[0].mxu0
      %v7971 = vadd.f32 0.0, %v7970
      %v7972 = vpop.f32.mrb[0].mxu0
      %7973 = vmatprep.mubr.bf16.mxu0 0
      %7974 = vmatmul.mubr.bf16.gmra.mrb[0].mxu0 %v7914
      %v7975 = vpop.f32.mrb[0].mxu0
      %v7976 = vadd.f32 0.0, %v7975
      %v7977 = vpop.f32.mrb[0].mxu0
      %v7978 = vpop.f32.mrb[0].mxu0
      %v7979 = vadd.f32 0.0, %v7978
      %v7980 = vpop.f32.mrb[0].mxu0
      %7981 = vmatprep.mubr.bf16.mxu0 0
      %7982 = vmatmul.mubr.bf16.gmra.mrb[0].mxu0 %v7917
      %v7983 = vpop.f32.mrb[0].mxu0
      %v7984 = vadd.f32 0.0, %v7983
      %v7985 = vpop.f32.mrb[0].mxu0
      %v7986 = vpop.f32.mrb[0].mxu0
      %v7987 = vadd.f32 0.0, %v7986
      %v7988 = vpop.f32.mrb[0].mxu0
      %7989 = vmatprep.mubr.bf16.mxu0 0
      %7990 = vmatmul.mubr.bf16.gmra.mrb[0].mxu0 %v7920
      %v7991 = vpop.f32.mrb[0].mxu0
      %v7992 = vadd.f32 0.0, %v7991
      %v7993 = vpop.f32.mrb[0].mxu0
      %v7994 = vpop.f32.mrb[0].mxu0
      %v7995 = vadd.f32 0.0, %v7994
      %v7996 = vpop.f32.mrb[0].mxu0
      %7997 = vmatprep.mubr.bf16.mxu0 0
      %7998 = vmatmul.mubr.bf16.gmra.mrb[0].mxu0 %v7923
      %v7999 = vpop.f32.mrb[0].mxu0
      %v8000 = vadd.f32 0.0, %v7999
      %v8001 = vpop.f32.mrb[0].mxu0
      %v8002 = vpop.f32.mrb[0].mxu0
      %v8003 = vpop.f32.mrb[0].mxu0
      %8004 = vdwg.mxu0
      %v8005 = vadd.f32 %v7753, %v7960
      %v8006 = vadd.f32 %v7754, %v7963
      %v8007 = vadd.f32 %v7755, %v7968
      %v8008 = vadd.f32 %v7756, %v7971
      %v8009 = vadd.f32 %v7757, %v7976
      %v8010 = vadd.f32 %v7758, %v7979
      %v8011 = vadd.f32 %v7759, %v7984
      %v8012 = vadd.f32 %v7760, %v7987
      %v8013 = vadd.f32 %v7761, %v7992
      %v8014 = vadd.f32 %v7762, %v7995
      %v8015 = vadd.f32 %v7763, %v8000
      %v8016 = vmax.f32 %v7879, %v8005
      %v8017 = vmax.f32 %v7880, %v8006
      %v8018 = vmax.f32 %v7881, %v8007
      %v8019 = vmax.f32 %v7882, %v8008
      %v8020 = vmax.f32 %v7883, %v8009
      %v8021 = vmax.f32 %v7884, %v8010
      %v8022 = vmax.f32 %v7885, %v8011
      %v8023 = vmax.f32 %v7886, %v8012
      %v8024 = vmax.f32 %v7887, %v8013
      %v8025 = vmax.f32 %v7888, %v8014
      %v8026 = vmax.f32 %v7889, %v8015
      %v8027 = vld [vmem:[%s2] sm:$0x1]
      %v8029 = vlaneseq
      %v8030 = vshrl.u32 %v8029, 7
      %v8031 = vsub.s32 0, %v8030
      %v8032 = vrot.slane %v8027, %v8031
      %v8034 = vadd.f32 %v8016, %v8032
      %v8035 = vadd.f32 %v8017, %v8032
      %v8036 = vadd.f32 %v8018, %v8032
      %v8037 = vadd.f32 %v8019, %v8032
      %v8038 = vadd.f32 %v8020, %v8032
      %v8039 = vadd.f32 %v8021, %v8032
      %v8040 = vadd.f32 %v8022, %v8032
      %v8041 = vadd.f32 %v8023, %v8032
      %v8042 = vadd.f32 %v8024, %v8032
      %v8043 = vadd.f32 %v8025, %v8032
      %v8044 = vadd.f32 %v8026, %v8032
      %v8045 = vmax.f32 %v8034, 0.0
      %v8046 = vmax.f32 %v8035, 0.0
      %v8047 = vmax.f32 %v8036, 0.0
      %v8048 = vmax.f32 %v8037, 0.0
      %v8049 = vmax.f32 %v8038, 0.0
      %v8050 = vmax.f32 %v8039, 0.0
      %v8051 = vmax.f32 %v8040, 0.0
      %v8052 = vmax.f32 %v8041, 0.0
      %v8053 = vmax.f32 %v8042, 0.0
      %v8054 = vmax.f32 %v8043, 0.0
      %v8055 = vmax.f32 %v8044, 0.0
      %8056 = vst [vmem:[%s170] sm:$0xff] %v8045
      %8057 = vst [vmem:[%s170 + $0x8] sm:$0xff] %v8046
      %8058 = vst [vmem:[%s170 + $0x10] sm:$0xff] %v8047
      %8059 = vst [vmem:[%s170 + $0x18] sm:$0xff] %v8048
      %8060 = vst [vmem:[%s170 + $0x20] sm:$0xff] %v8049
      %8061 = vst [vmem:[%s170 + $0x28] sm:$0xff] %v8050
      %8062 = vst [vmem:[%s170 + $0x30] sm:$0xff] %v8051
      %8063 = vst [vmem:[%s170 + $0x38] sm:$0xff] %v8052
      %8064 = vst [vmem:[%s170 + $0x40] sm:$0xff] %v8053
      %8065 = vst [vmem:[%s170 + $0x48] sm:$0xff] %v8054
      %8066 = vst [vmem:[%s170 + $0x50] sm:$0x1] %v8055
      %p8067 = scmp.lt.s32.totalorder %s14, 5
      %s8068 = scalar_select %p8067, %s14, 5
      %s8069 = smul.addr %s8068, 11
      %s8070 = smul.addr %s8069, 8
      %s8071 = scalar_lea.vmem %s3, %s8070
      // Predicated region
      $region33: #{conv_3d_forward.3} parent=31 // pred_check
        %p8072 = pneg %p100
      $region34: #{conv_3d_forward.3} parent=31 // pred_check_branch
        %8074 = sbr.rel (%p8072) target = $region36
      $region35: #{conv_3d_forward.3} parent=31 // pred_region
        _
      $region36: #{conv_3d_forward.3} parent=31 // pred_fallthru
        _
    $region32: #{conv_3d_forward.3} parent=5 // pred_fallthru
      _
    %p8075 = scmp.le.s32.totalorder 2, %s9
    // Predicated region
    $region37: #{conv_3d_forward.3} parent=5 // pred_check
      %p8076 = pneg %p8075
    $region38: #{conv_3d_forward.3} parent=5 // pred_check_branch
      %8078 = sbr.rel (%p8076) target = $region40
    $region39: #{conv_3d_forward.3} parent=5 // pred_region
      %s8079 = ssub.s32 %s9, 2
      // Predicated region
      $region41: #{conv_3d_forward.3} parent=39 // pred_check
        %p8080 = pneg %p106
      $region42: #{conv_3d_forward.3} parent=39 // pred_check_branch
        %8082 = sbr.rel (%p8080) target = $region44
      $region43: #{conv_3d_forward.3} parent=39 // pred_region
        %p8083 = scmp.lt.s32.totalorder %s15, 5
        %s8084 = scalar_select %p8083, %s15, 5
        %s8085 = smul.addr %s8084, 11
        %s8086 = smul.addr %s8085, 8
        %s8087 = scalar_lea.vmem %s3, %s8086
      $region44: #{conv_3d_forward.3} parent=39 // pred_fallthru
        _
    $region40: #{conv_3d_forward.3} parent=5 // pred_fallthru
      _
  $region6: #{conv_3d_forward.3} parent=0 // loop_footer
    %s13 = sadd.s32 1, %s9
  $region7: #{conv_3d_forward.3} parent=0 // loop_footer_branch
    %8 = sbr.rel target = $region3
  $region8: #{conv_3d_forward.3} parent=0 // loop_exit
    _

</llo_original>
